<compile_context>
chip_gen: v5e
topology: v5e:2x2
jax: 0.10.0
libtpu: 0.0.40
codegen_flags: <defaults>
</compile_context>

<pallas_src>
import functools

import jax
import jax.numpy as jnp
from jax import lax
from jax.experimental import pallas as pl
from jax.experimental.pallas import tpu as pltpu


def _vmem():
    return pl.BlockSpec(memory_space=pltpu.MemorySpace.VMEM)


def _round_up(x, m):
    return ((x + m - 1) // m) * m


# ---------------------------------------------------------------------------
# Fused kernel
# ---------------------------------------------------------------------------
def _similarity_net_kernel(data_ref, s16_ref, s32_ref, out_ref, *,
                           num_steps, n_t, n_b, node_dim, edge_dim,
                           edges_in_dim, reid_dim, offs):
    f32 = jnp.float32
    i32 = jnp.int32
    tb = n_t * n_b
    npb = n_t + n_b

    def dot(a, b):
        return jnp.dot(a, b, precision=lax.Precision.HIGHEST,
                       preferred_element_type=f32)

    def relu(x):
        return jnp.maximum(x, 0.0)

    # ---------------- static weight views out of the two packed slabs --------
    ein_w1 = s16_ref[offs["ein_w1"]:offs["ein_w1"] + edges_in_dim, :]
    em0 = offs["em_w1"]
    em_w1a = s16_ref[em0:em0 + node_dim, :]                                   # rows: a
    em_w1e1 = s16_ref[em0 + node_dim:em0 + node_dim + edge_dim, :]            # edge_cur
    em_w1e2 = s16_ref[em0 + node_dim + edge_dim:
                      em0 + node_dim + 2 * edge_dim, :]                       # edge_init
    em_w1b = s16_ref[em0 + node_dim + 2 * edge_dim:
                     em0 + 2 * node_dim + 2 * edge_dim, :]                    # b
    ein_w2 = s16_ref[offs["ein_w2"]:offs["ein_w2"] + edge_dim, :]
    em_w2 = s16_ref[offs["em_w2"]:offs["em_w2"] + edge_dim, :]
    cl_w1 = s16_ref[offs["cl_w1"]:offs["cl_w1"] + edge_dim, :]
    cl_w2 = s16_ref[offs["cl_w2"]:offs["cl_w2"] + edge_dim, 0:1]

    cnn_w = s32_ref[offs["cnn_w"]:offs["cnn_w"] + reid_dim, :]
    nm_w1 = s32_ref[offs["nm_w1"]:offs["nm_w1"] + node_dim + edge_dim, :]
    nm_w2 = s32_ref[offs["nm_w2"]:offs["nm_w2"] + node_dim, :]
    ob = offs["bias"]
    cnn_b = s32_ref[ob + 0:ob + 1, :]
    nm_b1 = s32_ref[ob + 1:ob + 2, :]
    nm_b2 = s32_ref[ob + 2:ob + 3, :]
    ein_b1 = s32_ref[ob + 3:ob + 4, 0:edge_dim]
    ein_b2 = s32_ref[ob + 4:ob + 5, 0:edge_dim]
    em_b1 = s32_ref[ob + 5:ob + 6, 0:edge_dim]
    em_b2 = s32_ref[ob + 6:ob + 7, 0:edge_dim]
    cl_b1 = s32_ref[ob + 7:ob + 8, 0:edge_dim]
    cl_b2 = s32_ref[ob + 8:ob + 9, 0:1]

    # ---------------- one-hot selection matrices, generated in-kernel --------
    # Flattened edge i <-> (track t = i // B, detection b = i % B).  Built from
    # iota comparisons only (no vector integer div/mod).
    e_row_t = lax.broadcasted_iota(i32, (tb, n_t), 0)
    t_col = lax.broadcasted_iota(i32, (tb, n_t), 1)
    s_a = ((e_row_t >= t_col * n_b) & (e_row_t < (t_col + 1) * n_b)).astype(f32)  # (TB,T)
    i_div = jnp.sum(s_a * t_col.astype(f32), axis=1, keepdims=True)               # i // B
    e_row_b = lax.broadcasted_iota(i32, (tb, n_b), 0).astype(f32)
    b_col = lax.broadcasted_iota(i32, (tb, n_b), 1).astype(f32)
    s_b = ((e_row_b - jnp.float32(n_b) * i_div) == b_col).astype(f32)             # (TB,B)
    s_ab = jnp.concatenate([s_a, s_b], axis=1)                                    # (TB,T+B)

    t_row = lax.broadcasted_iota(i32, (n_t, tb), 0)
    e_col_t = lax.broadcasted_iota(i32, (n_t, tb), 1)
    s_at = ((e_col_t >= t_row * n_b) & (e_col_t < (t_row + 1) * n_b)).astype(f32)  # (T,TB)
    i_div_l = jnp.sum(s_at * t_row.astype(f32), axis=0, keepdims=True)             # (1,TB)
    b_row = lax.broadcasted_iota(i32, (n_b, tb), 0).astype(f32)
    e_col_b = lax.broadcasted_iota(i32, (n_b, tb), 1).astype(f32)
    s_bt = ((e_col_b - jnp.float32(n_b) * i_div_l) == b_row).astype(f32)           # (B,TB)
    s_ab_t = jnp.concatenate([s_at, s_bt], axis=0)                                 # (T+B,TB)

    # ---------------- load the single data slab -------------------------------
    data = data_ref[...]                            # (T+B, reid + 5)
    app = data[:, 0:reid_dim]
    geo = data[:, reid_dim:reid_dim + 5]            # [left, top, right, bottom, time]

    # ---------------- cosine re-id distance -----------------------------------
    inv_norm = lax.rsqrt(jnp.maximum(jnp.sum(app * app, axis=-1, keepdims=True),
                                     1e-24))
    app_n = app * inv_norm
    cmat = lax.dot_general(app_n[0:n_t, :], app_n[n_t:npb, :],
                           (((1,), (1,)), ((), ())),
                           precision=lax.Precision.HIGHEST,
                           preferred_element_type=f32)                    # (T, B)
    dist_reid = 1.0 - jnp.sum(dot(s_a, cmat) * s_b, axis=-1, keepdims=True)  # (TB,1)

    # ---------------- per-node geometry, then ONE broadcast matmul ------------
    xcyc = (geo[:, 0:2] + geo[:, 2:4]) * 0.5        # (T+B, 2) box centers
    wh = geo[:, 2:4] - geo[:, 0:2]                  # (T+B, 2) [w, h]
    lwh = jnp.log(wh)                               # logs on T+B rows, not T*B edges
    # signed node features g = [xc, yc, log w, log h, time, w]; track rows carry a
    # minus sign except for w so that  s_ab @ g  yields per-edge (det - track)
    # differences in cols 0..4 and the (w_t + w_c) denominator in col 5.
    row_n = lax.broadcasted_iota(i32, (npb, 6), 0)
    col_n = lax.broadcasted_iota(i32, (npb, 6), 1)
    sign = jnp.where((row_n < n_t) & (col_n != 5), -1.0, 1.0)
    g = jnp.concatenate([xcyc, lwh, geo[:, 4:5], wh[:, 0:1]], axis=1) * sign

    raw = dot(s_ab, g)                                               # (TB, 6)
    inv_den = pl.reciprocal(raw[:, 5:6], approx=True) * 2.0          # 2 / (w_t + w_c)
    dxy = raw[:, 0:2] * (-inv_den)                                   # dist_x, dist_y
    feats = jnp.concatenate([dxy, raw[:, 2:5], dist_reid], axis=1)   # [dx,dy,dw,dh,dt,reid]

    # ---------------- edge_in_mlp + cnn_linear ---------------------------------
    h0 = relu(dot(feats, ein_w1) + ein_b1)
    edge_embeds = relu(dot(h0, ein_w2) + ein_b2)                     # (TB, E)
    embeds_all = relu(dot(app, cnn_w) + cnn_b)                       # (T+B, N) [tracks; dets]

    # Loop invariants (initial-edge contribution + layer-1 bias pre-folded).
    base = dot(edge_embeds, em_w1e2) + em_b1                         # (TB, E)
    em_w1ab = jnp.concatenate([em_w1a, em_w1b], axis=1)              # (N, 2E)
    is_track = lax.broadcasted_iota(i32, (npb, edge_dim), 0) < n_t   # (T+B, E)

    # ---------------- num_steps message-passing rounds (unrolled) --------------
    cls_in = []
    for _ in range(num_steps):
        # edge update: split-weight form of edge_mlp(cat(a, edge_cur, edge_init, b))
        contrib = dot(embeds_all, em_w1ab)                           # (T+B, 2E)
        m = jnp.where(is_track, contrib[:, 0:edge_dim],
                      contrib[:, edge_dim:2 * edge_dim])             # per-node a/b part
        h1 = relu(dot(edge_embeds, em_w1e1) + dot(s_ab, m) + base)
        edge_embeds = relu(dot(h1, em_w2) + em_b2)                   # (TB, E)

        # node update: both node sets and both neighbour sums stacked
        sums = dot(s_ab_t, edge_embeds)                              # (T+B, E)
        hn = relu(dot(jnp.concatenate([embeds_all, sums], axis=1), nm_w1) + nm_b1)
        embeds_all = relu(dot(hn, nm_w2) + nm_b2)                    # (T+B, N)

        cls_in.append(edge_embeds)

    # ---------------- classifier, batched over every step ----------------------
    ee_all = jnp.concatenate(cls_in, axis=0)                         # (S*TB, E)
    hc = relu(dot(ee_all, cl_w1) + cl_b1)
    out_ref[...] = dot(hc, cl_w2) + cl_b2                            # (S*TB, 1)


# ---------------------------------------------------------------------------
# Wrapper: packs inputs/weights into 3 slabs and calls the kernel once
# ---------------------------------------------------------------------------
def similarity_net_forward(params, track_app, current_app, track_coords,
                           current_coords, track_t, curr_t, *, num_steps):
    f32 = jnp.float32
    n_t, reid_dim = track_app.shape
    n_b = current_app.shape[0]
    node_dim = params["cnn_linear"][0].shape[1]
    edge_dim = params["edge_in_mlp"][2].shape[1]
    edges_in_dim = params["edge_in_mlp"][0].shape[0]

    cnn_w, cnn_b = params["cnn_linear"]
    ein_w1, ein_b1, ein_w2, ein_b2 = params["edge_in_mlp"]
    em_w1, em_b1, em_w2, em_b2 = params["edge_mlp"]
    nm_w1, nm_b1, nm_w2, nm_b2 = params["node_mlp"]
    cl_w1, cl_b1, cl_w2, cl_b2 = params["classifier"]

    # Data slab: [appearance | l, t, r, b, timestamp], tracks stacked over detections.
    data_all = jnp.concatenate(
        [jnp.concatenate([track_app, track_coords, track_t[:, None]], axis=-1),
         jnp.concatenate([current_app, current_coords, curr_t[:, None]], axis=-1)],
        axis=0).astype(f32)                                          # (T+B, reid+5)

    def pad_cols(a, cols):
        return jnp.pad(a, ((0, 0), (0, cols - a.shape[1])))

    # Slab of all edge_dim-wide weights (row offsets are static; kernel slices them).
    offs = {}
    offs["ein_w1"] = 0
    offs["em_w1"] = _round_up(edges_in_dim, 8)
    offs["ein_w2"] = offs["em_w1"] + 2 * node_dim + 2 * edge_dim
    offs["em_w2"] = offs["ein_w2"] + edge_dim
    offs["cl_w1"] = offs["em_w2"] + edge_dim
    offs["cl_w2"] = offs["cl_w1"] + edge_dim
    slab16 = jnp.concatenate([
        jnp.pad(ein_w1, ((0, offs["em_w1"] - edges_in_dim), (0, 0))),
        em_w1, ein_w2, em_w2, cl_w1, pad_cols(cl_w2, edge_dim)], axis=0).astype(f32)

    # Slab of all node_dim-wide weights plus every bias (9 rows, width-padded).
    offs["cnn_w"] = 0
    offs["nm_w1"] = reid_dim
    offs["nm_w2"] = offs["nm_w1"] + node_dim + edge_dim
    offs["bias"] = offs["nm_w2"] + node_dim
    biases = jnp.concatenate([
        cnn_b, nm_b1, nm_b2,
        pad_cols(ein_b1, node_dim), pad_cols(ein_b2, node_dim),
        pad_cols(em_b1, node_dim), pad_cols(em_b2, node_dim),
        pad_cols(cl_b1, node_dim), pad_cols(cl_b2, node_dim)], axis=0)
    slab32 = jnp.concatenate([cnn_w, nm_w1, nm_w2, biases], axis=0).astype(f32)

    kernel = functools.partial(
        _similarity_net_kernel, num_steps=num_steps, n_t=n_t, n_b=n_b,
        node_dim=node_dim, edge_dim=edge_dim, edges_in_dim=edges_in_dim,
        reid_dim=reid_dim, offs=offs)

    out = pl.pallas_call(
        kernel,
        out_shape=jax.ShapeDtypeStruct((num_steps * n_t * n_b, 1), f32),
        in_specs=[_vmem(), _vmem(), _vmem()],
        out_specs=_vmem(),
    )(data_all, slab16, slab32)
    return out.reshape(num_steps, n_t, n_b)


# ---------------------------------------------------------------------------
# Parameters (deterministic synthetic init; Linear(in,out) -> W:(in,out), b:(1,out))
# ---------------------------------------------------------------------------
def _linear_params(key, d_in, d_out):
    kw, kb = jax.random.split(key)
    scale = 1.0 / jnp.sqrt(jnp.float32(d_in))
    w = jax.random.uniform(kw, (d_in, d_out), jnp.float32, -scale, scale)
    b = jax.random.uniform(kb, (1, d_out), jnp.float32, -scale, scale)
    return w, b


def init_params(key, node_dim, edge_dim, reid_dim, edges_in_dim):
    keys = jax.random.split(key, 10)
    edge_in_dim_mp = 2 * node_dim + 2 * edge_dim
    node_in_dim_mp = node_dim + edge_dim
    return {
        "cnn_linear": _linear_params(keys[0], reid_dim, node_dim),
        "edge_in_mlp": (*_linear_params(keys[1], edges_in_dim, edge_dim),
                        *_linear_params(keys[2], edge_dim, edge_dim)),
        "edge_mlp": (*_linear_params(keys[3], edge_in_dim_mp, edge_dim),
                     *_linear_params(keys[4], edge_dim, edge_dim)),
        "node_mlp": (*_linear_params(keys[5], node_in_dim_mp, node_dim),
                     *_linear_params(keys[6], node_dim, node_dim)),
        "classifier": (*_linear_params(keys[7], edge_dim, edge_dim),
                       *_linear_params(keys[8], edge_dim, 1)),
    }


# ---------------------------------------------------------------------------
# Pure-JAX reference (mirrors the PyTorch module) for correctness validation
# ---------------------------------------------------------------------------
def _reference_forward(params, track_app, current_app, track_coords,
                       current_coords, track_t, curr_t, *, num_steps):
    def normalize(v):
        n = jnp.maximum(jnp.sqrt(jnp.sum(v * v, -1, keepdims=True)), 1e-12)
        return v / n

    def mlp2(xv, p, final_relu):
        w1, b1, w2, b2 = p
        hv = jnp.maximum(xv @ w1 + b1, 0.0)
        yv = hv @ w2 + b2
        return jnp.maximum(yv, 0.0) if final_relu else yv

    dist_reid = 1.0 - normalize(track_app) @ normalize(current_app).T

    def to_xcycwh(bx):
        l, t, r, b = bx[:, 0], bx[:, 1], bx[:, 2], bx[:, 3]
        return jnp.stack([(l + r) / 2, (t + b) / 2, r - l, b - t], axis=-1)

    tc = to_xcycwh(track_coords)[:, None, :]
    cc = to_xcycwh(current_coords)[None, :, :]
    denom = (tc[..., 2] + cc[..., 2]) / 2
    dist_x = (tc[..., 0] - cc[..., 0]) / denom
    dist_y = (tc[..., 1] - cc[..., 1]) / denom
    dist_w = jnp.log(cc[..., 2] / tc[..., 2])
    dist_h = jnp.log(cc[..., 3] / tc[..., 3])
    dist_t = curr_t[None, :] - track_t[:, None]
    edge_feats = jnp.stack([dist_x, dist_y, dist_w, dist_h, dist_t], -1)
    edge_feats = jnp.concatenate([edge_feats, dist_reid[..., None]], -1)

    edge_embeds = mlp2(edge_feats, params["edge_in_mlp"], True)
    initial = edge_embeds
    cw, cb = params["cnn_linear"]
    track_embeds = jnp.maximum(track_app @ cw + cb, 0.0)
    curr_embeds = jnp.maximum(current_app @ cw + cb, 0.0)
    n_t, n_b = edge_embeds.shape[:2]
    outs = []
    for _ in range(num_steps):
        ee = jnp.concatenate([edge_embeds, initial], -1)
        a_in = jnp.broadcast_to(track_embeds[:, None, :], (n_t, n_b, track_embeds.shape[-1]))
        b_in = jnp.broadcast_to(curr_embeds[None, :, :], (n_t, n_b, curr_embeds.shape[-1]))
        edge_in = jnp.concatenate([a_in, ee, b_in], -1)
        edge_embeds = mlp2(edge_in, params["edge_mlp"], True)
        a_sum = edge_embeds.sum(1)
        b_sum = edge_embeds.sum(0)
        track_new = mlp2(jnp.concatenate([track_embeds, a_sum], -1), params["node_mlp"], True)
        curr_new = mlp2(jnp.concatenate([curr_embeds, b_sum], -1), params["node_mlp"], True)
        track_embeds, curr_embeds = track_new, curr_new
        outs.append(mlp2(edge_embeds, params["classifier"], False)[..., 0])
    return jnp.stack(outs)


# ---------------------------------------------------------------------------
if __name__ == "__main__":
    jax.config.update("jax_default_matmul_precision", "highest")

    node_dim, edge_dim, reid_dim, edges_in_dim, num_steps = 32, 16, 64, 6, 3
    num_tracks, num_boxes = 8, 10

    key = jax.random.PRNGKey(0)
    kp, k1, k2, k3, k4, k5, k6 = jax.random.split(key, 7)

    params = init_params(kp, node_dim, edge_dim, reid_dim, edges_in_dim)

    track_app = jax.random.normal(k1, (num_tracks, reid_dim), jnp.float32)
    current_app = jax.random.normal(k2, (num_boxes, reid_dim), jnp.float32)

    # boxes as [left, top, right, bottom] with guaranteed positive width/height
    tlt = jax.random.uniform(k3, (num_tracks, 2), jnp.float32, 0.0, 100.0)
    twh = jax.random.uniform(k4, (num_tracks, 2), jnp.float32, 5.0, 50.0)
    track_coords = jnp.concatenate([tlt, tlt + twh], axis=-1)
    clt = jax.random.uniform(k5, (num_boxes, 2), jnp.float32, 0.0, 100.0)
    cwh = jax.random.uniform(k6, (num_boxes, 2), jnp.float32, 5.0, 50.0)
    current_coords = jnp.concatenate([clt, clt + cwh], axis=-1)

    track_t = jnp.arange(num_tracks, dtype=jnp.float32)
    curr_t = jnp.full((num_boxes,), float(num_tracks), dtype=jnp.float32)

    fwd = jax.jit(functools.partial(similarity_net_forward, num_steps=num_steps))
    out = jax.block_until_ready(fwd(params, track_app, current_app, track_coords,
                                    current_coords, track_t, curr_t))

    assert out.shape == (num_steps, num_tracks, num_boxes), out.shape
    assert bool(jnp.all(jnp.isfinite(out)))

    ref = _reference_forward(params, track_app, current_app, track_coords,
                             current_coords, track_t, curr_t, num_steps=num_steps)
    assert jnp.allclose(out, ref, rtol=1e-2, atol=1e-2), \
        float(jnp.max(jnp.abs(out - ref)))

    print("KERNEL_OK")
</pallas_src>

<mosaic_0001>
module attributes {stable_mosaic.version = 11 : i64} {
  func.func @_similarity_net_kernel(%arg0: memref<18x69xf32, #tpu.memory_space<vmem>>, %arg1: memref<168x16xf32, #tpu.memory_space<vmem>>, %arg2: memref<153x32xf32, #tpu.memory_space<vmem>>, %arg3: memref<240x1xf32, #tpu.memory_space<vmem>>) attributes {dimension_semantics = [], scalar_prefetch = 0 : i64, scratch_operands = 0 : i64, tpu.core_type = #tpu.core_type<tc>} {
    %c0 = arith.constant 0 : index
    %c0_0 = arith.constant 0 : index
    %0 = vector.load %arg1[%c0, %c0_0] : memref<168x16xf32, #tpu.memory_space<vmem>>, vector<6x16xf32>
    %c8 = arith.constant 8 : index
    %c0_1 = arith.constant 0 : index
    %1 = vector.load %arg1[%c8, %c0_1] : memref<168x16xf32, #tpu.memory_space<vmem>>, vector<32x16xf32>
    %c40 = arith.constant 40 : index
    %c0_2 = arith.constant 0 : index
    %2 = vector.load %arg1[%c40, %c0_2] : memref<168x16xf32, #tpu.memory_space<vmem>>, vector<16x16xf32>
    %c56 = arith.constant 56 : index
    %c0_3 = arith.constant 0 : index
    %3 = vector.load %arg1[%c56, %c0_3] : memref<168x16xf32, #tpu.memory_space<vmem>>, vector<16x16xf32>
    %c72 = arith.constant 72 : index
    %c0_4 = arith.constant 0 : index
    %4 = vector.load %arg1[%c72, %c0_4] : memref<168x16xf32, #tpu.memory_space<vmem>>, vector<32x16xf32>
    %c104 = arith.constant 104 : index
    %c0_5 = arith.constant 0 : index
    %5 = vector.load %arg1[%c104, %c0_5] : memref<168x16xf32, #tpu.memory_space<vmem>>, vector<16x16xf32>
    %c120 = arith.constant 120 : index
    %c0_6 = arith.constant 0 : index
    %6 = vector.load %arg1[%c120, %c0_6] : memref<168x16xf32, #tpu.memory_space<vmem>>, vector<16x16xf32>
    %c136 = arith.constant 136 : index
    %c0_7 = arith.constant 0 : index
    %7 = vector.load %arg1[%c136, %c0_7] : memref<168x16xf32, #tpu.memory_space<vmem>>, vector<16x16xf32>
    %c152 = arith.constant 152 : index
    %c0_8 = arith.constant 0 : index
    %8 = vector.load %arg1[%c152, %c0_8] : memref<168x16xf32, #tpu.memory_space<vmem>>, vector<16x1xf32>
    %c0_9 = arith.constant 0 : index
    %c0_10 = arith.constant 0 : index
    %9 = vector.load %arg2[%c0_9, %c0_10] : memref<153x32xf32, #tpu.memory_space<vmem>>, vector<64x32xf32>
    %c64 = arith.constant 64 : index
    %c0_11 = arith.constant 0 : index
    %10 = vector.load %arg2[%c64, %c0_11] : memref<153x32xf32, #tpu.memory_space<vmem>>, vector<48x32xf32>
    %c112 = arith.constant 112 : index
    %c0_12 = arith.constant 0 : index
    %11 = vector.load %arg2[%c112, %c0_12] : memref<153x32xf32, #tpu.memory_space<vmem>>, vector<32x32xf32>
    %c144 = arith.constant 144 : index
    %c0_13 = arith.constant 0 : index
    %12 = vector.load %arg2[%c144, %c0_13] : memref<153x32xf32, #tpu.memory_space<vmem>>, vector<1x32xf32>
    %c145 = arith.constant 145 : index
    %c0_14 = arith.constant 0 : index
    %13 = vector.load %arg2[%c145, %c0_14] : memref<153x32xf32, #tpu.memory_space<vmem>>, vector<1x32xf32>
    %c146 = arith.constant 146 : index
    %c0_15 = arith.constant 0 : index
    %14 = vector.load %arg2[%c146, %c0_15] : memref<153x32xf32, #tpu.memory_space<vmem>>, vector<1x32xf32>
    %c147 = arith.constant 147 : index
    %c0_16 = arith.constant 0 : index
    %15 = vector.load %arg2[%c147, %c0_16] : memref<153x32xf32, #tpu.memory_space<vmem>>, vector<1x16xf32>
    %c148 = arith.constant 148 : index
    %c0_17 = arith.constant 0 : index
    %16 = vector.load %arg2[%c148, %c0_17] : memref<153x32xf32, #tpu.memory_space<vmem>>, vector<1x16xf32>
    %c149 = arith.constant 149 : index
    %c0_18 = arith.constant 0 : index
    %17 = vector.load %arg2[%c149, %c0_18] : memref<153x32xf32, #tpu.memory_space<vmem>>, vector<1x16xf32>
    %c150 = arith.constant 150 : index
    %c0_19 = arith.constant 0 : index
    %18 = vector.load %arg2[%c150, %c0_19] : memref<153x32xf32, #tpu.memory_space<vmem>>, vector<1x16xf32>
    %c151 = arith.constant 151 : index
    %c0_20 = arith.constant 0 : index
    %19 = vector.load %arg2[%c151, %c0_20] : memref<153x32xf32, #tpu.memory_space<vmem>>, vector<1x16xf32>
    %c152_21 = arith.constant 152 : index
    %c0_22 = arith.constant 0 : index
    %20 = vector.load %arg2[%c152_21, %c0_22] : memref<153x32xf32, #tpu.memory_space<vmem>>, vector<1x1xf32>
    %21 = tpu.iota {dimensions = array<i32: 0>} : vector<80x8xi32>
    %22 = tpu.iota {dimensions = array<i32: 1>} : vector<80x8xi32>
    %c10_i32 = arith.constant 10 : i32
    %23 = vector.broadcast %c10_i32 : i32 to vector<80x8xi32>
    %24 = arith.muli %22, %23 : vector<80x8xi32>
    %25 = arith.cmpi sge, %21, %24 : vector<80x8xi32>
    %c1_i32 = arith.constant 1 : i32
    %26 = vector.broadcast %c1_i32 : i32 to vector<80x8xi32>
    %27 = arith.addi %22, %26 : vector<80x8xi32>
    %c10_i32_23 = arith.constant 10 : i32
    %28 = vector.broadcast %c10_i32_23 : i32 to vector<80x8xi32>
    %29 = arith.muli %27, %28 : vector<80x8xi32>
    %30 = arith.cmpi slt, %21, %29 : vector<80x8xi32>
    %31 = arith.andi %25, %30 : vector<80x8xi1>
    %32 = arith.extui %31 : vector<80x8xi1> to vector<80x8xi32>
    %33 = arith.sitofp %32 : vector<80x8xi32> to vector<80x8xf32>
    %34 = arith.sitofp %22 : vector<80x8xi32> to vector<80x8xf32>
    %35 = arith.mulf %33, %34 : vector<80x8xf32>
    %cst = arith.constant dense<0.000000e+00> : vector<80xf32>
    %36 = vector.multi_reduction <add>, %35, %cst [1] : vector<80x8xf32> to vector<80xf32>
    %37 = vector.shape_cast %36 : vector<80xf32> to vector<80x1xf32>
    %38 = tpu.iota {dimensions = array<i32: 0>} : vector<80x10xi32>
    %39 = arith.sitofp %38 : vector<80x10xi32> to vector<80x10xf32>
    %40 = tpu.iota {dimensions = array<i32: 1>} : vector<80x10xi32>
    %41 = arith.sitofp %40 : vector<80x10xi32> to vector<80x10xf32>
    %cst_24 = arith.constant 1.000000e+01 : f32
    %42 = vector.broadcast %cst_24 : f32 to vector<80x1xf32>
    %43 = arith.mulf %42, %37 : vector<80x1xf32>
    %44 = vector.broadcast %43 : vector<80x1xf32> to vector<80x10xf32>
    %45 = arith.subf %39, %44 : vector<80x10xf32>
    %46 = arith.cmpf oeq, %45, %41 : vector<80x10xf32>
    %47 = arith.extui %46 : vector<80x10xi1> to vector<80x10xi32>
    %48 = arith.sitofp %47 : vector<80x10xi32> to vector<80x10xf32>
    %49 = tpu.concatenate %33, %48 in 1 : vector<80x8xf32>, vector<80x10xf32> -> vector<80x18xf32>
    %50 = tpu.iota {dimensions = array<i32: 0>} : vector<8x80xi32>
    %51 = tpu.iota {dimensions = array<i32: 1>} : vector<8x80xi32>
    %c10_i32_25 = arith.constant 10 : i32
    %52 = vector.broadcast %c10_i32_25 : i32 to vector<8x80xi32>
    %53 = arith.muli %50, %52 : vector<8x80xi32>
    %54 = arith.cmpi sge, %51, %53 : vector<8x80xi32>
    %c1_i32_26 = arith.constant 1 : i32
    %55 = vector.broadcast %c1_i32_26 : i32 to vector<8x80xi32>
    %56 = arith.addi %50, %55 : vector<8x80xi32>
    %c10_i32_27 = arith.constant 10 : i32
    %57 = vector.broadcast %c10_i32_27 : i32 to vector<8x80xi32>
    %58 = arith.muli %56, %57 : vector<8x80xi32>
    %59 = arith.cmpi slt, %51, %58 : vector<8x80xi32>
    %60 = arith.andi %54, %59 : vector<8x80xi1>
    %61 = arith.extui %60 : vector<8x80xi1> to vector<8x80xi32>
    %62 = arith.sitofp %61 : vector<8x80xi32> to vector<8x80xf32>
    %63 = arith.sitofp %50 : vector<8x80xi32> to vector<8x80xf32>
    %64 = arith.mulf %62, %63 : vector<8x80xf32>
    %cst_28 = arith.constant dense<0.000000e+00> : vector<80xf32>
    %65 = vector.multi_reduction <add>, %64, %cst_28 [0] : vector<8x80xf32> to vector<80xf32>
    %66 = vector.shape_cast %65 : vector<80xf32> to vector<1x80xf32>
    %67 = tpu.iota {dimensions = array<i32: 0>} : vector<10x80xi32>
    %68 = arith.sitofp %67 : vector<10x80xi32> to vector<10x80xf32>
    %69 = tpu.iota {dimensions = array<i32: 1>} : vector<10x80xi32>
    %70 = arith.sitofp %69 : vector<10x80xi32> to vector<10x80xf32>
    %cst_29 = arith.constant 1.000000e+01 : f32
    %71 = vector.broadcast %cst_29 : f32 to vector<1x80xf32>
    %72 = arith.mulf %71, %66 : vector<1x80xf32>
    %73 = vector.broadcast %72 : vector<1x80xf32> to vector<10x80xf32>
    %74 = arith.subf %70, %73 : vector<10x80xf32>
    %75 = arith.cmpf oeq, %74, %68 : vector<10x80xf32>
    %76 = arith.extui %75 : vector<10x80xi1> to vector<10x80xi32>
    %77 = arith.sitofp %76 : vector<10x80xi32> to vector<10x80xf32>
    %78 = tpu.concatenate %62, %77 in 0 : vector<8x80xf32>, vector<10x80xf32> -> vector<18x80xf32>
    %c0_30 = arith.constant 0 : index
    %c0_31 = arith.constant 0 : index
    %79 = vector.load %arg0[%c0_30, %c0_31] : memref<18x69xf32, #tpu.memory_space<vmem>>, vector<18x69xf32>
    %80 = vector.extract_strided_slice %79 {offsets = [0, 0], sizes = [18, 64], strides = [1, 1]} : vector<18x69xf32> to vector<18x64xf32>
    %81 = vector.extract_strided_slice %79 {offsets = [0, 64], sizes = [18, 5], strides = [1, 1]} : vector<18x69xf32> to vector<18x5xf32>
    %82 = arith.mulf %80, %80 : vector<18x64xf32>
    %cst_32 = arith.constant dense<0.000000e+00> : vector<18xf32>
    %83 = vector.multi_reduction <add>, %82, %cst_32 [1] : vector<18x64xf32> to vector<18xf32>
    %84 = vector.shape_cast %83 : vector<18xf32> to vector<18x1xf32>
    %cst_33 = arith.constant 1.000000e-24 : f32
    %85 = vector.broadcast %cst_33 : f32 to vector<18x1xf32>
    %86 = arith.maximumf %84, %85 : vector<18x1xf32>
    %87 = math.rsqrt %86 : vector<18x1xf32>
    %88 = vector.broadcast %87 : vector<18x1xf32> to vector<18x64xf32>
    %89 = arith.mulf %80, %88 : vector<18x64xf32>
    %90 = vector.extract_strided_slice %89 {offsets = [0, 0], sizes = [8, 64], strides = [1, 1]} : vector<18x64xf32> to vector<8x64xf32>
    %91 = vector.extract_strided_slice %89 {offsets = [8, 0], sizes = [10, 64], strides = [1, 1]} : vector<18x64xf32> to vector<10x64xf32>
    %cst_34 = arith.constant dense<0.000000e+00> : vector<8x10xf32>
    %92 = tpu.matmul %90, %91, %cst_34 {dimension_numbers = #tpu.dot_dimension_numbers<[1], [1], [0], [0], [0, 0, 1, 0], [], []>, precision = #tpu.contract_precision<fp32>} : vector<8x64xf32>, vector<10x64xf32>, vector<8x10xf32> -> vector<8x10xf32>
    %cst_35 = arith.constant dense<0.000000e+00> : vector<80x10xf32>
    %93 = tpu.matmul %33, %92, %cst_35 {dimension_numbers = #tpu.dot_dimension_numbers<[1], [0], [0], [1], [0, 0, 1, 1], [], []>, precision = #tpu.contract_precision<fp32>} : vector<80x8xf32>, vector<8x10xf32>, vector<80x10xf32> -> vector<80x10xf32>
    %94 = arith.mulf %93, %48 : vector<80x10xf32>
    %cst_36 = arith.constant dense<0.000000e+00> : vector<80xf32>
    %95 = vector.multi_reduction <add>, %94, %cst_36 [1] : vector<80x10xf32> to vector<80xf32>
    %96 = vector.shape_cast %95 : vector<80xf32> to vector<80x1xf32>
    %cst_37 = arith.constant 1.000000e+00 : f32
    %97 = vector.broadcast %cst_37 : f32 to vector<80x1xf32>
    %98 = arith.subf %97, %96 : vector<80x1xf32>
    %99 = vector.extract_strided_slice %81 {offsets = [0, 0], sizes = [18, 2], strides = [1, 1]} : vector<18x5xf32> to vector<18x2xf32>
    %100 = vector.extract_strided_slice %81 {offsets = [0, 2], sizes = [18, 2], strides = [1, 1]} : vector<18x5xf32> to vector<18x2xf32>
    %101 = arith.addf %99, %100 : vector<18x2xf32>
    %cst_38 = arith.constant 5.000000e-01 : f32
    %102 = vector.broadcast %cst_38 : f32 to vector<18x2xf32>
    %103 = arith.mulf %101, %102 : vector<18x2xf32>
    %104 = vector.extract_strided_slice %81 {offsets = [0, 2], sizes = [18, 2], strides = [1, 1]} : vector<18x5xf32> to vector<18x2xf32>
    %105 = vector.extract_strided_slice %81 {offsets = [0, 0], sizes = [18, 2], strides = [1, 1]} : vector<18x5xf32> to vector<18x2xf32>
    %106 = arith.subf %104, %105 : vector<18x2xf32>
    %107 = math.log %106 : vector<18x2xf32>
    %108 = tpu.iota {dimensions = array<i32: 0>} : vector<18x6xi32>
    %109 = tpu.iota {dimensions = array<i32: 1>} : vector<18x6xi32>
    %c8_i32 = arith.constant 8 : i32
    %110 = vector.broadcast %c8_i32 : i32 to vector<18x6xi32>
    %111 = arith.cmpi slt, %108, %110 : vector<18x6xi32>
    %c5_i32 = arith.constant 5 : i32
    %112 = vector.broadcast %c5_i32 : i32 to vector<18x6xi32>
    %113 = arith.cmpi ne, %109, %112 : vector<18x6xi32>
    %114 = arith.andi %111, %113 : vector<18x6xi1>
    %cst_39 = arith.constant -1.000000e+00 : f32
    %cst_40 = arith.constant 1.000000e+00 : f32
    %115 = vector.broadcast %cst_39 : f32 to vector<18x6xf32>
    %116 = vector.broadcast %cst_40 : f32 to vector<18x6xf32>
    %117 = arith.select %114, %115, %116 : vector<18x6xi1>, vector<18x6xf32>
    %118 = vector.extract_strided_slice %81 {offsets = [0, 4], sizes = [18, 1], strides = [1, 1]} : vector<18x5xf32> to vector<18x1xf32>
    %119 = vector.extract_strided_slice %106 {offsets = [0, 0], sizes = [18, 1], strides = [1, 1]} : vector<18x2xf32> to vector<18x1xf32>
    %120 = tpu.concatenate %103, %107, %118, %119 in 1 : vector<18x2xf32>, vector<18x2xf32>, vector<18x1xf32>, vector<18x1xf32> -> vector<18x6xf32>
    %121 = arith.mulf %120, %117 : vector<18x6xf32>
    %cst_41 = arith.constant dense<0.000000e+00> : vector<80x6xf32>
    %122 = tpu.matmul %49, %121, %cst_41 {dimension_numbers = #tpu.dot_dimension_numbers<[1], [0], [0], [1], [0, 0, 1, 1], [], []>, precision = #tpu.contract_precision<fp32>} : vector<80x18xf32>, vector<18x6xf32>, vector<80x6xf32> -> vector<80x6xf32>
    %123 = vector.extract_strided_slice %122 {offsets = [0, 5], sizes = [80, 1], strides = [1, 1]} : vector<80x6xf32> to vector<80x1xf32>
    %124 = tpu.reciprocal %123 {approx = true} : vector<80x1xf32> -> vector<80x1xf32>
    %cst_42 = arith.constant 2.000000e+00 : f32
    %125 = vector.broadcast %cst_42 : f32 to vector<80x1xf32>
    %126 = arith.mulf %124, %125 : vector<80x1xf32>
    %127 = vector.extract_strided_slice %122 {offsets = [0, 0], sizes = [80, 2], strides = [1, 1]} : vector<80x6xf32> to vector<80x2xf32>
    %cst_43 = arith.constant 0.000000e+00 : f32
    %128 = vector.broadcast %cst_43 : f32 to vector<80x1xf32>
    %129 = arith.subf %128, %126 : vector<80x1xf32>
    %130 = vector.broadcast %129 : vector<80x1xf32> to vector<80x2xf32>
    %131 = arith.mulf %127, %130 : vector<80x2xf32>
    %132 = vector.extract_strided_slice %122 {offsets = [0, 2], sizes = [80, 3], strides = [1, 1]} : vector<80x6xf32> to vector<80x3xf32>
    %133 = tpu.concatenate %131, %132, %98 in 1 : vector<80x2xf32>, vector<80x3xf32>, vector<80x1xf32> -> vector<80x6xf32>
    %cst_44 = arith.constant dense<0.000000e+00> : vector<80x16xf32>
    %134 = tpu.matmul %133, %0, %cst_44 {dimension_numbers = #tpu.dot_dimension_numbers<[1], [0], [0], [1], [0, 0, 1, 1], [], []>, precision = #tpu.contract_precision<fp32>} : vector<80x6xf32>, vector<6x16xf32>, vector<80x16xf32> -> vector<80x16xf32>
    %135 = vector.broadcast %15 : vector<1x16xf32> to vector<80x16xf32>
    %136 = arith.addf %134, %135 : vector<80x16xf32>
    %cst_45 = arith.constant 0.000000e+00 : f32
    %137 = vector.broadcast %cst_45 : f32 to vector<80x16xf32>
    %138 = arith.maximumf %136, %137 : vector<80x16xf32>
    %cst_46 = arith.constant dense<0.000000e+00> : vector<80x16xf32>
    %139 = tpu.matmul %138, %5, %cst_46 {dimension_numbers = #tpu.dot_dimension_numbers<[1], [0], [0], [1], [0, 0, 1, 1], [], []>, precision = #tpu.contract_precision<fp32>} : vector<80x16xf32>, vector<16x16xf32>, vector<80x16xf32> -> vector<80x16xf32>
    %140 = vector.broadcast %16 : vector<1x16xf32> to vector<80x16xf32>
    %141 = arith.addf %139, %140 : vector<80x16xf32>
    %cst_47 = arith.constant 0.000000e+00 : f32
    %142 = vector.broadcast %cst_47 : f32 to vector<80x16xf32>
    %143 = arith.maximumf %141, %142 : vector<80x16xf32>
    %cst_48 = arith.constant dense<0.000000e+00> : vector<18x32xf32>
    %144 = tpu.matmul %80, %9, %cst_48 {dimension_numbers = #tpu.dot_dimension_numbers<[1], [0], [0], [1], [0, 0, 1, 1], [], []>, precision = #tpu.contract_precision<fp32>} : vector<18x64xf32>, vector<64x32xf32>, vector<18x32xf32> -> vector<18x32xf32>
    %145 = vector.broadcast %12 : vector<1x32xf32> to vector<18x32xf32>
    %146 = arith.addf %144, %145 : vector<18x32xf32>
    %cst_49 = arith.constant 0.000000e+00 : f32
    %147 = vector.broadcast %cst_49 : f32 to vector<18x32xf32>
    %148 = arith.maximumf %146, %147 : vector<18x32xf32>
    %cst_50 = arith.constant dense<0.000000e+00> : vector<80x16xf32>
    %149 = tpu.matmul %143, %3, %cst_50 {dimension_numbers = #tpu.dot_dimension_numbers<[1], [0], [0], [1], [0, 0, 1, 1], [], []>, precision = #tpu.contract_precision<fp32>} : vector<80x16xf32>, vector<16x16xf32>, vector<80x16xf32> -> vector<80x16xf32>
    %150 = vector.broadcast %17 : vector<1x16xf32> to vector<80x16xf32>
    %151 = arith.addf %149, %150 : vector<80x16xf32>
    %152 = tpu.concatenate %1, %4 in 1 : vector<32x16xf32>, vector<32x16xf32> -> vector<32x32xf32>
    %153 = tpu.iota {dimensions = array<i32: 0>} : vector<18x16xi32>
    %c8_i32_51 = arith.constant 8 : i32
    %154 = vector.broadcast %c8_i32_51 : i32 to vector<18x16xi32>
    %155 = arith.cmpi slt, %153, %154 : vector<18x16xi32>
    %cst_52 = arith.constant dense<0.000000e+00> : vector<18x32xf32>
    %156 = tpu.matmul %148, %152, %cst_52 {dimension_numbers = #tpu.dot_dimension_numbers<[1], [0], [0], [1], [0, 0, 1, 1], [], []>, precision = #tpu.contract_precision<fp32>} : vector<18x32xf32>, vector<32x32xf32>, vector<18x32xf32> -> vector<18x32xf32>
    %157 = vector.extract_strided_slice %156 {offsets = [0, 0], sizes = [18, 16], strides = [1, 1]} : vector<18x32xf32> to vector<18x16xf32>
    %158 = vector.extract_strided_slice %156 {offsets = [0, 16], sizes = [18, 16], strides = [1, 1]} : vector<18x32xf32> to vector<18x16xf32>
    %159 = arith.select %155, %157, %158 : vector<18x16xi1>, vector<18x16xf32>
    %cst_53 = arith.constant dense<0.000000e+00> : vector<80x16xf32>
    %160 = tpu.matmul %143, %2, %cst_53 {dimension_numbers = #tpu.dot_dimension_numbers<[1], [0], [0], [1], [0, 0, 1, 1], [], []>, precision = #tpu.contract_precision<fp32>} : vector<80x16xf32>, vector<16x16xf32>, vector<80x16xf32> -> vector<80x16xf32>
    %cst_54 = arith.constant dense<0.000000e+00> : vector<80x16xf32>
    %161 = tpu.matmul %49, %159, %cst_54 {dimension_numbers = #tpu.dot_dimension_numbers<[1], [0], [0], [1], [0, 0, 1, 1], [], []>, precision = #tpu.contract_precision<fp32>} : vector<80x18xf32>, vector<18x16xf32>, vector<80x16xf32> -> vector<80x16xf32>
    %162 = arith.addf %160, %161 : vector<80x16xf32>
    %163 = arith.addf %162, %151 : vector<80x16xf32>
    %cst_55 = arith.constant 0.000000e+00 : f32
    %164 = vector.broadcast %cst_55 : f32 to vector<80x16xf32>
    %165 = arith.maximumf %163, %164 : vector<80x16xf32>
    %cst_56 = arith.constant dense<0.000000e+00> : vector<80x16xf32>
    %166 = tpu.matmul %165, %6, %cst_56 {dimension_numbers = #tpu.dot_dimension_numbers<[1], [0], [0], [1], [0, 0, 1, 1], [], []>, precision = #tpu.contract_precision<fp32>} : vector<80x16xf32>, vector<16x16xf32>, vector<80x16xf32> -> vector<80x16xf32>
    %167 = vector.broadcast %18 : vector<1x16xf32> to vector<80x16xf32>
    %168 = arith.addf %166, %167 : vector<80x16xf32>
    %cst_57 = arith.constant 0.000000e+00 : f32
    %169 = vector.broadcast %cst_57 : f32 to vector<80x16xf32>
    %170 = arith.maximumf %168, %169 : vector<80x16xf32>
    %cst_58 = arith.constant dense<0.000000e+00> : vector<18x16xf32>
    %171 = tpu.matmul %78, %170, %cst_58 {dimension_numbers = #tpu.dot_dimension_numbers<[1], [0], [0], [1], [0, 0, 1, 1], [], []>, precision = #tpu.contract_precision<fp32>} : vector<18x80xf32>, vector<80x16xf32>, vector<18x16xf32> -> vector<18x16xf32>
    %172 = tpu.concatenate %148, %171 in 1 : vector<18x32xf32>, vector<18x16xf32> -> vector<18x48xf32>
    %cst_59 = arith.constant dense<0.000000e+00> : vector<18x32xf32>
    %173 = tpu.matmul %172, %10, %cst_59 {dimension_numbers = #tpu.dot_dimension_numbers<[1], [0], [0], [1], [0, 0, 1, 1], [], []>, precision = #tpu.contract_precision<fp32>} : vector<18x48xf32>, vector<48x32xf32>, vector<18x32xf32> -> vector<18x32xf32>
    %174 = vector.broadcast %13 : vector<1x32xf32> to vector<18x32xf32>
    %175 = arith.addf %173, %174 : vector<18x32xf32>
    %cst_60 = arith.constant 0.000000e+00 : f32
    %176 = vector.broadcast %cst_60 : f32 to vector<18x32xf32>
    %177 = arith.maximumf %175, %176 : vector<18x32xf32>
    %cst_61 = arith.constant dense<0.000000e+00> : vector<18x32xf32>
    %178 = tpu.matmul %177, %11, %cst_61 {dimension_numbers = #tpu.dot_dimension_numbers<[1], [0], [0], [1], [0, 0, 1, 1], [], []>, precision = #tpu.contract_precision<fp32>} : vector<18x32xf32>, vector<32x32xf32>, vector<18x32xf32> -> vector<18x32xf32>
    %179 = vector.broadcast %14 : vector<1x32xf32> to vector<18x32xf32>
    %180 = arith.addf %178, %179 : vector<18x32xf32>
    %cst_62 = arith.constant 0.000000e+00 : f32
    %181 = vector.broadcast %cst_62 : f32 to vector<18x32xf32>
    %182 = arith.maximumf %180, %181 : vector<18x32xf32>
    %cst_63 = arith.constant dense<0.000000e+00> : vector<18x32xf32>
    %183 = tpu.matmul %182, %152, %cst_63 {dimension_numbers = #tpu.dot_dimension_numbers<[1], [0], [0], [1], [0, 0, 1, 1], [], []>, precision = #tpu.contract_precision<fp32>} : vector<18x32xf32>, vector<32x32xf32>, vector<18x32xf32> -> vector<18x32xf32>
    %184 = vector.extract_strided_slice %183 {offsets = [0, 0], sizes = [18, 16], strides = [1, 1]} : vector<18x32xf32> to vector<18x16xf32>
    %185 = vector.extract_strided_slice %183 {offsets = [0, 16], sizes = [18, 16], strides = [1, 1]} : vector<18x32xf32> to vector<18x16xf32>
    %186 = arith.select %155, %184, %185 : vector<18x16xi1>, vector<18x16xf32>
    %cst_64 = arith.constant dense<0.000000e+00> : vector<80x16xf32>
    %187 = tpu.matmul %170, %2, %cst_64 {dimension_numbers = #tpu.dot_dimension_numbers<[1], [0], [0], [1], [0, 0, 1, 1], [], []>, precision = #tpu.contract_precision<fp32>} : vector<80x16xf32>, vector<16x16xf32>, vector<80x16xf32> -> vector<80x16xf32>
    %cst_65 = arith.constant dense<0.000000e+00> : vector<80x16xf32>
    %188 = tpu.matmul %49, %186, %cst_65 {dimension_numbers = #tpu.dot_dimension_numbers<[1], [0], [0], [1], [0, 0, 1, 1], [], []>, precision = #tpu.contract_precision<fp32>} : vector<80x18xf32>, vector<18x16xf32>, vector<80x16xf32> -> vector<80x16xf32>
    %189 = arith.addf %187, %188 : vector<80x16xf32>
    %190 = arith.addf %189, %151 : vector<80x16xf32>
    %cst_66 = arith.constant 0.000000e+00 : f32
    %191 = vector.broadcast %cst_66 : f32 to vector<80x16xf32>
    %192 = arith.maximumf %190, %191 : vector<80x16xf32>
    %cst_67 = arith.constant dense<0.000000e+00> : vector<80x16xf32>
    %193 = tpu.matmul %192, %6, %cst_67 {dimension_numbers = #tpu.dot_dimension_numbers<[1], [0], [0], [1], [0, 0, 1, 1], [], []>, precision = #tpu.contract_precision<fp32>} : vector<80x16xf32>, vector<16x16xf32>, vector<80x16xf32> -> vector<80x16xf32>
    %194 = vector.broadcast %18 : vector<1x16xf32> to vector<80x16xf32>
    %195 = arith.addf %193, %194 : vector<80x16xf32>
    %cst_68 = arith.constant 0.000000e+00 : f32
    %196 = vector.broadcast %cst_68 : f32 to vector<80x16xf32>
    %197 = arith.maximumf %195, %196 : vector<80x16xf32>
    %cst_69 = arith.constant dense<0.000000e+00> : vector<18x16xf32>
    %198 = tpu.matmul %78, %197, %cst_69 {dimension_numbers = #tpu.dot_dimension_numbers<[1], [0], [0], [1], [0, 0, 1, 1], [], []>, precision = #tpu.contract_precision<fp32>} : vector<18x80xf32>, vector<80x16xf32>, vector<18x16xf32> -> vector<18x16xf32>
    %199 = tpu.concatenate %182, %198 in 1 : vector<18x32xf32>, vector<18x16xf32> -> vector<18x48xf32>
    %cst_70 = arith.constant dense<0.000000e+00> : vector<18x32xf32>
    %200 = tpu.matmul %199, %10, %cst_70 {dimension_numbers = #tpu.dot_dimension_numbers<[1], [0], [0], [1], [0, 0, 1, 1], [], []>, precision = #tpu.contract_precision<fp32>} : vector<18x48xf32>, vector<48x32xf32>, vector<18x32xf32> -> vector<18x32xf32>
    %201 = vector.broadcast %13 : vector<1x32xf32> to vector<18x32xf32>
    %202 = arith.addf %200, %201 : vector<18x32xf32>
    %cst_71 = arith.constant 0.000000e+00 : f32
    %203 = vector.broadcast %cst_71 : f32 to vector<18x32xf32>
    %204 = arith.maximumf %202, %203 : vector<18x32xf32>
    %cst_72 = arith.constant dense<0.000000e+00> : vector<18x32xf32>
    %205 = tpu.matmul %204, %11, %cst_72 {dimension_numbers = #tpu.dot_dimension_numbers<[1], [0], [0], [1], [0, 0, 1, 1], [], []>, precision = #tpu.contract_precision<fp32>} : vector<18x32xf32>, vector<32x32xf32>, vector<18x32xf32> -> vector<18x32xf32>
    %206 = vector.broadcast %14 : vector<1x32xf32> to vector<18x32xf32>
    %207 = arith.addf %205, %206 : vector<18x32xf32>
    %cst_73 = arith.constant 0.000000e+00 : f32
    %208 = vector.broadcast %cst_73 : f32 to vector<18x32xf32>
    %209 = arith.maximumf %207, %208 : vector<18x32xf32>
    %cst_74 = arith.constant dense<0.000000e+00> : vector<18x32xf32>
    %210 = tpu.matmul %209, %152, %cst_74 {dimension_numbers = #tpu.dot_dimension_numbers<[1], [0], [0], [1], [0, 0, 1, 1], [], []>, precision = #tpu.contract_precision<fp32>} : vector<18x32xf32>, vector<32x32xf32>, vector<18x32xf32> -> vector<18x32xf32>
    %211 = vector.extract_strided_slice %210 {offsets = [0, 0], sizes = [18, 16], strides = [1, 1]} : vector<18x32xf32> to vector<18x16xf32>
    %212 = vector.extract_strided_slice %210 {offsets = [0, 16], sizes = [18, 16], strides = [1, 1]} : vector<18x32xf32> to vector<18x16xf32>
    %213 = arith.select %155, %211, %212 : vector<18x16xi1>, vector<18x16xf32>
    %cst_75 = arith.constant dense<0.000000e+00> : vector<80x16xf32>
    %214 = tpu.matmul %197, %2, %cst_75 {dimension_numbers = #tpu.dot_dimension_numbers<[1], [0], [0], [1], [0, 0, 1, 1], [], []>, precision = #tpu.contract_precision<fp32>} : vector<80x16xf32>, vector<16x16xf32>, vector<80x16xf32> -> vector<80x16xf32>
    %cst_76 = arith.constant dense<0.000000e+00> : vector<80x16xf32>
    %215 = tpu.matmul %49, %213, %cst_76 {dimension_numbers = #tpu.dot_dimension_numbers<[1], [0], [0], [1], [0, 0, 1, 1], [], []>, precision = #tpu.contract_precision<fp32>} : vector<80x18xf32>, vector<18x16xf32>, vector<80x16xf32> -> vector<80x16xf32>
    %216 = arith.addf %214, %215 : vector<80x16xf32>
    %217 = arith.addf %216, %151 : vector<80x16xf32>
    %cst_77 = arith.constant 0.000000e+00 : f32
    %218 = vector.broadcast %cst_77 : f32 to vector<80x16xf32>
    %219 = arith.maximumf %217, %218 : vector<80x16xf32>
    %cst_78 = arith.constant dense<0.000000e+00> : vector<80x16xf32>
    %220 = tpu.matmul %219, %6, %cst_78 {dimension_numbers = #tpu.dot_dimension_numbers<[1], [0], [0], [1], [0, 0, 1, 1], [], []>, precision = #tpu.contract_precision<fp32>} : vector<80x16xf32>, vector<16x16xf32>, vector<80x16xf32> -> vector<80x16xf32>
    %221 = vector.broadcast %18 : vector<1x16xf32> to vector<80x16xf32>
    %222 = arith.addf %220, %221 : vector<80x16xf32>
    %cst_79 = arith.constant 0.000000e+00 : f32
    %223 = vector.broadcast %cst_79 : f32 to vector<80x16xf32>
    %224 = arith.maximumf %222, %223 : vector<80x16xf32>
    %225 = tpu.concatenate %170, %197, %224 in 0 : vector<80x16xf32>, vector<80x16xf32>, vector<80x16xf32> -> vector<240x16xf32>
    %cst_80 = arith.constant dense<0.000000e+00> : vector<240x16xf32>
    %226 = tpu.matmul %225, %7, %cst_80 {dimension_numbers = #tpu.dot_dimension_numbers<[1], [0], [0], [1], [0, 0, 1, 1], [], []>, precision = #tpu.contract_precision<fp32>} : vector<240x16xf32>, vector<16x16xf32>, vector<240x16xf32> -> vector<240x16xf32>
    %227 = vector.broadcast %19 : vector<1x16xf32> to vector<240x16xf32>
    %228 = arith.addf %226, %227 : vector<240x16xf32>
    %cst_81 = arith.constant 0.000000e+00 : f32
    %229 = vector.broadcast %cst_81 : f32 to vector<240x16xf32>
    %230 = arith.maximumf %228, %229 : vector<240x16xf32>
    %cst_82 = arith.constant dense<0.000000e+00> : vector<240x1xf32>
    %231 = tpu.matmul %230, %8, %cst_82 {dimension_numbers = #tpu.dot_dimension_numbers<[1], [0], [0], [1], [0, 0, 1, 1], [], []>, precision = #tpu.contract_precision<fp32>} : vector<240x16xf32>, vector<16x1xf32>, vector<240x1xf32> -> vector<240x1xf32>
    %232 = vector.broadcast %20 : vector<1x1xf32> to vector<240x1xf32>
    %233 = arith.addf %231, %232 : vector<240x1xf32>
    %c0_83 = arith.constant 0 : index
    %c0_84 = arith.constant 0 : index
    %234 = vector.load %arg3[%c0_83, %c0_84] : memref<240x1xf32, #tpu.memory_space<vmem>>, vector<240x1xf32>
    tpu.vector_store %arg3[%c0_83, %c0_84], %233 {strides = array<i32>} : memref<240x1xf32, #tpu.memory_space<vmem>>, vector<240x1xf32>,
    return
  }
}

</mosaic_0001>

<llo_original>
// kernel: similarity_net_forward.1
$region0: #{similarity_net_forward.1}
  #allocation0 [shape = 'u32[]', space=smem, size = 0x4, offset = 0x4, fixed_abs, tag = 'smem constant byte address 0x4 - core index']
  #allocation1 [shape = 'u32[72,128]{1,0:T(1,128)}', space=vmem, size = 0x9000, scoped, tag = 'internal scratch']
  %s0 = inlined_call_operand.vmem [shape: f32[18,69], index: 0, kind: input, shape index: {}]
  %s1 = inlined_call_operand.vmem [shape: f32[168,16], index: 1, kind: input, shape index: {}]
  %s2 = inlined_call_operand.vmem [shape: f32[153,32], index: 2, kind: input, shape index: {}]
  %s3 = inlined_call_operand.vmem [shape: f32[240,1], index: 3, kind: output, shape index: {}]
  %s4 = sld [smem:[#allocation0]]
  $region22: #{similarity_net_forward.1} parent=0
    _
  %s6 = ssub.s32 1, %s4
  %s7 = scalar_select 0, %s6, %s4
  // Predicated region
  $region2: #{similarity_net_forward.1} parent=0 // pred_check
    _
  $region3: #{similarity_net_forward.1} parent=0 // pred_check_branch
    %9 = sbr.rel (0) target = $region5
  $region4: #{similarity_net_forward.1} parent=0 // pred_region
    _
  $region5: #{similarity_net_forward.1} parent=0 // pred_fallthru
    _
  // Predicated region
  $region6: #{similarity_net_forward.1} parent=0 // pred_check
    _
  $region7: #{similarity_net_forward.1} parent=0 // pred_check_branch
    %11 = sbr.rel (0) target = $region9
  $region8: #{similarity_net_forward.1} parent=0 // pred_region
    _
  $region9: #{similarity_net_forward.1} parent=0 // pred_fallthru
    _
  // Predicated region
  $region10: #{similarity_net_forward.1} parent=0 // pred_check
    _
  $region11: #{similarity_net_forward.1} parent=0 // pred_check_branch
    %13 = sbr.rel (0) target = $region13
  $region12: #{similarity_net_forward.1} parent=0 // pred_region
    _
  $region13: #{similarity_net_forward.1} parent=0 // pred_fallthru
    _
  %v14 = vld [vmem:[%s1] sm:$0x3f]
  %v15 = vld [vmem:[%s1 + $0x8] sm:$0xff]
  %v16 = vld [vmem:[%s1 + $0x10] sm:$0xff]
  %v17 = vld [vmem:[%s1 + $0x18] sm:$0xff]
  %v18 = vld [vmem:[%s1 + $0x20] sm:$0xff]
  %v19 = vld [vmem:[%s1 + $0x28] sm:$0xff]
  %v20 = vld [vmem:[%s1 + $0x30] sm:$0xff]
  %v21 = vld [vmem:[%s1 + $0x38] sm:$0xff]
  %v22 = vld [vmem:[%s1 + $0x40] sm:$0xff]
  %v23 = vld [vmem:[%s1 + $0x48] sm:$0xff]
  %v24 = vld [vmem:[%s1 + $0x50] sm:$0xff]
  %v25 = vld [vmem:[%s1 + $0x58] sm:$0xff]
  %v26 = vld [vmem:[%s1 + $0x60] sm:$0xff]
  %v27 = vld [vmem:[%s1 + $0x68] sm:$0xff]
  %v28 = vld [vmem:[%s1 + $0x70] sm:$0xff]
  %v29 = vld [vmem:[%s1 + $0x78] sm:$0xff]
  %v30 = vld [vmem:[%s1 + $0x80] sm:$0xff]
  %v31 = vld [vmem:[%s1 + $0x88] sm:$0xff]
  %v32 = vld [vmem:[%s1 + $0x90] sm:$0xff]
  %v33 = vld [vmem:[%s1 + $0x98] sm:$0xff]
  %v34 = vld [vmem:[%s1 + $0xa0] sm:$0xff]
  %v35 = vld [vmem:[%s2] sm:$0xff]
  %v36 = vld [vmem:[%s2 + $0x8] sm:$0xff]
  %v37 = vld [vmem:[%s2 + $0x10] sm:$0xff]
  %v38 = vld [vmem:[%s2 + $0x18] sm:$0xff]
  %v39 = vld [vmem:[%s2 + $0x20] sm:$0xff]
  %v40 = vld [vmem:[%s2 + $0x28] sm:$0xff]
  %v41 = vld [vmem:[%s2 + $0x30] sm:$0xff]
  %v42 = vld [vmem:[%s2 + $0x38] sm:$0xff]
  %v43 = vld [vmem:[%s2 + $0x40] sm:$0xff]
  %v44 = vld [vmem:[%s2 + $0x48] sm:$0xff]
  %v45 = vld [vmem:[%s2 + $0x50] sm:$0xff]
  %v46 = vld [vmem:[%s2 + $0x58] sm:$0xff]
  %v47 = vld [vmem:[%s2 + $0x60] sm:$0xff]
  %v48 = vld [vmem:[%s2 + $0x68] sm:$0xff]
  %v49 = vld [vmem:[%s2 + $0x70] sm:$0xff]
  %v50 = vld [vmem:[%s2 + $0x78] sm:$0xff]
  %v51 = vld [vmem:[%s2 + $0x80] sm:$0xff]
  %v52 = vld [vmem:[%s2 + $0x88] sm:$0xff]
  %v53 = vld [vmem:[%s2 + $0x90] sm:$0x1]
  %v54 = vld [vmem:[%s2 + $0x91] sm:$0x1]
  %v55 = vld [vmem:[%s2 + $0x92] sm:$0x1]
  %v56 = vld [vmem:[%s2 + $0x93] sm:$0x1]
  %v57 = vld [vmem:[%s2 + $0x94] sm:$0x1]
  %v58 = vld [vmem:[%s2 + $0x95] sm:$0x1]
  %v59 = vld [vmem:[%s2 + $0x96] sm:$0x1]
  %v60 = vld [vmem:[%s2 + $0x97] sm:$0x1]
  %v61 = vld [vmem:[%s2 + $0x98] sm:$0x1]
  %v62 = vlaneseq
  %v63 = vshrl.u32 %v62, 7
  %v64 = vadd.s32 %v63, 8
  %v65 = vadd.s32 %v63, 16
  %v66 = vadd.s32 %v63, 24
  %v67 = vadd.s32 %v63, 32
  %v68 = vadd.s32 %v63, 40
  %v69 = vadd.s32 %v63, 48
  %v70 = vadd.s32 %v63, 56
  %v71 = vadd.s32 %v63, 64
  %v72 = vadd.s32 %v63, 72
  %v73 = vlaneseq
  %v74 = vand.u32 %v73, 127
  %v75 = vmul.u32 %v74, 10
  %vm76 = vcmp.ge.s32.totalorder %v63, %v75
  %vm77 = vcmp.ge.s32.totalorder %v64, %v75
  %vm78 = vcmp.ge.s32.totalorder %v65, %v75
  %vm79 = vcmp.ge.s32.totalorder %v66, %v75
  %vm80 = vcmp.ge.s32.totalorder %v67, %v75
  %vm81 = vcmp.ge.s32.totalorder %v68, %v75
  %vm82 = vcmp.ge.s32.totalorder %v69, %v75
  %vm83 = vcmp.ge.s32.totalorder %v70, %v75
  %vm84 = vcmp.ge.s32.totalorder %v71, %v75
  %vm85 = vcmp.ge.s32.totalorder %v72, %v75
  %v86 = vadd.s32 %v74, 1
  %v87 = vmul.u32 %v86, 10
  %vm88 = vcmp.lt.s32.totalorder %v63, %v87
  %vm89 = vcmp.lt.s32.totalorder %v64, %v87
  %vm90 = vcmp.lt.s32.totalorder %v65, %v87
  %vm91 = vcmp.lt.s32.totalorder %v66, %v87
  %vm92 = vcmp.lt.s32.totalorder %v67, %v87
  %vm93 = vcmp.lt.s32.totalorder %v68, %v87
  %vm94 = vcmp.lt.s32.totalorder %v69, %v87
  %vm95 = vcmp.lt.s32.totalorder %v70, %v87
  %vm96 = vcmp.lt.s32.totalorder %v71, %v87
  %vm97 = vcmp.lt.s32.totalorder %v72, %v87
  %vm98 = vmand %vm76, %vm88
  %vm99 = vmand %vm77, %vm89
  %vm100 = vmand %vm78, %vm90
  %vm101 = vmand %vm79, %vm91
  %vm102 = vmand %vm80, %vm92
  %vm103 = vmand %vm81, %vm93
  %vm104 = vmand %vm82, %vm94
  %vm105 = vmand %vm83, %vm95
  %vm106 = vmand %vm84, %vm96
  %vm107 = vmand %vm85, %vm97
  %v108 = vsel %vm98, 1, 0
  %v109 = vsel %vm99, 1, 0
  %v110 = vsel %vm100, 1, 0
  %v111 = vsel %vm101, 1, 0
  %v112 = vsel %vm102, 1, 0
  %v113 = vsel %vm103, 1, 0
  %v114 = vsel %vm104, 1, 0
  %v115 = vsel %vm105, 1, 0
  %v116 = vsel %vm106, 1, 0
  %v117 = vsel %vm107, 1, 0
  %v118 = vcvt.s32.f32 %v108
  %v119 = vcvt.s32.f32 %v109
  %v120 = vcvt.s32.f32 %v110
  %v121 = vcvt.s32.f32 %v111
  %v122 = vcvt.s32.f32 %v112
  %v123 = vcvt.s32.f32 %v113
  %v124 = vcvt.s32.f32 %v114
  %v125 = vcvt.s32.f32 %v115
  %v126 = vcvt.s32.f32 %v116
  %v127 = vcvt.s32.f32 %v117
  %v128 = vcvt.s32.f32 %v74
  %v129 = vmul.f32 %v118, %v128
  %v130 = vmul.f32 %v119, %v128
  %v131 = vmul.f32 %v120, %v128
  %v132 = vmul.f32 %v121, %v128
  %v133 = vmul.f32 %v122, %v128
  %v134 = vmul.f32 %v123, %v128
  %v135 = vmul.f32 %v124, %v128
  %v136 = vmul.f32 %v125, %v128
  %v137 = vmul.f32 %v126, %v128
  %v138 = vmul.f32 %v127, %v128
  %vm139 = vcmask 64512
  %v140 = vsel %vm139, %v129, 0.0
  %141 = vadd.xlane.f32.xlu0 %v140
  %v142 = vpop.xlane.xlu0 %141
  %v143 = vsel %vm139, %v130, 0.0
  %144 = vadd.xlane.f32.xlu0 %v143
  %v145 = vpop.xlane.xlu0 %144
  %v146 = vsel %vm139, %v131, 0.0
  %147 = vadd.xlane.f32.xlu0 %v146
  %v148 = vpop.xlane.xlu0 %147
  %v149 = vsel %vm139, %v132, 0.0
  %150 = vadd.xlane.f32.xlu0 %v149
  %v151 = vpop.xlane.xlu0 %150
  %v152 = vsel %vm139, %v133, 0.0
  %153 = vadd.xlane.f32.xlu0 %v152
  %v154 = vpop.xlane.xlu0 %153
  %v155 = vsel %vm139, %v134, 0.0
  %156 = vadd.xlane.f32.xlu0 %v155
  %v157 = vpop.xlane.xlu0 %156
  %v158 = vsel %vm139, %v135, 0.0
  %159 = vadd.xlane.f32.xlu0 %v158
  %v160 = vpop.xlane.xlu0 %159
  %v161 = vsel %vm139, %v136, 0.0
  %162 = vadd.xlane.f32.xlu0 %v161
  %v163 = vpop.xlane.xlu0 %162
  %v164 = vsel %vm139, %v137, 0.0
  %165 = vadd.xlane.f32.xlu0 %v164
  %v166 = vpop.xlane.xlu0 %165
  %v167 = vsel %vm139, %v138, 0.0
  %168 = vadd.xlane.f32.xlu0 %v167
  %v169 = vpop.xlane.xlu0 %168
  %v170 = vcvt.s32.f32 %v63
  %v171 = vcvt.s32.f32 %v64
  %v172 = vcvt.s32.f32 %v65
  %v173 = vcvt.s32.f32 %v66
  %v174 = vcvt.s32.f32 %v67
  %v175 = vcvt.s32.f32 %v68
  %v176 = vcvt.s32.f32 %v69
  %v177 = vcvt.s32.f32 %v70
  %v178 = vcvt.s32.f32 %v71
  %v179 = vcvt.s32.f32 %v72
  %v180 = vmul.f32 %v142, 10.0
  %v181 = vmul.f32 %v145, 10.0
  %v182 = vmul.f32 %v148, 10.0
  %v183 = vmul.f32 %v151, 10.0
  %v184 = vmul.f32 %v154, 10.0
  %v185 = vmul.f32 %v157, 10.0
  %v186 = vmul.f32 %v160, 10.0
  %v187 = vmul.f32 %v163, 10.0
  %v188 = vmul.f32 %v166, 10.0
  %v189 = vmul.f32 %v169, 10.0
  %v190 = vsub.f32 %v170, %v180
  %v191 = vsub.f32 %v171, %v181
  %v192 = vsub.f32 %v172, %v182
  %v193 = vsub.f32 %v173, %v183
  %v194 = vsub.f32 %v174, %v184
  %v195 = vsub.f32 %v175, %v185
  %v196 = vsub.f32 %v176, %v186
  %v197 = vsub.f32 %v177, %v187
  %v198 = vsub.f32 %v178, %v188
  %v199 = vsub.f32 %v179, %v189
  %vm200 = vcmp.eq.f32.partialorder %v190, %v128
  %vm201 = vcmp.eq.f32.partialorder %v191, %v128
  %vm202 = vcmp.eq.f32.partialorder %v192, %v128
  %vm203 = vcmp.eq.f32.partialorder %v193, %v128
  %vm204 = vcmp.eq.f32.partialorder %v194, %v128
  %vm205 = vcmp.eq.f32.partialorder %v195, %v128
  %vm206 = vcmp.eq.f32.partialorder %v196, %v128
  %vm207 = vcmp.eq.f32.partialorder %v197, %v128
  %vm208 = vcmp.eq.f32.partialorder %v198, %v128
  %vm209 = vcmp.eq.f32.partialorder %v199, %v128
  %v210 = vsel %vm200, 1, 0
  %v211 = vsel %vm201, 1, 0
  %v212 = vsel %vm202, 1, 0
  %v213 = vsel %vm203, 1, 0
  %v214 = vsel %vm204, 1, 0
  %v215 = vsel %vm205, 1, 0
  %v216 = vsel %vm206, 1, 0
  %v217 = vsel %vm207, 1, 0
  %v218 = vsel %vm208, 1, 0
  %v219 = vsel %vm209, 1, 0
  %v220 = vcvt.s32.f32 %v210
  %v221 = vcvt.s32.f32 %v211
  %v222 = vcvt.s32.f32 %v212
  %v223 = vcvt.s32.f32 %v213
  %v224 = vcvt.s32.f32 %v214
  %v225 = vcvt.s32.f32 %v215
  %v226 = vcvt.s32.f32 %v216
  %v227 = vcvt.s32.f32 %v217
  %v228 = vcvt.s32.f32 %v218
  %v229 = vcvt.s32.f32 %v219
  %240 = vrot.lane.b32.xlu0 %v220, 8
  %v241 = vpop.permute.xlu0 %240
  %242 = vrot.lane.b32.xlu0 %v221, 8
  %v243 = vpop.permute.xlu0 %242
  %244 = vrot.lane.b32.xlu0 %v222, 8
  %v245 = vpop.permute.xlu0 %244
  %246 = vrot.lane.b32.xlu0 %v223, 8
  %v247 = vpop.permute.xlu0 %246
  %248 = vrot.lane.b32.xlu0 %v224, 8
  %v249 = vpop.permute.xlu0 %248
  %250 = vrot.lane.b32.xlu0 %v225, 8
  %v251 = vpop.permute.xlu0 %250
  %252 = vrot.lane.b32.xlu0 %v226, 8
  %v253 = vpop.permute.xlu0 %252
  %254 = vrot.lane.b32.xlu0 %v227, 8
  %v255 = vpop.permute.xlu0 %254
  %256 = vrot.lane.b32.xlu0 %v228, 8
  %v257 = vpop.permute.xlu0 %256
  %258 = vrot.lane.b32.xlu0 %v229, 8
  %v259 = vpop.permute.xlu0 %258
  %v270 = vsel %vm139, %v118, %v241
  %v271 = vsel %vm139, %v119, %v243
  %v272 = vsel %vm139, %v120, %v245
  %v273 = vsel %vm139, %v121, %v247
  %v274 = vsel %vm139, %v122, %v249
  %v275 = vsel %vm139, %v123, %v251
  %v276 = vsel %vm139, %v124, %v253
  %v277 = vsel %vm139, %v125, %v255
  %v278 = vsel %vm139, %v126, %v257
  %v279 = vsel %vm139, %v127, %v259
  %v280 = vmul.u32 %v63, 10
  %vm281 = vcmp.ge.s32.totalorder %v74, %v280
  %v282 = vadd.s32 %v63, 1
  %v283 = vmul.u32 %v282, 10
  %vm284 = vcmp.lt.s32.totalorder %v74, %v283
  %vm285 = vmand %vm281, %vm284
  %v286 = vsel %vm285, 1, 0
  %v287 = vcvt.s32.f32 %v286
  %v288 = vmul.f32 %v287, %v170
  %vm289 = vcmask 654336
  %v290 = vsel %vm289, %v288, 0.0
  %v291 = vrot.slane %v290, 4
  %v292 = vadd.f32 %v290, %v291
  %v293 = vrot.slane %v292, 2
  %v294 = vadd.f32 %v292, %v293
  %v295 = vrot.slane %v294, 1
  %v296 = vadd.f32 %v294, %v295
  %v297 = vmul.f32 %v296, 10.0
  %v298 = vsub.f32 %v128, %v297
  %vm299 = vcmp.eq.f32.partialorder %v298, %v170
  %vm300 = vcmp.eq.f32.partialorder %v298, %v171
  %v301 = vsel %vm299, 1, 0
  %v302 = vsel %vm300, 1, 0
  %v303 = vcvt.s32.f32 %v301
  %v304 = vcvt.s32.f32 %v302
  %v305 = vld [vmem:[%s0] sm:$0xff]
  %v306 = vld [vmem:[%s0 + $0x8] sm:$0xff]
  %v307 = vld [vmem:[%s0 + $0x10] sm:$0x3]
  %v308 = vmul.f32 %v305, %v305
  %v309 = vmul.f32 %v306, %v306
  %v310 = vmul.f32 %v307, %v307
  %vm311 = vcmask 523264
  %v312 = vsel %vm311, %v308, 0.0
  %313 = vadd.xlane.f32.xlu0 %v312
  %v314 = vpop.xlane.xlu0 %313
  %v315 = vsel %vm311, %v309, 0.0
  %316 = vadd.xlane.f32.xlu0 %v315
  %v317 = vpop.xlane.xlu0 %316
  %vm318 = vcmask 517120
  %v319 = vsel %vm318, %v310, 0.0
  %320 = vadd.xlane.f32.xlu0 %v319
  %v321 = vpop.xlane.xlu0 %320
  %v322 = vmax.f32 %v314, 1e-24
  %v323 = vmax.f32 %v317, 1e-24
  %v324 = vmax.f32 %v321, 1e-24
  %v325 = vrsqrt.pop %v322
  %v326 = vmul.f32 %v325, %v322
  %v327 = vmul.f32 %v326, %v325
  %v328 = vmul.f32 0.5, %v327
  %v329 = vsub.f32 1.5, %v328
  %v330 = vmul.f32 %v325, %v329
  %vm331 = vweird.f32 %v322
  %vm332 = vweird.f32 %v325
  %vm333 = vmor %vm331, %vm332
  %v334 = vsel %vm333, %v325, %v330
  %v335 = vrsqrt.pop %v323
  %v336 = vmul.f32 %v335, %v323
  %v337 = vmul.f32 %v336, %v335
  %v338 = vmul.f32 0.5, %v337
  %v339 = vsub.f32 1.5, %v338
  %v340 = vmul.f32 %v335, %v339
  %vm341 = vweird.f32 %v323
  %vm342 = vweird.f32 %v335
  %vm343 = vmor %vm341, %vm342
  %v344 = vsel %vm343, %v335, %v340
  %v345 = vrsqrt.pop %v324
  %v346 = vmul.f32 %v345, %v324
  %v347 = vmul.f32 %v346, %v345
  %v348 = vmul.f32 0.5, %v347
  %v349 = vsub.f32 1.5, %v348
  %v350 = vmul.f32 %v345, %v349
  %vm351 = vweird.f32 %v324
  %vm352 = vweird.f32 %v345
  %vm353 = vmor %vm351, %vm352
  %v354 = vsel %vm353, %v345, %v350
  %v355 = vmul.f32 %v305, %v334
  %v356 = vmul.f32 %v306, %v344
  %v357 = vmul.f32 %v307, %v354
  %v359 = vsel %vm311, %v355, 0
  %v362 = vsel %vm311, %v356, 0
  %v365 = vsel %vm311, %v357, 0
  %367 = vmatpush.xpose.msra.mxu0 0.0
  %368 = vmatpush.xpose.msra.mxu0 0.0
  %369 = vmatpush.xpose.msra.mxu0 0.0
  %370 = vmatpush.xpose.msra.mxu0 0.0
  %371 = vmatpush.xpose.msra.mxu0 0.0
  %372 = vmatpush.xpose.msra.mxu0 0.0
  %373 = vmatpush.xpose.msra.mxu0 0.0
  %374 = vmatpush.xpose.msra.mxu0 0.0
  %375 = vmatpush.xpose.msra.mxu0 0.0
  %376 = vmatpush.xpose.msra.mxu0 0.0
  %377 = vmatpush.xpose.msra.mxu0 0.0
  %378 = vmatpush.xpose.msra.mxu0 0.0
  %379 = vmatpush.xpose.msra.mxu0 0.0
  %380 = vmatpush.xpose.msra.mxu0 0.0
  %v381 = vand.u32 %v365, 4294901760
  %382 = vmatpush.xpose.msra.mxu0 %v381
  %v383 = vand.u32 %v362, 4294901760
  %384 = vmatpush.xpose.msra.mxu0 %v383
  %v385 = vand.u32 %v359, 4294901760
  %v386 = vsub.f32 %v359, %v385
  %v387 = vand.u32 %v386, 4294901760
  %v388 = vsub.f32 %v386, %v387
  %v389 = vand.u32 %v388, 4294901760
  %390 = vmatmul.f32.gmra.mxu0 %v389
  %v391 = vpop.f32.mrf.mxu0
  %v392 = vadd.f32 0.0, %v391
  %393 = vdwg.mxu0
  %394 = vmatpush.xpose.msra.mxu0 0.0
  %395 = vmatpush.xpose.msra.mxu0 0.0
  %396 = vmatpush.xpose.msra.mxu0 0.0
  %397 = vmatpush.xpose.msra.mxu0 0.0
  %398 = vmatpush.xpose.msra.mxu0 0.0
  %399 = vmatpush.xpose.msra.mxu0 0.0
  %400 = vmatpush.xpose.msra.mxu0 0.0
  %401 = vmatpush.xpose.msra.mxu0 0.0
  %402 = vmatpush.xpose.msra.mxu0 0.0
  %403 = vmatpush.xpose.msra.mxu0 0.0
  %404 = vmatpush.xpose.msra.mxu0 0.0
  %405 = vmatpush.xpose.msra.mxu0 0.0
  %406 = vmatpush.xpose.msra.mxu0 0.0
  %407 = vmatpush.xpose.msra.mxu0 0.0
  %v408 = vand.u32 %v365, 4294901760
  %v409 = vsub.f32 %v365, %v408
  %v410 = vand.u32 %v409, 4294901760
  %v411 = vsub.f32 %v409, %v410
  %v412 = vand.u32 %v411, 4294901760
  %413 = vmatpush.xpose.msra.mxu0 %v412
  %v414 = vand.u32 %v362, 4294901760
  %v415 = vsub.f32 %v362, %v414
  %v416 = vand.u32 %v415, 4294901760
  %v417 = vsub.f32 %v415, %v416
  %v418 = vand.u32 %v417, 4294901760
  %419 = vmatpush.xpose.msra.mxu0 %v418
  %v420 = vand.u32 %v359, 4294901760
  %421 = vmatmul.f32.gmra.mxu0 %v420
  %v422 = vpop.f32.mrf.mxu0
  %v423 = vadd.f32 %v392, %v422
  %424 = vdwg.mxu0
  %425 = vmatpush.xpose.msra.mxu0 0.0
  %426 = vmatpush.xpose.msra.mxu0 0.0
  %427 = vmatpush.xpose.msra.mxu0 0.0
  %428 = vmatpush.xpose.msra.mxu0 0.0
  %429 = vmatpush.xpose.msra.mxu0 0.0
  %430 = vmatpush.xpose.msra.mxu0 0.0
  %431 = vmatpush.xpose.msra.mxu0 0.0
  %432 = vmatpush.xpose.msra.mxu0 0.0
  %433 = vmatpush.xpose.msra.mxu0 0.0
  %434 = vmatpush.xpose.msra.mxu0 0.0
  %435 = vmatpush.xpose.msra.mxu0 0.0
  %436 = vmatpush.xpose.msra.mxu0 0.0
  %437 = vmatpush.xpose.msra.mxu0 0.0
  %438 = vmatpush.xpose.msra.mxu0 0.0
  %v439 = vand.u32 %v365, 4294901760
  %v440 = vsub.f32 %v365, %v439
  %441 = vmatpush.xpose.msra.mxu0 %v440
  %v442 = vand.u32 %v362, 4294901760
  %v443 = vsub.f32 %v362, %v442
  %444 = vmatpush.xpose.msra.mxu0 %v443
  %v445 = vand.u32 %v359, 4294901760
  %v446 = vsub.f32 %v359, %v445
  %447 = vmatmul.f32.gmra.mxu0 %v446
  %v448 = vpop.f32.mrf.mxu0
  %v449 = vadd.f32 %v423, %v448
  %450 = vdwg.mxu0
  %451 = vmatpush.xpose.msra.mxu0 0.0
  %452 = vmatpush.xpose.msra.mxu0 0.0
  %453 = vmatpush.xpose.msra.mxu0 0.0
  %454 = vmatpush.xpose.msra.mxu0 0.0
  %455 = vmatpush.xpose.msra.mxu0 0.0
  %456 = vmatpush.xpose.msra.mxu0 0.0
  %457 = vmatpush.xpose.msra.mxu0 0.0
  %458 = vmatpush.xpose.msra.mxu0 0.0
  %459 = vmatpush.xpose.msra.mxu0 0.0
  %460 = vmatpush.xpose.msra.mxu0 0.0
  %461 = vmatpush.xpose.msra.mxu0 0.0
  %462 = vmatpush.xpose.msra.mxu0 0.0
  %463 = vmatpush.xpose.msra.mxu0 0.0
  %464 = vmatpush.xpose.msra.mxu0 0.0
  %v465 = vand.u32 %v365, 4294901760
  %466 = vmatpush.xpose.msra.mxu0 %v465
  %v467 = vand.u32 %v362, 4294901760
  %468 = vmatpush.xpose.msra.mxu0 %v467
  %v469 = vand.u32 %v359, 4294901760
  %v470 = vsub.f32 %v359, %v469
  %v471 = vand.u32 %v470, 4294901760
  %472 = vmatmul.f32.gmra.mxu0 %v471
  %v473 = vpop.f32.mrf.mxu0
  %v474 = vadd.f32 %v449, %v473
  %475 = vdwg.mxu0
  %476 = vmatpush.xpose.msra.mxu0 0.0
  %477 = vmatpush.xpose.msra.mxu0 0.0
  %478 = vmatpush.xpose.msra.mxu0 0.0
  %479 = vmatpush.xpose.msra.mxu0 0.0
  %480 = vmatpush.xpose.msra.mxu0 0.0
  %481 = vmatpush.xpose.msra.mxu0 0.0
  %482 = vmatpush.xpose.msra.mxu0 0.0
  %483 = vmatpush.xpose.msra.mxu0 0.0
  %484 = vmatpush.xpose.msra.mxu0 0.0
  %485 = vmatpush.xpose.msra.mxu0 0.0
  %486 = vmatpush.xpose.msra.mxu0 0.0
  %487 = vmatpush.xpose.msra.mxu0 0.0
  %488 = vmatpush.xpose.msra.mxu0 0.0
  %489 = vmatpush.xpose.msra.mxu0 0.0
  %v490 = vand.u32 %v365, 4294901760
  %v491 = vsub.f32 %v365, %v490
  %v492 = vand.u32 %v491, 4294901760
  %493 = vmatpush.xpose.msra.mxu0 %v492
  %v494 = vand.u32 %v362, 4294901760
  %v495 = vsub.f32 %v362, %v494
  %v496 = vand.u32 %v495, 4294901760
  %497 = vmatpush.xpose.msra.mxu0 %v496
  %v498 = vand.u32 %v359, 4294901760
  %499 = vmatmul.f32.gmra.mxu0 %v498
  %v500 = vpop.f32.mrf.mxu0
  %v501 = vadd.f32 %v474, %v500
  %502 = vdwg.mxu0
  %503 = vmatpush.xpose.msra.mxu0 0.0
  %504 = vmatpush.xpose.msra.mxu0 0.0
  %505 = vmatpush.xpose.msra.mxu0 0.0
  %506 = vmatpush.xpose.msra.mxu0 0.0
  %507 = vmatpush.xpose.msra.mxu0 0.0
  %508 = vmatpush.xpose.msra.mxu0 0.0
  %509 = vmatpush.xpose.msra.mxu0 0.0
  %510 = vmatpush.xpose.msra.mxu0 0.0
  %511 = vmatpush.xpose.msra.mxu0 0.0
  %512 = vmatpush.xpose.msra.mxu0 0.0
  %513 = vmatpush.xpose.msra.mxu0 0.0
  %514 = vmatpush.xpose.msra.mxu0 0.0
  %515 = vmatpush.xpose.msra.mxu0 0.0
  %516 = vmatpush.xpose.msra.mxu0 0.0
  %v517 = vand.u32 %v365, 4294901760
  %518 = vmatpush.xpose.msra.mxu0 %v517
  %v519 = vand.u32 %v362, 4294901760
  %520 = vmatpush.xpose.msra.mxu0 %v519
  %v521 = vand.u32 %v359, 4294901760
  %522 = vmatmul.f32.gmra.mxu0 %v521
  %v523 = vpop.f32.mrf.mxu0
  %v524 = vadd.f32 %v501, %v523
  %525 = vdwg.mxu0
  %v527 = vsel %vm139, %v118, 0
  %v530 = vsel %vm139, %v119, 0
  %v533 = vsel %vm139, %v120, 0
  %v536 = vsel %vm139, %v121, 0
  %v539 = vsel %vm139, %v122, 0
  %v542 = vsel %vm139, %v123, 0
  %v545 = vsel %vm139, %v124, 0
  %v548 = vsel %vm139, %v125, 0
  %v551 = vsel %vm139, %v126, 0
  %v554 = vsel %vm139, %v127, 0
  %556 = vmatpush.msra.mxu0 0.0
  %557 = vmatpush.msra.mxu0 0.0
  %558 = vmatpush.msra.mxu0 0.0
  %559 = vmatpush.msra.mxu0 0.0
  %560 = vmatpush.msra.mxu0 0.0
  %561 = vmatpush.msra.mxu0 0.0
  %562 = vmatpush.msra.mxu0 0.0
  %563 = vmatpush.msra.mxu0 0.0
  %564 = vmatpush.msra.mxu0 0.0
  %565 = vmatpush.msra.mxu0 0.0
  %566 = vmatpush.msra.mxu0 0.0
  %567 = vmatpush.msra.mxu0 0.0
  %568 = vmatpush.msra.mxu0 0.0
  %569 = vmatpush.msra.mxu0 0.0
  %570 = vmatpush.msra.mxu0 0.0
  %v571 = vand.u32 %v524, 4294901760
  %572 = vmatpush.msra.mxu0 %v571
  %v573 = vand.u32 %v527, 4294901760
  %v574 = vsub.f32 %v527, %v573
  %v575 = vand.u32 %v574, 4294901760
  %v576 = vsub.f32 %v574, %v575
  %v577 = vand.u32 %v576, 4294901760
  %578 = vmatmul.f32.gmra.mxu0 %v577
  %v579 = vpop.f32.mrf.mxu0
  %v580 = vadd.f32 0.0, %v579
  %v581 = vand.u32 %v530, 4294901760
  %v582 = vsub.f32 %v530, %v581
  %v583 = vand.u32 %v582, 4294901760
  %v584 = vsub.f32 %v582, %v583
  %v585 = vand.u32 %v584, 4294901760
  %586 = vmatmul.f32.gmra.mxu0 %v585
  %v587 = vpop.f32.mrf.mxu0
  %v588 = vadd.f32 0.0, %v587
  %v589 = vand.u32 %v533, 4294901760
  %v590 = vsub.f32 %v533, %v589
  %v591 = vand.u32 %v590, 4294901760
  %v592 = vsub.f32 %v590, %v591
  %v593 = vand.u32 %v592, 4294901760
  %594 = vmatmul.f32.gmra.mxu0 %v593
  %v595 = vpop.f32.mrf.mxu0
  %v596 = vadd.f32 0.0, %v595
  %v597 = vand.u32 %v536, 4294901760
  %v598 = vsub.f32 %v536, %v597
  %v599 = vand.u32 %v598, 4294901760
  %v600 = vsub.f32 %v598, %v599
  %v601 = vand.u32 %v600, 4294901760
  %602 = vmatmul.f32.gmra.mxu0 %v601
  %v603 = vpop.f32.mrf.mxu0
  %v604 = vadd.f32 0.0, %v603
  %v605 = vand.u32 %v539, 4294901760
  %v606 = vsub.f32 %v539, %v605
  %v607 = vand.u32 %v606, 4294901760
  %v608 = vsub.f32 %v606, %v607
  %v609 = vand.u32 %v608, 4294901760
  %610 = vmatmul.f32.gmra.mxu0 %v609
  %v611 = vpop.f32.mrf.mxu0
  %v612 = vadd.f32 0.0, %v611
  %v613 = vand.u32 %v542, 4294901760
  %v614 = vsub.f32 %v542, %v613
  %v615 = vand.u32 %v614, 4294901760
  %v616 = vsub.f32 %v614, %v615
  %v617 = vand.u32 %v616, 4294901760
  %618 = vmatmul.f32.gmra.mxu0 %v617
  %v619 = vpop.f32.mrf.mxu0
  %v620 = vadd.f32 0.0, %v619
  %v621 = vand.u32 %v545, 4294901760
  %v622 = vsub.f32 %v545, %v621
  %v623 = vand.u32 %v622, 4294901760
  %v624 = vsub.f32 %v622, %v623
  %v625 = vand.u32 %v624, 4294901760
  %626 = vmatmul.f32.gmra.mxu0 %v625
  %v627 = vpop.f32.mrf.mxu0
  %v628 = vadd.f32 0.0, %v627
  %v629 = vand.u32 %v548, 4294901760
  %v630 = vsub.f32 %v548, %v629
  %v631 = vand.u32 %v630, 4294901760
  %v632 = vsub.f32 %v630, %v631
  %v633 = vand.u32 %v632, 4294901760
  %634 = vmatmul.f32.gmra.mxu0 %v633
  %v635 = vpop.f32.mrf.mxu0
  %v636 = vadd.f32 0.0, %v635
  %v637 = vand.u32 %v551, 4294901760
  %v638 = vsub.f32 %v551, %v637
  %v639 = vand.u32 %v638, 4294901760
  %v640 = vsub.f32 %v638, %v639
  %v641 = vand.u32 %v640, 4294901760
  %642 = vmatmul.f32.gmra.mxu0 %v641
  %v643 = vpop.f32.mrf.mxu0
  %v644 = vadd.f32 0.0, %v643
  %v645 = vand.u32 %v554, 4294901760
  %v646 = vsub.f32 %v554, %v645
  %v647 = vand.u32 %v646, 4294901760
  %v648 = vsub.f32 %v646, %v647
  %v649 = vand.u32 %v648, 4294901760
  %650 = vmatmul.f32.gmra.mxu0 %v649
  %v651 = vpop.f32.mrf.mxu0
  %v652 = vadd.f32 0.0, %v651
  %653 = vdwg.mxu0
  %654 = vmatpush.msra.mxu0 0.0
  %655 = vmatpush.msra.mxu0 0.0
  %656 = vmatpush.msra.mxu0 0.0
  %657 = vmatpush.msra.mxu0 0.0
  %658 = vmatpush.msra.mxu0 0.0
  %659 = vmatpush.msra.mxu0 0.0
  %660 = vmatpush.msra.mxu0 0.0
  %661 = vmatpush.msra.mxu0 0.0
  %662 = vmatpush.msra.mxu0 0.0
  %663 = vmatpush.msra.mxu0 0.0
  %664 = vmatpush.msra.mxu0 0.0
  %665 = vmatpush.msra.mxu0 0.0
  %666 = vmatpush.msra.mxu0 0.0
  %667 = vmatpush.msra.mxu0 0.0
  %668 = vmatpush.msra.mxu0 0.0
  %v669 = vand.u32 %v524, 4294901760
  %v670 = vsub.f32 %v524, %v669
  %v671 = vand.u32 %v670, 4294901760
  %v672 = vsub.f32 %v670, %v671
  %v673 = vand.u32 %v672, 4294901760
  %674 = vmatpush.msra.mxu0 %v673
  %v675 = vand.u32 %v527, 4294901760
  %676 = vmatmul.f32.gmra.mxu0 %v675
  %v677 = vpop.f32.mrf.mxu0
  %v678 = vadd.f32 %v580, %v677
  %v679 = vand.u32 %v530, 4294901760
  %680 = vmatmul.f32.gmra.mxu0 %v679
  %v681 = vpop.f32.mrf.mxu0
  %v682 = vadd.f32 %v588, %v681
  %v683 = vand.u32 %v533, 4294901760
  %684 = vmatmul.f32.gmra.mxu0 %v683
  %v685 = vpop.f32.mrf.mxu0
  %v686 = vadd.f32 %v596, %v685
  %v687 = vand.u32 %v536, 4294901760
  %688 = vmatmul.f32.gmra.mxu0 %v687
  %v689 = vpop.f32.mrf.mxu0
  %v690 = vadd.f32 %v604, %v689
  %v691 = vand.u32 %v539, 4294901760
  %692 = vmatmul.f32.gmra.mxu0 %v691
  %v693 = vpop.f32.mrf.mxu0
  %v694 = vadd.f32 %v612, %v693
  %v695 = vand.u32 %v542, 4294901760
  %696 = vmatmul.f32.gmra.mxu0 %v695
  %v697 = vpop.f32.mrf.mxu0
  %v698 = vadd.f32 %v620, %v697
  %v699 = vand.u32 %v545, 4294901760
  %700 = vmatmul.f32.gmra.mxu0 %v699
  %v701 = vpop.f32.mrf.mxu0
  %v702 = vadd.f32 %v628, %v701
  %v703 = vand.u32 %v548, 4294901760
  %704 = vmatmul.f32.gmra.mxu0 %v703
  %v705 = vpop.f32.mrf.mxu0
  %v706 = vadd.f32 %v636, %v705
  %v707 = vand.u32 %v551, 4294901760
  %708 = vmatmul.f32.gmra.mxu0 %v707
  %v709 = vpop.f32.mrf.mxu0
  %v710 = vadd.f32 %v644, %v709
  %v711 = vand.u32 %v554, 4294901760
  %712 = vmatmul.f32.gmra.mxu0 %v711
  %v713 = vpop.f32.mrf.mxu0
  %v714 = vadd.f32 %v652, %v713
  %715 = vdwg.mxu0
  %716 = vmatpush.msra.mxu0 0.0
  %717 = vmatpush.msra.mxu0 0.0
  %718 = vmatpush.msra.mxu0 0.0
  %719 = vmatpush.msra.mxu0 0.0
  %720 = vmatpush.msra.mxu0 0.0
  %721 = vmatpush.msra.mxu0 0.0
  %722 = vmatpush.msra.mxu0 0.0
  %723 = vmatpush.msra.mxu0 0.0
  %724 = vmatpush.msra.mxu0 0.0
  %725 = vmatpush.msra.mxu0 0.0
  %726 = vmatpush.msra.mxu0 0.0
  %727 = vmatpush.msra.mxu0 0.0
  %728 = vmatpush.msra.mxu0 0.0
  %729 = vmatpush.msra.mxu0 0.0
  %730 = vmatpush.msra.mxu0 0.0
  %v731 = vand.u32 %v524, 4294901760
  %v732 = vsub.f32 %v524, %v731
  %733 = vmatpush.msra.mxu0 %v732
  %v734 = vand.u32 %v527, 4294901760
  %v735 = vsub.f32 %v527, %v734
  %736 = vmatmul.f32.gmra.mxu0 %v735
  %v737 = vpop.f32.mrf.mxu0
  %v738 = vadd.f32 %v678, %v737
  %v739 = vand.u32 %v530, 4294901760
  %v740 = vsub.f32 %v530, %v739
  %741 = vmatmul.f32.gmra.mxu0 %v740
  %v742 = vpop.f32.mrf.mxu0
  %v743 = vadd.f32 %v682, %v742
  %v744 = vand.u32 %v533, 4294901760
  %v745 = vsub.f32 %v533, %v744
  %746 = vmatmul.f32.gmra.mxu0 %v745
  %v747 = vpop.f32.mrf.mxu0
  %v748 = vadd.f32 %v686, %v747
  %v749 = vand.u32 %v536, 4294901760
  %v750 = vsub.f32 %v536, %v749
  %751 = vmatmul.f32.gmra.mxu0 %v750
  %v752 = vpop.f32.mrf.mxu0
  %v753 = vadd.f32 %v690, %v752
  %v754 = vand.u32 %v539, 4294901760
  %v755 = vsub.f32 %v539, %v754
  %756 = vmatmul.f32.gmra.mxu0 %v755
  %v757 = vpop.f32.mrf.mxu0
  %v758 = vadd.f32 %v694, %v757
  %v759 = vand.u32 %v542, 4294901760
  %v760 = vsub.f32 %v542, %v759
  %761 = vmatmul.f32.gmra.mxu0 %v760
  %v762 = vpop.f32.mrf.mxu0
  %v763 = vadd.f32 %v698, %v762
  %v764 = vand.u32 %v545, 4294901760
  %v765 = vsub.f32 %v545, %v764
  %766 = vmatmul.f32.gmra.mxu0 %v765
  %v767 = vpop.f32.mrf.mxu0
  %v768 = vadd.f32 %v702, %v767
  %v769 = vand.u32 %v548, 4294901760
  %v770 = vsub.f32 %v548, %v769
  %771 = vmatmul.f32.gmra.mxu0 %v770
  %v772 = vpop.f32.mrf.mxu0
  %v773 = vadd.f32 %v706, %v772
  %v774 = vand.u32 %v551, 4294901760
  %v775 = vsub.f32 %v551, %v774
  %776 = vmatmul.f32.gmra.mxu0 %v775
  %v777 = vpop.f32.mrf.mxu0
  %v778 = vadd.f32 %v710, %v777
  %v779 = vand.u32 %v554, 4294901760
  %v780 = vsub.f32 %v554, %v779
  %781 = vmatmul.f32.gmra.mxu0 %v780
  %v782 = vpop.f32.mrf.mxu0
  %v783 = vadd.f32 %v714, %v782
  %784 = vdwg.mxu0
  %785 = vmatpush.msra.mxu0 0.0
  %786 = vmatpush.msra.mxu0 0.0
  %787 = vmatpush.msra.mxu0 0.0
  %788 = vmatpush.msra.mxu0 0.0
  %789 = vmatpush.msra.mxu0 0.0
  %790 = vmatpush.msra.mxu0 0.0
  %791 = vmatpush.msra.mxu0 0.0
  %792 = vmatpush.msra.mxu0 0.0
  %793 = vmatpush.msra.mxu0 0.0
  %794 = vmatpush.msra.mxu0 0.0
  %795 = vmatpush.msra.mxu0 0.0
  %796 = vmatpush.msra.mxu0 0.0
  %797 = vmatpush.msra.mxu0 0.0
  %798 = vmatpush.msra.mxu0 0.0
  %799 = vmatpush.msra.mxu0 0.0
  %v800 = vand.u32 %v524, 4294901760
  %801 = vmatpush.msra.mxu0 %v800
  %v802 = vand.u32 %v527, 4294901760
  %v803 = vsub.f32 %v527, %v802
  %v804 = vand.u32 %v803, 4294901760
  %805 = vmatmul.f32.gmra.mxu0 %v804
  %v806 = vpop.f32.mrf.mxu0
  %v807 = vadd.f32 %v738, %v806
  %v808 = vand.u32 %v530, 4294901760
  %v809 = vsub.f32 %v530, %v808
  %v810 = vand.u32 %v809, 4294901760
  %811 = vmatmul.f32.gmra.mxu0 %v810
  %v812 = vpop.f32.mrf.mxu0
  %v813 = vadd.f32 %v743, %v812
  %v814 = vand.u32 %v533, 4294901760
  %v815 = vsub.f32 %v533, %v814
  %v816 = vand.u32 %v815, 4294901760
  %817 = vmatmul.f32.gmra.mxu0 %v816
  %v818 = vpop.f32.mrf.mxu0
  %v819 = vadd.f32 %v748, %v818
  %v820 = vand.u32 %v536, 4294901760
  %v821 = vsub.f32 %v536, %v820
  %v822 = vand.u32 %v821, 4294901760
  %823 = vmatmul.f32.gmra.mxu0 %v822
  %v824 = vpop.f32.mrf.mxu0
  %v825 = vadd.f32 %v753, %v824
  %v826 = vand.u32 %v539, 4294901760
  %v827 = vsub.f32 %v539, %v826
  %v828 = vand.u32 %v827, 4294901760
  %829 = vmatmul.f32.gmra.mxu0 %v828
  %v830 = vpop.f32.mrf.mxu0
  %v831 = vadd.f32 %v758, %v830
  %v832 = vand.u32 %v542, 4294901760
  %v833 = vsub.f32 %v542, %v832
  %v834 = vand.u32 %v833, 4294901760
  %835 = vmatmul.f32.gmra.mxu0 %v834
  %v836 = vpop.f32.mrf.mxu0
  %v837 = vadd.f32 %v763, %v836
  %v838 = vand.u32 %v545, 4294901760
  %v839 = vsub.f32 %v545, %v838
  %v840 = vand.u32 %v839, 4294901760
  %841 = vmatmul.f32.gmra.mxu0 %v840
  %v842 = vpop.f32.mrf.mxu0
  %v843 = vadd.f32 %v768, %v842
  %v844 = vand.u32 %v548, 4294901760
  %v845 = vsub.f32 %v548, %v844
  %v846 = vand.u32 %v845, 4294901760
  %847 = vmatmul.f32.gmra.mxu0 %v846
  %v848 = vpop.f32.mrf.mxu0
  %v849 = vadd.f32 %v773, %v848
  %v850 = vand.u32 %v551, 4294901760
  %v851 = vsub.f32 %v551, %v850
  %v852 = vand.u32 %v851, 4294901760
  %853 = vmatmul.f32.gmra.mxu0 %v852
  %v854 = vpop.f32.mrf.mxu0
  %v855 = vadd.f32 %v778, %v854
  %v856 = vand.u32 %v554, 4294901760
  %v857 = vsub.f32 %v554, %v856
  %v858 = vand.u32 %v857, 4294901760
  %859 = vmatmul.f32.gmra.mxu0 %v858
  %v860 = vpop.f32.mrf.mxu0
  %v861 = vadd.f32 %v783, %v860
  %862 = vdwg.mxu0
  %863 = vmatpush.msra.mxu0 0.0
  %864 = vmatpush.msra.mxu0 0.0
  %865 = vmatpush.msra.mxu0 0.0
  %866 = vmatpush.msra.mxu0 0.0
  %867 = vmatpush.msra.mxu0 0.0
  %868 = vmatpush.msra.mxu0 0.0
  %869 = vmatpush.msra.mxu0 0.0
  %870 = vmatpush.msra.mxu0 0.0
  %871 = vmatpush.msra.mxu0 0.0
  %872 = vmatpush.msra.mxu0 0.0
  %873 = vmatpush.msra.mxu0 0.0
  %874 = vmatpush.msra.mxu0 0.0
  %875 = vmatpush.msra.mxu0 0.0
  %876 = vmatpush.msra.mxu0 0.0
  %877 = vmatpush.msra.mxu0 0.0
  %v878 = vand.u32 %v524, 4294901760
  %v879 = vsub.f32 %v524, %v878
  %v880 = vand.u32 %v879, 4294901760
  %881 = vmatpush.msra.mxu0 %v880
  %v882 = vand.u32 %v527, 4294901760
  %883 = vmatmul.f32.gmra.mxu0 %v882
  %v884 = vpop.f32.mrf.mxu0
  %v885 = vadd.f32 %v807, %v884
  %v886 = vand.u32 %v530, 4294901760
  %887 = vmatmul.f32.gmra.mxu0 %v886
  %v888 = vpop.f32.mrf.mxu0
  %v889 = vadd.f32 %v813, %v888
  %v890 = vand.u32 %v533, 4294901760
  %891 = vmatmul.f32.gmra.mxu0 %v890
  %v892 = vpop.f32.mrf.mxu0
  %v893 = vadd.f32 %v819, %v892
  %v894 = vand.u32 %v536, 4294901760
  %895 = vmatmul.f32.gmra.mxu0 %v894
  %v896 = vpop.f32.mrf.mxu0
  %v897 = vadd.f32 %v825, %v896
  %v898 = vand.u32 %v539, 4294901760
  %899 = vmatmul.f32.gmra.mxu0 %v898
  %v900 = vpop.f32.mrf.mxu0
  %v901 = vadd.f32 %v831, %v900
  %v902 = vand.u32 %v542, 4294901760
  %903 = vmatmul.f32.gmra.mxu0 %v902
  %v904 = vpop.f32.mrf.mxu0
  %v905 = vadd.f32 %v837, %v904
  %v906 = vand.u32 %v545, 4294901760
  %907 = vmatmul.f32.gmra.mxu0 %v906
  %v908 = vpop.f32.mrf.mxu0
  %v909 = vadd.f32 %v843, %v908
  %v910 = vand.u32 %v548, 4294901760
  %911 = vmatmul.f32.gmra.mxu0 %v910
  %v912 = vpop.f32.mrf.mxu0
  %v913 = vadd.f32 %v849, %v912
  %v914 = vand.u32 %v551, 4294901760
  %915 = vmatmul.f32.gmra.mxu0 %v914
  %v916 = vpop.f32.mrf.mxu0
  %v917 = vadd.f32 %v855, %v916
  %v918 = vand.u32 %v554, 4294901760
  %919 = vmatmul.f32.gmra.mxu0 %v918
  %v920 = vpop.f32.mrf.mxu0
  %v921 = vadd.f32 %v861, %v920
  %922 = vdwg.mxu0
  %923 = vmatpush.msra.mxu0 0.0
  %924 = vmatpush.msra.mxu0 0.0
  %925 = vmatpush.msra.mxu0 0.0
  %926 = vmatpush.msra.mxu0 0.0
  %927 = vmatpush.msra.mxu0 0.0
  %928 = vmatpush.msra.mxu0 0.0
  %929 = vmatpush.msra.mxu0 0.0
  %930 = vmatpush.msra.mxu0 0.0
  %931 = vmatpush.msra.mxu0 0.0
  %932 = vmatpush.msra.mxu0 0.0
  %933 = vmatpush.msra.mxu0 0.0
  %934 = vmatpush.msra.mxu0 0.0
  %935 = vmatpush.msra.mxu0 0.0
  %936 = vmatpush.msra.mxu0 0.0
  %937 = vmatpush.msra.mxu0 0.0
  %v938 = vand.u32 %v524, 4294901760
  %939 = vmatpush.msra.mxu0 %v938
  %v940 = vand.u32 %v527, 4294901760
  %941 = vmatmul.f32.gmra.mxu0 %v940
  %v942 = vpop.f32.mrf.mxu0
  %v943 = vadd.f32 %v885, %v942
  %v944 = vand.u32 %v530, 4294901760
  %945 = vmatmul.f32.gmra.mxu0 %v944
  %v946 = vpop.f32.mrf.mxu0
  %v947 = vadd.f32 %v889, %v946
  %v948 = vand.u32 %v533, 4294901760
  %949 = vmatmul.f32.gmra.mxu0 %v948
  %v950 = vpop.f32.mrf.mxu0
  %v951 = vadd.f32 %v893, %v950
  %v952 = vand.u32 %v536, 4294901760
  %953 = vmatmul.f32.gmra.mxu0 %v952
  %v954 = vpop.f32.mrf.mxu0
  %v955 = vadd.f32 %v897, %v954
  %v956 = vand.u32 %v539, 4294901760
  %957 = vmatmul.f32.gmra.mxu0 %v956
  %v958 = vpop.f32.mrf.mxu0
  %v959 = vadd.f32 %v901, %v958
  %v960 = vand.u32 %v542, 4294901760
  %961 = vmatmul.f32.gmra.mxu0 %v960
  %v962 = vpop.f32.mrf.mxu0
  %v963 = vadd.f32 %v905, %v962
  %v964 = vand.u32 %v545, 4294901760
  %965 = vmatmul.f32.gmra.mxu0 %v964
  %v966 = vpop.f32.mrf.mxu0
  %v967 = vadd.f32 %v909, %v966
  %v968 = vand.u32 %v548, 4294901760
  %969 = vmatmul.f32.gmra.mxu0 %v968
  %v970 = vpop.f32.mrf.mxu0
  %v971 = vadd.f32 %v913, %v970
  %v972 = vand.u32 %v551, 4294901760
  %973 = vmatmul.f32.gmra.mxu0 %v972
  %v974 = vpop.f32.mrf.mxu0
  %v975 = vadd.f32 %v917, %v974
  %v976 = vand.u32 %v554, 4294901760
  %977 = vmatmul.f32.gmra.mxu0 %v976
  %v978 = vpop.f32.mrf.mxu0
  %v979 = vadd.f32 %v921, %v978
  %980 = vdwg.mxu0
  %v981 = vmul.f32 %v943, %v220
  %v982 = vmul.f32 %v947, %v221
  %v983 = vmul.f32 %v951, %v222
  %v984 = vmul.f32 %v955, %v223
  %v985 = vmul.f32 %v959, %v224
  %v986 = vmul.f32 %v963, %v225
  %v987 = vmul.f32 %v967, %v226
  %v988 = vmul.f32 %v971, %v227
  %v989 = vmul.f32 %v975, %v228
  %v990 = vmul.f32 %v979, %v229
  %vm991 = vcmask 80896
  %v992 = vsel %vm991, %v981, 0.0
  %993 = vadd.xlane.f32.xlu0 %v992
  %v994 = vpop.xlane.xlu0 %993
  %v995 = vsel %vm991, %v982, 0.0
  %996 = vadd.xlane.f32.xlu0 %v995
  %v997 = vpop.xlane.xlu0 %996
  %v998 = vsel %vm991, %v983, 0.0
  %999 = vadd.xlane.f32.xlu0 %v998
  %v1000 = vpop.xlane.xlu0 %999
  %v1001 = vsel %vm991, %v984, 0.0
  %1002 = vadd.xlane.f32.xlu0 %v1001
  %v1003 = vpop.xlane.xlu0 %1002
  %v1004 = vsel %vm991, %v985, 0.0
  %1005 = vadd.xlane.f32.xlu0 %v1004
  %v1006 = vpop.xlane.xlu0 %1005
  %v1007 = vsel %vm991, %v986, 0.0
  %1008 = vadd.xlane.f32.xlu0 %v1007
  %v1009 = vpop.xlane.xlu0 %1008
  %v1010 = vsel %vm991, %v987, 0.0
  %1011 = vadd.xlane.f32.xlu0 %v1010
  %v1012 = vpop.xlane.xlu0 %1011
  %v1013 = vsel %vm991, %v988, 0.0
  %1014 = vadd.xlane.f32.xlu0 %v1013
  %v1015 = vpop.xlane.xlu0 %1014
  %v1016 = vsel %vm991, %v989, 0.0
  %1017 = vadd.xlane.f32.xlu0 %v1016
  %v1018 = vpop.xlane.xlu0 %1017
  %v1019 = vsel %vm991, %v990, 0.0
  %1020 = vadd.xlane.f32.xlu0 %v1019
  %v1021 = vpop.xlane.xlu0 %1020
  %v1022 = vsub.f32 1.0, %v994
  %v1023 = vsub.f32 1.0, %v997
  %v1024 = vsub.f32 1.0, %v1000
  %v1025 = vsub.f32 1.0, %v1003
  %v1026 = vsub.f32 1.0, %v1006
  %v1027 = vsub.f32 1.0, %v1009
  %v1028 = vsub.f32 1.0, %v1012
  %v1029 = vsub.f32 1.0, %v1015
  %v1030 = vsub.f32 1.0, %v1018
  %v1031 = vsub.f32 1.0, %v1021
  %1035 = vrot.lane.b32.xlu0 %v305, 126
  %v1036 = vpop.permute.xlu0 %1035
  %1037 = vrot.lane.b32.xlu0 %v306, 126
  %v1038 = vpop.permute.xlu0 %1037
  %1039 = vrot.lane.b32.xlu0 %v307, 126
  %v1040 = vpop.permute.xlu0 %1039
  %v1044 = vadd.f32 %v305, %v1036
  %v1045 = vadd.f32 %v306, %v1038
  %v1046 = vadd.f32 %v307, %v1040
  %v1047 = vmul.f32 %v1044, 0.5
  %v1048 = vmul.f32 %v1045, 0.5
  %v1049 = vmul.f32 %v1046, 0.5
  %1050 = vrot.lane.b32.xlu0 %v305, 2
  %v1051 = vpop.permute.xlu0 %1050
  %1052 = vrot.lane.b32.xlu0 %v306, 2
  %v1053 = vpop.permute.xlu0 %1052
  %1054 = vrot.lane.b32.xlu0 %v307, 2
  %v1055 = vpop.permute.xlu0 %1054
  %v1059 = vsub.f32 %v305, %v1051
  %v1060 = vsub.f32 %v306, %v1053
  %v1061 = vsub.f32 %v307, %v1055
  %v1062 = vlog2.pop %v1059
  %v1063 = vmul.f32 %v1062, 0.6931472
  %v1064 = vlog2.pop %v1060
  %v1065 = vmul.f32 %v1064, 0.6931472
  %v1066 = vlog2.pop %v1061
  %v1067 = vmul.f32 %v1066, 0.6931472
  %vm1068 = vcmp.lt.s32.totalorder %v63, 8
  %vm1069 = vcmp.lt.s32.totalorder %v64, 8
  %vm1070 = vcmp.lt.s32.totalorder %v65, 8
  %vm1071 = vcmp.ne.s32.totalorder %v74, 5
  %vm1072 = vmand %vm1068, %vm1071
  %vm1073 = vmand %vm1069, %vm1071
  %vm1074 = vmand %vm1070, %vm1071
  %v1075 = vsel %vm1072, -1.0, 1.0
  %v1076 = vsel %vm1073, -1.0, 1.0
  %v1077 = vsel %vm1074, -1.0, 1.0
  %1081 = vrot.lane.b32.xlu0 %v1047, 64
  %v1082 = vpop.permute.xlu0 %1081
  %1083 = vrot.lane.b32.xlu0 %v1048, 64
  %v1084 = vpop.permute.xlu0 %1083
  %1085 = vrot.lane.b32.xlu0 %v1049, 64
  %v1086 = vpop.permute.xlu0 %1085
  %1093 = vrot.lane.b32.xlu0 %v1063, 64
  %v1094 = vpop.permute.xlu0 %1093
  %1095 = vrot.lane.b32.xlu0 %v1065, 64
  %v1096 = vpop.permute.xlu0 %1095
  %1097 = vrot.lane.b32.xlu0 %v1067, 64
  %v1098 = vpop.permute.xlu0 %1097
  %1102 = vrot.lane.b32.xlu0 %v305, 64
  %v1103 = vpop.permute.xlu0 %1102
  %1104 = vrot.lane.b32.xlu0 %v306, 64
  %v1105 = vpop.permute.xlu0 %1104
  %1106 = vrot.lane.b32.xlu0 %v307, 64
  %v1107 = vpop.permute.xlu0 %1106
  %1114 = vrot.lane.b32.xlu0 %v1059, 67
  %v1115 = vpop.permute.xlu0 %1114
  %1116 = vrot.lane.b32.xlu0 %v1060, 67
  %v1117 = vpop.permute.xlu0 %1116
  %1118 = vrot.lane.b32.xlu0 %v1061, 67
  %v1119 = vpop.permute.xlu0 %1118
  %vm1123 = vcmask 15360
  %v1124 = vsel %vm1123, %v1082, %v1094
  %v1125 = vsel %vm1123, %v1084, %v1096
  %v1126 = vsel %vm1123, %v1086, %v1098
  %vm1127 = vcmask 31744
  %v1128 = vsel %vm1127, %v1124, %v1103
  %v1129 = vsel %vm1127, %v1125, %v1105
  %v1130 = vsel %vm1127, %v1126, %v1107
  %vm1131 = vcmask 39936
  %v1132 = vsel %vm1131, %v1128, %v1115
  %v1133 = vsel %vm1131, %v1129, %v1117
  %v1134 = vsel %vm1131, %v1130, %v1119
  %v1135 = vmul.f32 %v1132, %v1075
  %v1136 = vmul.f32 %v1133, %v1076
  %v1137 = vmul.f32 %v1134, %v1077
  %vm1138 = vcmask 146432
  %v1140 = vsel %vm1138, %v270, 0
  %v1143 = vsel %vm1138, %v271, 0
  %v1146 = vsel %vm1138, %v272, 0
  %v1149 = vsel %vm1138, %v273, 0
  %v1152 = vsel %vm1138, %v274, 0
  %v1155 = vsel %vm1138, %v275, 0
  %v1158 = vsel %vm1138, %v276, 0
  %v1161 = vsel %vm1138, %v277, 0
  %v1164 = vsel %vm1138, %v278, 0
  %v1167 = vsel %vm1138, %v279, 0
  %vm1169 = vcmask 1041408
  %v1171 = vsel %vm1169, %v1137, 0
  %1173 = vmatpush.msra.mxu0 0.0
  %1174 = vmatpush.msra.mxu0 0.0
  %1175 = vmatpush.msra.mxu0 0.0
  %1176 = vmatpush.msra.mxu0 0.0
  %1177 = vmatpush.msra.mxu0 0.0
  %1178 = vmatpush.msra.mxu0 0.0
  %1179 = vmatpush.msra.mxu0 0.0
  %1180 = vmatpush.msra.mxu0 0.0
  %1181 = vmatpush.msra.mxu0 0.0
  %1182 = vmatpush.msra.mxu0 0.0
  %1183 = vmatpush.msra.mxu0 0.0
  %1184 = vmatpush.msra.mxu0 0.0
  %1185 = vmatpush.msra.mxu0 0.0
  %v1186 = vand.u32 %v1171, 4294901760
  %1187 = vmatpush.msra.mxu0 %v1186
  %v1188 = vand.u32 %v1136, 4294901760
  %1189 = vmatpush.msra.mxu0 %v1188
  %v1190 = vand.u32 %v1135, 4294901760
  %1191 = vmatpush.msra.mxu0 %v1190
  %v1192 = vand.u32 %v1140, 4294901760
  %v1193 = vsub.f32 %v1140, %v1192
  %v1194 = vand.u32 %v1193, 4294901760
  %v1195 = vsub.f32 %v1193, %v1194
  %v1196 = vand.u32 %v1195, 4294901760
  %1197 = vmatmul.f32.gmra.mxu0 %v1196
  %v1198 = vpop.f32.mrf.mxu0
  %v1199 = vadd.f32 0.0, %v1198
  %v1200 = vand.u32 %v1143, 4294901760
  %v1201 = vsub.f32 %v1143, %v1200
  %v1202 = vand.u32 %v1201, 4294901760
  %v1203 = vsub.f32 %v1201, %v1202
  %v1204 = vand.u32 %v1203, 4294901760
  %1205 = vmatmul.f32.gmra.mxu0 %v1204
  %v1206 = vpop.f32.mrf.mxu0
  %v1207 = vadd.f32 0.0, %v1206
  %v1208 = vand.u32 %v1146, 4294901760
  %v1209 = vsub.f32 %v1146, %v1208
  %v1210 = vand.u32 %v1209, 4294901760
  %v1211 = vsub.f32 %v1209, %v1210
  %v1212 = vand.u32 %v1211, 4294901760
  %1213 = vmatmul.f32.gmra.mxu0 %v1212
  %v1214 = vpop.f32.mrf.mxu0
  %v1215 = vadd.f32 0.0, %v1214
  %v1216 = vand.u32 %v1149, 4294901760
  %v1217 = vsub.f32 %v1149, %v1216
  %v1218 = vand.u32 %v1217, 4294901760
  %v1219 = vsub.f32 %v1217, %v1218
  %v1220 = vand.u32 %v1219, 4294901760
  %1221 = vmatmul.f32.gmra.mxu0 %v1220
  %v1222 = vpop.f32.mrf.mxu0
  %v1223 = vadd.f32 0.0, %v1222
  %v1224 = vand.u32 %v1152, 4294901760
  %v1225 = vsub.f32 %v1152, %v1224
  %v1226 = vand.u32 %v1225, 4294901760
  %v1227 = vsub.f32 %v1225, %v1226
  %v1228 = vand.u32 %v1227, 4294901760
  %1229 = vmatmul.f32.gmra.mxu0 %v1228
  %v1230 = vpop.f32.mrf.mxu0
  %v1231 = vadd.f32 0.0, %v1230
  %v1232 = vand.u32 %v1155, 4294901760
  %v1233 = vsub.f32 %v1155, %v1232
  %v1234 = vand.u32 %v1233, 4294901760
  %v1235 = vsub.f32 %v1233, %v1234
  %v1236 = vand.u32 %v1235, 4294901760
  %1237 = vmatmul.f32.gmra.mxu0 %v1236
  %v1238 = vpop.f32.mrf.mxu0
  %v1239 = vadd.f32 0.0, %v1238
  %v1240 = vand.u32 %v1158, 4294901760
  %v1241 = vsub.f32 %v1158, %v1240
  %v1242 = vand.u32 %v1241, 4294901760
  %v1243 = vsub.f32 %v1241, %v1242
  %v1244 = vand.u32 %v1243, 4294901760
  %1245 = vmatmul.f32.gmra.mxu0 %v1244
  %v1246 = vpop.f32.mrf.mxu0
  %v1247 = vadd.f32 0.0, %v1246
  %v1248 = vand.u32 %v1161, 4294901760
  %v1249 = vsub.f32 %v1161, %v1248
  %v1250 = vand.u32 %v1249, 4294901760
  %v1251 = vsub.f32 %v1249, %v1250
  %v1252 = vand.u32 %v1251, 4294901760
  %1253 = vmatmul.f32.gmra.mxu0 %v1252
  %v1254 = vpop.f32.mrf.mxu0
  %v1255 = vadd.f32 0.0, %v1254
  %v1256 = vand.u32 %v1164, 4294901760
  %v1257 = vsub.f32 %v1164, %v1256
  %v1258 = vand.u32 %v1257, 4294901760
  %v1259 = vsub.f32 %v1257, %v1258
  %v1260 = vand.u32 %v1259, 4294901760
  %1261 = vmatmul.f32.gmra.mxu0 %v1260
  %v1262 = vpop.f32.mrf.mxu0
  %v1263 = vadd.f32 0.0, %v1262
  %v1264 = vand.u32 %v1167, 4294901760
  %v1265 = vsub.f32 %v1167, %v1264
  %v1266 = vand.u32 %v1265, 4294901760
  %v1267 = vsub.f32 %v1265, %v1266
  %v1268 = vand.u32 %v1267, 4294901760
  %1269 = vmatmul.f32.gmra.mxu0 %v1268
  %v1270 = vpop.f32.mrf.mxu0
  %v1271 = vadd.f32 0.0, %v1270
  %1272 = vdwg.mxu0
  %1273 = vmatpush.msra.mxu0 0.0
  %1274 = vmatpush.msra.mxu0 0.0
  %1275 = vmatpush.msra.mxu0 0.0
  %1276 = vmatpush.msra.mxu0 0.0
  %1277 = vmatpush.msra.mxu0 0.0
  %1278 = vmatpush.msra.mxu0 0.0
  %1279 = vmatpush.msra.mxu0 0.0
  %1280 = vmatpush.msra.mxu0 0.0
  %1281 = vmatpush.msra.mxu0 0.0
  %1282 = vmatpush.msra.mxu0 0.0
  %1283 = vmatpush.msra.mxu0 0.0
  %1284 = vmatpush.msra.mxu0 0.0
  %1285 = vmatpush.msra.mxu0 0.0
  %v1286 = vand.u32 %v1171, 4294901760
  %v1287 = vsub.f32 %v1171, %v1286
  %v1288 = vand.u32 %v1287, 4294901760
  %v1289 = vsub.f32 %v1287, %v1288
  %v1290 = vand.u32 %v1289, 4294901760
  %1291 = vmatpush.msra.mxu0 %v1290
  %v1292 = vand.u32 %v1136, 4294901760
  %v1293 = vsub.f32 %v1136, %v1292
  %v1294 = vand.u32 %v1293, 4294901760
  %v1295 = vsub.f32 %v1293, %v1294
  %v1296 = vand.u32 %v1295, 4294901760
  %1297 = vmatpush.msra.mxu0 %v1296
  %v1298 = vand.u32 %v1135, 4294901760
  %v1299 = vsub.f32 %v1135, %v1298
  %v1300 = vand.u32 %v1299, 4294901760
  %v1301 = vsub.f32 %v1299, %v1300
  %v1302 = vand.u32 %v1301, 4294901760
  %1303 = vmatpush.msra.mxu0 %v1302
  %v1304 = vand.u32 %v1140, 4294901760
  %1305 = vmatmul.f32.gmra.mxu0 %v1304
  %v1306 = vpop.f32.mrf.mxu0
  %v1307 = vadd.f32 %v1199, %v1306
  %v1308 = vand.u32 %v1143, 4294901760
  %1309 = vmatmul.f32.gmra.mxu0 %v1308
  %v1310 = vpop.f32.mrf.mxu0
  %v1311 = vadd.f32 %v1207, %v1310
  %v1312 = vand.u32 %v1146, 4294901760
  %1313 = vmatmul.f32.gmra.mxu0 %v1312
  %v1314 = vpop.f32.mrf.mxu0
  %v1315 = vadd.f32 %v1215, %v1314
  %v1316 = vand.u32 %v1149, 4294901760
  %1317 = vmatmul.f32.gmra.mxu0 %v1316
  %v1318 = vpop.f32.mrf.mxu0
  %v1319 = vadd.f32 %v1223, %v1318
  %v1320 = vand.u32 %v1152, 4294901760
  %1321 = vmatmul.f32.gmra.mxu0 %v1320
  %v1322 = vpop.f32.mrf.mxu0
  %v1323 = vadd.f32 %v1231, %v1322
  %v1324 = vand.u32 %v1155, 4294901760
  %1325 = vmatmul.f32.gmra.mxu0 %v1324
  %v1326 = vpop.f32.mrf.mxu0
  %v1327 = vadd.f32 %v1239, %v1326
  %v1328 = vand.u32 %v1158, 4294901760
  %1329 = vmatmul.f32.gmra.mxu0 %v1328
  %v1330 = vpop.f32.mrf.mxu0
  %v1331 = vadd.f32 %v1247, %v1330
  %v1332 = vand.u32 %v1161, 4294901760
  %1333 = vmatmul.f32.gmra.mxu0 %v1332
  %v1334 = vpop.f32.mrf.mxu0
  %v1335 = vadd.f32 %v1255, %v1334
  %v1336 = vand.u32 %v1164, 4294901760
  %1337 = vmatmul.f32.gmra.mxu0 %v1336
  %v1338 = vpop.f32.mrf.mxu0
  %v1339 = vadd.f32 %v1263, %v1338
  %v1340 = vand.u32 %v1167, 4294901760
  %1341 = vmatmul.f32.gmra.mxu0 %v1340
  %v1342 = vpop.f32.mrf.mxu0
  %v1343 = vadd.f32 %v1271, %v1342
  %1344 = vdwg.mxu0
  %1345 = vmatpush.msra.mxu0 0.0
  %1346 = vmatpush.msra.mxu0 0.0
  %1347 = vmatpush.msra.mxu0 0.0
  %1348 = vmatpush.msra.mxu0 0.0
  %1349 = vmatpush.msra.mxu0 0.0
  %1350 = vmatpush.msra.mxu0 0.0
  %1351 = vmatpush.msra.mxu0 0.0
  %1352 = vmatpush.msra.mxu0 0.0
  %1353 = vmatpush.msra.mxu0 0.0
  %1354 = vmatpush.msra.mxu0 0.0
  %1355 = vmatpush.msra.mxu0 0.0
  %1356 = vmatpush.msra.mxu0 0.0
  %1357 = vmatpush.msra.mxu0 0.0
  %v1358 = vand.u32 %v1171, 4294901760
  %v1359 = vsub.f32 %v1171, %v1358
  %1360 = vmatpush.msra.mxu0 %v1359
  %v1361 = vand.u32 %v1136, 4294901760
  %v1362 = vsub.f32 %v1136, %v1361
  %1363 = vmatpush.msra.mxu0 %v1362
  %v1364 = vand.u32 %v1135, 4294901760
  %v1365 = vsub.f32 %v1135, %v1364
  %1366 = vmatpush.msra.mxu0 %v1365
  %v1367 = vand.u32 %v1140, 4294901760
  %v1368 = vsub.f32 %v1140, %v1367
  %1369 = vmatmul.f32.gmra.mxu0 %v1368
  %v1370 = vpop.f32.mrf.mxu0
  %v1371 = vadd.f32 %v1307, %v1370
  %v1372 = vand.u32 %v1143, 4294901760
  %v1373 = vsub.f32 %v1143, %v1372
  %1374 = vmatmul.f32.gmra.mxu0 %v1373
  %v1375 = vpop.f32.mrf.mxu0
  %v1376 = vadd.f32 %v1311, %v1375
  %v1377 = vand.u32 %v1146, 4294901760
  %v1378 = vsub.f32 %v1146, %v1377
  %1379 = vmatmul.f32.gmra.mxu0 %v1378
  %v1380 = vpop.f32.mrf.mxu0
  %v1381 = vadd.f32 %v1315, %v1380
  %v1382 = vand.u32 %v1149, 4294901760
  %v1383 = vsub.f32 %v1149, %v1382
  %1384 = vmatmul.f32.gmra.mxu0 %v1383
  %v1385 = vpop.f32.mrf.mxu0
  %v1386 = vadd.f32 %v1319, %v1385
  %v1387 = vand.u32 %v1152, 4294901760
  %v1388 = vsub.f32 %v1152, %v1387
  %1389 = vmatmul.f32.gmra.mxu0 %v1388
  %v1390 = vpop.f32.mrf.mxu0
  %v1391 = vadd.f32 %v1323, %v1390
  %v1392 = vand.u32 %v1155, 4294901760
  %v1393 = vsub.f32 %v1155, %v1392
  %1394 = vmatmul.f32.gmra.mxu0 %v1393
  %v1395 = vpop.f32.mrf.mxu0
  %v1396 = vadd.f32 %v1327, %v1395
  %v1397 = vand.u32 %v1158, 4294901760
  %v1398 = vsub.f32 %v1158, %v1397
  %1399 = vmatmul.f32.gmra.mxu0 %v1398
  %v1400 = vpop.f32.mrf.mxu0
  %v1401 = vadd.f32 %v1331, %v1400
  %v1402 = vand.u32 %v1161, 4294901760
  %v1403 = vsub.f32 %v1161, %v1402
  %1404 = vmatmul.f32.gmra.mxu0 %v1403
  %v1405 = vpop.f32.mrf.mxu0
  %v1406 = vadd.f32 %v1335, %v1405
  %v1407 = vand.u32 %v1164, 4294901760
  %v1408 = vsub.f32 %v1164, %v1407
  %1409 = vmatmul.f32.gmra.mxu0 %v1408
  %v1410 = vpop.f32.mrf.mxu0
  %v1411 = vadd.f32 %v1339, %v1410
  %v1412 = vand.u32 %v1167, 4294901760
  %v1413 = vsub.f32 %v1167, %v1412
  %1414 = vmatmul.f32.gmra.mxu0 %v1413
  %v1415 = vpop.f32.mrf.mxu0
  %v1416 = vadd.f32 %v1343, %v1415
  %1417 = vdwg.mxu0
  %1418 = vmatpush.msra.mxu0 0.0
  %1419 = vmatpush.msra.mxu0 0.0
  %1420 = vmatpush.msra.mxu0 0.0
  %1421 = vmatpush.msra.mxu0 0.0
  %1422 = vmatpush.msra.mxu0 0.0
  %1423 = vmatpush.msra.mxu0 0.0
  %1424 = vmatpush.msra.mxu0 0.0
  %1425 = vmatpush.msra.mxu0 0.0
  %1426 = vmatpush.msra.mxu0 0.0
  %1427 = vmatpush.msra.mxu0 0.0
  %1428 = vmatpush.msra.mxu0 0.0
  %1429 = vmatpush.msra.mxu0 0.0
  %1430 = vmatpush.msra.mxu0 0.0
  %v1431 = vand.u32 %v1171, 4294901760
  %1432 = vmatpush.msra.mxu0 %v1431
  %v1433 = vand.u32 %v1136, 4294901760
  %1434 = vmatpush.msra.mxu0 %v1433
  %v1435 = vand.u32 %v1135, 4294901760
  %1436 = vmatpush.msra.mxu0 %v1435
  %v1437 = vand.u32 %v1140, 4294901760
  %v1438 = vsub.f32 %v1140, %v1437
  %v1439 = vand.u32 %v1438, 4294901760
  %1440 = vmatmul.f32.gmra.mxu0 %v1439
  %v1441 = vpop.f32.mrf.mxu0
  %v1442 = vadd.f32 %v1371, %v1441
  %v1443 = vand.u32 %v1143, 4294901760
  %v1444 = vsub.f32 %v1143, %v1443
  %v1445 = vand.u32 %v1444, 4294901760
  %1446 = vmatmul.f32.gmra.mxu0 %v1445
  %v1447 = vpop.f32.mrf.mxu0
  %v1448 = vadd.f32 %v1376, %v1447
  %v1449 = vand.u32 %v1146, 4294901760
  %v1450 = vsub.f32 %v1146, %v1449
  %v1451 = vand.u32 %v1450, 4294901760
  %1452 = vmatmul.f32.gmra.mxu0 %v1451
  %v1453 = vpop.f32.mrf.mxu0
  %v1454 = vadd.f32 %v1381, %v1453
  %v1455 = vand.u32 %v1149, 4294901760
  %v1456 = vsub.f32 %v1149, %v1455
  %v1457 = vand.u32 %v1456, 4294901760
  %1458 = vmatmul.f32.gmra.mxu0 %v1457
  %v1459 = vpop.f32.mrf.mxu0
  %v1460 = vadd.f32 %v1386, %v1459
  %v1461 = vand.u32 %v1152, 4294901760
  %v1462 = vsub.f32 %v1152, %v1461
  %v1463 = vand.u32 %v1462, 4294901760
  %1464 = vmatmul.f32.gmra.mxu0 %v1463
  %v1465 = vpop.f32.mrf.mxu0
  %v1466 = vadd.f32 %v1391, %v1465
  %v1467 = vand.u32 %v1155, 4294901760
  %v1468 = vsub.f32 %v1155, %v1467
  %v1469 = vand.u32 %v1468, 4294901760
  %1470 = vmatmul.f32.gmra.mxu0 %v1469
  %v1471 = vpop.f32.mrf.mxu0
  %v1472 = vadd.f32 %v1396, %v1471
  %v1473 = vand.u32 %v1158, 4294901760
  %v1474 = vsub.f32 %v1158, %v1473
  %v1475 = vand.u32 %v1474, 4294901760
  %1476 = vmatmul.f32.gmra.mxu0 %v1475
  %v1477 = vpop.f32.mrf.mxu0
  %v1478 = vadd.f32 %v1401, %v1477
  %v1479 = vand.u32 %v1161, 4294901760
  %v1480 = vsub.f32 %v1161, %v1479
  %v1481 = vand.u32 %v1480, 4294901760
  %1482 = vmatmul.f32.gmra.mxu0 %v1481
  %v1483 = vpop.f32.mrf.mxu0
  %v1484 = vadd.f32 %v1406, %v1483
  %v1485 = vand.u32 %v1164, 4294901760
  %v1486 = vsub.f32 %v1164, %v1485
  %v1487 = vand.u32 %v1486, 4294901760
  %1488 = vmatmul.f32.gmra.mxu0 %v1487
  %v1489 = vpop.f32.mrf.mxu0
  %v1490 = vadd.f32 %v1411, %v1489
  %v1491 = vand.u32 %v1167, 4294901760
  %v1492 = vsub.f32 %v1167, %v1491
  %v1493 = vand.u32 %v1492, 4294901760
  %1494 = vmatmul.f32.gmra.mxu0 %v1493
  %v1495 = vpop.f32.mrf.mxu0
  %v1496 = vadd.f32 %v1416, %v1495
  %1497 = vdwg.mxu0
  %1498 = vmatpush.msra.mxu0 0.0
  %1499 = vmatpush.msra.mxu0 0.0
  %1500 = vmatpush.msra.mxu0 0.0
  %1501 = vmatpush.msra.mxu0 0.0
  %1502 = vmatpush.msra.mxu0 0.0
  %1503 = vmatpush.msra.mxu0 0.0
  %1504 = vmatpush.msra.mxu0 0.0
  %1505 = vmatpush.msra.mxu0 0.0
  %1506 = vmatpush.msra.mxu0 0.0
  %1507 = vmatpush.msra.mxu0 0.0
  %1508 = vmatpush.msra.mxu0 0.0
  %1509 = vmatpush.msra.mxu0 0.0
  %1510 = vmatpush.msra.mxu0 0.0
  %v1511 = vand.u32 %v1171, 4294901760
  %v1512 = vsub.f32 %v1171, %v1511
  %v1513 = vand.u32 %v1512, 4294901760
  %1514 = vmatpush.msra.mxu0 %v1513
  %v1515 = vand.u32 %v1136, 4294901760
  %v1516 = vsub.f32 %v1136, %v1515
  %v1517 = vand.u32 %v1516, 4294901760
  %1518 = vmatpush.msra.mxu0 %v1517
  %v1519 = vand.u32 %v1135, 4294901760
  %v1520 = vsub.f32 %v1135, %v1519
  %v1521 = vand.u32 %v1520, 4294901760
  %1522 = vmatpush.msra.mxu0 %v1521
  %v1523 = vand.u32 %v1140, 4294901760
  %1524 = vmatmul.f32.gmra.mxu0 %v1523
  %v1525 = vpop.f32.mrf.mxu0
  %v1526 = vadd.f32 %v1442, %v1525
  %v1527 = vand.u32 %v1143, 4294901760
  %1528 = vmatmul.f32.gmra.mxu0 %v1527
  %v1529 = vpop.f32.mrf.mxu0
  %v1530 = vadd.f32 %v1448, %v1529
  %v1531 = vand.u32 %v1146, 4294901760
  %1532 = vmatmul.f32.gmra.mxu0 %v1531
  %v1533 = vpop.f32.mrf.mxu0
  %v1534 = vadd.f32 %v1454, %v1533
  %v1535 = vand.u32 %v1149, 4294901760
  %1536 = vmatmul.f32.gmra.mxu0 %v1535
  %v1537 = vpop.f32.mrf.mxu0
  %v1538 = vadd.f32 %v1460, %v1537
  %v1539 = vand.u32 %v1152, 4294901760
  %1540 = vmatmul.f32.gmra.mxu0 %v1539
  %v1541 = vpop.f32.mrf.mxu0
  %v1542 = vadd.f32 %v1466, %v1541
  %v1543 = vand.u32 %v1155, 4294901760
  %1544 = vmatmul.f32.gmra.mxu0 %v1543
  %v1545 = vpop.f32.mrf.mxu0
  %v1546 = vadd.f32 %v1472, %v1545
  %v1547 = vand.u32 %v1158, 4294901760
  %1548 = vmatmul.f32.gmra.mxu0 %v1547
  %v1549 = vpop.f32.mrf.mxu0
  %v1550 = vadd.f32 %v1478, %v1549
  %v1551 = vand.u32 %v1161, 4294901760
  %1552 = vmatmul.f32.gmra.mxu0 %v1551
  %v1553 = vpop.f32.mrf.mxu0
  %v1554 = vadd.f32 %v1484, %v1553
  %v1555 = vand.u32 %v1164, 4294901760
  %1556 = vmatmul.f32.gmra.mxu0 %v1555
  %v1557 = vpop.f32.mrf.mxu0
  %v1558 = vadd.f32 %v1490, %v1557
  %v1559 = vand.u32 %v1167, 4294901760
  %1560 = vmatmul.f32.gmra.mxu0 %v1559
  %v1561 = vpop.f32.mrf.mxu0
  %v1562 = vadd.f32 %v1496, %v1561
  %1563 = vdwg.mxu0
  %1564 = vmatpush.msra.mxu0 0.0
  %1565 = vmatpush.msra.mxu0 0.0
  %1566 = vmatpush.msra.mxu0 0.0
  %1567 = vmatpush.msra.mxu0 0.0
  %1568 = vmatpush.msra.mxu0 0.0
  %1569 = vmatpush.msra.mxu0 0.0
  %1570 = vmatpush.msra.mxu0 0.0
  %1571 = vmatpush.msra.mxu0 0.0
  %1572 = vmatpush.msra.mxu0 0.0
  %1573 = vmatpush.msra.mxu0 0.0
  %1574 = vmatpush.msra.mxu0 0.0
  %1575 = vmatpush.msra.mxu0 0.0
  %1576 = vmatpush.msra.mxu0 0.0
  %v1577 = vand.u32 %v1171, 4294901760
  %1578 = vmatpush.msra.mxu0 %v1577
  %v1579 = vand.u32 %v1136, 4294901760
  %1580 = vmatpush.msra.mxu0 %v1579
  %v1581 = vand.u32 %v1135, 4294901760
  %1582 = vmatpush.msra.mxu0 %v1581
  %v1583 = vand.u32 %v1140, 4294901760
  %1584 = vmatmul.f32.gmra.mxu0 %v1583
  %v1585 = vpop.f32.mrf.mxu0
  %v1586 = vadd.f32 %v1526, %v1585
  %v1587 = vand.u32 %v1143, 4294901760
  %1588 = vmatmul.f32.gmra.mxu0 %v1587
  %v1589 = vpop.f32.mrf.mxu0
  %v1590 = vadd.f32 %v1530, %v1589
  %v1591 = vand.u32 %v1146, 4294901760
  %1592 = vmatmul.f32.gmra.mxu0 %v1591
  %v1593 = vpop.f32.mrf.mxu0
  %v1594 = vadd.f32 %v1534, %v1593
  %v1595 = vand.u32 %v1149, 4294901760
  %1596 = vmatmul.f32.gmra.mxu0 %v1595
  %v1597 = vpop.f32.mrf.mxu0
  %v1598 = vadd.f32 %v1538, %v1597
  %v1599 = vand.u32 %v1152, 4294901760
  %1600 = vmatmul.f32.gmra.mxu0 %v1599
  %v1601 = vpop.f32.mrf.mxu0
  %v1602 = vadd.f32 %v1542, %v1601
  %v1603 = vand.u32 %v1155, 4294901760
  %1604 = vmatmul.f32.gmra.mxu0 %v1603
  %v1605 = vpop.f32.mrf.mxu0
  %v1606 = vadd.f32 %v1546, %v1605
  %v1607 = vand.u32 %v1158, 4294901760
  %1608 = vmatmul.f32.gmra.mxu0 %v1607
  %v1609 = vpop.f32.mrf.mxu0
  %v1610 = vadd.f32 %v1550, %v1609
  %v1611 = vand.u32 %v1161, 4294901760
  %1612 = vmatmul.f32.gmra.mxu0 %v1611
  %v1613 = vpop.f32.mrf.mxu0
  %v1614 = vadd.f32 %v1554, %v1613
  %v1615 = vand.u32 %v1164, 4294901760
  %1616 = vmatmul.f32.gmra.mxu0 %v1615
  %v1617 = vpop.f32.mrf.mxu0
  %v1618 = vadd.f32 %v1558, %v1617
  %v1619 = vand.u32 %v1167, 4294901760
  %1620 = vmatmul.f32.gmra.mxu0 %v1619
  %v1621 = vpop.f32.mrf.mxu0
  %v1622 = vadd.f32 %v1562, %v1621
  %1623 = vdwg.mxu0
  %v1624 = vrcp.pop %v1586
  %v1625 = vrcp.pop %v1590
  %v1626 = vrcp.pop %v1594
  %v1627 = vrcp.pop %v1598
  %v1628 = vrcp.pop %v1602
  %v1629 = vrcp.pop %v1606
  %v1630 = vrcp.pop %v1610
  %v1631 = vrcp.pop %v1614
  %v1632 = vrcp.pop %v1618
  %v1633 = vrcp.pop %v1622
  %v1634 = vmul.f32 %v1624, 2.0
  %v1635 = vmul.f32 %v1625, 2.0
  %v1636 = vmul.f32 %v1626, 2.0
  %v1637 = vmul.f32 %v1627, 2.0
  %v1638 = vmul.f32 %v1628, 2.0
  %v1639 = vmul.f32 %v1629, 2.0
  %v1640 = vmul.f32 %v1630, 2.0
  %v1641 = vmul.f32 %v1631, 2.0
  %v1642 = vmul.f32 %v1632, 2.0
  %v1643 = vmul.f32 %v1633, 2.0
  %v1644 = vsub.f32 0.0, %v1634
  %v1645 = vsub.f32 0.0, %v1635
  %v1646 = vsub.f32 0.0, %v1636
  %v1647 = vsub.f32 0.0, %v1637
  %v1648 = vsub.f32 0.0, %v1638
  %v1649 = vsub.f32 0.0, %v1639
  %v1650 = vsub.f32 0.0, %v1640
  %v1651 = vsub.f32 0.0, %v1641
  %v1652 = vsub.f32 0.0, %v1642
  %v1653 = vsub.f32 0.0, %v1643
  %1655 = vset.pattern.permute.xlu0 5
  %1656 = vperm.xlu0 %1655, %v1644
  %v1657 = vpop.permute.xlu0 %1656
  %1660 = vset.pattern.permute.xlu0 5
  %1661 = vperm.xlu0 %1660, %v1645
  %v1662 = vpop.permute.xlu0 %1661
  %1665 = vset.pattern.permute.xlu0 5
  %1666 = vperm.xlu0 %1665, %v1646
  %v1667 = vpop.permute.xlu0 %1666
  %1670 = vset.pattern.permute.xlu0 5
  %1671 = vperm.xlu0 %1670, %v1647
  %v1672 = vpop.permute.xlu0 %1671
  %1675 = vset.pattern.permute.xlu0 5
  %1676 = vperm.xlu0 %1675, %v1648
  %v1677 = vpop.permute.xlu0 %1676
  %1680 = vset.pattern.permute.xlu0 5
  %1681 = vperm.xlu0 %1680, %v1649
  %v1682 = vpop.permute.xlu0 %1681
  %1685 = vset.pattern.permute.xlu0 5
  %1686 = vperm.xlu0 %1685, %v1650
  %v1687 = vpop.permute.xlu0 %1686
  %1690 = vset.pattern.permute.xlu0 5
  %1691 = vperm.xlu0 %1690, %v1651
  %v1692 = vpop.permute.xlu0 %1691
  %1695 = vset.pattern.permute.xlu0 5
  %1696 = vperm.xlu0 %1695, %v1652
  %v1697 = vpop.permute.xlu0 %1696
  %1700 = vset.pattern.permute.xlu0 5
  %1701 = vperm.xlu0 %1700, %v1653
  %v1702 = vpop.permute.xlu0 %1701
  %v1704 = vmul.f32 %v1586, %v1657
  %v1705 = vmul.f32 %v1590, %v1662
  %v1706 = vmul.f32 %v1594, %v1667
  %v1707 = vmul.f32 %v1598, %v1672
  %v1708 = vmul.f32 %v1602, %v1677
  %v1709 = vmul.f32 %v1606, %v1682
  %v1710 = vmul.f32 %v1610, %v1687
  %v1711 = vmul.f32 %v1614, %v1692
  %v1712 = vmul.f32 %v1618, %v1697
  %v1713 = vmul.f32 %v1622, %v1702
  %v1714 = vsel %vm1123, %v1704, %v1586
  %v1715 = vsel %vm1123, %v1705, %v1590
  %v1716 = vsel %vm1123, %v1706, %v1594
  %v1717 = vsel %vm1123, %v1707, %v1598
  %v1718 = vsel %vm1123, %v1708, %v1602
  %v1719 = vsel %vm1123, %v1709, %v1606
  %v1720 = vsel %vm1123, %v1710, %v1610
  %v1721 = vsel %vm1123, %v1711, %v1614
  %v1722 = vsel %vm1123, %v1712, %v1618
  %v1723 = vsel %vm1123, %v1713, %v1622
  %v1724 = vsel %vm1131, %v1714, %v1022
  %v1725 = vsel %vm1131, %v1715, %v1023
  %v1726 = vsel %vm1131, %v1716, %v1024
  %v1727 = vsel %vm1131, %v1717, %v1025
  %v1728 = vsel %vm1131, %v1718, %v1026
  %v1729 = vsel %vm1131, %v1719, %v1027
  %v1730 = vsel %vm1131, %v1720, %v1028
  %v1731 = vsel %vm1131, %v1721, %v1029
  %v1732 = vsel %vm1131, %v1722, %v1030
  %v1733 = vsel %vm1131, %v1723, %v1031
  %v1734 = vperm.slane %v56, 0
  %vm1735 = vcmask 48128
  %v1737 = vsel %vm1735, %v1724, 0
  %v1740 = vsel %vm1735, %v1725, 0
  %v1743 = vsel %vm1735, %v1726, 0
  %v1746 = vsel %vm1735, %v1727, 0
  %v1749 = vsel %vm1735, %v1728, 0
  %v1752 = vsel %vm1735, %v1729, 0
  %v1755 = vsel %vm1735, %v1730, 0
  %v1758 = vsel %vm1735, %v1731, 0
  %v1761 = vsel %vm1735, %v1732, 0
  %v1764 = vsel %vm1735, %v1733, 0
  %vm1766 = vcmask 1045504
  %v1768 = vsel %vm1766, %v14, 0
  %1770 = vmatpush.msra.mxu0 0.0
  %1771 = vmatpush.msra.mxu0 0.0
  %1772 = vmatpush.msra.mxu0 0.0
  %1773 = vmatpush.msra.mxu0 0.0
  %1774 = vmatpush.msra.mxu0 0.0
  %1775 = vmatpush.msra.mxu0 0.0
  %1776 = vmatpush.msra.mxu0 0.0
  %1777 = vmatpush.msra.mxu0 0.0
  %1778 = vmatpush.msra.mxu0 0.0
  %1779 = vmatpush.msra.mxu0 0.0
  %1780 = vmatpush.msra.mxu0 0.0
  %1781 = vmatpush.msra.mxu0 0.0
  %1782 = vmatpush.msra.mxu0 0.0
  %1783 = vmatpush.msra.mxu0 0.0
  %1784 = vmatpush.msra.mxu0 0.0
  %v1785 = vand.u32 %v1768, 4294901760
  %1786 = vmatpush.msra.mxu0 %v1785
  %v1787 = vand.u32 %v1737, 4294901760
  %v1788 = vsub.f32 %v1737, %v1787
  %v1789 = vand.u32 %v1788, 4294901760
  %v1790 = vsub.f32 %v1788, %v1789
  %v1791 = vand.u32 %v1790, 4294901760
  %1792 = vmatmul.f32.gmra.mxu0 %v1791
  %v1793 = vpop.f32.mrf.mxu0
  %v1794 = vadd.f32 %v1734, %v1793
  %v1795 = vand.u32 %v1740, 4294901760
  %v1796 = vsub.f32 %v1740, %v1795
  %v1797 = vand.u32 %v1796, 4294901760
  %v1798 = vsub.f32 %v1796, %v1797
  %v1799 = vand.u32 %v1798, 4294901760
  %1800 = vmatmul.f32.gmra.mxu0 %v1799
  %v1801 = vpop.f32.mrf.mxu0
  %v1802 = vadd.f32 %v1734, %v1801
  %v1803 = vand.u32 %v1743, 4294901760
  %v1804 = vsub.f32 %v1743, %v1803
  %v1805 = vand.u32 %v1804, 4294901760
  %v1806 = vsub.f32 %v1804, %v1805
  %v1807 = vand.u32 %v1806, 4294901760
  %1808 = vmatmul.f32.gmra.mxu0 %v1807
  %v1809 = vpop.f32.mrf.mxu0
  %v1810 = vadd.f32 %v1734, %v1809
  %v1811 = vand.u32 %v1746, 4294901760
  %v1812 = vsub.f32 %v1746, %v1811
  %v1813 = vand.u32 %v1812, 4294901760
  %v1814 = vsub.f32 %v1812, %v1813
  %v1815 = vand.u32 %v1814, 4294901760
  %1816 = vmatmul.f32.gmra.mxu0 %v1815
  %v1817 = vpop.f32.mrf.mxu0
  %v1818 = vadd.f32 %v1734, %v1817
  %v1819 = vand.u32 %v1749, 4294901760
  %v1820 = vsub.f32 %v1749, %v1819
  %v1821 = vand.u32 %v1820, 4294901760
  %v1822 = vsub.f32 %v1820, %v1821
  %v1823 = vand.u32 %v1822, 4294901760
  %1824 = vmatmul.f32.gmra.mxu0 %v1823
  %v1825 = vpop.f32.mrf.mxu0
  %v1826 = vadd.f32 %v1734, %v1825
  %v1827 = vand.u32 %v1752, 4294901760
  %v1828 = vsub.f32 %v1752, %v1827
  %v1829 = vand.u32 %v1828, 4294901760
  %v1830 = vsub.f32 %v1828, %v1829
  %v1831 = vand.u32 %v1830, 4294901760
  %1832 = vmatmul.f32.gmra.mxu0 %v1831
  %v1833 = vpop.f32.mrf.mxu0
  %v1834 = vadd.f32 %v1734, %v1833
  %v1835 = vand.u32 %v1755, 4294901760
  %v1836 = vsub.f32 %v1755, %v1835
  %v1837 = vand.u32 %v1836, 4294901760
  %v1838 = vsub.f32 %v1836, %v1837
  %v1839 = vand.u32 %v1838, 4294901760
  %1840 = vmatmul.f32.gmra.mxu0 %v1839
  %v1841 = vpop.f32.mrf.mxu0
  %v1842 = vadd.f32 %v1734, %v1841
  %v1843 = vand.u32 %v1758, 4294901760
  %v1844 = vsub.f32 %v1758, %v1843
  %v1845 = vand.u32 %v1844, 4294901760
  %v1846 = vsub.f32 %v1844, %v1845
  %v1847 = vand.u32 %v1846, 4294901760
  %1848 = vmatmul.f32.gmra.mxu0 %v1847
  %v1849 = vpop.f32.mrf.mxu0
  %v1850 = vadd.f32 %v1734, %v1849
  %v1851 = vand.u32 %v1761, 4294901760
  %v1852 = vsub.f32 %v1761, %v1851
  %v1853 = vand.u32 %v1852, 4294901760
  %v1854 = vsub.f32 %v1852, %v1853
  %v1855 = vand.u32 %v1854, 4294901760
  %1856 = vmatmul.f32.gmra.mxu0 %v1855
  %v1857 = vpop.f32.mrf.mxu0
  %v1858 = vadd.f32 %v1734, %v1857
  %v1859 = vand.u32 %v1764, 4294901760
  %v1860 = vsub.f32 %v1764, %v1859
  %v1861 = vand.u32 %v1860, 4294901760
  %v1862 = vsub.f32 %v1860, %v1861
  %v1863 = vand.u32 %v1862, 4294901760
  %1864 = vmatmul.f32.gmra.mxu0 %v1863
  %v1865 = vpop.f32.mrf.mxu0
  %v1866 = vadd.f32 %v1734, %v1865
  %1867 = vdwg.mxu0
  %1868 = vmatpush.msra.mxu0 0.0
  %1869 = vmatpush.msra.mxu0 0.0
  %1870 = vmatpush.msra.mxu0 0.0
  %1871 = vmatpush.msra.mxu0 0.0
  %1872 = vmatpush.msra.mxu0 0.0
  %1873 = vmatpush.msra.mxu0 0.0
  %1874 = vmatpush.msra.mxu0 0.0
  %1875 = vmatpush.msra.mxu0 0.0
  %1876 = vmatpush.msra.mxu0 0.0
  %1877 = vmatpush.msra.mxu0 0.0
  %1878 = vmatpush.msra.mxu0 0.0
  %1879 = vmatpush.msra.mxu0 0.0
  %1880 = vmatpush.msra.mxu0 0.0
  %1881 = vmatpush.msra.mxu0 0.0
  %1882 = vmatpush.msra.mxu0 0.0
  %v1883 = vand.u32 %v1768, 4294901760
  %v1884 = vsub.f32 %v1768, %v1883
  %v1885 = vand.u32 %v1884, 4294901760
  %v1886 = vsub.f32 %v1884, %v1885
  %v1887 = vand.u32 %v1886, 4294901760
  %1888 = vmatpush.msra.mxu0 %v1887
  %v1889 = vand.u32 %v1737, 4294901760
  %1890 = vmatmul.f32.gmra.mxu0 %v1889
  %v1891 = vpop.f32.mrf.mxu0
  %v1892 = vadd.f32 %v1794, %v1891
  %v1893 = vand.u32 %v1740, 4294901760
  %1894 = vmatmul.f32.gmra.mxu0 %v1893
  %v1895 = vpop.f32.mrf.mxu0
  %v1896 = vadd.f32 %v1802, %v1895
  %v1897 = vand.u32 %v1743, 4294901760
  %1898 = vmatmul.f32.gmra.mxu0 %v1897
  %v1899 = vpop.f32.mrf.mxu0
  %v1900 = vadd.f32 %v1810, %v1899
  %v1901 = vand.u32 %v1746, 4294901760
  %1902 = vmatmul.f32.gmra.mxu0 %v1901
  %v1903 = vpop.f32.mrf.mxu0
  %v1904 = vadd.f32 %v1818, %v1903
  %v1905 = vand.u32 %v1749, 4294901760
  %1906 = vmatmul.f32.gmra.mxu0 %v1905
  %v1907 = vpop.f32.mrf.mxu0
  %v1908 = vadd.f32 %v1826, %v1907
  %v1909 = vand.u32 %v1752, 4294901760
  %1910 = vmatmul.f32.gmra.mxu0 %v1909
  %v1911 = vpop.f32.mrf.mxu0
  %v1912 = vadd.f32 %v1834, %v1911
  %v1913 = vand.u32 %v1755, 4294901760
  %1914 = vmatmul.f32.gmra.mxu0 %v1913
  %v1915 = vpop.f32.mrf.mxu0
  %v1916 = vadd.f32 %v1842, %v1915
  %v1917 = vand.u32 %v1758, 4294901760
  %1918 = vmatmul.f32.gmra.mxu0 %v1917
  %v1919 = vpop.f32.mrf.mxu0
  %v1920 = vadd.f32 %v1850, %v1919
  %v1921 = vand.u32 %v1761, 4294901760
  %1922 = vmatmul.f32.gmra.mxu0 %v1921
  %v1923 = vpop.f32.mrf.mxu0
  %v1924 = vadd.f32 %v1858, %v1923
  %v1925 = vand.u32 %v1764, 4294901760
  %1926 = vmatmul.f32.gmra.mxu0 %v1925
  %v1927 = vpop.f32.mrf.mxu0
  %v1928 = vadd.f32 %v1866, %v1927
  %1929 = vdwg.mxu0
  %1930 = vmatpush.msra.mxu0 0.0
  %1931 = vmatpush.msra.mxu0 0.0
  %1932 = vmatpush.msra.mxu0 0.0
  %1933 = vmatpush.msra.mxu0 0.0
  %1934 = vmatpush.msra.mxu0 0.0
  %1935 = vmatpush.msra.mxu0 0.0
  %1936 = vmatpush.msra.mxu0 0.0
  %1937 = vmatpush.msra.mxu0 0.0
  %1938 = vmatpush.msra.mxu0 0.0
  %1939 = vmatpush.msra.mxu0 0.0
  %1940 = vmatpush.msra.mxu0 0.0
  %1941 = vmatpush.msra.mxu0 0.0
  %1942 = vmatpush.msra.mxu0 0.0
  %1943 = vmatpush.msra.mxu0 0.0
  %1944 = vmatpush.msra.mxu0 0.0
  %v1945 = vand.u32 %v1768, 4294901760
  %v1946 = vsub.f32 %v1768, %v1945
  %1947 = vmatpush.msra.mxu0 %v1946
  %v1948 = vand.u32 %v1737, 4294901760
  %v1949 = vsub.f32 %v1737, %v1948
  %1950 = vmatmul.f32.gmra.mxu0 %v1949
  %v1951 = vpop.f32.mrf.mxu0
  %v1952 = vadd.f32 %v1892, %v1951
  %v1953 = vand.u32 %v1740, 4294901760
  %v1954 = vsub.f32 %v1740, %v1953
  %1955 = vmatmul.f32.gmra.mxu0 %v1954
  %v1956 = vpop.f32.mrf.mxu0
  %v1957 = vadd.f32 %v1896, %v1956
  %v1958 = vand.u32 %v1743, 4294901760
  %v1959 = vsub.f32 %v1743, %v1958
  %1960 = vmatmul.f32.gmra.mxu0 %v1959
  %v1961 = vpop.f32.mrf.mxu0
  %v1962 = vadd.f32 %v1900, %v1961
  %v1963 = vand.u32 %v1746, 4294901760
  %v1964 = vsub.f32 %v1746, %v1963
  %1965 = vmatmul.f32.gmra.mxu0 %v1964
  %v1966 = vpop.f32.mrf.mxu0
  %v1967 = vadd.f32 %v1904, %v1966
  %v1968 = vand.u32 %v1749, 4294901760
  %v1969 = vsub.f32 %v1749, %v1968
  %1970 = vmatmul.f32.gmra.mxu0 %v1969
  %v1971 = vpop.f32.mrf.mxu0
  %v1972 = vadd.f32 %v1908, %v1971
  %v1973 = vand.u32 %v1752, 4294901760
  %v1974 = vsub.f32 %v1752, %v1973
  %1975 = vmatmul.f32.gmra.mxu0 %v1974
  %v1976 = vpop.f32.mrf.mxu0
  %v1977 = vadd.f32 %v1912, %v1976
  %v1978 = vand.u32 %v1755, 4294901760
  %v1979 = vsub.f32 %v1755, %v1978
  %1980 = vmatmul.f32.gmra.mxu0 %v1979
  %v1981 = vpop.f32.mrf.mxu0
  %v1982 = vadd.f32 %v1916, %v1981
  %v1983 = vand.u32 %v1758, 4294901760
  %v1984 = vsub.f32 %v1758, %v1983
  %1985 = vmatmul.f32.gmra.mxu0 %v1984
  %v1986 = vpop.f32.mrf.mxu0
  %v1987 = vadd.f32 %v1920, %v1986
  %v1988 = vand.u32 %v1761, 4294901760
  %v1989 = vsub.f32 %v1761, %v1988
  %1990 = vmatmul.f32.gmra.mxu0 %v1989
  %v1991 = vpop.f32.mrf.mxu0
  %v1992 = vadd.f32 %v1924, %v1991
  %v1993 = vand.u32 %v1764, 4294901760
  %v1994 = vsub.f32 %v1764, %v1993
  %1995 = vmatmul.f32.gmra.mxu0 %v1994
  %v1996 = vpop.f32.mrf.mxu0
  %v1997 = vadd.f32 %v1928, %v1996
  %1998 = vdwg.mxu0
  %1999 = vmatpush.msra.mxu0 0.0
  %2000 = vmatpush.msra.mxu0 0.0
  %2001 = vmatpush.msra.mxu0 0.0
  %2002 = vmatpush.msra.mxu0 0.0
  %2003 = vmatpush.msra.mxu0 0.0
  %2004 = vmatpush.msra.mxu0 0.0
  %2005 = vmatpush.msra.mxu0 0.0
  %2006 = vmatpush.msra.mxu0 0.0
  %2007 = vmatpush.msra.mxu0 0.0
  %2008 = vmatpush.msra.mxu0 0.0
  %2009 = vmatpush.msra.mxu0 0.0
  %2010 = vmatpush.msra.mxu0 0.0
  %2011 = vmatpush.msra.mxu0 0.0
  %2012 = vmatpush.msra.mxu0 0.0
  %2013 = vmatpush.msra.mxu0 0.0
  %v2014 = vand.u32 %v1768, 4294901760
  %2015 = vmatpush.msra.mxu0 %v2014
  %v2016 = vand.u32 %v1737, 4294901760
  %v2017 = vsub.f32 %v1737, %v2016
  %v2018 = vand.u32 %v2017, 4294901760
  %2019 = vmatmul.f32.gmra.mxu0 %v2018
  %v2020 = vpop.f32.mrf.mxu0
  %v2021 = vadd.f32 %v1952, %v2020
  %v2022 = vand.u32 %v1740, 4294901760
  %v2023 = vsub.f32 %v1740, %v2022
  %v2024 = vand.u32 %v2023, 4294901760
  %2025 = vmatmul.f32.gmra.mxu0 %v2024
  %v2026 = vpop.f32.mrf.mxu0
  %v2027 = vadd.f32 %v1957, %v2026
  %v2028 = vand.u32 %v1743, 4294901760
  %v2029 = vsub.f32 %v1743, %v2028
  %v2030 = vand.u32 %v2029, 4294901760
  %2031 = vmatmul.f32.gmra.mxu0 %v2030
  %v2032 = vpop.f32.mrf.mxu0
  %v2033 = vadd.f32 %v1962, %v2032
  %v2034 = vand.u32 %v1746, 4294901760
  %v2035 = vsub.f32 %v1746, %v2034
  %v2036 = vand.u32 %v2035, 4294901760
  %2037 = vmatmul.f32.gmra.mxu0 %v2036
  %v2038 = vpop.f32.mrf.mxu0
  %v2039 = vadd.f32 %v1967, %v2038
  %v2040 = vand.u32 %v1749, 4294901760
  %v2041 = vsub.f32 %v1749, %v2040
  %v2042 = vand.u32 %v2041, 4294901760
  %2043 = vmatmul.f32.gmra.mxu0 %v2042
  %v2044 = vpop.f32.mrf.mxu0
  %v2045 = vadd.f32 %v1972, %v2044
  %v2046 = vand.u32 %v1752, 4294901760
  %v2047 = vsub.f32 %v1752, %v2046
  %v2048 = vand.u32 %v2047, 4294901760
  %2049 = vmatmul.f32.gmra.mxu0 %v2048
  %v2050 = vpop.f32.mrf.mxu0
  %v2051 = vadd.f32 %v1977, %v2050
  %v2052 = vand.u32 %v1755, 4294901760
  %v2053 = vsub.f32 %v1755, %v2052
  %v2054 = vand.u32 %v2053, 4294901760
  %2055 = vmatmul.f32.gmra.mxu0 %v2054
  %v2056 = vpop.f32.mrf.mxu0
  %v2057 = vadd.f32 %v1982, %v2056
  %v2058 = vand.u32 %v1758, 4294901760
  %v2059 = vsub.f32 %v1758, %v2058
  %v2060 = vand.u32 %v2059, 4294901760
  %2061 = vmatmul.f32.gmra.mxu0 %v2060
  %v2062 = vpop.f32.mrf.mxu0
  %v2063 = vadd.f32 %v1987, %v2062
  %v2064 = vand.u32 %v1761, 4294901760
  %v2065 = vsub.f32 %v1761, %v2064
  %v2066 = vand.u32 %v2065, 4294901760
  %2067 = vmatmul.f32.gmra.mxu0 %v2066
  %v2068 = vpop.f32.mrf.mxu0
  %v2069 = vadd.f32 %v1992, %v2068
  %v2070 = vand.u32 %v1764, 4294901760
  %v2071 = vsub.f32 %v1764, %v2070
  %v2072 = vand.u32 %v2071, 4294901760
  %2073 = vmatmul.f32.gmra.mxu0 %v2072
  %v2074 = vpop.f32.mrf.mxu0
  %v2075 = vadd.f32 %v1997, %v2074
  %2076 = vdwg.mxu0
  %2077 = vmatpush.msra.mxu0 0.0
  %2078 = vmatpush.msra.mxu0 0.0
  %2079 = vmatpush.msra.mxu0 0.0
  %2080 = vmatpush.msra.mxu0 0.0
  %2081 = vmatpush.msra.mxu0 0.0
  %2082 = vmatpush.msra.mxu0 0.0
  %2083 = vmatpush.msra.mxu0 0.0
  %2084 = vmatpush.msra.mxu0 0.0
  %2085 = vmatpush.msra.mxu0 0.0
  %2086 = vmatpush.msra.mxu0 0.0
  %2087 = vmatpush.msra.mxu0 0.0
  %2088 = vmatpush.msra.mxu0 0.0
  %2089 = vmatpush.msra.mxu0 0.0
  %2090 = vmatpush.msra.mxu0 0.0
  %2091 = vmatpush.msra.mxu0 0.0
  %v2092 = vand.u32 %v1768, 4294901760
  %v2093 = vsub.f32 %v1768, %v2092
  %v2094 = vand.u32 %v2093, 4294901760
  %2095 = vmatpush.msra.mxu0 %v2094
  %v2096 = vand.u32 %v1737, 4294901760
  %2097 = vmatmul.f32.gmra.mxu0 %v2096
  %v2098 = vpop.f32.mrf.mxu0
  %v2099 = vadd.f32 %v2021, %v2098
  %v2100 = vand.u32 %v1740, 4294901760
  %2101 = vmatmul.f32.gmra.mxu0 %v2100
  %v2102 = vpop.f32.mrf.mxu0
  %v2103 = vadd.f32 %v2027, %v2102
  %v2104 = vand.u32 %v1743, 4294901760
  %2105 = vmatmul.f32.gmra.mxu0 %v2104
  %v2106 = vpop.f32.mrf.mxu0
  %v2107 = vadd.f32 %v2033, %v2106
  %v2108 = vand.u32 %v1746, 4294901760
  %2109 = vmatmul.f32.gmra.mxu0 %v2108
  %v2110 = vpop.f32.mrf.mxu0
  %v2111 = vadd.f32 %v2039, %v2110
  %v2112 = vand.u32 %v1749, 4294901760
  %2113 = vmatmul.f32.gmra.mxu0 %v2112
  %v2114 = vpop.f32.mrf.mxu0
  %v2115 = vadd.f32 %v2045, %v2114
  %v2116 = vand.u32 %v1752, 4294901760
  %2117 = vmatmul.f32.gmra.mxu0 %v2116
  %v2118 = vpop.f32.mrf.mxu0
  %v2119 = vadd.f32 %v2051, %v2118
  %v2120 = vand.u32 %v1755, 4294901760
  %2121 = vmatmul.f32.gmra.mxu0 %v2120
  %v2122 = vpop.f32.mrf.mxu0
  %v2123 = vadd.f32 %v2057, %v2122
  %v2124 = vand.u32 %v1758, 4294901760
  %2125 = vmatmul.f32.gmra.mxu0 %v2124
  %v2126 = vpop.f32.mrf.mxu0
  %v2127 = vadd.f32 %v2063, %v2126
  %v2128 = vand.u32 %v1761, 4294901760
  %2129 = vmatmul.f32.gmra.mxu0 %v2128
  %v2130 = vpop.f32.mrf.mxu0
  %v2131 = vadd.f32 %v2069, %v2130
  %v2132 = vand.u32 %v1764, 4294901760
  %2133 = vmatmul.f32.gmra.mxu0 %v2132
  %v2134 = vpop.f32.mrf.mxu0
  %v2135 = vadd.f32 %v2075, %v2134
  %2136 = vdwg.mxu0
  %2137 = vmatpush.msra.mxu0 0.0
  %2138 = vmatpush.msra.mxu0 0.0
  %2139 = vmatpush.msra.mxu0 0.0
  %2140 = vmatpush.msra.mxu0 0.0
  %2141 = vmatpush.msra.mxu0 0.0
  %2142 = vmatpush.msra.mxu0 0.0
  %2143 = vmatpush.msra.mxu0 0.0
  %2144 = vmatpush.msra.mxu0 0.0
  %2145 = vmatpush.msra.mxu0 0.0
  %2146 = vmatpush.msra.mxu0 0.0
  %2147 = vmatpush.msra.mxu0 0.0
  %2148 = vmatpush.msra.mxu0 0.0
  %2149 = vmatpush.msra.mxu0 0.0
  %2150 = vmatpush.msra.mxu0 0.0
  %2151 = vmatpush.msra.mxu0 0.0
  %v2152 = vand.u32 %v1768, 4294901760
  %2153 = vmatpush.msra.mxu0 %v2152
  %v2154 = vand.u32 %v1737, 4294901760
  %2155 = vmatmul.f32.gmra.mxu0 %v2154
  %v2156 = vpop.f32.mrf.mxu0
  %v2157 = vadd.f32 %v2099, %v2156
  %v2158 = vand.u32 %v1740, 4294901760
  %2159 = vmatmul.f32.gmra.mxu0 %v2158
  %v2160 = vpop.f32.mrf.mxu0
  %v2161 = vadd.f32 %v2103, %v2160
  %v2162 = vand.u32 %v1743, 4294901760
  %2163 = vmatmul.f32.gmra.mxu0 %v2162
  %v2164 = vpop.f32.mrf.mxu0
  %v2165 = vadd.f32 %v2107, %v2164
  %v2166 = vand.u32 %v1746, 4294901760
  %2167 = vmatmul.f32.gmra.mxu0 %v2166
  %v2168 = vpop.f32.mrf.mxu0
  %v2169 = vadd.f32 %v2111, %v2168
  %v2170 = vand.u32 %v1749, 4294901760
  %2171 = vmatmul.f32.gmra.mxu0 %v2170
  %v2172 = vpop.f32.mrf.mxu0
  %v2173 = vadd.f32 %v2115, %v2172
  %v2174 = vand.u32 %v1752, 4294901760
  %2175 = vmatmul.f32.gmra.mxu0 %v2174
  %v2176 = vpop.f32.mrf.mxu0
  %v2177 = vadd.f32 %v2119, %v2176
  %v2178 = vand.u32 %v1755, 4294901760
  %2179 = vmatmul.f32.gmra.mxu0 %v2178
  %v2180 = vpop.f32.mrf.mxu0
  %v2181 = vadd.f32 %v2123, %v2180
  %v2182 = vand.u32 %v1758, 4294901760
  %2183 = vmatmul.f32.gmra.mxu0 %v2182
  %v2184 = vpop.f32.mrf.mxu0
  %v2185 = vadd.f32 %v2127, %v2184
  %v2186 = vand.u32 %v1761, 4294901760
  %2187 = vmatmul.f32.gmra.mxu0 %v2186
  %v2188 = vpop.f32.mrf.mxu0
  %v2189 = vadd.f32 %v2131, %v2188
  %v2190 = vand.u32 %v1764, 4294901760
  %2191 = vmatmul.f32.gmra.mxu0 %v2190
  %v2192 = vpop.f32.mrf.mxu0
  %v2193 = vadd.f32 %v2135, %v2192
  %2194 = vdwg.mxu0
  %v2195 = vmax.f32 %v2157, 0.0
  %v2196 = vmax.f32 %v2161, 0.0
  %v2197 = vmax.f32 %v2165, 0.0
  %v2198 = vmax.f32 %v2169, 0.0
  %v2199 = vmax.f32 %v2173, 0.0
  %v2200 = vmax.f32 %v2177, 0.0
  %v2201 = vmax.f32 %v2181, 0.0
  %v2202 = vmax.f32 %v2185, 0.0
  %v2203 = vmax.f32 %v2189, 0.0
  %v2204 = vmax.f32 %v2193, 0.0
  %v2205 = vperm.slane %v57, 0
  %vm2206 = vcmask 130048
  %v2208 = vsel %vm2206, %v2195, 0
  %v2211 = vsel %vm2206, %v2196, 0
  %v2214 = vsel %vm2206, %v2197, 0
  %v2217 = vsel %vm2206, %v2198, 0
  %v2220 = vsel %vm2206, %v2199, 0
  %v2223 = vsel %vm2206, %v2200, 0
  %v2226 = vsel %vm2206, %v2201, 0
  %v2229 = vsel %vm2206, %v2202, 0
  %v2232 = vsel %vm2206, %v2203, 0
  %v2235 = vsel %vm2206, %v2204, 0
  %2237 = vmatpush.msra.mxu0 0.0
  %2238 = vmatpush.msra.mxu0 0.0
  %2239 = vmatpush.msra.mxu0 0.0
  %2240 = vmatpush.msra.mxu0 0.0
  %2241 = vmatpush.msra.mxu0 0.0
  %2242 = vmatpush.msra.mxu0 0.0
  %2243 = vmatpush.msra.mxu0 0.0
  %2244 = vmatpush.msra.mxu0 0.0
  %2245 = vmatpush.msra.mxu0 0.0
  %2246 = vmatpush.msra.mxu0 0.0
  %2247 = vmatpush.msra.mxu0 0.0
  %2248 = vmatpush.msra.mxu0 0.0
  %2249 = vmatpush.msra.mxu0 0.0
  %2250 = vmatpush.msra.mxu0 0.0
  %v2251 = vand.u32 %v28, 4294901760
  %2252 = vmatpush.msra.mxu0 %v2251
  %v2253 = vand.u32 %v27, 4294901760
  %2254 = vmatpush.msra.mxu0 %v2253
  %v2255 = vand.u32 %v2208, 4294901760
  %v2256 = vsub.f32 %v2208, %v2255
  %v2257 = vand.u32 %v2256, 4294901760
  %v2258 = vsub.f32 %v2256, %v2257
  %v2259 = vand.u32 %v2258, 4294901760
  %2260 = vmatmul.f32.gmra.mxu0 %v2259
  %v2261 = vpop.f32.mrf.mxu0
  %v2262 = vadd.f32 %v2205, %v2261
  %v2263 = vand.u32 %v2211, 4294901760
  %v2264 = vsub.f32 %v2211, %v2263
  %v2265 = vand.u32 %v2264, 4294901760
  %v2266 = vsub.f32 %v2264, %v2265
  %v2267 = vand.u32 %v2266, 4294901760
  %2268 = vmatmul.f32.gmra.mxu0 %v2267
  %v2269 = vpop.f32.mrf.mxu0
  %v2270 = vadd.f32 %v2205, %v2269
  %v2271 = vand.u32 %v2214, 4294901760
  %v2272 = vsub.f32 %v2214, %v2271
  %v2273 = vand.u32 %v2272, 4294901760
  %v2274 = vsub.f32 %v2272, %v2273
  %v2275 = vand.u32 %v2274, 4294901760
  %2276 = vmatmul.f32.gmra.mxu0 %v2275
  %v2277 = vpop.f32.mrf.mxu0
  %v2278 = vadd.f32 %v2205, %v2277
  %v2279 = vand.u32 %v2217, 4294901760
  %v2280 = vsub.f32 %v2217, %v2279
  %v2281 = vand.u32 %v2280, 4294901760
  %v2282 = vsub.f32 %v2280, %v2281
  %v2283 = vand.u32 %v2282, 4294901760
  %2284 = vmatmul.f32.gmra.mxu0 %v2283
  %v2285 = vpop.f32.mrf.mxu0
  %v2286 = vadd.f32 %v2205, %v2285
  %v2287 = vand.u32 %v2220, 4294901760
  %v2288 = vsub.f32 %v2220, %v2287
  %v2289 = vand.u32 %v2288, 4294901760
  %v2290 = vsub.f32 %v2288, %v2289
  %v2291 = vand.u32 %v2290, 4294901760
  %2292 = vmatmul.f32.gmra.mxu0 %v2291
  %v2293 = vpop.f32.mrf.mxu0
  %v2294 = vadd.f32 %v2205, %v2293
  %v2295 = vand.u32 %v2223, 4294901760
  %v2296 = vsub.f32 %v2223, %v2295
  %v2297 = vand.u32 %v2296, 4294901760
  %v2298 = vsub.f32 %v2296, %v2297
  %v2299 = vand.u32 %v2298, 4294901760
  %2300 = vmatmul.f32.gmra.mxu0 %v2299
  %v2301 = vpop.f32.mrf.mxu0
  %v2302 = vadd.f32 %v2205, %v2301
  %v2303 = vand.u32 %v2226, 4294901760
  %v2304 = vsub.f32 %v2226, %v2303
  %v2305 = vand.u32 %v2304, 4294901760
  %v2306 = vsub.f32 %v2304, %v2305
  %v2307 = vand.u32 %v2306, 4294901760
  %2308 = vmatmul.f32.gmra.mxu0 %v2307
  %v2309 = vpop.f32.mrf.mxu0
  %v2310 = vadd.f32 %v2205, %v2309
  %v2311 = vand.u32 %v2229, 4294901760
  %v2312 = vsub.f32 %v2229, %v2311
  %v2313 = vand.u32 %v2312, 4294901760
  %v2314 = vsub.f32 %v2312, %v2313
  %v2315 = vand.u32 %v2314, 4294901760
  %2316 = vmatmul.f32.gmra.mxu0 %v2315
  %v2317 = vpop.f32.mrf.mxu0
  %v2318 = vadd.f32 %v2205, %v2317
  %v2319 = vand.u32 %v2232, 4294901760
  %v2320 = vsub.f32 %v2232, %v2319
  %v2321 = vand.u32 %v2320, 4294901760
  %v2322 = vsub.f32 %v2320, %v2321
  %v2323 = vand.u32 %v2322, 4294901760
  %2324 = vmatmul.f32.gmra.mxu0 %v2323
  %v2325 = vpop.f32.mrf.mxu0
  %v2326 = vadd.f32 %v2205, %v2325
  %v2327 = vand.u32 %v2235, 4294901760
  %v2328 = vsub.f32 %v2235, %v2327
  %v2329 = vand.u32 %v2328, 4294901760
  %v2330 = vsub.f32 %v2328, %v2329
  %v2331 = vand.u32 %v2330, 4294901760
  %2332 = vmatmul.f32.gmra.mxu0 %v2331
  %v2333 = vpop.f32.mrf.mxu0
  %v2334 = vadd.f32 %v2205, %v2333
  %2335 = vdwg.mxu0
  %2336 = vmatpush.msra.mxu0 0.0
  %2337 = vmatpush.msra.mxu0 0.0
  %2338 = vmatpush.msra.mxu0 0.0
  %2339 = vmatpush.msra.mxu0 0.0
  %2340 = vmatpush.msra.mxu0 0.0
  %2341 = vmatpush.msra.mxu0 0.0
  %2342 = vmatpush.msra.mxu0 0.0
  %2343 = vmatpush.msra.mxu0 0.0
  %2344 = vmatpush.msra.mxu0 0.0
  %2345 = vmatpush.msra.mxu0 0.0
  %2346 = vmatpush.msra.mxu0 0.0
  %2347 = vmatpush.msra.mxu0 0.0
  %2348 = vmatpush.msra.mxu0 0.0
  %2349 = vmatpush.msra.mxu0 0.0
  %v2350 = vand.u32 %v28, 4294901760
  %v2351 = vsub.f32 %v28, %v2350
  %v2352 = vand.u32 %v2351, 4294901760
  %v2353 = vsub.f32 %v2351, %v2352
  %v2354 = vand.u32 %v2353, 4294901760
  %2355 = vmatpush.msra.mxu0 %v2354
  %v2356 = vand.u32 %v27, 4294901760
  %v2357 = vsub.f32 %v27, %v2356
  %v2358 = vand.u32 %v2357, 4294901760
  %v2359 = vsub.f32 %v2357, %v2358
  %v2360 = vand.u32 %v2359, 4294901760
  %2361 = vmatpush.msra.mxu0 %v2360
  %v2362 = vand.u32 %v2208, 4294901760
  %2363 = vmatmul.f32.gmra.mxu0 %v2362
  %v2364 = vpop.f32.mrf.mxu0
  %v2365 = vadd.f32 %v2262, %v2364
  %v2366 = vand.u32 %v2211, 4294901760
  %2367 = vmatmul.f32.gmra.mxu0 %v2366
  %v2368 = vpop.f32.mrf.mxu0
  %v2369 = vadd.f32 %v2270, %v2368
  %v2370 = vand.u32 %v2214, 4294901760
  %2371 = vmatmul.f32.gmra.mxu0 %v2370
  %v2372 = vpop.f32.mrf.mxu0
  %v2373 = vadd.f32 %v2278, %v2372
  %v2374 = vand.u32 %v2217, 4294901760
  %2375 = vmatmul.f32.gmra.mxu0 %v2374
  %v2376 = vpop.f32.mrf.mxu0
  %v2377 = vadd.f32 %v2286, %v2376
  %v2378 = vand.u32 %v2220, 4294901760
  %2379 = vmatmul.f32.gmra.mxu0 %v2378
  %v2380 = vpop.f32.mrf.mxu0
  %v2381 = vadd.f32 %v2294, %v2380
  %v2382 = vand.u32 %v2223, 4294901760
  %2383 = vmatmul.f32.gmra.mxu0 %v2382
  %v2384 = vpop.f32.mrf.mxu0
  %v2385 = vadd.f32 %v2302, %v2384
  %v2386 = vand.u32 %v2226, 4294901760
  %2387 = vmatmul.f32.gmra.mxu0 %v2386
  %v2388 = vpop.f32.mrf.mxu0
  %v2389 = vadd.f32 %v2310, %v2388
  %v2390 = vand.u32 %v2229, 4294901760
  %2391 = vmatmul.f32.gmra.mxu0 %v2390
  %v2392 = vpop.f32.mrf.mxu0
  %v2393 = vadd.f32 %v2318, %v2392
  %v2394 = vand.u32 %v2232, 4294901760
  %2395 = vmatmul.f32.gmra.mxu0 %v2394
  %v2396 = vpop.f32.mrf.mxu0
  %v2397 = vadd.f32 %v2326, %v2396
  %v2398 = vand.u32 %v2235, 4294901760
  %2399 = vmatmul.f32.gmra.mxu0 %v2398
  %v2400 = vpop.f32.mrf.mxu0
  %v2401 = vadd.f32 %v2334, %v2400
  %2402 = vdwg.mxu0
  %2403 = vmatpush.msra.mxu0 0.0
  %2404 = vmatpush.msra.mxu0 0.0
  %2405 = vmatpush.msra.mxu0 0.0
  %2406 = vmatpush.msra.mxu0 0.0
  %2407 = vmatpush.msra.mxu0 0.0
  %2408 = vmatpush.msra.mxu0 0.0
  %2409 = vmatpush.msra.mxu0 0.0
  %2410 = vmatpush.msra.mxu0 0.0
  %2411 = vmatpush.msra.mxu0 0.0
  %2412 = vmatpush.msra.mxu0 0.0
  %2413 = vmatpush.msra.mxu0 0.0
  %2414 = vmatpush.msra.mxu0 0.0
  %2415 = vmatpush.msra.mxu0 0.0
  %2416 = vmatpush.msra.mxu0 0.0
  %v2417 = vand.u32 %v28, 4294901760
  %v2418 = vsub.f32 %v28, %v2417
  %2419 = vmatpush.msra.mxu0 %v2418
  %v2420 = vand.u32 %v27, 4294901760
  %v2421 = vsub.f32 %v27, %v2420
  %2422 = vmatpush.msra.mxu0 %v2421
  %v2423 = vand.u32 %v2208, 4294901760
  %v2424 = vsub.f32 %v2208, %v2423
  %2425 = vmatmul.f32.gmra.mxu0 %v2424
  %v2426 = vpop.f32.mrf.mxu0
  %v2427 = vadd.f32 %v2365, %v2426
  %v2428 = vand.u32 %v2211, 4294901760
  %v2429 = vsub.f32 %v2211, %v2428
  %2430 = vmatmul.f32.gmra.mxu0 %v2429
  %v2431 = vpop.f32.mrf.mxu0
  %v2432 = vadd.f32 %v2369, %v2431
  %v2433 = vand.u32 %v2214, 4294901760
  %v2434 = vsub.f32 %v2214, %v2433
  %2435 = vmatmul.f32.gmra.mxu0 %v2434
  %v2436 = vpop.f32.mrf.mxu0
  %v2437 = vadd.f32 %v2373, %v2436
  %v2438 = vand.u32 %v2217, 4294901760
  %v2439 = vsub.f32 %v2217, %v2438
  %2440 = vmatmul.f32.gmra.mxu0 %v2439
  %v2441 = vpop.f32.mrf.mxu0
  %v2442 = vadd.f32 %v2377, %v2441
  %v2443 = vand.u32 %v2220, 4294901760
  %v2444 = vsub.f32 %v2220, %v2443
  %2445 = vmatmul.f32.gmra.mxu0 %v2444
  %v2446 = vpop.f32.mrf.mxu0
  %v2447 = vadd.f32 %v2381, %v2446
  %v2448 = vand.u32 %v2223, 4294901760
  %v2449 = vsub.f32 %v2223, %v2448
  %2450 = vmatmul.f32.gmra.mxu0 %v2449
  %v2451 = vpop.f32.mrf.mxu0
  %v2452 = vadd.f32 %v2385, %v2451
  %v2453 = vand.u32 %v2226, 4294901760
  %v2454 = vsub.f32 %v2226, %v2453
  %2455 = vmatmul.f32.gmra.mxu0 %v2454
  %v2456 = vpop.f32.mrf.mxu0
  %v2457 = vadd.f32 %v2389, %v2456
  %v2458 = vand.u32 %v2229, 4294901760
  %v2459 = vsub.f32 %v2229, %v2458
  %2460 = vmatmul.f32.gmra.mxu0 %v2459
  %v2461 = vpop.f32.mrf.mxu0
  %v2462 = vadd.f32 %v2393, %v2461
  %v2463 = vand.u32 %v2232, 4294901760
  %v2464 = vsub.f32 %v2232, %v2463
  %2465 = vmatmul.f32.gmra.mxu0 %v2464
  %v2466 = vpop.f32.mrf.mxu0
  %v2467 = vadd.f32 %v2397, %v2466
  %v2468 = vand.u32 %v2235, 4294901760
  %v2469 = vsub.f32 %v2235, %v2468
  %2470 = vmatmul.f32.gmra.mxu0 %v2469
  %v2471 = vpop.f32.mrf.mxu0
  %v2472 = vadd.f32 %v2401, %v2471
  %2473 = vdwg.mxu0
  %2474 = vmatpush.msra.mxu0 0.0
  %2475 = vmatpush.msra.mxu0 0.0
  %2476 = vmatpush.msra.mxu0 0.0
  %2477 = vmatpush.msra.mxu0 0.0
  %2478 = vmatpush.msra.mxu0 0.0
  %2479 = vmatpush.msra.mxu0 0.0
  %2480 = vmatpush.msra.mxu0 0.0
  %2481 = vmatpush.msra.mxu0 0.0
  %2482 = vmatpush.msra.mxu0 0.0
  %2483 = vmatpush.msra.mxu0 0.0
  %2484 = vmatpush.msra.mxu0 0.0
  %2485 = vmatpush.msra.mxu0 0.0
  %2486 = vmatpush.msra.mxu0 0.0
  %2487 = vmatpush.msra.mxu0 0.0
  %v2488 = vand.u32 %v28, 4294901760
  %2489 = vmatpush.msra.mxu0 %v2488
  %v2490 = vand.u32 %v27, 4294901760
  %2491 = vmatpush.msra.mxu0 %v2490
  %v2492 = vand.u32 %v2208, 4294901760
  %v2493 = vsub.f32 %v2208, %v2492
  %v2494 = vand.u32 %v2493, 4294901760
  %2495 = vmatmul.f32.gmra.mxu0 %v2494
  %v2496 = vpop.f32.mrf.mxu0
  %v2497 = vadd.f32 %v2427, %v2496
  %v2498 = vand.u32 %v2211, 4294901760
  %v2499 = vsub.f32 %v2211, %v2498
  %v2500 = vand.u32 %v2499, 4294901760
  %2501 = vmatmul.f32.gmra.mxu0 %v2500
  %v2502 = vpop.f32.mrf.mxu0
  %v2503 = vadd.f32 %v2432, %v2502
  %v2504 = vand.u32 %v2214, 4294901760
  %v2505 = vsub.f32 %v2214, %v2504
  %v2506 = vand.u32 %v2505, 4294901760
  %2507 = vmatmul.f32.gmra.mxu0 %v2506
  %v2508 = vpop.f32.mrf.mxu0
  %v2509 = vadd.f32 %v2437, %v2508
  %v2510 = vand.u32 %v2217, 4294901760
  %v2511 = vsub.f32 %v2217, %v2510
  %v2512 = vand.u32 %v2511, 4294901760
  %2513 = vmatmul.f32.gmra.mxu0 %v2512
  %v2514 = vpop.f32.mrf.mxu0
  %v2515 = vadd.f32 %v2442, %v2514
  %v2516 = vand.u32 %v2220, 4294901760
  %v2517 = vsub.f32 %v2220, %v2516
  %v2518 = vand.u32 %v2517, 4294901760
  %2519 = vmatmul.f32.gmra.mxu0 %v2518
  %v2520 = vpop.f32.mrf.mxu0
  %v2521 = vadd.f32 %v2447, %v2520
  %v2522 = vand.u32 %v2223, 4294901760
  %v2523 = vsub.f32 %v2223, %v2522
  %v2524 = vand.u32 %v2523, 4294901760
  %2525 = vmatmul.f32.gmra.mxu0 %v2524
  %v2526 = vpop.f32.mrf.mxu0
  %v2527 = vadd.f32 %v2452, %v2526
  %v2528 = vand.u32 %v2226, 4294901760
  %v2529 = vsub.f32 %v2226, %v2528
  %v2530 = vand.u32 %v2529, 4294901760
  %2531 = vmatmul.f32.gmra.mxu0 %v2530
  %v2532 = vpop.f32.mrf.mxu0
  %v2533 = vadd.f32 %v2457, %v2532
  %v2534 = vand.u32 %v2229, 4294901760
  %v2535 = vsub.f32 %v2229, %v2534
  %v2536 = vand.u32 %v2535, 4294901760
  %2537 = vmatmul.f32.gmra.mxu0 %v2536
  %v2538 = vpop.f32.mrf.mxu0
  %v2539 = vadd.f32 %v2462, %v2538
  %v2540 = vand.u32 %v2232, 4294901760
  %v2541 = vsub.f32 %v2232, %v2540
  %v2542 = vand.u32 %v2541, 4294901760
  %2543 = vmatmul.f32.gmra.mxu0 %v2542
  %v2544 = vpop.f32.mrf.mxu0
  %v2545 = vadd.f32 %v2467, %v2544
  %v2546 = vand.u32 %v2235, 4294901760
  %v2547 = vsub.f32 %v2235, %v2546
  %v2548 = vand.u32 %v2547, 4294901760
  %2549 = vmatmul.f32.gmra.mxu0 %v2548
  %v2550 = vpop.f32.mrf.mxu0
  %v2551 = vadd.f32 %v2472, %v2550
  %2552 = vdwg.mxu0
  %2553 = vmatpush.msra.mxu0 0.0
  %2554 = vmatpush.msra.mxu0 0.0
  %2555 = vmatpush.msra.mxu0 0.0
  %2556 = vmatpush.msra.mxu0 0.0
  %2557 = vmatpush.msra.mxu0 0.0
  %2558 = vmatpush.msra.mxu0 0.0
  %2559 = vmatpush.msra.mxu0 0.0
  %2560 = vmatpush.msra.mxu0 0.0
  %2561 = vmatpush.msra.mxu0 0.0
  %2562 = vmatpush.msra.mxu0 0.0
  %2563 = vmatpush.msra.mxu0 0.0
  %2564 = vmatpush.msra.mxu0 0.0
  %2565 = vmatpush.msra.mxu0 0.0
  %2566 = vmatpush.msra.mxu0 0.0
  %v2567 = vand.u32 %v28, 4294901760
  %v2568 = vsub.f32 %v28, %v2567
  %v2569 = vand.u32 %v2568, 4294901760
  %2570 = vmatpush.msra.mxu0 %v2569
  %v2571 = vand.u32 %v27, 4294901760
  %v2572 = vsub.f32 %v27, %v2571
  %v2573 = vand.u32 %v2572, 4294901760
  %2574 = vmatpush.msra.mxu0 %v2573
  %v2575 = vand.u32 %v2208, 4294901760
  %2576 = vmatmul.f32.gmra.mxu0 %v2575
  %v2577 = vpop.f32.mrf.mxu0
  %v2578 = vadd.f32 %v2497, %v2577
  %v2579 = vand.u32 %v2211, 4294901760
  %2580 = vmatmul.f32.gmra.mxu0 %v2579
  %v2581 = vpop.f32.mrf.mxu0
  %v2582 = vadd.f32 %v2503, %v2581
  %v2583 = vand.u32 %v2214, 4294901760
  %2584 = vmatmul.f32.gmra.mxu0 %v2583
  %v2585 = vpop.f32.mrf.mxu0
  %v2586 = vadd.f32 %v2509, %v2585
  %v2587 = vand.u32 %v2217, 4294901760
  %2588 = vmatmul.f32.gmra.mxu0 %v2587
  %v2589 = vpop.f32.mrf.mxu0
  %v2590 = vadd.f32 %v2515, %v2589
  %v2591 = vand.u32 %v2220, 4294901760
  %2592 = vmatmul.f32.gmra.mxu0 %v2591
  %v2593 = vpop.f32.mrf.mxu0
  %v2594 = vadd.f32 %v2521, %v2593
  %v2595 = vand.u32 %v2223, 4294901760
  %2596 = vmatmul.f32.gmra.mxu0 %v2595
  %v2597 = vpop.f32.mrf.mxu0
  %v2598 = vadd.f32 %v2527, %v2597
  %v2599 = vand.u32 %v2226, 4294901760
  %2600 = vmatmul.f32.gmra.mxu0 %v2599
  %v2601 = vpop.f32.mrf.mxu0
  %v2602 = vadd.f32 %v2533, %v2601
  %v2603 = vand.u32 %v2229, 4294901760
  %2604 = vmatmul.f32.gmra.mxu0 %v2603
  %v2605 = vpop.f32.mrf.mxu0
  %v2606 = vadd.f32 %v2539, %v2605
  %v2607 = vand.u32 %v2232, 4294901760
  %2608 = vmatmul.f32.gmra.mxu0 %v2607
  %v2609 = vpop.f32.mrf.mxu0
  %v2610 = vadd.f32 %v2545, %v2609
  %v2611 = vand.u32 %v2235, 4294901760
  %2612 = vmatmul.f32.gmra.mxu0 %v2611
  %v2613 = vpop.f32.mrf.mxu0
  %v2614 = vadd.f32 %v2551, %v2613
  %2615 = vdwg.mxu0
  %2616 = vmatpush.msra.mxu0 0.0
  %2617 = vmatpush.msra.mxu0 0.0
  %2618 = vmatpush.msra.mxu0 0.0
  %2619 = vmatpush.msra.mxu0 0.0
  %2620 = vmatpush.msra.mxu0 0.0
  %2621 = vmatpush.msra.mxu0 0.0
  %2622 = vmatpush.msra.mxu0 0.0
  %2623 = vmatpush.msra.mxu0 0.0
  %2624 = vmatpush.msra.mxu0 0.0
  %2625 = vmatpush.msra.mxu0 0.0
  %2626 = vmatpush.msra.mxu0 0.0
  %2627 = vmatpush.msra.mxu0 0.0
  %2628 = vmatpush.msra.mxu0 0.0
  %2629 = vmatpush.msra.mxu0 0.0
  %v2630 = vand.u32 %v28, 4294901760
  %2631 = vmatpush.msra.mxu0 %v2630
  %v2632 = vand.u32 %v27, 4294901760
  %2633 = vmatpush.msra.mxu0 %v2632
  %v2634 = vand.u32 %v2208, 4294901760
  %2635 = vmatmul.f32.gmra.mxu0 %v2634
  %v2636 = vpop.f32.mrf.mxu0
  %v2637 = vadd.f32 %v2578, %v2636
  %v2638 = vand.u32 %v2211, 4294901760
  %2639 = vmatmul.f32.gmra.mxu0 %v2638
  %v2640 = vpop.f32.mrf.mxu0
  %v2641 = vadd.f32 %v2582, %v2640
  %v2642 = vand.u32 %v2214, 4294901760
  %2643 = vmatmul.f32.gmra.mxu0 %v2642
  %v2644 = vpop.f32.mrf.mxu0
  %v2645 = vadd.f32 %v2586, %v2644
  %v2646 = vand.u32 %v2217, 4294901760
  %2647 = vmatmul.f32.gmra.mxu0 %v2646
  %v2648 = vpop.f32.mrf.mxu0
  %v2649 = vadd.f32 %v2590, %v2648
  %v2650 = vand.u32 %v2220, 4294901760
  %2651 = vmatmul.f32.gmra.mxu0 %v2650
  %v2652 = vpop.f32.mrf.mxu0
  %v2653 = vadd.f32 %v2594, %v2652
  %v2654 = vand.u32 %v2223, 4294901760
  %2655 = vmatmul.f32.gmra.mxu0 %v2654
  %v2656 = vpop.f32.mrf.mxu0
  %v2657 = vadd.f32 %v2598, %v2656
  %v2658 = vand.u32 %v2226, 4294901760
  %2659 = vmatmul.f32.gmra.mxu0 %v2658
  %v2660 = vpop.f32.mrf.mxu0
  %v2661 = vadd.f32 %v2602, %v2660
  %v2662 = vand.u32 %v2229, 4294901760
  %2663 = vmatmul.f32.gmra.mxu0 %v2662
  %v2664 = vpop.f32.mrf.mxu0
  %v2665 = vadd.f32 %v2606, %v2664
  %v2666 = vand.u32 %v2232, 4294901760
  %2667 = vmatmul.f32.gmra.mxu0 %v2666
  %v2668 = vpop.f32.mrf.mxu0
  %v2669 = vadd.f32 %v2610, %v2668
  %v2670 = vand.u32 %v2235, 4294901760
  %2671 = vmatmul.f32.gmra.mxu0 %v2670
  %v2672 = vpop.f32.mrf.mxu0
  %v2673 = vadd.f32 %v2614, %v2672
  %2674 = vdwg.mxu0
  %v2675 = vmax.f32 %v2637, 0.0
  %v2676 = vmax.f32 %v2641, 0.0
  %v2677 = vmax.f32 %v2645, 0.0
  %v2678 = vmax.f32 %v2649, 0.0
  %v2679 = vmax.f32 %v2653, 0.0
  %v2680 = vmax.f32 %v2657, 0.0
  %v2681 = vmax.f32 %v2661, 0.0
  %v2682 = vmax.f32 %v2665, 0.0
  %v2683 = vmax.f32 %v2669, 0.0
  %v2684 = vmax.f32 %v2673, 0.0
  %v2685 = vperm.slane %v53, 0
  %v2686 = vsel %vm311, %v305, 0
  %v2688 = vsel %vm311, %v306, 0
  %v2690 = vsel %vm311, %v307, 0
  %2692 = vmatpush.msra.mxu0 0.0
  %2693 = vmatpush.msra.mxu0 0.0
  %2694 = vmatpush.msra.mxu0 0.0
  %2695 = vmatpush.msra.mxu0 0.0
  %2696 = vmatpush.msra.mxu0 0.0
  %2697 = vmatpush.msra.mxu0 0.0
  %2698 = vmatpush.msra.mxu0 0.0
  %2699 = vmatpush.msra.mxu0 0.0
  %v2700 = vand.u32 %v42, 4294901760
  %2701 = vmatpush.msra.mxu0 %v2700
  %v2702 = vand.u32 %v41, 4294901760
  %2703 = vmatpush.msra.mxu0 %v2702
  %v2704 = vand.u32 %v40, 4294901760
  %2705 = vmatpush.msra.mxu0 %v2704
  %v2706 = vand.u32 %v39, 4294901760
  %2707 = vmatpush.msra.mxu0 %v2706
  %v2708 = vand.u32 %v38, 4294901760
  %2709 = vmatpush.msra.mxu0 %v2708
  %v2710 = vand.u32 %v37, 4294901760
  %2711 = vmatpush.msra.mxu0 %v2710
  %v2712 = vand.u32 %v36, 4294901760
  %2713 = vmatpush.msra.mxu0 %v2712
  %v2714 = vand.u32 %v35, 4294901760
  %2715 = vmatpush.msra.mxu0 %v2714
  %v2716 = vand.u32 %v2686, 4294901760
  %v2717 = vsub.f32 %v2686, %v2716
  %v2718 = vand.u32 %v2717, 4294901760
  %v2719 = vsub.f32 %v2717, %v2718
  %v2720 = vand.u32 %v2719, 4294901760
  %2721 = vmatmul.f32.gmra.mxu0 %v2720
  %v2722 = vpop.f32.mrf.mxu0
  %v2723 = vadd.f32 %v2685, %v2722
  %v2724 = vand.u32 %v2688, 4294901760
  %v2725 = vsub.f32 %v2688, %v2724
  %v2726 = vand.u32 %v2725, 4294901760
  %v2727 = vsub.f32 %v2725, %v2726
  %v2728 = vand.u32 %v2727, 4294901760
  %2729 = vmatmul.f32.gmra.mxu0 %v2728
  %v2730 = vpop.f32.mrf.mxu0
  %v2731 = vadd.f32 %v2685, %v2730
  %v2732 = vand.u32 %v2690, 4294901760
  %v2733 = vsub.f32 %v2690, %v2732
  %v2734 = vand.u32 %v2733, 4294901760
  %v2735 = vsub.f32 %v2733, %v2734
  %v2736 = vand.u32 %v2735, 4294901760
  %2737 = vmatmul.f32.gmra.mxu0 %v2736
  %v2738 = vpop.f32.mrf.mxu0
  %v2739 = vadd.f32 %v2685, %v2738
  %2740 = vdwg.mxu0
  %2741 = vmatpush.msra.mxu0 0.0
  %2742 = vmatpush.msra.mxu0 0.0
  %2743 = vmatpush.msra.mxu0 0.0
  %2744 = vmatpush.msra.mxu0 0.0
  %2745 = vmatpush.msra.mxu0 0.0
  %2746 = vmatpush.msra.mxu0 0.0
  %2747 = vmatpush.msra.mxu0 0.0
  %2748 = vmatpush.msra.mxu0 0.0
  %v2749 = vand.u32 %v42, 4294901760
  %v2750 = vsub.f32 %v42, %v2749
  %v2751 = vand.u32 %v2750, 4294901760
  %v2752 = vsub.f32 %v2750, %v2751
  %v2753 = vand.u32 %v2752, 4294901760
  %2754 = vmatpush.msra.mxu0 %v2753
  %v2755 = vand.u32 %v41, 4294901760
  %v2756 = vsub.f32 %v41, %v2755
  %v2757 = vand.u32 %v2756, 4294901760
  %v2758 = vsub.f32 %v2756, %v2757
  %v2759 = vand.u32 %v2758, 4294901760
  %2760 = vmatpush.msra.mxu0 %v2759
  %v2761 = vand.u32 %v40, 4294901760
  %v2762 = vsub.f32 %v40, %v2761
  %v2763 = vand.u32 %v2762, 4294901760
  %v2764 = vsub.f32 %v2762, %v2763
  %v2765 = vand.u32 %v2764, 4294901760
  %2766 = vmatpush.msra.mxu0 %v2765
  %v2767 = vand.u32 %v39, 4294901760
  %v2768 = vsub.f32 %v39, %v2767
  %v2769 = vand.u32 %v2768, 4294901760
  %v2770 = vsub.f32 %v2768, %v2769
  %v2771 = vand.u32 %v2770, 4294901760
  %2772 = vmatpush.msra.mxu0 %v2771
  %v2773 = vand.u32 %v38, 4294901760
  %v2774 = vsub.f32 %v38, %v2773
  %v2775 = vand.u32 %v2774, 4294901760
  %v2776 = vsub.f32 %v2774, %v2775
  %v2777 = vand.u32 %v2776, 4294901760
  %2778 = vmatpush.msra.mxu0 %v2777
  %v2779 = vand.u32 %v37, 4294901760
  %v2780 = vsub.f32 %v37, %v2779
  %v2781 = vand.u32 %v2780, 4294901760
  %v2782 = vsub.f32 %v2780, %v2781
  %v2783 = vand.u32 %v2782, 4294901760
  %2784 = vmatpush.msra.mxu0 %v2783
  %v2785 = vand.u32 %v36, 4294901760
  %v2786 = vsub.f32 %v36, %v2785
  %v2787 = vand.u32 %v2786, 4294901760
  %v2788 = vsub.f32 %v2786, %v2787
  %v2789 = vand.u32 %v2788, 4294901760
  %2790 = vmatpush.msra.mxu0 %v2789
  %v2791 = vand.u32 %v35, 4294901760
  %v2792 = vsub.f32 %v35, %v2791
  %v2793 = vand.u32 %v2792, 4294901760
  %v2794 = vsub.f32 %v2792, %v2793
  %v2795 = vand.u32 %v2794, 4294901760
  %2796 = vmatpush.msra.mxu0 %v2795
  %v2797 = vand.u32 %v2686, 4294901760
  %2798 = vmatmul.f32.gmra.mxu0 %v2797
  %v2799 = vpop.f32.mrf.mxu0
  %v2800 = vadd.f32 %v2723, %v2799
  %v2801 = vand.u32 %v2688, 4294901760
  %2802 = vmatmul.f32.gmra.mxu0 %v2801
  %v2803 = vpop.f32.mrf.mxu0
  %v2804 = vadd.f32 %v2731, %v2803
  %v2805 = vand.u32 %v2690, 4294901760
  %2806 = vmatmul.f32.gmra.mxu0 %v2805
  %v2807 = vpop.f32.mrf.mxu0
  %v2808 = vadd.f32 %v2739, %v2807
  %2809 = vdwg.mxu0
  %2810 = vmatpush.msra.mxu0 0.0
  %2811 = vmatpush.msra.mxu0 0.0
  %2812 = vmatpush.msra.mxu0 0.0
  %2813 = vmatpush.msra.mxu0 0.0
  %2814 = vmatpush.msra.mxu0 0.0
  %2815 = vmatpush.msra.mxu0 0.0
  %2816 = vmatpush.msra.mxu0 0.0
  %2817 = vmatpush.msra.mxu0 0.0
  %v2818 = vand.u32 %v42, 4294901760
  %v2819 = vsub.f32 %v42, %v2818
  %2820 = vmatpush.msra.mxu0 %v2819
  %v2821 = vand.u32 %v41, 4294901760
  %v2822 = vsub.f32 %v41, %v2821
  %2823 = vmatpush.msra.mxu0 %v2822
  %v2824 = vand.u32 %v40, 4294901760
  %v2825 = vsub.f32 %v40, %v2824
  %2826 = vmatpush.msra.mxu0 %v2825
  %v2827 = vand.u32 %v39, 4294901760
  %v2828 = vsub.f32 %v39, %v2827
  %2829 = vmatpush.msra.mxu0 %v2828
  %v2830 = vand.u32 %v38, 4294901760
  %v2831 = vsub.f32 %v38, %v2830
  %2832 = vmatpush.msra.mxu0 %v2831
  %v2833 = vand.u32 %v37, 4294901760
  %v2834 = vsub.f32 %v37, %v2833
  %2835 = vmatpush.msra.mxu0 %v2834
  %v2836 = vand.u32 %v36, 4294901760
  %v2837 = vsub.f32 %v36, %v2836
  %2838 = vmatpush.msra.mxu0 %v2837
  %v2839 = vand.u32 %v35, 4294901760
  %v2840 = vsub.f32 %v35, %v2839
  %2841 = vmatpush.msra.mxu0 %v2840
  %v2842 = vand.u32 %v2686, 4294901760
  %v2843 = vsub.f32 %v2686, %v2842
  %2844 = vmatmul.f32.gmra.mxu0 %v2843
  %v2845 = vpop.f32.mrf.mxu0
  %v2846 = vadd.f32 %v2800, %v2845
  %v2847 = vand.u32 %v2688, 4294901760
  %v2848 = vsub.f32 %v2688, %v2847
  %2849 = vmatmul.f32.gmra.mxu0 %v2848
  %v2850 = vpop.f32.mrf.mxu0
  %v2851 = vadd.f32 %v2804, %v2850
  %v2852 = vand.u32 %v2690, 4294901760
  %v2853 = vsub.f32 %v2690, %v2852
  %2854 = vmatmul.f32.gmra.mxu0 %v2853
  %v2855 = vpop.f32.mrf.mxu0
  %v2856 = vadd.f32 %v2808, %v2855
  %2857 = vdwg.mxu0
  %2858 = vmatpush.msra.mxu0 0.0
  %2859 = vmatpush.msra.mxu0 0.0
  %2860 = vmatpush.msra.mxu0 0.0
  %2861 = vmatpush.msra.mxu0 0.0
  %2862 = vmatpush.msra.mxu0 0.0
  %2863 = vmatpush.msra.mxu0 0.0
  %2864 = vmatpush.msra.mxu0 0.0
  %2865 = vmatpush.msra.mxu0 0.0
  %v2866 = vand.u32 %v42, 4294901760
  %2867 = vmatpush.msra.mxu0 %v2866
  %v2868 = vand.u32 %v41, 4294901760
  %2869 = vmatpush.msra.mxu0 %v2868
  %v2870 = vand.u32 %v40, 4294901760
  %2871 = vmatpush.msra.mxu0 %v2870
  %v2872 = vand.u32 %v39, 4294901760
  %2873 = vmatpush.msra.mxu0 %v2872
  %v2874 = vand.u32 %v38, 4294901760
  %2875 = vmatpush.msra.mxu0 %v2874
  %v2876 = vand.u32 %v37, 4294901760
  %2877 = vmatpush.msra.mxu0 %v2876
  %v2878 = vand.u32 %v36, 4294901760
  %2879 = vmatpush.msra.mxu0 %v2878
  %v2880 = vand.u32 %v35, 4294901760
  %2881 = vmatpush.msra.mxu0 %v2880
  %v2882 = vand.u32 %v2686, 4294901760
  %v2883 = vsub.f32 %v2686, %v2882
  %v2884 = vand.u32 %v2883, 4294901760
  %2885 = vmatmul.f32.gmra.mxu0 %v2884
  %v2886 = vpop.f32.mrf.mxu0
  %v2887 = vadd.f32 %v2846, %v2886
  %v2888 = vand.u32 %v2688, 4294901760
  %v2889 = vsub.f32 %v2688, %v2888
  %v2890 = vand.u32 %v2889, 4294901760
  %2891 = vmatmul.f32.gmra.mxu0 %v2890
  %v2892 = vpop.f32.mrf.mxu0
  %v2893 = vadd.f32 %v2851, %v2892
  %v2894 = vand.u32 %v2690, 4294901760
  %v2895 = vsub.f32 %v2690, %v2894
  %v2896 = vand.u32 %v2895, 4294901760
  %2897 = vmatmul.f32.gmra.mxu0 %v2896
  %v2898 = vpop.f32.mrf.mxu0
  %v2899 = vadd.f32 %v2856, %v2898
  %2900 = vdwg.mxu0
  %2901 = vmatpush.msra.mxu0 0.0
  %2902 = vmatpush.msra.mxu0 0.0
  %2903 = vmatpush.msra.mxu0 0.0
  %2904 = vmatpush.msra.mxu0 0.0
  %2905 = vmatpush.msra.mxu0 0.0
  %2906 = vmatpush.msra.mxu0 0.0
  %2907 = vmatpush.msra.mxu0 0.0
  %2908 = vmatpush.msra.mxu0 0.0
  %v2909 = vand.u32 %v42, 4294901760
  %v2910 = vsub.f32 %v42, %v2909
  %v2911 = vand.u32 %v2910, 4294901760
  %2912 = vmatpush.msra.mxu0 %v2911
  %v2913 = vand.u32 %v41, 4294901760
  %v2914 = vsub.f32 %v41, %v2913
  %v2915 = vand.u32 %v2914, 4294901760
  %2916 = vmatpush.msra.mxu0 %v2915
  %v2917 = vand.u32 %v40, 4294901760
  %v2918 = vsub.f32 %v40, %v2917
  %v2919 = vand.u32 %v2918, 4294901760
  %2920 = vmatpush.msra.mxu0 %v2919
  %v2921 = vand.u32 %v39, 4294901760
  %v2922 = vsub.f32 %v39, %v2921
  %v2923 = vand.u32 %v2922, 4294901760
  %2924 = vmatpush.msra.mxu0 %v2923
  %v2925 = vand.u32 %v38, 4294901760
  %v2926 = vsub.f32 %v38, %v2925
  %v2927 = vand.u32 %v2926, 4294901760
  %2928 = vmatpush.msra.mxu0 %v2927
  %v2929 = vand.u32 %v37, 4294901760
  %v2930 = vsub.f32 %v37, %v2929
  %v2931 = vand.u32 %v2930, 4294901760
  %2932 = vmatpush.msra.mxu0 %v2931
  %v2933 = vand.u32 %v36, 4294901760
  %v2934 = vsub.f32 %v36, %v2933
  %v2935 = vand.u32 %v2934, 4294901760
  %2936 = vmatpush.msra.mxu0 %v2935
  %v2937 = vand.u32 %v35, 4294901760
  %v2938 = vsub.f32 %v35, %v2937
  %v2939 = vand.u32 %v2938, 4294901760
  %2940 = vmatpush.msra.mxu0 %v2939
  %v2941 = vand.u32 %v2686, 4294901760
  %2942 = vmatmul.f32.gmra.mxu0 %v2941
  %v2943 = vpop.f32.mrf.mxu0
  %v2944 = vadd.f32 %v2887, %v2943
  %v2945 = vand.u32 %v2688, 4294901760
  %2946 = vmatmul.f32.gmra.mxu0 %v2945
  %v2947 = vpop.f32.mrf.mxu0
  %v2948 = vadd.f32 %v2893, %v2947
  %v2949 = vand.u32 %v2690, 4294901760
  %2950 = vmatmul.f32.gmra.mxu0 %v2949
  %v2951 = vpop.f32.mrf.mxu0
  %v2952 = vadd.f32 %v2899, %v2951
  %2953 = vdwg.mxu0
  %2954 = vmatpush.msra.mxu0 0.0
  %2955 = vmatpush.msra.mxu0 0.0
  %2956 = vmatpush.msra.mxu0 0.0
  %2957 = vmatpush.msra.mxu0 0.0
  %2958 = vmatpush.msra.mxu0 0.0
  %2959 = vmatpush.msra.mxu0 0.0
  %2960 = vmatpush.msra.mxu0 0.0
  %2961 = vmatpush.msra.mxu0 0.0
  %v2962 = vand.u32 %v42, 4294901760
  %2963 = vmatpush.msra.mxu0 %v2962
  %v2964 = vand.u32 %v41, 4294901760
  %2965 = vmatpush.msra.mxu0 %v2964
  %v2966 = vand.u32 %v40, 4294901760
  %2967 = vmatpush.msra.mxu0 %v2966
  %v2968 = vand.u32 %v39, 4294901760
  %2969 = vmatpush.msra.mxu0 %v2968
  %v2970 = vand.u32 %v38, 4294901760
  %2971 = vmatpush.msra.mxu0 %v2970
  %v2972 = vand.u32 %v37, 4294901760
  %2973 = vmatpush.msra.mxu0 %v2972
  %v2974 = vand.u32 %v36, 4294901760
  %2975 = vmatpush.msra.mxu0 %v2974
  %v2976 = vand.u32 %v35, 4294901760
  %2977 = vmatpush.msra.mxu0 %v2976
  %v2978 = vand.u32 %v2686, 4294901760
  %2979 = vmatmul.f32.gmra.mxu0 %v2978
  %v2980 = vpop.f32.mrf.mxu0
  %v2981 = vadd.f32 %v2944, %v2980
  %v2982 = vand.u32 %v2688, 4294901760
  %2983 = vmatmul.f32.gmra.mxu0 %v2982
  %v2984 = vpop.f32.mrf.mxu0
  %v2985 = vadd.f32 %v2948, %v2984
  %v2986 = vand.u32 %v2690, 4294901760
  %2987 = vmatmul.f32.gmra.mxu0 %v2986
  %v2988 = vpop.f32.mrf.mxu0
  %v2989 = vadd.f32 %v2952, %v2988
  %2990 = vdwg.mxu0
  %v2991 = vmax.f32 %v2981, 0.0
  %v2992 = vmax.f32 %v2985, 0.0
  %v2993 = vmax.f32 %v2989, 0.0
  %v2994 = vperm.slane %v58, 0
  %v2996 = vsel %vm2206, %v2675, 0
  %v2999 = vsel %vm2206, %v2676, 0
  %v3002 = vsel %vm2206, %v2677, 0
  %v3005 = vsel %vm2206, %v2678, 0
  %v3008 = vsel %vm2206, %v2679, 0
  %v3011 = vsel %vm2206, %v2680, 0
  %v3014 = vsel %vm2206, %v2681, 0
  %v3017 = vsel %vm2206, %v2682, 0
  %v3020 = vsel %vm2206, %v2683, 0
  %v3023 = vsel %vm2206, %v2684, 0
  %3025 = vmatpush.msra.mxu0 0.0
  %3026 = vmatpush.msra.mxu0 0.0
  %3027 = vmatpush.msra.mxu0 0.0
  %3028 = vmatpush.msra.mxu0 0.0
  %3029 = vmatpush.msra.mxu0 0.0
  %3030 = vmatpush.msra.mxu0 0.0
  %3031 = vmatpush.msra.mxu0 0.0
  %3032 = vmatpush.msra.mxu0 0.0
  %3033 = vmatpush.msra.mxu0 0.0
  %3034 = vmatpush.msra.mxu0 0.0
  %3035 = vmatpush.msra.mxu0 0.0
  %3036 = vmatpush.msra.mxu0 0.0
  %3037 = vmatpush.msra.mxu0 0.0
  %3038 = vmatpush.msra.mxu0 0.0
  %v3039 = vand.u32 %v22, 4294901760
  %3040 = vmatpush.msra.mxu0 %v3039
  %v3041 = vand.u32 %v21, 4294901760
  %3042 = vmatpush.msra.mxu0 %v3041
  %v3043 = vand.u32 %v2996, 4294901760
  %v3044 = vsub.f32 %v2996, %v3043
  %v3045 = vand.u32 %v3044, 4294901760
  %v3046 = vsub.f32 %v3044, %v3045
  %v3047 = vand.u32 %v3046, 4294901760
  %3048 = vmatmul.f32.gmra.mxu0 %v3047
  %v3049 = vpop.f32.mrf.mxu0
  %v3050 = vadd.f32 %v2994, %v3049
  %v3051 = vand.u32 %v2999, 4294901760
  %v3052 = vsub.f32 %v2999, %v3051
  %v3053 = vand.u32 %v3052, 4294901760
  %v3054 = vsub.f32 %v3052, %v3053
  %v3055 = vand.u32 %v3054, 4294901760
  %3056 = vmatmul.f32.gmra.mxu0 %v3055
  %v3057 = vpop.f32.mrf.mxu0
  %v3058 = vadd.f32 %v2994, %v3057
  %v3059 = vand.u32 %v3002, 4294901760
  %v3060 = vsub.f32 %v3002, %v3059
  %v3061 = vand.u32 %v3060, 4294901760
  %v3062 = vsub.f32 %v3060, %v3061
  %v3063 = vand.u32 %v3062, 4294901760
  %3064 = vmatmul.f32.gmra.mxu0 %v3063
  %v3065 = vpop.f32.mrf.mxu0
  %v3066 = vadd.f32 %v2994, %v3065
  %v3067 = vand.u32 %v3005, 4294901760
  %v3068 = vsub.f32 %v3005, %v3067
  %v3069 = vand.u32 %v3068, 4294901760
  %v3070 = vsub.f32 %v3068, %v3069
  %v3071 = vand.u32 %v3070, 4294901760
  %3072 = vmatmul.f32.gmra.mxu0 %v3071
  %v3073 = vpop.f32.mrf.mxu0
  %v3074 = vadd.f32 %v2994, %v3073
  %v3075 = vand.u32 %v3008, 4294901760
  %v3076 = vsub.f32 %v3008, %v3075
  %v3077 = vand.u32 %v3076, 4294901760
  %v3078 = vsub.f32 %v3076, %v3077
  %v3079 = vand.u32 %v3078, 4294901760
  %3080 = vmatmul.f32.gmra.mxu0 %v3079
  %v3081 = vpop.f32.mrf.mxu0
  %v3082 = vadd.f32 %v2994, %v3081
  %v3083 = vand.u32 %v3011, 4294901760
  %v3084 = vsub.f32 %v3011, %v3083
  %v3085 = vand.u32 %v3084, 4294901760
  %v3086 = vsub.f32 %v3084, %v3085
  %v3087 = vand.u32 %v3086, 4294901760
  %3088 = vmatmul.f32.gmra.mxu0 %v3087
  %v3089 = vpop.f32.mrf.mxu0
  %v3090 = vadd.f32 %v2994, %v3089
  %v3091 = vand.u32 %v3014, 4294901760
  %v3092 = vsub.f32 %v3014, %v3091
  %v3093 = vand.u32 %v3092, 4294901760
  %v3094 = vsub.f32 %v3092, %v3093
  %v3095 = vand.u32 %v3094, 4294901760
  %3096 = vmatmul.f32.gmra.mxu0 %v3095
  %v3097 = vpop.f32.mrf.mxu0
  %v3098 = vadd.f32 %v2994, %v3097
  %v3099 = vand.u32 %v3017, 4294901760
  %v3100 = vsub.f32 %v3017, %v3099
  %v3101 = vand.u32 %v3100, 4294901760
  %v3102 = vsub.f32 %v3100, %v3101
  %v3103 = vand.u32 %v3102, 4294901760
  %3104 = vmatmul.f32.gmra.mxu0 %v3103
  %v3105 = vpop.f32.mrf.mxu0
  %v3106 = vadd.f32 %v2994, %v3105
  %v3107 = vand.u32 %v3020, 4294901760
  %v3108 = vsub.f32 %v3020, %v3107
  %v3109 = vand.u32 %v3108, 4294901760
  %v3110 = vsub.f32 %v3108, %v3109
  %v3111 = vand.u32 %v3110, 4294901760
  %3112 = vmatmul.f32.gmra.mxu0 %v3111
  %v3113 = vpop.f32.mrf.mxu0
  %v3114 = vadd.f32 %v2994, %v3113
  %v3115 = vand.u32 %v3023, 4294901760
  %v3116 = vsub.f32 %v3023, %v3115
  %v3117 = vand.u32 %v3116, 4294901760
  %v3118 = vsub.f32 %v3116, %v3117
  %v3119 = vand.u32 %v3118, 4294901760
  %3120 = vmatmul.f32.gmra.mxu0 %v3119
  %v3121 = vpop.f32.mrf.mxu0
  %v3122 = vadd.f32 %v2994, %v3121
  %3123 = vdwg.mxu0
  %3124 = vmatpush.msra.mxu0 0.0
  %3125 = vmatpush.msra.mxu0 0.0
  %3126 = vmatpush.msra.mxu0 0.0
  %3127 = vmatpush.msra.mxu0 0.0
  %3128 = vmatpush.msra.mxu0 0.0
  %3129 = vmatpush.msra.mxu0 0.0
  %3130 = vmatpush.msra.mxu0 0.0
  %3131 = vmatpush.msra.mxu0 0.0
  %3132 = vmatpush.msra.mxu0 0.0
  %3133 = vmatpush.msra.mxu0 0.0
  %3134 = vmatpush.msra.mxu0 0.0
  %3135 = vmatpush.msra.mxu0 0.0
  %3136 = vmatpush.msra.mxu0 0.0
  %3137 = vmatpush.msra.mxu0 0.0
  %v3138 = vand.u32 %v22, 4294901760
  %v3139 = vsub.f32 %v22, %v3138
  %v3140 = vand.u32 %v3139, 4294901760
  %v3141 = vsub.f32 %v3139, %v3140
  %v3142 = vand.u32 %v3141, 4294901760
  %3143 = vmatpush.msra.mxu0 %v3142
  %v3144 = vand.u32 %v21, 4294901760
  %v3145 = vsub.f32 %v21, %v3144
  %v3146 = vand.u32 %v3145, 4294901760
  %v3147 = vsub.f32 %v3145, %v3146
  %v3148 = vand.u32 %v3147, 4294901760
  %3149 = vmatpush.msra.mxu0 %v3148
  %v3150 = vand.u32 %v2996, 4294901760
  %3151 = vmatmul.f32.gmra.mxu0 %v3150
  %v3152 = vpop.f32.mrf.mxu0
  %v3153 = vadd.f32 %v3050, %v3152
  %v3154 = vand.u32 %v2999, 4294901760
  %3155 = vmatmul.f32.gmra.mxu0 %v3154
  %v3156 = vpop.f32.mrf.mxu0
  %v3157 = vadd.f32 %v3058, %v3156
  %v3158 = vand.u32 %v3002, 4294901760
  %3159 = vmatmul.f32.gmra.mxu0 %v3158
  %v3160 = vpop.f32.mrf.mxu0
  %v3161 = vadd.f32 %v3066, %v3160
  %v3162 = vand.u32 %v3005, 4294901760
  %3163 = vmatmul.f32.gmra.mxu0 %v3162
  %v3164 = vpop.f32.mrf.mxu0
  %v3165 = vadd.f32 %v3074, %v3164
  %v3166 = vand.u32 %v3008, 4294901760
  %3167 = vmatmul.f32.gmra.mxu0 %v3166
  %v3168 = vpop.f32.mrf.mxu0
  %v3169 = vadd.f32 %v3082, %v3168
  %v3170 = vand.u32 %v3011, 4294901760
  %3171 = vmatmul.f32.gmra.mxu0 %v3170
  %v3172 = vpop.f32.mrf.mxu0
  %v3173 = vadd.f32 %v3090, %v3172
  %v3174 = vand.u32 %v3014, 4294901760
  %3175 = vmatmul.f32.gmra.mxu0 %v3174
  %v3176 = vpop.f32.mrf.mxu0
  %v3177 = vadd.f32 %v3098, %v3176
  %v3178 = vand.u32 %v3017, 4294901760
  %3179 = vmatmul.f32.gmra.mxu0 %v3178
  %v3180 = vpop.f32.mrf.mxu0
  %v3181 = vadd.f32 %v3106, %v3180
  %v3182 = vand.u32 %v3020, 4294901760
  %3183 = vmatmul.f32.gmra.mxu0 %v3182
  %v3184 = vpop.f32.mrf.mxu0
  %v3185 = vadd.f32 %v3114, %v3184
  %v3186 = vand.u32 %v3023, 4294901760
  %3187 = vmatmul.f32.gmra.mxu0 %v3186
  %v3188 = vpop.f32.mrf.mxu0
  %v3189 = vadd.f32 %v3122, %v3188
  %3190 = vdwg.mxu0
  %3191 = vmatpush.msra.mxu0 0.0
  %3192 = vmatpush.msra.mxu0 0.0
  %3193 = vmatpush.msra.mxu0 0.0
  %3194 = vmatpush.msra.mxu0 0.0
  %3195 = vmatpush.msra.mxu0 0.0
  %3196 = vmatpush.msra.mxu0 0.0
  %3197 = vmatpush.msra.mxu0 0.0
  %3198 = vmatpush.msra.mxu0 0.0
  %3199 = vmatpush.msra.mxu0 0.0
  %3200 = vmatpush.msra.mxu0 0.0
  %3201 = vmatpush.msra.mxu0 0.0
  %3202 = vmatpush.msra.mxu0 0.0
  %3203 = vmatpush.msra.mxu0 0.0
  %3204 = vmatpush.msra.mxu0 0.0
  %v3205 = vand.u32 %v22, 4294901760
  %v3206 = vsub.f32 %v22, %v3205
  %3207 = vmatpush.msra.mxu0 %v3206
  %v3208 = vand.u32 %v21, 4294901760
  %v3209 = vsub.f32 %v21, %v3208
  %3210 = vmatpush.msra.mxu0 %v3209
  %v3211 = vand.u32 %v2996, 4294901760
  %v3212 = vsub.f32 %v2996, %v3211
  %3213 = vmatmul.f32.gmra.mxu0 %v3212
  %v3214 = vpop.f32.mrf.mxu0
  %v3215 = vadd.f32 %v3153, %v3214
  %v3216 = vand.u32 %v2999, 4294901760
  %v3217 = vsub.f32 %v2999, %v3216
  %3218 = vmatmul.f32.gmra.mxu0 %v3217
  %v3219 = vpop.f32.mrf.mxu0
  %v3220 = vadd.f32 %v3157, %v3219
  %v3221 = vand.u32 %v3002, 4294901760
  %v3222 = vsub.f32 %v3002, %v3221
  %3223 = vmatmul.f32.gmra.mxu0 %v3222
  %v3224 = vpop.f32.mrf.mxu0
  %v3225 = vadd.f32 %v3161, %v3224
  %v3226 = vand.u32 %v3005, 4294901760
  %v3227 = vsub.f32 %v3005, %v3226
  %3228 = vmatmul.f32.gmra.mxu0 %v3227
  %v3229 = vpop.f32.mrf.mxu0
  %v3230 = vadd.f32 %v3165, %v3229
  %v3231 = vand.u32 %v3008, 4294901760
  %v3232 = vsub.f32 %v3008, %v3231
  %3233 = vmatmul.f32.gmra.mxu0 %v3232
  %v3234 = vpop.f32.mrf.mxu0
  %v3235 = vadd.f32 %v3169, %v3234
  %v3236 = vand.u32 %v3011, 4294901760
  %v3237 = vsub.f32 %v3011, %v3236
  %3238 = vmatmul.f32.gmra.mxu0 %v3237
  %v3239 = vpop.f32.mrf.mxu0
  %v3240 = vadd.f32 %v3173, %v3239
  %v3241 = vand.u32 %v3014, 4294901760
  %v3242 = vsub.f32 %v3014, %v3241
  %3243 = vmatmul.f32.gmra.mxu0 %v3242
  %v3244 = vpop.f32.mrf.mxu0
  %v3245 = vadd.f32 %v3177, %v3244
  %v3246 = vand.u32 %v3017, 4294901760
  %v3247 = vsub.f32 %v3017, %v3246
  %3248 = vmatmul.f32.gmra.mxu0 %v3247
  %v3249 = vpop.f32.mrf.mxu0
  %v3250 = vadd.f32 %v3181, %v3249
  %v3251 = vand.u32 %v3020, 4294901760
  %v3252 = vsub.f32 %v3020, %v3251
  %3253 = vmatmul.f32.gmra.mxu0 %v3252
  %v3254 = vpop.f32.mrf.mxu0
  %v3255 = vadd.f32 %v3185, %v3254
  %v3256 = vand.u32 %v3023, 4294901760
  %v3257 = vsub.f32 %v3023, %v3256
  %3258 = vmatmul.f32.gmra.mxu0 %v3257
  %v3259 = vpop.f32.mrf.mxu0
  %v3260 = vadd.f32 %v3189, %v3259
  %3261 = vdwg.mxu0
  %3262 = vmatpush.msra.mxu0 0.0
  %3263 = vmatpush.msra.mxu0 0.0
  %3264 = vmatpush.msra.mxu0 0.0
  %3265 = vmatpush.msra.mxu0 0.0
  %3266 = vmatpush.msra.mxu0 0.0
  %3267 = vmatpush.msra.mxu0 0.0
  %3268 = vmatpush.msra.mxu0 0.0
  %3269 = vmatpush.msra.mxu0 0.0
  %3270 = vmatpush.msra.mxu0 0.0
  %3271 = vmatpush.msra.mxu0 0.0
  %3272 = vmatpush.msra.mxu0 0.0
  %3273 = vmatpush.msra.mxu0 0.0
  %3274 = vmatpush.msra.mxu0 0.0
  %3275 = vmatpush.msra.mxu0 0.0
  %v3276 = vand.u32 %v22, 4294901760
  %3277 = vmatpush.msra.mxu0 %v3276
  %v3278 = vand.u32 %v21, 4294901760
  %3279 = vmatpush.msra.mxu0 %v3278
  %v3280 = vand.u32 %v2996, 4294901760
  %v3281 = vsub.f32 %v2996, %v3280
  %v3282 = vand.u32 %v3281, 4294901760
  %3283 = vmatmul.f32.gmra.mxu0 %v3282
  %v3284 = vpop.f32.mrf.mxu0
  %v3285 = vadd.f32 %v3215, %v3284
  %v3286 = vand.u32 %v2999, 4294901760
  %v3287 = vsub.f32 %v2999, %v3286
  %v3288 = vand.u32 %v3287, 4294901760
  %3289 = vmatmul.f32.gmra.mxu0 %v3288
  %v3290 = vpop.f32.mrf.mxu0
  %v3291 = vadd.f32 %v3220, %v3290
  %v3292 = vand.u32 %v3002, 4294901760
  %v3293 = vsub.f32 %v3002, %v3292
  %v3294 = vand.u32 %v3293, 4294901760
  %3295 = vmatmul.f32.gmra.mxu0 %v3294
  %v3296 = vpop.f32.mrf.mxu0
  %v3297 = vadd.f32 %v3225, %v3296
  %v3298 = vand.u32 %v3005, 4294901760
  %v3299 = vsub.f32 %v3005, %v3298
  %v3300 = vand.u32 %v3299, 4294901760
  %3301 = vmatmul.f32.gmra.mxu0 %v3300
  %v3302 = vpop.f32.mrf.mxu0
  %v3303 = vadd.f32 %v3230, %v3302
  %v3304 = vand.u32 %v3008, 4294901760
  %v3305 = vsub.f32 %v3008, %v3304
  %v3306 = vand.u32 %v3305, 4294901760
  %3307 = vmatmul.f32.gmra.mxu0 %v3306
  %v3308 = vpop.f32.mrf.mxu0
  %v3309 = vadd.f32 %v3235, %v3308
  %v3310 = vand.u32 %v3011, 4294901760
  %v3311 = vsub.f32 %v3011, %v3310
  %v3312 = vand.u32 %v3311, 4294901760
  %3313 = vmatmul.f32.gmra.mxu0 %v3312
  %v3314 = vpop.f32.mrf.mxu0
  %v3315 = vadd.f32 %v3240, %v3314
  %v3316 = vand.u32 %v3014, 4294901760
  %v3317 = vsub.f32 %v3014, %v3316
  %v3318 = vand.u32 %v3317, 4294901760
  %3319 = vmatmul.f32.gmra.mxu0 %v3318
  %v3320 = vpop.f32.mrf.mxu0
  %v3321 = vadd.f32 %v3245, %v3320
  %v3322 = vand.u32 %v3017, 4294901760
  %v3323 = vsub.f32 %v3017, %v3322
  %v3324 = vand.u32 %v3323, 4294901760
  %3325 = vmatmul.f32.gmra.mxu0 %v3324
  %v3326 = vpop.f32.mrf.mxu0
  %v3327 = vadd.f32 %v3250, %v3326
  %v3328 = vand.u32 %v3020, 4294901760
  %v3329 = vsub.f32 %v3020, %v3328
  %v3330 = vand.u32 %v3329, 4294901760
  %3331 = vmatmul.f32.gmra.mxu0 %v3330
  %v3332 = vpop.f32.mrf.mxu0
  %v3333 = vadd.f32 %v3255, %v3332
  %v3334 = vand.u32 %v3023, 4294901760
  %v3335 = vsub.f32 %v3023, %v3334
  %v3336 = vand.u32 %v3335, 4294901760
  %3337 = vmatmul.f32.gmra.mxu0 %v3336
  %v3338 = vpop.f32.mrf.mxu0
  %v3339 = vadd.f32 %v3260, %v3338
  %3340 = vdwg.mxu0
  %3341 = vmatpush.msra.mxu0 0.0
  %3342 = vmatpush.msra.mxu0 0.0
  %3343 = vmatpush.msra.mxu0 0.0
  %3344 = vmatpush.msra.mxu0 0.0
  %3345 = vmatpush.msra.mxu0 0.0
  %3346 = vmatpush.msra.mxu0 0.0
  %3347 = vmatpush.msra.mxu0 0.0
  %3348 = vmatpush.msra.mxu0 0.0
  %3349 = vmatpush.msra.mxu0 0.0
  %3350 = vmatpush.msra.mxu0 0.0
  %3351 = vmatpush.msra.mxu0 0.0
  %3352 = vmatpush.msra.mxu0 0.0
  %3353 = vmatpush.msra.mxu0 0.0
  %3354 = vmatpush.msra.mxu0 0.0
  %v3355 = vand.u32 %v22, 4294901760
  %v3356 = vsub.f32 %v22, %v3355
  %v3357 = vand.u32 %v3356, 4294901760
  %3358 = vmatpush.msra.mxu0 %v3357
  %v3359 = vand.u32 %v21, 4294901760
  %v3360 = vsub.f32 %v21, %v3359
  %v3361 = vand.u32 %v3360, 4294901760
  %3362 = vmatpush.msra.mxu0 %v3361
  %v3363 = vand.u32 %v2996, 4294901760
  %3364 = vmatmul.f32.gmra.mxu0 %v3363
  %v3365 = vpop.f32.mrf.mxu0
  %v3366 = vadd.f32 %v3285, %v3365
  %v3367 = vand.u32 %v2999, 4294901760
  %3368 = vmatmul.f32.gmra.mxu0 %v3367
  %v3369 = vpop.f32.mrf.mxu0
  %v3370 = vadd.f32 %v3291, %v3369
  %v3371 = vand.u32 %v3002, 4294901760
  %3372 = vmatmul.f32.gmra.mxu0 %v3371
  %v3373 = vpop.f32.mrf.mxu0
  %v3374 = vadd.f32 %v3297, %v3373
  %v3375 = vand.u32 %v3005, 4294901760
  %3376 = vmatmul.f32.gmra.mxu0 %v3375
  %v3377 = vpop.f32.mrf.mxu0
  %v3378 = vadd.f32 %v3303, %v3377
  %v3379 = vand.u32 %v3008, 4294901760
  %3380 = vmatmul.f32.gmra.mxu0 %v3379
  %v3381 = vpop.f32.mrf.mxu0
  %v3382 = vadd.f32 %v3309, %v3381
  %v3383 = vand.u32 %v3011, 4294901760
  %3384 = vmatmul.f32.gmra.mxu0 %v3383
  %v3385 = vpop.f32.mrf.mxu0
  %v3386 = vadd.f32 %v3315, %v3385
  %v3387 = vand.u32 %v3014, 4294901760
  %3388 = vmatmul.f32.gmra.mxu0 %v3387
  %v3389 = vpop.f32.mrf.mxu0
  %v3390 = vadd.f32 %v3321, %v3389
  %v3391 = vand.u32 %v3017, 4294901760
  %3392 = vmatmul.f32.gmra.mxu0 %v3391
  %v3393 = vpop.f32.mrf.mxu0
  %v3394 = vadd.f32 %v3327, %v3393
  %v3395 = vand.u32 %v3020, 4294901760
  %3396 = vmatmul.f32.gmra.mxu0 %v3395
  %v3397 = vpop.f32.mrf.mxu0
  %v3398 = vadd.f32 %v3333, %v3397
  %v3399 = vand.u32 %v3023, 4294901760
  %3400 = vmatmul.f32.gmra.mxu0 %v3399
  %v3401 = vpop.f32.mrf.mxu0
  %v3402 = vadd.f32 %v3339, %v3401
  %3403 = vdwg.mxu0
  %3404 = vmatpush.msra.mxu0 0.0
  %3405 = vmatpush.msra.mxu0 0.0
  %3406 = vmatpush.msra.mxu0 0.0
  %3407 = vmatpush.msra.mxu0 0.0
  %3408 = vmatpush.msra.mxu0 0.0
  %3409 = vmatpush.msra.mxu0 0.0
  %3410 = vmatpush.msra.mxu0 0.0
  %3411 = vmatpush.msra.mxu0 0.0
  %3412 = vmatpush.msra.mxu0 0.0
  %3413 = vmatpush.msra.mxu0 0.0
  %3414 = vmatpush.msra.mxu0 0.0
  %3415 = vmatpush.msra.mxu0 0.0
  %3416 = vmatpush.msra.mxu0 0.0
  %3417 = vmatpush.msra.mxu0 0.0
  %v3418 = vand.u32 %v22, 4294901760
  %3419 = vmatpush.msra.mxu0 %v3418
  %v3420 = vand.u32 %v21, 4294901760
  %3421 = vmatpush.msra.mxu0 %v3420
  %v3422 = vand.u32 %v2996, 4294901760
  %3423 = vmatmul.f32.gmra.mxu0 %v3422
  %v3424 = vpop.f32.mrf.mxu0
  %v3425 = vadd.f32 %v3366, %v3424
  %v3426 = vand.u32 %v2999, 4294901760
  %3427 = vmatmul.f32.gmra.mxu0 %v3426
  %v3428 = vpop.f32.mrf.mxu0
  %v3429 = vadd.f32 %v3370, %v3428
  %v3430 = vand.u32 %v3002, 4294901760
  %3431 = vmatmul.f32.gmra.mxu0 %v3430
  %v3432 = vpop.f32.mrf.mxu0
  %v3433 = vadd.f32 %v3374, %v3432
  %v3434 = vand.u32 %v3005, 4294901760
  %3435 = vmatmul.f32.gmra.mxu0 %v3434
  %v3436 = vpop.f32.mrf.mxu0
  %v3437 = vadd.f32 %v3378, %v3436
  %v3438 = vand.u32 %v3008, 4294901760
  %3439 = vmatmul.f32.gmra.mxu0 %v3438
  %v3440 = vpop.f32.mrf.mxu0
  %v3441 = vadd.f32 %v3382, %v3440
  %v3442 = vand.u32 %v3011, 4294901760
  %3443 = vmatmul.f32.gmra.mxu0 %v3442
  %v3444 = vpop.f32.mrf.mxu0
  %v3445 = vadd.f32 %v3386, %v3444
  %v3446 = vand.u32 %v3014, 4294901760
  %3447 = vmatmul.f32.gmra.mxu0 %v3446
  %v3448 = vpop.f32.mrf.mxu0
  %v3449 = vadd.f32 %v3390, %v3448
  %v3450 = vand.u32 %v3017, 4294901760
  %3451 = vmatmul.f32.gmra.mxu0 %v3450
  %v3452 = vpop.f32.mrf.mxu0
  %v3453 = vadd.f32 %v3394, %v3452
  %v3454 = vand.u32 %v3020, 4294901760
  %3455 = vmatmul.f32.gmra.mxu0 %v3454
  %v3456 = vpop.f32.mrf.mxu0
  %v3457 = vadd.f32 %v3398, %v3456
  %v3458 = vand.u32 %v3023, 4294901760
  %3459 = vmatmul.f32.gmra.mxu0 %v3458
  %v3460 = vpop.f32.mrf.mxu0
  %v3461 = vadd.f32 %v3402, %v3460
  %3462 = vdwg.mxu0
  %3467 = vrot.lane.b32.xlu0 %v23, 16
  %v3468 = vpop.permute.xlu0 %3467
  %3469 = vrot.lane.b32.xlu0 %v24, 16
  %v3470 = vpop.permute.xlu0 %3469
  %3471 = vrot.lane.b32.xlu0 %v25, 16
  %v3472 = vpop.permute.xlu0 %3471
  %3473 = vrot.lane.b32.xlu0 %v26, 16
  %v3474 = vpop.permute.xlu0 %3473
  %v3479 = vsel %vm2206, %v15, %v3468
  %v3480 = vsel %vm2206, %v16, %v3470
  %v3481 = vsel %vm2206, %v17, %v3472
  %v3482 = vsel %vm2206, %v18, %v3474
  %vm3483 = vcmask 261120
  %v3485 = vsel %vm3483, %v2991, 0
  %v3488 = vsel %vm3483, %v2992, 0
  %v3491 = vsel %vm3483, %v2993, 0
  %3493 = vmatpush.msra.mxu0 0.0
  %3494 = vmatpush.msra.mxu0 0.0
  %3495 = vmatpush.msra.mxu0 0.0
  %3496 = vmatpush.msra.mxu0 0.0
  %3497 = vmatpush.msra.mxu0 0.0
  %3498 = vmatpush.msra.mxu0 0.0
  %3499 = vmatpush.msra.mxu0 0.0
  %3500 = vmatpush.msra.mxu0 0.0
  %3501 = vmatpush.msra.mxu0 0.0
  %3502 = vmatpush.msra.mxu0 0.0
  %3503 = vmatpush.msra.mxu0 0.0
  %3504 = vmatpush.msra.mxu0 0.0
  %v3505 = vand.u32 %v3482, 4294901760
  %3506 = vmatpush.msra.mxu0 %v3505
  %v3507 = vand.u32 %v3481, 4294901760
  %3508 = vmatpush.msra.mxu0 %v3507
  %v3509 = vand.u32 %v3480, 4294901760
  %3510 = vmatpush.msra.mxu0 %v3509
  %v3511 = vand.u32 %v3479, 4294901760
  %3512 = vmatpush.msra.mxu0 %v3511
  %v3513 = vand.u32 %v3485, 4294901760
  %v3514 = vsub.f32 %v3485, %v3513
  %v3515 = vand.u32 %v3514, 4294901760
  %v3516 = vsub.f32 %v3514, %v3515
  %v3517 = vand.u32 %v3516, 4294901760
  %3518 = vmatmul.f32.gmra.mxu0 %v3517
  %v3519 = vpop.f32.mrf.mxu0
  %v3520 = vadd.f32 0.0, %v3519
  %v3521 = vand.u32 %v3488, 4294901760
  %v3522 = vsub.f32 %v3488, %v3521
  %v3523 = vand.u32 %v3522, 4294901760
  %v3524 = vsub.f32 %v3522, %v3523
  %v3525 = vand.u32 %v3524, 4294901760
  %3526 = vmatmul.f32.gmra.mxu0 %v3525
  %v3527 = vpop.f32.mrf.mxu0
  %v3528 = vadd.f32 0.0, %v3527
  %v3529 = vand.u32 %v3491, 4294901760
  %v3530 = vsub.f32 %v3491, %v3529
  %v3531 = vand.u32 %v3530, 4294901760
  %v3532 = vsub.f32 %v3530, %v3531
  %v3533 = vand.u32 %v3532, 4294901760
  %3534 = vmatmul.f32.gmra.mxu0 %v3533
  %v3535 = vpop.f32.mrf.mxu0
  %v3536 = vadd.f32 0.0, %v3535
  %3537 = vdwg.mxu0
  %3538 = vmatpush.msra.mxu0 0.0
  %3539 = vmatpush.msra.mxu0 0.0
  %3540 = vmatpush.msra.mxu0 0.0
  %3541 = vmatpush.msra.mxu0 0.0
  %3542 = vmatpush.msra.mxu0 0.0
  %3543 = vmatpush.msra.mxu0 0.0
  %3544 = vmatpush.msra.mxu0 0.0
  %3545 = vmatpush.msra.mxu0 0.0
  %3546 = vmatpush.msra.mxu0 0.0
  %3547 = vmatpush.msra.mxu0 0.0
  %3548 = vmatpush.msra.mxu0 0.0
  %3549 = vmatpush.msra.mxu0 0.0
  %v3550 = vand.u32 %v3482, 4294901760
  %v3551 = vsub.f32 %v3482, %v3550
  %v3552 = vand.u32 %v3551, 4294901760
  %v3553 = vsub.f32 %v3551, %v3552
  %v3554 = vand.u32 %v3553, 4294901760
  %3555 = vmatpush.msra.mxu0 %v3554
  %v3556 = vand.u32 %v3481, 4294901760
  %v3557 = vsub.f32 %v3481, %v3556
  %v3558 = vand.u32 %v3557, 4294901760
  %v3559 = vsub.f32 %v3557, %v3558
  %v3560 = vand.u32 %v3559, 4294901760
  %3561 = vmatpush.msra.mxu0 %v3560
  %v3562 = vand.u32 %v3480, 4294901760
  %v3563 = vsub.f32 %v3480, %v3562
  %v3564 = vand.u32 %v3563, 4294901760
  %v3565 = vsub.f32 %v3563, %v3564
  %v3566 = vand.u32 %v3565, 4294901760
  %3567 = vmatpush.msra.mxu0 %v3566
  %v3568 = vand.u32 %v3479, 4294901760
  %v3569 = vsub.f32 %v3479, %v3568
  %v3570 = vand.u32 %v3569, 4294901760
  %v3571 = vsub.f32 %v3569, %v3570
  %v3572 = vand.u32 %v3571, 4294901760
  %3573 = vmatpush.msra.mxu0 %v3572
  %v3574 = vand.u32 %v3485, 4294901760
  %3575 = vmatmul.f32.gmra.mxu0 %v3574
  %v3576 = vpop.f32.mrf.mxu0
  %v3577 = vadd.f32 %v3520, %v3576
  %v3578 = vand.u32 %v3488, 4294901760
  %3579 = vmatmul.f32.gmra.mxu0 %v3578
  %v3580 = vpop.f32.mrf.mxu0
  %v3581 = vadd.f32 %v3528, %v3580
  %v3582 = vand.u32 %v3491, 4294901760
  %3583 = vmatmul.f32.gmra.mxu0 %v3582
  %v3584 = vpop.f32.mrf.mxu0
  %v3585 = vadd.f32 %v3536, %v3584
  %3586 = vdwg.mxu0
  %3587 = vmatpush.msra.mxu0 0.0
  %3588 = vmatpush.msra.mxu0 0.0
  %3589 = vmatpush.msra.mxu0 0.0
  %3590 = vmatpush.msra.mxu0 0.0
  %3591 = vmatpush.msra.mxu0 0.0
  %3592 = vmatpush.msra.mxu0 0.0
  %3593 = vmatpush.msra.mxu0 0.0
  %3594 = vmatpush.msra.mxu0 0.0
  %3595 = vmatpush.msra.mxu0 0.0
  %3596 = vmatpush.msra.mxu0 0.0
  %3597 = vmatpush.msra.mxu0 0.0
  %3598 = vmatpush.msra.mxu0 0.0
  %v3599 = vand.u32 %v3482, 4294901760
  %v3600 = vsub.f32 %v3482, %v3599
  %3601 = vmatpush.msra.mxu0 %v3600
  %v3602 = vand.u32 %v3481, 4294901760
  %v3603 = vsub.f32 %v3481, %v3602
  %3604 = vmatpush.msra.mxu0 %v3603
  %v3605 = vand.u32 %v3480, 4294901760
  %v3606 = vsub.f32 %v3480, %v3605
  %3607 = vmatpush.msra.mxu0 %v3606
  %v3608 = vand.u32 %v3479, 4294901760
  %v3609 = vsub.f32 %v3479, %v3608
  %3610 = vmatpush.msra.mxu0 %v3609
  %v3611 = vand.u32 %v3485, 4294901760
  %v3612 = vsub.f32 %v3485, %v3611
  %3613 = vmatmul.f32.gmra.mxu0 %v3612
  %v3614 = vpop.f32.mrf.mxu0
  %v3615 = vadd.f32 %v3577, %v3614
  %v3616 = vand.u32 %v3488, 4294901760
  %v3617 = vsub.f32 %v3488, %v3616
  %3618 = vmatmul.f32.gmra.mxu0 %v3617
  %v3619 = vpop.f32.mrf.mxu0
  %v3620 = vadd.f32 %v3581, %v3619
  %v3621 = vand.u32 %v3491, 4294901760
  %v3622 = vsub.f32 %v3491, %v3621
  %3623 = vmatmul.f32.gmra.mxu0 %v3622
  %v3624 = vpop.f32.mrf.mxu0
  %v3625 = vadd.f32 %v3585, %v3624
  %3626 = vdwg.mxu0
  %3627 = vmatpush.msra.mxu0 0.0
  %3628 = vmatpush.msra.mxu0 0.0
  %3629 = vmatpush.msra.mxu0 0.0
  %3630 = vmatpush.msra.mxu0 0.0
  %3631 = vmatpush.msra.mxu0 0.0
  %3632 = vmatpush.msra.mxu0 0.0
  %3633 = vmatpush.msra.mxu0 0.0
  %3634 = vmatpush.msra.mxu0 0.0
  %3635 = vmatpush.msra.mxu0 0.0
  %3636 = vmatpush.msra.mxu0 0.0
  %3637 = vmatpush.msra.mxu0 0.0
  %3638 = vmatpush.msra.mxu0 0.0
  %v3639 = vand.u32 %v3482, 4294901760
  %3640 = vmatpush.msra.mxu0 %v3639
  %v3641 = vand.u32 %v3481, 4294901760
  %3642 = vmatpush.msra.mxu0 %v3641
  %v3643 = vand.u32 %v3480, 4294901760
  %3644 = vmatpush.msra.mxu0 %v3643
  %v3645 = vand.u32 %v3479, 4294901760
  %3646 = vmatpush.msra.mxu0 %v3645
  %v3647 = vand.u32 %v3485, 4294901760
  %v3648 = vsub.f32 %v3485, %v3647
  %v3649 = vand.u32 %v3648, 4294901760
  %3650 = vmatmul.f32.gmra.mxu0 %v3649
  %v3651 = vpop.f32.mrf.mxu0
  %v3652 = vadd.f32 %v3615, %v3651
  %v3653 = vand.u32 %v3488, 4294901760
  %v3654 = vsub.f32 %v3488, %v3653
  %v3655 = vand.u32 %v3654, 4294901760
  %3656 = vmatmul.f32.gmra.mxu0 %v3655
  %v3657 = vpop.f32.mrf.mxu0
  %v3658 = vadd.f32 %v3620, %v3657
  %v3659 = vand.u32 %v3491, 4294901760
  %v3660 = vsub.f32 %v3491, %v3659
  %v3661 = vand.u32 %v3660, 4294901760
  %3662 = vmatmul.f32.gmra.mxu0 %v3661
  %v3663 = vpop.f32.mrf.mxu0
  %v3664 = vadd.f32 %v3625, %v3663
  %3665 = vdwg.mxu0
  %3666 = vmatpush.msra.mxu0 0.0
  %3667 = vmatpush.msra.mxu0 0.0
  %3668 = vmatpush.msra.mxu0 0.0
  %3669 = vmatpush.msra.mxu0 0.0
  %3670 = vmatpush.msra.mxu0 0.0
  %3671 = vmatpush.msra.mxu0 0.0
  %3672 = vmatpush.msra.mxu0 0.0
  %3673 = vmatpush.msra.mxu0 0.0
  %3674 = vmatpush.msra.mxu0 0.0
  %3675 = vmatpush.msra.mxu0 0.0
  %3676 = vmatpush.msra.mxu0 0.0
  %3677 = vmatpush.msra.mxu0 0.0
  %v3678 = vand.u32 %v3482, 4294901760
  %v3679 = vsub.f32 %v3482, %v3678
  %v3680 = vand.u32 %v3679, 4294901760
  %3681 = vmatpush.msra.mxu0 %v3680
  %v3682 = vand.u32 %v3481, 4294901760
  %v3683 = vsub.f32 %v3481, %v3682
  %v3684 = vand.u32 %v3683, 4294901760
  %3685 = vmatpush.msra.mxu0 %v3684
  %v3686 = vand.u32 %v3480, 4294901760
  %v3687 = vsub.f32 %v3480, %v3686
  %v3688 = vand.u32 %v3687, 4294901760
  %3689 = vmatpush.msra.mxu0 %v3688
  %v3690 = vand.u32 %v3479, 4294901760
  %v3691 = vsub.f32 %v3479, %v3690
  %v3692 = vand.u32 %v3691, 4294901760
  %3693 = vmatpush.msra.mxu0 %v3692
  %v3694 = vand.u32 %v3485, 4294901760
  %3695 = vmatmul.f32.gmra.mxu0 %v3694
  %v3696 = vpop.f32.mrf.mxu0
  %v3697 = vadd.f32 %v3652, %v3696
  %v3698 = vand.u32 %v3488, 4294901760
  %3699 = vmatmul.f32.gmra.mxu0 %v3698
  %v3700 = vpop.f32.mrf.mxu0
  %v3701 = vadd.f32 %v3658, %v3700
  %v3702 = vand.u32 %v3491, 4294901760
  %3703 = vmatmul.f32.gmra.mxu0 %v3702
  %v3704 = vpop.f32.mrf.mxu0
  %v3705 = vadd.f32 %v3664, %v3704
  %3706 = vdwg.mxu0
  %3707 = vmatpush.msra.mxu0 0.0
  %3708 = vmatpush.msra.mxu0 0.0
  %3709 = vmatpush.msra.mxu0 0.0
  %3710 = vmatpush.msra.mxu0 0.0
  %3711 = vmatpush.msra.mxu0 0.0
  %3712 = vmatpush.msra.mxu0 0.0
  %3713 = vmatpush.msra.mxu0 0.0
  %3714 = vmatpush.msra.mxu0 0.0
  %3715 = vmatpush.msra.mxu0 0.0
  %3716 = vmatpush.msra.mxu0 0.0
  %3717 = vmatpush.msra.mxu0 0.0
  %3718 = vmatpush.msra.mxu0 0.0
  %v3719 = vand.u32 %v3482, 4294901760
  %3720 = vmatpush.msra.mxu0 %v3719
  %v3721 = vand.u32 %v3481, 4294901760
  %3722 = vmatpush.msra.mxu0 %v3721
  %v3723 = vand.u32 %v3480, 4294901760
  %3724 = vmatpush.msra.mxu0 %v3723
  %v3725 = vand.u32 %v3479, 4294901760
  %3726 = vmatpush.msra.mxu0 %v3725
  %v3727 = vand.u32 %v3485, 4294901760
  %3728 = vmatmul.f32.gmra.mxu0 %v3727
  %v3729 = vpop.f32.mrf.mxu0
  %v3730 = vadd.f32 %v3697, %v3729
  %v3731 = vand.u32 %v3488, 4294901760
  %3732 = vmatmul.f32.gmra.mxu0 %v3731
  %v3733 = vpop.f32.mrf.mxu0
  %v3734 = vadd.f32 %v3701, %v3733
  %v3735 = vand.u32 %v3491, 4294901760
  %3736 = vmatmul.f32.gmra.mxu0 %v3735
  %v3737 = vpop.f32.mrf.mxu0
  %v3738 = vadd.f32 %v3705, %v3737
  %3739 = vdwg.mxu0
  %3743 = vrot.lane.b32.xlu0 %v3730, 112
  %v3744 = vpop.permute.xlu0 %3743
  %3745 = vrot.lane.b32.xlu0 %v3734, 112
  %v3746 = vpop.permute.xlu0 %3745
  %3747 = vrot.lane.b32.xlu0 %v3738, 112
  %v3748 = vpop.permute.xlu0 %3747
  %v3752 = vsel %vm1068, %v3730, %v3744
  %v3753 = vsel %vm1069, %v3734, %v3746
  %v3754 = vsel %vm1070, %v3738, %v3748
  %v3756 = vsel %vm1169, %v3754, 0
  %3758 = vmatpush.msra.mxu0 0.0
  %3759 = vmatpush.msra.mxu0 0.0
  %3760 = vmatpush.msra.mxu0 0.0
  %3761 = vmatpush.msra.mxu0 0.0
  %3762 = vmatpush.msra.mxu0 0.0
  %3763 = vmatpush.msra.mxu0 0.0
  %3764 = vmatpush.msra.mxu0 0.0
  %3765 = vmatpush.msra.mxu0 0.0
  %3766 = vmatpush.msra.mxu0 0.0
  %3767 = vmatpush.msra.mxu0 0.0
  %3768 = vmatpush.msra.mxu0 0.0
  %3769 = vmatpush.msra.mxu0 0.0
  %3770 = vmatpush.msra.mxu0 0.0
  %v3771 = vand.u32 %v3756, 4294901760
  %3772 = vmatpush.msra.mxu0 %v3771
  %v3773 = vand.u32 %v3753, 4294901760
  %3774 = vmatpush.msra.mxu0 %v3773
  %v3775 = vand.u32 %v3752, 4294901760
  %3776 = vmatpush.msra.mxu0 %v3775
  %v3777 = vand.u32 %v1140, 4294901760
  %v3778 = vsub.f32 %v1140, %v3777
  %v3779 = vand.u32 %v3778, 4294901760
  %v3780 = vsub.f32 %v3778, %v3779
  %v3781 = vand.u32 %v3780, 4294901760
  %3782 = vmatmul.f32.gmra.mxu0 %v3781
  %v3783 = vpop.f32.mrf.mxu0
  %v3784 = vadd.f32 0.0, %v3783
  %v3785 = vand.u32 %v1143, 4294901760
  %v3786 = vsub.f32 %v1143, %v3785
  %v3787 = vand.u32 %v3786, 4294901760
  %v3788 = vsub.f32 %v3786, %v3787
  %v3789 = vand.u32 %v3788, 4294901760
  %3790 = vmatmul.f32.gmra.mxu0 %v3789
  %v3791 = vpop.f32.mrf.mxu0
  %v3792 = vadd.f32 0.0, %v3791
  %v3793 = vand.u32 %v1146, 4294901760
  %v3794 = vsub.f32 %v1146, %v3793
  %v3795 = vand.u32 %v3794, 4294901760
  %v3796 = vsub.f32 %v3794, %v3795
  %v3797 = vand.u32 %v3796, 4294901760
  %3798 = vmatmul.f32.gmra.mxu0 %v3797
  %v3799 = vpop.f32.mrf.mxu0
  %v3800 = vadd.f32 0.0, %v3799
  %v3801 = vand.u32 %v1149, 4294901760
  %v3802 = vsub.f32 %v1149, %v3801
  %v3803 = vand.u32 %v3802, 4294901760
  %v3804 = vsub.f32 %v3802, %v3803
  %v3805 = vand.u32 %v3804, 4294901760
  %3806 = vmatmul.f32.gmra.mxu0 %v3805
  %v3807 = vpop.f32.mrf.mxu0
  %v3808 = vadd.f32 0.0, %v3807
  %v3809 = vand.u32 %v1152, 4294901760
  %v3810 = vsub.f32 %v1152, %v3809
  %v3811 = vand.u32 %v3810, 4294901760
  %v3812 = vsub.f32 %v3810, %v3811
  %v3813 = vand.u32 %v3812, 4294901760
  %3814 = vmatmul.f32.gmra.mxu0 %v3813
  %v3815 = vpop.f32.mrf.mxu0
  %v3816 = vadd.f32 0.0, %v3815
  %v3817 = vand.u32 %v1155, 4294901760
  %v3818 = vsub.f32 %v1155, %v3817
  %v3819 = vand.u32 %v3818, 4294901760
  %v3820 = vsub.f32 %v3818, %v3819
  %v3821 = vand.u32 %v3820, 4294901760
  %3822 = vmatmul.f32.gmra.mxu0 %v3821
  %v3823 = vpop.f32.mrf.mxu0
  %v3824 = vadd.f32 0.0, %v3823
  %v3825 = vand.u32 %v1158, 4294901760
  %v3826 = vsub.f32 %v1158, %v3825
  %v3827 = vand.u32 %v3826, 4294901760
  %v3828 = vsub.f32 %v3826, %v3827
  %v3829 = vand.u32 %v3828, 4294901760
  %3830 = vmatmul.f32.gmra.mxu0 %v3829
  %v3831 = vpop.f32.mrf.mxu0
  %v3832 = vadd.f32 0.0, %v3831
  %v3833 = vand.u32 %v1161, 4294901760
  %v3834 = vsub.f32 %v1161, %v3833
  %v3835 = vand.u32 %v3834, 4294901760
  %v3836 = vsub.f32 %v3834, %v3835
  %v3837 = vand.u32 %v3836, 4294901760
  %3838 = vmatmul.f32.gmra.mxu0 %v3837
  %v3839 = vpop.f32.mrf.mxu0
  %v3840 = vadd.f32 0.0, %v3839
  %v3841 = vand.u32 %v1164, 4294901760
  %v3842 = vsub.f32 %v1164, %v3841
  %v3843 = vand.u32 %v3842, 4294901760
  %v3844 = vsub.f32 %v3842, %v3843
  %v3845 = vand.u32 %v3844, 4294901760
  %3846 = vmatmul.f32.gmra.mxu0 %v3845
  %v3847 = vpop.f32.mrf.mxu0
  %v3848 = vadd.f32 0.0, %v3847
  %v3849 = vand.u32 %v1167, 4294901760
  %v3850 = vsub.f32 %v1167, %v3849
  %v3851 = vand.u32 %v3850, 4294901760
  %v3852 = vsub.f32 %v3850, %v3851
  %v3853 = vand.u32 %v3852, 4294901760
  %3854 = vmatmul.f32.gmra.mxu0 %v3853
  %v3855 = vpop.f32.mrf.mxu0
  %v3856 = vadd.f32 0.0, %v3855
  %3857 = vdwg.mxu0
  %3858 = vmatpush.msra.mxu0 0.0
  %3859 = vmatpush.msra.mxu0 0.0
  %3860 = vmatpush.msra.mxu0 0.0
  %3861 = vmatpush.msra.mxu0 0.0
  %3862 = vmatpush.msra.mxu0 0.0
  %3863 = vmatpush.msra.mxu0 0.0
  %3864 = vmatpush.msra.mxu0 0.0
  %3865 = vmatpush.msra.mxu0 0.0
  %3866 = vmatpush.msra.mxu0 0.0
  %3867 = vmatpush.msra.mxu0 0.0
  %3868 = vmatpush.msra.mxu0 0.0
  %3869 = vmatpush.msra.mxu0 0.0
  %3870 = vmatpush.msra.mxu0 0.0
  %v3871 = vand.u32 %v3756, 4294901760
  %v3872 = vsub.f32 %v3756, %v3871
  %v3873 = vand.u32 %v3872, 4294901760
  %v3874 = vsub.f32 %v3872, %v3873
  %v3875 = vand.u32 %v3874, 4294901760
  %3876 = vmatpush.msra.mxu0 %v3875
  %v3877 = vand.u32 %v3753, 4294901760
  %v3878 = vsub.f32 %v3753, %v3877
  %v3879 = vand.u32 %v3878, 4294901760
  %v3880 = vsub.f32 %v3878, %v3879
  %v3881 = vand.u32 %v3880, 4294901760
  %3882 = vmatpush.msra.mxu0 %v3881
  %v3883 = vand.u32 %v3752, 4294901760
  %v3884 = vsub.f32 %v3752, %v3883
  %v3885 = vand.u32 %v3884, 4294901760
  %v3886 = vsub.f32 %v3884, %v3885
  %v3887 = vand.u32 %v3886, 4294901760
  %3888 = vmatpush.msra.mxu0 %v3887
  %v3889 = vand.u32 %v1140, 4294901760
  %3890 = vmatmul.f32.gmra.mxu0 %v3889
  %v3891 = vpop.f32.mrf.mxu0
  %v3892 = vadd.f32 %v3784, %v3891
  %v3893 = vand.u32 %v1143, 4294901760
  %3894 = vmatmul.f32.gmra.mxu0 %v3893
  %v3895 = vpop.f32.mrf.mxu0
  %v3896 = vadd.f32 %v3792, %v3895
  %v3897 = vand.u32 %v1146, 4294901760
  %3898 = vmatmul.f32.gmra.mxu0 %v3897
  %v3899 = vpop.f32.mrf.mxu0
  %v3900 = vadd.f32 %v3800, %v3899
  %v3901 = vand.u32 %v1149, 4294901760
  %3902 = vmatmul.f32.gmra.mxu0 %v3901
  %v3903 = vpop.f32.mrf.mxu0
  %v3904 = vadd.f32 %v3808, %v3903
  %v3905 = vand.u32 %v1152, 4294901760
  %3906 = vmatmul.f32.gmra.mxu0 %v3905
  %v3907 = vpop.f32.mrf.mxu0
  %v3908 = vadd.f32 %v3816, %v3907
  %v3909 = vand.u32 %v1155, 4294901760
  %3910 = vmatmul.f32.gmra.mxu0 %v3909
  %v3911 = vpop.f32.mrf.mxu0
  %v3912 = vadd.f32 %v3824, %v3911
  %v3913 = vand.u32 %v1158, 4294901760
  %3914 = vmatmul.f32.gmra.mxu0 %v3913
  %v3915 = vpop.f32.mrf.mxu0
  %v3916 = vadd.f32 %v3832, %v3915
  %v3917 = vand.u32 %v1161, 4294901760
  %3918 = vmatmul.f32.gmra.mxu0 %v3917
  %v3919 = vpop.f32.mrf.mxu0
  %v3920 = vadd.f32 %v3840, %v3919
  %v3921 = vand.u32 %v1164, 4294901760
  %3922 = vmatmul.f32.gmra.mxu0 %v3921
  %v3923 = vpop.f32.mrf.mxu0
  %v3924 = vadd.f32 %v3848, %v3923
  %v3925 = vand.u32 %v1167, 4294901760
  %3926 = vmatmul.f32.gmra.mxu0 %v3925
  %v3927 = vpop.f32.mrf.mxu0
  %v3928 = vadd.f32 %v3856, %v3927
  %3929 = vdwg.mxu0
  %3930 = vmatpush.msra.mxu0 0.0
  %3931 = vmatpush.msra.mxu0 0.0
  %3932 = vmatpush.msra.mxu0 0.0
  %3933 = vmatpush.msra.mxu0 0.0
  %3934 = vmatpush.msra.mxu0 0.0
  %3935 = vmatpush.msra.mxu0 0.0
  %3936 = vmatpush.msra.mxu0 0.0
  %3937 = vmatpush.msra.mxu0 0.0
  %3938 = vmatpush.msra.mxu0 0.0
  %3939 = vmatpush.msra.mxu0 0.0
  %3940 = vmatpush.msra.mxu0 0.0
  %3941 = vmatpush.msra.mxu0 0.0
  %3942 = vmatpush.msra.mxu0 0.0
  %v3943 = vand.u32 %v3756, 4294901760
  %v3944 = vsub.f32 %v3756, %v3943
  %3945 = vmatpush.msra.mxu0 %v3944
  %v3946 = vand.u32 %v3753, 4294901760
  %v3947 = vsub.f32 %v3753, %v3946
  %3948 = vmatpush.msra.mxu0 %v3947
  %v3949 = vand.u32 %v3752, 4294901760
  %v3950 = vsub.f32 %v3752, %v3949
  %3951 = vmatpush.msra.mxu0 %v3950
  %v3952 = vand.u32 %v1140, 4294901760
  %v3953 = vsub.f32 %v1140, %v3952
  %3954 = vmatmul.f32.gmra.mxu0 %v3953
  %v3955 = vpop.f32.mrf.mxu0
  %v3956 = vadd.f32 %v3892, %v3955
  %v3957 = vand.u32 %v1143, 4294901760
  %v3958 = vsub.f32 %v1143, %v3957
  %3959 = vmatmul.f32.gmra.mxu0 %v3958
  %v3960 = vpop.f32.mrf.mxu0
  %v3961 = vadd.f32 %v3896, %v3960
  %v3962 = vand.u32 %v1146, 4294901760
  %v3963 = vsub.f32 %v1146, %v3962
  %3964 = vmatmul.f32.gmra.mxu0 %v3963
  %v3965 = vpop.f32.mrf.mxu0
  %v3966 = vadd.f32 %v3900, %v3965
  %v3967 = vand.u32 %v1149, 4294901760
  %v3968 = vsub.f32 %v1149, %v3967
  %3969 = vmatmul.f32.gmra.mxu0 %v3968
  %v3970 = vpop.f32.mrf.mxu0
  %v3971 = vadd.f32 %v3904, %v3970
  %v3972 = vand.u32 %v1152, 4294901760
  %v3973 = vsub.f32 %v1152, %v3972
  %3974 = vmatmul.f32.gmra.mxu0 %v3973
  %v3975 = vpop.f32.mrf.mxu0
  %v3976 = vadd.f32 %v3908, %v3975
  %v3977 = vand.u32 %v1155, 4294901760
  %v3978 = vsub.f32 %v1155, %v3977
  %3979 = vmatmul.f32.gmra.mxu0 %v3978
  %v3980 = vpop.f32.mrf.mxu0
  %v3981 = vadd.f32 %v3912, %v3980
  %v3982 = vand.u32 %v1158, 4294901760
  %v3983 = vsub.f32 %v1158, %v3982
  %3984 = vmatmul.f32.gmra.mxu0 %v3983
  %v3985 = vpop.f32.mrf.mxu0
  %v3986 = vadd.f32 %v3916, %v3985
  %v3987 = vand.u32 %v1161, 4294901760
  %v3988 = vsub.f32 %v1161, %v3987
  %3989 = vmatmul.f32.gmra.mxu0 %v3988
  %v3990 = vpop.f32.mrf.mxu0
  %v3991 = vadd.f32 %v3920, %v3990
  %v3992 = vand.u32 %v1164, 4294901760
  %v3993 = vsub.f32 %v1164, %v3992
  %3994 = vmatmul.f32.gmra.mxu0 %v3993
  %v3995 = vpop.f32.mrf.mxu0
  %v3996 = vadd.f32 %v3924, %v3995
  %v3997 = vand.u32 %v1167, 4294901760
  %v3998 = vsub.f32 %v1167, %v3997
  %3999 = vmatmul.f32.gmra.mxu0 %v3998
  %v4000 = vpop.f32.mrf.mxu0
  %v4001 = vadd.f32 %v3928, %v4000
  %4002 = vdwg.mxu0
  %4003 = vmatpush.msra.mxu0 0.0
  %4004 = vmatpush.msra.mxu0 0.0
  %4005 = vmatpush.msra.mxu0 0.0
  %4006 = vmatpush.msra.mxu0 0.0
  %4007 = vmatpush.msra.mxu0 0.0
  %4008 = vmatpush.msra.mxu0 0.0
  %4009 = vmatpush.msra.mxu0 0.0
  %4010 = vmatpush.msra.mxu0 0.0
  %4011 = vmatpush.msra.mxu0 0.0
  %4012 = vmatpush.msra.mxu0 0.0
  %4013 = vmatpush.msra.mxu0 0.0
  %4014 = vmatpush.msra.mxu0 0.0
  %4015 = vmatpush.msra.mxu0 0.0
  %v4016 = vand.u32 %v3756, 4294901760
  %4017 = vmatpush.msra.mxu0 %v4016
  %v4018 = vand.u32 %v3753, 4294901760
  %4019 = vmatpush.msra.mxu0 %v4018
  %v4020 = vand.u32 %v3752, 4294901760
  %4021 = vmatpush.msra.mxu0 %v4020
  %v4022 = vand.u32 %v1140, 4294901760
  %v4023 = vsub.f32 %v1140, %v4022
  %v4024 = vand.u32 %v4023, 4294901760
  %4025 = vmatmul.f32.gmra.mxu0 %v4024
  %v4026 = vpop.f32.mrf.mxu0
  %v4027 = vadd.f32 %v3956, %v4026
  %v4028 = vand.u32 %v1143, 4294901760
  %v4029 = vsub.f32 %v1143, %v4028
  %v4030 = vand.u32 %v4029, 4294901760
  %4031 = vmatmul.f32.gmra.mxu0 %v4030
  %v4032 = vpop.f32.mrf.mxu0
  %v4033 = vadd.f32 %v3961, %v4032
  %v4034 = vand.u32 %v1146, 4294901760
  %v4035 = vsub.f32 %v1146, %v4034
  %v4036 = vand.u32 %v4035, 4294901760
  %4037 = vmatmul.f32.gmra.mxu0 %v4036
  %v4038 = vpop.f32.mrf.mxu0
  %v4039 = vadd.f32 %v3966, %v4038
  %v4040 = vand.u32 %v1149, 4294901760
  %v4041 = vsub.f32 %v1149, %v4040
  %v4042 = vand.u32 %v4041, 4294901760
  %4043 = vmatmul.f32.gmra.mxu0 %v4042
  %v4044 = vpop.f32.mrf.mxu0
  %v4045 = vadd.f32 %v3971, %v4044
  %v4046 = vand.u32 %v1152, 4294901760
  %v4047 = vsub.f32 %v1152, %v4046
  %v4048 = vand.u32 %v4047, 4294901760
  %4049 = vmatmul.f32.gmra.mxu0 %v4048
  %v4050 = vpop.f32.mrf.mxu0
  %v4051 = vadd.f32 %v3976, %v4050
  %v4052 = vand.u32 %v1155, 4294901760
  %v4053 = vsub.f32 %v1155, %v4052
  %v4054 = vand.u32 %v4053, 4294901760
  %4055 = vmatmul.f32.gmra.mxu0 %v4054
  %v4056 = vpop.f32.mrf.mxu0
  %v4057 = vadd.f32 %v3981, %v4056
  %v4058 = vand.u32 %v1158, 4294901760
  %v4059 = vsub.f32 %v1158, %v4058
  %v4060 = vand.u32 %v4059, 4294901760
  %4061 = vmatmul.f32.gmra.mxu0 %v4060
  %v4062 = vpop.f32.mrf.mxu0
  %v4063 = vadd.f32 %v3986, %v4062
  %v4064 = vand.u32 %v1161, 4294901760
  %v4065 = vsub.f32 %v1161, %v4064
  %v4066 = vand.u32 %v4065, 4294901760
  %4067 = vmatmul.f32.gmra.mxu0 %v4066
  %v4068 = vpop.f32.mrf.mxu0
  %v4069 = vadd.f32 %v3991, %v4068
  %v4070 = vand.u32 %v1164, 4294901760
  %v4071 = vsub.f32 %v1164, %v4070
  %v4072 = vand.u32 %v4071, 4294901760
  %4073 = vmatmul.f32.gmra.mxu0 %v4072
  %v4074 = vpop.f32.mrf.mxu0
  %v4075 = vadd.f32 %v3996, %v4074
  %v4076 = vand.u32 %v1167, 4294901760
  %v4077 = vsub.f32 %v1167, %v4076
  %v4078 = vand.u32 %v4077, 4294901760
  %4079 = vmatmul.f32.gmra.mxu0 %v4078
  %v4080 = vpop.f32.mrf.mxu0
  %v4081 = vadd.f32 %v4001, %v4080
  %4082 = vdwg.mxu0
  %4083 = vmatpush.msra.mxu0 0.0
  %4084 = vmatpush.msra.mxu0 0.0
  %4085 = vmatpush.msra.mxu0 0.0
  %4086 = vmatpush.msra.mxu0 0.0
  %4087 = vmatpush.msra.mxu0 0.0
  %4088 = vmatpush.msra.mxu0 0.0
  %4089 = vmatpush.msra.mxu0 0.0
  %4090 = vmatpush.msra.mxu0 0.0
  %4091 = vmatpush.msra.mxu0 0.0
  %4092 = vmatpush.msra.mxu0 0.0
  %4093 = vmatpush.msra.mxu0 0.0
  %4094 = vmatpush.msra.mxu0 0.0
  %4095 = vmatpush.msra.mxu0 0.0
  %v4096 = vand.u32 %v3756, 4294901760
  %v4097 = vsub.f32 %v3756, %v4096
  %v4098 = vand.u32 %v4097, 4294901760
  %4099 = vmatpush.msra.mxu0 %v4098
  %v4100 = vand.u32 %v3753, 4294901760
  %v4101 = vsub.f32 %v3753, %v4100
  %v4102 = vand.u32 %v4101, 4294901760
  %4103 = vmatpush.msra.mxu0 %v4102
  %v4104 = vand.u32 %v3752, 4294901760
  %v4105 = vsub.f32 %v3752, %v4104
  %v4106 = vand.u32 %v4105, 4294901760
  %4107 = vmatpush.msra.mxu0 %v4106
  %v4108 = vand.u32 %v1140, 4294901760
  %4109 = vmatmul.f32.gmra.mxu0 %v4108
  %v4110 = vpop.f32.mrf.mxu0
  %v4111 = vadd.f32 %v4027, %v4110
  %v4112 = vand.u32 %v1143, 4294901760
  %4113 = vmatmul.f32.gmra.mxu0 %v4112
  %v4114 = vpop.f32.mrf.mxu0
  %v4115 = vadd.f32 %v4033, %v4114
  %v4116 = vand.u32 %v1146, 4294901760
  %4117 = vmatmul.f32.gmra.mxu0 %v4116
  %v4118 = vpop.f32.mrf.mxu0
  %v4119 = vadd.f32 %v4039, %v4118
  %v4120 = vand.u32 %v1149, 4294901760
  %4121 = vmatmul.f32.gmra.mxu0 %v4120
  %v4122 = vpop.f32.mrf.mxu0
  %v4123 = vadd.f32 %v4045, %v4122
  %v4124 = vand.u32 %v1152, 4294901760
  %4125 = vmatmul.f32.gmra.mxu0 %v4124
  %v4126 = vpop.f32.mrf.mxu0
  %v4127 = vadd.f32 %v4051, %v4126
  %v4128 = vand.u32 %v1155, 4294901760
  %4129 = vmatmul.f32.gmra.mxu0 %v4128
  %v4130 = vpop.f32.mrf.mxu0
  %v4131 = vadd.f32 %v4057, %v4130
  %v4132 = vand.u32 %v1158, 4294901760
  %4133 = vmatmul.f32.gmra.mxu0 %v4132
  %v4134 = vpop.f32.mrf.mxu0
  %v4135 = vadd.f32 %v4063, %v4134
  %v4136 = vand.u32 %v1161, 4294901760
  %4137 = vmatmul.f32.gmra.mxu0 %v4136
  %v4138 = vpop.f32.mrf.mxu0
  %v4139 = vadd.f32 %v4069, %v4138
  %v4140 = vand.u32 %v1164, 4294901760
  %4141 = vmatmul.f32.gmra.mxu0 %v4140
  %v4142 = vpop.f32.mrf.mxu0
  %v4143 = vadd.f32 %v4075, %v4142
  %v4144 = vand.u32 %v1167, 4294901760
  %4145 = vmatmul.f32.gmra.mxu0 %v4144
  %v4146 = vpop.f32.mrf.mxu0
  %v4147 = vadd.f32 %v4081, %v4146
  %4148 = vdwg.mxu0
  %4149 = vmatpush.msra.mxu0 0.0
  %4150 = vmatpush.msra.mxu0 0.0
  %4151 = vmatpush.msra.mxu0 0.0
  %4152 = vmatpush.msra.mxu0 0.0
  %4153 = vmatpush.msra.mxu0 0.0
  %4154 = vmatpush.msra.mxu0 0.0
  %4155 = vmatpush.msra.mxu0 0.0
  %4156 = vmatpush.msra.mxu0 0.0
  %4157 = vmatpush.msra.mxu0 0.0
  %4158 = vmatpush.msra.mxu0 0.0
  %4159 = vmatpush.msra.mxu0 0.0
  %4160 = vmatpush.msra.mxu0 0.0
  %4161 = vmatpush.msra.mxu0 0.0
  %v4162 = vand.u32 %v3756, 4294901760
  %4163 = vmatpush.msra.mxu0 %v4162
  %v4164 = vand.u32 %v3753, 4294901760
  %4165 = vmatpush.msra.mxu0 %v4164
  %v4166 = vand.u32 %v3752, 4294901760
  %4167 = vmatpush.msra.mxu0 %v4166
  %v4168 = vand.u32 %v1140, 4294901760
  %4169 = vmatmul.f32.gmra.mxu0 %v4168
  %v4170 = vpop.f32.mrf.mxu0
  %v4171 = vadd.f32 %v4111, %v4170
  %v4172 = vand.u32 %v1143, 4294901760
  %4173 = vmatmul.f32.gmra.mxu0 %v4172
  %v4174 = vpop.f32.mrf.mxu0
  %v4175 = vadd.f32 %v4115, %v4174
  %v4176 = vand.u32 %v1146, 4294901760
  %4177 = vmatmul.f32.gmra.mxu0 %v4176
  %v4178 = vpop.f32.mrf.mxu0
  %v4179 = vadd.f32 %v4119, %v4178
  %v4180 = vand.u32 %v1149, 4294901760
  %4181 = vmatmul.f32.gmra.mxu0 %v4180
  %v4182 = vpop.f32.mrf.mxu0
  %v4183 = vadd.f32 %v4123, %v4182
  %v4184 = vand.u32 %v1152, 4294901760
  %4185 = vmatmul.f32.gmra.mxu0 %v4184
  %v4186 = vpop.f32.mrf.mxu0
  %v4187 = vadd.f32 %v4127, %v4186
  %v4188 = vand.u32 %v1155, 4294901760
  %4189 = vmatmul.f32.gmra.mxu0 %v4188
  %v4190 = vpop.f32.mrf.mxu0
  %v4191 = vadd.f32 %v4131, %v4190
  %v4192 = vand.u32 %v1158, 4294901760
  %4193 = vmatmul.f32.gmra.mxu0 %v4192
  %v4194 = vpop.f32.mrf.mxu0
  %v4195 = vadd.f32 %v4135, %v4194
  %v4196 = vand.u32 %v1161, 4294901760
  %4197 = vmatmul.f32.gmra.mxu0 %v4196
  %v4198 = vpop.f32.mrf.mxu0
  %v4199 = vadd.f32 %v4139, %v4198
  %v4200 = vand.u32 %v1164, 4294901760
  %4201 = vmatmul.f32.gmra.mxu0 %v4200
  %v4202 = vpop.f32.mrf.mxu0
  %v4203 = vadd.f32 %v4143, %v4202
  %v4204 = vand.u32 %v1167, 4294901760
  %4205 = vmatmul.f32.gmra.mxu0 %v4204
  %v4206 = vpop.f32.mrf.mxu0
  %v4207 = vadd.f32 %v4147, %v4206
  %4208 = vdwg.mxu0
  %4209 = vmatpush.msra.mxu0 0.0
  %4210 = vmatpush.msra.mxu0 0.0
  %4211 = vmatpush.msra.mxu0 0.0
  %4212 = vmatpush.msra.mxu0 0.0
  %4213 = vmatpush.msra.mxu0 0.0
  %4214 = vmatpush.msra.mxu0 0.0
  %4215 = vmatpush.msra.mxu0 0.0
  %4216 = vmatpush.msra.mxu0 0.0
  %4217 = vmatpush.msra.mxu0 0.0
  %4218 = vmatpush.msra.mxu0 0.0
  %4219 = vmatpush.msra.mxu0 0.0
  %4220 = vmatpush.msra.mxu0 0.0
  %4221 = vmatpush.msra.mxu0 0.0
  %4222 = vmatpush.msra.mxu0 0.0
  %v4223 = vand.u32 %v20, 4294901760
  %4224 = vmatpush.msra.mxu0 %v4223
  %v4225 = vand.u32 %v19, 4294901760
  %4226 = vmatpush.msra.mxu0 %v4225
  %v4227 = vand.u32 %v2996, 4294901760
  %v4228 = vsub.f32 %v2996, %v4227
  %v4229 = vand.u32 %v4228, 4294901760
  %v4230 = vsub.f32 %v4228, %v4229
  %v4231 = vand.u32 %v4230, 4294901760
  %4232 = vmatmul.f32.gmra.mxu0 %v4231
  %v4233 = vpop.f32.mrf.mxu0
  %v4234 = vadd.f32 %v4171, %v4233
  %v4235 = vand.u32 %v2999, 4294901760
  %v4236 = vsub.f32 %v2999, %v4235
  %v4237 = vand.u32 %v4236, 4294901760
  %v4238 = vsub.f32 %v4236, %v4237
  %v4239 = vand.u32 %v4238, 4294901760
  %4240 = vmatmul.f32.gmra.mxu0 %v4239
  %v4241 = vpop.f32.mrf.mxu0
  %v4242 = vadd.f32 %v4175, %v4241
  %v4243 = vand.u32 %v3002, 4294901760
  %v4244 = vsub.f32 %v3002, %v4243
  %v4245 = vand.u32 %v4244, 4294901760
  %v4246 = vsub.f32 %v4244, %v4245
  %v4247 = vand.u32 %v4246, 4294901760
  %4248 = vmatmul.f32.gmra.mxu0 %v4247
  %v4249 = vpop.f32.mrf.mxu0
  %v4250 = vadd.f32 %v4179, %v4249
  %v4251 = vand.u32 %v3005, 4294901760
  %v4252 = vsub.f32 %v3005, %v4251
  %v4253 = vand.u32 %v4252, 4294901760
  %v4254 = vsub.f32 %v4252, %v4253
  %v4255 = vand.u32 %v4254, 4294901760
  %4256 = vmatmul.f32.gmra.mxu0 %v4255
  %v4257 = vpop.f32.mrf.mxu0
  %v4258 = vadd.f32 %v4183, %v4257
  %v4259 = vand.u32 %v3008, 4294901760
  %v4260 = vsub.f32 %v3008, %v4259
  %v4261 = vand.u32 %v4260, 4294901760
  %v4262 = vsub.f32 %v4260, %v4261
  %v4263 = vand.u32 %v4262, 4294901760
  %4264 = vmatmul.f32.gmra.mxu0 %v4263
  %v4265 = vpop.f32.mrf.mxu0
  %v4266 = vadd.f32 %v4187, %v4265
  %v4267 = vand.u32 %v3011, 4294901760
  %v4268 = vsub.f32 %v3011, %v4267
  %v4269 = vand.u32 %v4268, 4294901760
  %v4270 = vsub.f32 %v4268, %v4269
  %v4271 = vand.u32 %v4270, 4294901760
  %4272 = vmatmul.f32.gmra.mxu0 %v4271
  %v4273 = vpop.f32.mrf.mxu0
  %v4274 = vadd.f32 %v4191, %v4273
  %v4275 = vand.u32 %v3014, 4294901760
  %v4276 = vsub.f32 %v3014, %v4275
  %v4277 = vand.u32 %v4276, 4294901760
  %v4278 = vsub.f32 %v4276, %v4277
  %v4279 = vand.u32 %v4278, 4294901760
  %4280 = vmatmul.f32.gmra.mxu0 %v4279
  %v4281 = vpop.f32.mrf.mxu0
  %v4282 = vadd.f32 %v4195, %v4281
  %v4283 = vand.u32 %v3017, 4294901760
  %v4284 = vsub.f32 %v3017, %v4283
  %v4285 = vand.u32 %v4284, 4294901760
  %v4286 = vsub.f32 %v4284, %v4285
  %v4287 = vand.u32 %v4286, 4294901760
  %4288 = vmatmul.f32.gmra.mxu0 %v4287
  %v4289 = vpop.f32.mrf.mxu0
  %v4290 = vadd.f32 %v4199, %v4289
  %v4291 = vand.u32 %v3020, 4294901760
  %v4292 = vsub.f32 %v3020, %v4291
  %v4293 = vand.u32 %v4292, 4294901760
  %v4294 = vsub.f32 %v4292, %v4293
  %v4295 = vand.u32 %v4294, 4294901760
  %4296 = vmatmul.f32.gmra.mxu0 %v4295
  %v4297 = vpop.f32.mrf.mxu0
  %v4298 = vadd.f32 %v4203, %v4297
  %v4299 = vand.u32 %v3023, 4294901760
  %v4300 = vsub.f32 %v3023, %v4299
  %v4301 = vand.u32 %v4300, 4294901760
  %v4302 = vsub.f32 %v4300, %v4301
  %v4303 = vand.u32 %v4302, 4294901760
  %4304 = vmatmul.f32.gmra.mxu0 %v4303
  %v4305 = vpop.f32.mrf.mxu0
  %v4306 = vadd.f32 %v4207, %v4305
  %4307 = vdwg.mxu0
  %4308 = vmatpush.msra.mxu0 0.0
  %4309 = vmatpush.msra.mxu0 0.0
  %4310 = vmatpush.msra.mxu0 0.0
  %4311 = vmatpush.msra.mxu0 0.0
  %4312 = vmatpush.msra.mxu0 0.0
  %4313 = vmatpush.msra.mxu0 0.0
  %4314 = vmatpush.msra.mxu0 0.0
  %4315 = vmatpush.msra.mxu0 0.0
  %4316 = vmatpush.msra.mxu0 0.0
  %4317 = vmatpush.msra.mxu0 0.0
  %4318 = vmatpush.msra.mxu0 0.0
  %4319 = vmatpush.msra.mxu0 0.0
  %4320 = vmatpush.msra.mxu0 0.0
  %4321 = vmatpush.msra.mxu0 0.0
  %v4322 = vand.u32 %v20, 4294901760
  %v4323 = vsub.f32 %v20, %v4322
  %v4324 = vand.u32 %v4323, 4294901760
  %v4325 = vsub.f32 %v4323, %v4324
  %v4326 = vand.u32 %v4325, 4294901760
  %4327 = vmatpush.msra.mxu0 %v4326
  %v4328 = vand.u32 %v19, 4294901760
  %v4329 = vsub.f32 %v19, %v4328
  %v4330 = vand.u32 %v4329, 4294901760
  %v4331 = vsub.f32 %v4329, %v4330
  %v4332 = vand.u32 %v4331, 4294901760
  %4333 = vmatpush.msra.mxu0 %v4332
  %v4334 = vand.u32 %v2996, 4294901760
  %4335 = vmatmul.f32.gmra.mxu0 %v4334
  %v4336 = vpop.f32.mrf.mxu0
  %v4337 = vadd.f32 %v4234, %v4336
  %v4338 = vand.u32 %v2999, 4294901760
  %4339 = vmatmul.f32.gmra.mxu0 %v4338
  %v4340 = vpop.f32.mrf.mxu0
  %v4341 = vadd.f32 %v4242, %v4340
  %v4342 = vand.u32 %v3002, 4294901760
  %4343 = vmatmul.f32.gmra.mxu0 %v4342
  %v4344 = vpop.f32.mrf.mxu0
  %v4345 = vadd.f32 %v4250, %v4344
  %v4346 = vand.u32 %v3005, 4294901760
  %4347 = vmatmul.f32.gmra.mxu0 %v4346
  %v4348 = vpop.f32.mrf.mxu0
  %v4349 = vadd.f32 %v4258, %v4348
  %v4350 = vand.u32 %v3008, 4294901760
  %4351 = vmatmul.f32.gmra.mxu0 %v4350
  %v4352 = vpop.f32.mrf.mxu0
  %v4353 = vadd.f32 %v4266, %v4352
  %v4354 = vand.u32 %v3011, 4294901760
  %4355 = vmatmul.f32.gmra.mxu0 %v4354
  %v4356 = vpop.f32.mrf.mxu0
  %v4357 = vadd.f32 %v4274, %v4356
  %v4358 = vand.u32 %v3014, 4294901760
  %4359 = vmatmul.f32.gmra.mxu0 %v4358
  %v4360 = vpop.f32.mrf.mxu0
  %v4361 = vadd.f32 %v4282, %v4360
  %v4362 = vand.u32 %v3017, 4294901760
  %4363 = vmatmul.f32.gmra.mxu0 %v4362
  %v4364 = vpop.f32.mrf.mxu0
  %v4365 = vadd.f32 %v4290, %v4364
  %v4366 = vand.u32 %v3020, 4294901760
  %4367 = vmatmul.f32.gmra.mxu0 %v4366
  %v4368 = vpop.f32.mrf.mxu0
  %v4369 = vadd.f32 %v4298, %v4368
  %v4370 = vand.u32 %v3023, 4294901760
  %4371 = vmatmul.f32.gmra.mxu0 %v4370
  %v4372 = vpop.f32.mrf.mxu0
  %v4373 = vadd.f32 %v4306, %v4372
  %4374 = vdwg.mxu0
  %4375 = vmatpush.msra.mxu0 0.0
  %4376 = vmatpush.msra.mxu0 0.0
  %4377 = vmatpush.msra.mxu0 0.0
  %4378 = vmatpush.msra.mxu0 0.0
  %4379 = vmatpush.msra.mxu0 0.0
  %4380 = vmatpush.msra.mxu0 0.0
  %4381 = vmatpush.msra.mxu0 0.0
  %4382 = vmatpush.msra.mxu0 0.0
  %4383 = vmatpush.msra.mxu0 0.0
  %4384 = vmatpush.msra.mxu0 0.0
  %4385 = vmatpush.msra.mxu0 0.0
  %4386 = vmatpush.msra.mxu0 0.0
  %4387 = vmatpush.msra.mxu0 0.0
  %4388 = vmatpush.msra.mxu0 0.0
  %v4389 = vand.u32 %v20, 4294901760
  %v4390 = vsub.f32 %v20, %v4389
  %4391 = vmatpush.msra.mxu0 %v4390
  %v4392 = vand.u32 %v19, 4294901760
  %v4393 = vsub.f32 %v19, %v4392
  %4394 = vmatpush.msra.mxu0 %v4393
  %v4395 = vand.u32 %v2996, 4294901760
  %v4396 = vsub.f32 %v2996, %v4395
  %4397 = vmatmul.f32.gmra.mxu0 %v4396
  %v4398 = vpop.f32.mrf.mxu0
  %v4399 = vadd.f32 %v4337, %v4398
  %v4400 = vand.u32 %v2999, 4294901760
  %v4401 = vsub.f32 %v2999, %v4400
  %4402 = vmatmul.f32.gmra.mxu0 %v4401
  %v4403 = vpop.f32.mrf.mxu0
  %v4404 = vadd.f32 %v4341, %v4403
  %v4405 = vand.u32 %v3002, 4294901760
  %v4406 = vsub.f32 %v3002, %v4405
  %4407 = vmatmul.f32.gmra.mxu0 %v4406
  %v4408 = vpop.f32.mrf.mxu0
  %v4409 = vadd.f32 %v4345, %v4408
  %v4410 = vand.u32 %v3005, 4294901760
  %v4411 = vsub.f32 %v3005, %v4410
  %4412 = vmatmul.f32.gmra.mxu0 %v4411
  %v4413 = vpop.f32.mrf.mxu0
  %v4414 = vadd.f32 %v4349, %v4413
  %v4415 = vand.u32 %v3008, 4294901760
  %v4416 = vsub.f32 %v3008, %v4415
  %4417 = vmatmul.f32.gmra.mxu0 %v4416
  %v4418 = vpop.f32.mrf.mxu0
  %v4419 = vadd.f32 %v4353, %v4418
  %v4420 = vand.u32 %v3011, 4294901760
  %v4421 = vsub.f32 %v3011, %v4420
  %4422 = vmatmul.f32.gmra.mxu0 %v4421
  %v4423 = vpop.f32.mrf.mxu0
  %v4424 = vadd.f32 %v4357, %v4423
  %v4425 = vand.u32 %v3014, 4294901760
  %v4426 = vsub.f32 %v3014, %v4425
  %4427 = vmatmul.f32.gmra.mxu0 %v4426
  %v4428 = vpop.f32.mrf.mxu0
  %v4429 = vadd.f32 %v4361, %v4428
  %v4430 = vand.u32 %v3017, 4294901760
  %v4431 = vsub.f32 %v3017, %v4430
  %4432 = vmatmul.f32.gmra.mxu0 %v4431
  %v4433 = vpop.f32.mrf.mxu0
  %v4434 = vadd.f32 %v4365, %v4433
  %v4435 = vand.u32 %v3020, 4294901760
  %v4436 = vsub.f32 %v3020, %v4435
  %4437 = vmatmul.f32.gmra.mxu0 %v4436
  %v4438 = vpop.f32.mrf.mxu0
  %v4439 = vadd.f32 %v4369, %v4438
  %v4440 = vand.u32 %v3023, 4294901760
  %v4441 = vsub.f32 %v3023, %v4440
  %4442 = vmatmul.f32.gmra.mxu0 %v4441
  %v4443 = vpop.f32.mrf.mxu0
  %v4444 = vadd.f32 %v4373, %v4443
  %4445 = vdwg.mxu0
  %4446 = vmatpush.msra.mxu0 0.0
  %4447 = vmatpush.msra.mxu0 0.0
  %4448 = vmatpush.msra.mxu0 0.0
  %4449 = vmatpush.msra.mxu0 0.0
  %4450 = vmatpush.msra.mxu0 0.0
  %4451 = vmatpush.msra.mxu0 0.0
  %4452 = vmatpush.msra.mxu0 0.0
  %4453 = vmatpush.msra.mxu0 0.0
  %4454 = vmatpush.msra.mxu0 0.0
  %4455 = vmatpush.msra.mxu0 0.0
  %4456 = vmatpush.msra.mxu0 0.0
  %4457 = vmatpush.msra.mxu0 0.0
  %4458 = vmatpush.msra.mxu0 0.0
  %4459 = vmatpush.msra.mxu0 0.0
  %v4460 = vand.u32 %v20, 4294901760
  %4461 = vmatpush.msra.mxu0 %v4460
  %v4462 = vand.u32 %v19, 4294901760
  %4463 = vmatpush.msra.mxu0 %v4462
  %v4464 = vand.u32 %v2996, 4294901760
  %v4465 = vsub.f32 %v2996, %v4464
  %v4466 = vand.u32 %v4465, 4294901760
  %4467 = vmatmul.f32.gmra.mxu0 %v4466
  %v4468 = vpop.f32.mrf.mxu0
  %v4469 = vadd.f32 %v4399, %v4468
  %v4470 = vand.u32 %v2999, 4294901760
  %v4471 = vsub.f32 %v2999, %v4470
  %v4472 = vand.u32 %v4471, 4294901760
  %4473 = vmatmul.f32.gmra.mxu0 %v4472
  %v4474 = vpop.f32.mrf.mxu0
  %v4475 = vadd.f32 %v4404, %v4474
  %v4476 = vand.u32 %v3002, 4294901760
  %v4477 = vsub.f32 %v3002, %v4476
  %v4478 = vand.u32 %v4477, 4294901760
  %4479 = vmatmul.f32.gmra.mxu0 %v4478
  %v4480 = vpop.f32.mrf.mxu0
  %v4481 = vadd.f32 %v4409, %v4480
  %v4482 = vand.u32 %v3005, 4294901760
  %v4483 = vsub.f32 %v3005, %v4482
  %v4484 = vand.u32 %v4483, 4294901760
  %4485 = vmatmul.f32.gmra.mxu0 %v4484
  %v4486 = vpop.f32.mrf.mxu0
  %v4487 = vadd.f32 %v4414, %v4486
  %v4488 = vand.u32 %v3008, 4294901760
  %v4489 = vsub.f32 %v3008, %v4488
  %v4490 = vand.u32 %v4489, 4294901760
  %4491 = vmatmul.f32.gmra.mxu0 %v4490
  %v4492 = vpop.f32.mrf.mxu0
  %v4493 = vadd.f32 %v4419, %v4492
  %v4494 = vand.u32 %v3011, 4294901760
  %v4495 = vsub.f32 %v3011, %v4494
  %v4496 = vand.u32 %v4495, 4294901760
  %4497 = vmatmul.f32.gmra.mxu0 %v4496
  %v4498 = vpop.f32.mrf.mxu0
  %v4499 = vadd.f32 %v4424, %v4498
  %v4500 = vand.u32 %v3014, 4294901760
  %v4501 = vsub.f32 %v3014, %v4500
  %v4502 = vand.u32 %v4501, 4294901760
  %4503 = vmatmul.f32.gmra.mxu0 %v4502
  %v4504 = vpop.f32.mrf.mxu0
  %v4505 = vadd.f32 %v4429, %v4504
  %v4506 = vand.u32 %v3017, 4294901760
  %v4507 = vsub.f32 %v3017, %v4506
  %v4508 = vand.u32 %v4507, 4294901760
  %4509 = vmatmul.f32.gmra.mxu0 %v4508
  %v4510 = vpop.f32.mrf.mxu0
  %v4511 = vadd.f32 %v4434, %v4510
  %v4512 = vand.u32 %v3020, 4294901760
  %v4513 = vsub.f32 %v3020, %v4512
  %v4514 = vand.u32 %v4513, 4294901760
  %4515 = vmatmul.f32.gmra.mxu0 %v4514
  %v4516 = vpop.f32.mrf.mxu0
  %v4517 = vadd.f32 %v4439, %v4516
  %v4518 = vand.u32 %v3023, 4294901760
  %v4519 = vsub.f32 %v3023, %v4518
  %v4520 = vand.u32 %v4519, 4294901760
  %4521 = vmatmul.f32.gmra.mxu0 %v4520
  %v4522 = vpop.f32.mrf.mxu0
  %v4523 = vadd.f32 %v4444, %v4522
  %4524 = vdwg.mxu0
  %4525 = vmatpush.msra.mxu0 0.0
  %4526 = vmatpush.msra.mxu0 0.0
  %4527 = vmatpush.msra.mxu0 0.0
  %4528 = vmatpush.msra.mxu0 0.0
  %4529 = vmatpush.msra.mxu0 0.0
  %4530 = vmatpush.msra.mxu0 0.0
  %4531 = vmatpush.msra.mxu0 0.0
  %4532 = vmatpush.msra.mxu0 0.0
  %4533 = vmatpush.msra.mxu0 0.0
  %4534 = vmatpush.msra.mxu0 0.0
  %4535 = vmatpush.msra.mxu0 0.0
  %4536 = vmatpush.msra.mxu0 0.0
  %4537 = vmatpush.msra.mxu0 0.0
  %4538 = vmatpush.msra.mxu0 0.0
  %v4539 = vand.u32 %v20, 4294901760
  %v4540 = vsub.f32 %v20, %v4539
  %v4541 = vand.u32 %v4540, 4294901760
  %4542 = vmatpush.msra.mxu0 %v4541
  %v4543 = vand.u32 %v19, 4294901760
  %v4544 = vsub.f32 %v19, %v4543
  %v4545 = vand.u32 %v4544, 4294901760
  %4546 = vmatpush.msra.mxu0 %v4545
  %v4547 = vand.u32 %v2996, 4294901760
  %4548 = vmatmul.f32.gmra.mxu0 %v4547
  %v4549 = vpop.f32.mrf.mxu0
  %v4550 = vadd.f32 %v4469, %v4549
  %v4551 = vand.u32 %v2999, 4294901760
  %4552 = vmatmul.f32.gmra.mxu0 %v4551
  %v4553 = vpop.f32.mrf.mxu0
  %v4554 = vadd.f32 %v4475, %v4553
  %v4555 = vand.u32 %v3002, 4294901760
  %4556 = vmatmul.f32.gmra.mxu0 %v4555
  %v4557 = vpop.f32.mrf.mxu0
  %v4558 = vadd.f32 %v4481, %v4557
  %v4559 = vand.u32 %v3005, 4294901760
  %4560 = vmatmul.f32.gmra.mxu0 %v4559
  %v4561 = vpop.f32.mrf.mxu0
  %v4562 = vadd.f32 %v4487, %v4561
  %v4563 = vand.u32 %v3008, 4294901760
  %4564 = vmatmul.f32.gmra.mxu0 %v4563
  %v4565 = vpop.f32.mrf.mxu0
  %v4566 = vadd.f32 %v4493, %v4565
  %v4567 = vand.u32 %v3011, 4294901760
  %4568 = vmatmul.f32.gmra.mxu0 %v4567
  %v4569 = vpop.f32.mrf.mxu0
  %v4570 = vadd.f32 %v4499, %v4569
  %v4571 = vand.u32 %v3014, 4294901760
  %4572 = vmatmul.f32.gmra.mxu0 %v4571
  %v4573 = vpop.f32.mrf.mxu0
  %v4574 = vadd.f32 %v4505, %v4573
  %v4575 = vand.u32 %v3017, 4294901760
  %4576 = vmatmul.f32.gmra.mxu0 %v4575
  %v4577 = vpop.f32.mrf.mxu0
  %v4578 = vadd.f32 %v4511, %v4577
  %v4579 = vand.u32 %v3020, 4294901760
  %4580 = vmatmul.f32.gmra.mxu0 %v4579
  %v4581 = vpop.f32.mrf.mxu0
  %v4582 = vadd.f32 %v4517, %v4581
  %v4583 = vand.u32 %v3023, 4294901760
  %4584 = vmatmul.f32.gmra.mxu0 %v4583
  %v4585 = vpop.f32.mrf.mxu0
  %v4586 = vadd.f32 %v4523, %v4585
  %4587 = vdwg.mxu0
  %4588 = vmatpush.msra.mxu0 0.0
  %4589 = vmatpush.msra.mxu0 0.0
  %4590 = vmatpush.msra.mxu0 0.0
  %4591 = vmatpush.msra.mxu0 0.0
  %4592 = vmatpush.msra.mxu0 0.0
  %4593 = vmatpush.msra.mxu0 0.0
  %4594 = vmatpush.msra.mxu0 0.0
  %4595 = vmatpush.msra.mxu0 0.0
  %4596 = vmatpush.msra.mxu0 0.0
  %4597 = vmatpush.msra.mxu0 0.0
  %4598 = vmatpush.msra.mxu0 0.0
  %4599 = vmatpush.msra.mxu0 0.0
  %4600 = vmatpush.msra.mxu0 0.0
  %4601 = vmatpush.msra.mxu0 0.0
  %v4602 = vand.u32 %v20, 4294901760
  %4603 = vmatpush.msra.mxu0 %v4602
  %v4604 = vand.u32 %v19, 4294901760
  %4605 = vmatpush.msra.mxu0 %v4604
  %v4606 = vand.u32 %v2996, 4294901760
  %4607 = vmatmul.f32.gmra.mxu0 %v4606
  %v4608 = vpop.f32.mrf.mxu0
  %v4609 = vadd.f32 %v4550, %v4608
  %v4610 = vand.u32 %v2999, 4294901760
  %4611 = vmatmul.f32.gmra.mxu0 %v4610
  %v4612 = vpop.f32.mrf.mxu0
  %v4613 = vadd.f32 %v4554, %v4612
  %v4614 = vand.u32 %v3002, 4294901760
  %4615 = vmatmul.f32.gmra.mxu0 %v4614
  %v4616 = vpop.f32.mrf.mxu0
  %v4617 = vadd.f32 %v4558, %v4616
  %v4618 = vand.u32 %v3005, 4294901760
  %4619 = vmatmul.f32.gmra.mxu0 %v4618
  %v4620 = vpop.f32.mrf.mxu0
  %v4621 = vadd.f32 %v4562, %v4620
  %v4622 = vand.u32 %v3008, 4294901760
  %4623 = vmatmul.f32.gmra.mxu0 %v4622
  %v4624 = vpop.f32.mrf.mxu0
  %v4625 = vadd.f32 %v4566, %v4624
  %v4626 = vand.u32 %v3011, 4294901760
  %4627 = vmatmul.f32.gmra.mxu0 %v4626
  %v4628 = vpop.f32.mrf.mxu0
  %v4629 = vadd.f32 %v4570, %v4628
  %v4630 = vand.u32 %v3014, 4294901760
  %4631 = vmatmul.f32.gmra.mxu0 %v4630
  %v4632 = vpop.f32.mrf.mxu0
  %v4633 = vadd.f32 %v4574, %v4632
  %v4634 = vand.u32 %v3017, 4294901760
  %4635 = vmatmul.f32.gmra.mxu0 %v4634
  %v4636 = vpop.f32.mrf.mxu0
  %v4637 = vadd.f32 %v4578, %v4636
  %v4638 = vand.u32 %v3020, 4294901760
  %4639 = vmatmul.f32.gmra.mxu0 %v4638
  %v4640 = vpop.f32.mrf.mxu0
  %v4641 = vadd.f32 %v4582, %v4640
  %v4642 = vand.u32 %v3023, 4294901760
  %4643 = vmatmul.f32.gmra.mxu0 %v4642
  %v4644 = vpop.f32.mrf.mxu0
  %v4645 = vadd.f32 %v4586, %v4644
  %4646 = vdwg.mxu0
  %v4647 = vadd.f32 %v4609, %v3425
  %v4648 = vadd.f32 %v4613, %v3429
  %v4649 = vadd.f32 %v4617, %v3433
  %v4650 = vadd.f32 %v4621, %v3437
  %v4651 = vadd.f32 %v4625, %v3441
  %v4652 = vadd.f32 %v4629, %v3445
  %v4653 = vadd.f32 %v4633, %v3449
  %v4654 = vadd.f32 %v4637, %v3453
  %v4655 = vadd.f32 %v4641, %v3457
  %v4656 = vadd.f32 %v4645, %v3461
  %v4657 = vmax.f32 %v4647, 0.0
  %v4658 = vmax.f32 %v4648, 0.0
  %v4659 = vmax.f32 %v4649, 0.0
  %v4660 = vmax.f32 %v4650, 0.0
  %v4661 = vmax.f32 %v4651, 0.0
  %v4662 = vmax.f32 %v4652, 0.0
  %v4663 = vmax.f32 %v4653, 0.0
  %v4664 = vmax.f32 %v4654, 0.0
  %v4665 = vmax.f32 %v4655, 0.0
  %v4666 = vmax.f32 %v4656, 0.0
  %v4667 = vperm.slane %v59, 0
  %v4669 = vsel %vm2206, %v4657, 0
  %v4672 = vsel %vm2206, %v4658, 0
  %v4675 = vsel %vm2206, %v4659, 0
  %v4678 = vsel %vm2206, %v4660, 0
  %v4681 = vsel %vm2206, %v4661, 0
  %v4684 = vsel %vm2206, %v4662, 0
  %v4687 = vsel %vm2206, %v4663, 0
  %v4690 = vsel %vm2206, %v4664, 0
  %v4693 = vsel %vm2206, %v4665, 0
  %v4696 = vsel %vm2206, %v4666, 0
  %4698 = vmatpush.msra.mxu0 0.0
  %4699 = vmatpush.msra.mxu0 0.0
  %4700 = vmatpush.msra.mxu0 0.0
  %4701 = vmatpush.msra.mxu0 0.0
  %4702 = vmatpush.msra.mxu0 0.0
  %4703 = vmatpush.msra.mxu0 0.0
  %4704 = vmatpush.msra.mxu0 0.0
  %4705 = vmatpush.msra.mxu0 0.0
  %4706 = vmatpush.msra.mxu0 0.0
  %4707 = vmatpush.msra.mxu0 0.0
  %4708 = vmatpush.msra.mxu0 0.0
  %4709 = vmatpush.msra.mxu0 0.0
  %4710 = vmatpush.msra.mxu0 0.0
  %4711 = vmatpush.msra.mxu0 0.0
  %v4712 = vand.u32 %v30, 4294901760
  %4713 = vmatpush.msra.mxu0 %v4712
  %v4714 = vand.u32 %v29, 4294901760
  %4715 = vmatpush.msra.mxu0 %v4714
  %v4716 = vand.u32 %v4669, 4294901760
  %v4717 = vsub.f32 %v4669, %v4716
  %v4718 = vand.u32 %v4717, 4294901760
  %v4719 = vsub.f32 %v4717, %v4718
  %v4720 = vand.u32 %v4719, 4294901760
  %4721 = vmatmul.f32.gmra.mxu0 %v4720
  %v4722 = vpop.f32.mrf.mxu0
  %v4723 = vadd.f32 %v4667, %v4722
  %v4724 = vand.u32 %v4672, 4294901760
  %v4725 = vsub.f32 %v4672, %v4724
  %v4726 = vand.u32 %v4725, 4294901760
  %v4727 = vsub.f32 %v4725, %v4726
  %v4728 = vand.u32 %v4727, 4294901760
  %4729 = vmatmul.f32.gmra.mxu0 %v4728
  %v4730 = vpop.f32.mrf.mxu0
  %v4731 = vadd.f32 %v4667, %v4730
  %v4732 = vand.u32 %v4675, 4294901760
  %v4733 = vsub.f32 %v4675, %v4732
  %v4734 = vand.u32 %v4733, 4294901760
  %v4735 = vsub.f32 %v4733, %v4734
  %v4736 = vand.u32 %v4735, 4294901760
  %4737 = vmatmul.f32.gmra.mxu0 %v4736
  %v4738 = vpop.f32.mrf.mxu0
  %v4739 = vadd.f32 %v4667, %v4738
  %v4740 = vand.u32 %v4678, 4294901760
  %v4741 = vsub.f32 %v4678, %v4740
  %v4742 = vand.u32 %v4741, 4294901760
  %v4743 = vsub.f32 %v4741, %v4742
  %v4744 = vand.u32 %v4743, 4294901760
  %4745 = vmatmul.f32.gmra.mxu0 %v4744
  %v4746 = vpop.f32.mrf.mxu0
  %v4747 = vadd.f32 %v4667, %v4746
  %v4748 = vand.u32 %v4681, 4294901760
  %v4749 = vsub.f32 %v4681, %v4748
  %v4750 = vand.u32 %v4749, 4294901760
  %v4751 = vsub.f32 %v4749, %v4750
  %v4752 = vand.u32 %v4751, 4294901760
  %4753 = vmatmul.f32.gmra.mxu0 %v4752
  %v4754 = vpop.f32.mrf.mxu0
  %v4755 = vadd.f32 %v4667, %v4754
  %v4756 = vand.u32 %v4684, 4294901760
  %v4757 = vsub.f32 %v4684, %v4756
  %v4758 = vand.u32 %v4757, 4294901760
  %v4759 = vsub.f32 %v4757, %v4758
  %v4760 = vand.u32 %v4759, 4294901760
  %4761 = vmatmul.f32.gmra.mxu0 %v4760
  %v4762 = vpop.f32.mrf.mxu0
  %v4763 = vadd.f32 %v4667, %v4762
  %v4764 = vand.u32 %v4687, 4294901760
  %v4765 = vsub.f32 %v4687, %v4764
  %v4766 = vand.u32 %v4765, 4294901760
  %v4767 = vsub.f32 %v4765, %v4766
  %v4768 = vand.u32 %v4767, 4294901760
  %4769 = vmatmul.f32.gmra.mxu0 %v4768
  %v4770 = vpop.f32.mrf.mxu0
  %v4771 = vadd.f32 %v4667, %v4770
  %v4772 = vand.u32 %v4690, 4294901760
  %v4773 = vsub.f32 %v4690, %v4772
  %v4774 = vand.u32 %v4773, 4294901760
  %v4775 = vsub.f32 %v4773, %v4774
  %v4776 = vand.u32 %v4775, 4294901760
  %4777 = vmatmul.f32.gmra.mxu0 %v4776
  %v4778 = vpop.f32.mrf.mxu0
  %v4779 = vadd.f32 %v4667, %v4778
  %v4780 = vand.u32 %v4693, 4294901760
  %v4781 = vsub.f32 %v4693, %v4780
  %v4782 = vand.u32 %v4781, 4294901760
  %v4783 = vsub.f32 %v4781, %v4782
  %v4784 = vand.u32 %v4783, 4294901760
  %4785 = vmatmul.f32.gmra.mxu0 %v4784
  %v4786 = vpop.f32.mrf.mxu0
  %v4787 = vadd.f32 %v4667, %v4786
  %v4788 = vand.u32 %v4696, 4294901760
  %v4789 = vsub.f32 %v4696, %v4788
  %v4790 = vand.u32 %v4789, 4294901760
  %v4791 = vsub.f32 %v4789, %v4790
  %v4792 = vand.u32 %v4791, 4294901760
  %4793 = vmatmul.f32.gmra.mxu0 %v4792
  %v4794 = vpop.f32.mrf.mxu0
  %v4795 = vadd.f32 %v4667, %v4794
  %4796 = vdwg.mxu0
  %4797 = vmatpush.msra.mxu0 0.0
  %4798 = vmatpush.msra.mxu0 0.0
  %4799 = vmatpush.msra.mxu0 0.0
  %4800 = vmatpush.msra.mxu0 0.0
  %4801 = vmatpush.msra.mxu0 0.0
  %4802 = vmatpush.msra.mxu0 0.0
  %4803 = vmatpush.msra.mxu0 0.0
  %4804 = vmatpush.msra.mxu0 0.0
  %4805 = vmatpush.msra.mxu0 0.0
  %4806 = vmatpush.msra.mxu0 0.0
  %4807 = vmatpush.msra.mxu0 0.0
  %4808 = vmatpush.msra.mxu0 0.0
  %4809 = vmatpush.msra.mxu0 0.0
  %4810 = vmatpush.msra.mxu0 0.0
  %v4811 = vand.u32 %v30, 4294901760
  %v4812 = vsub.f32 %v30, %v4811
  %v4813 = vand.u32 %v4812, 4294901760
  %v4814 = vsub.f32 %v4812, %v4813
  %v4815 = vand.u32 %v4814, 4294901760
  %4816 = vmatpush.msra.mxu0 %v4815
  %v4817 = vand.u32 %v29, 4294901760
  %v4818 = vsub.f32 %v29, %v4817
  %v4819 = vand.u32 %v4818, 4294901760
  %v4820 = vsub.f32 %v4818, %v4819
  %v4821 = vand.u32 %v4820, 4294901760
  %4822 = vmatpush.msra.mxu0 %v4821
  %v4823 = vand.u32 %v4669, 4294901760
  %4824 = vmatmul.f32.gmra.mxu0 %v4823
  %v4825 = vpop.f32.mrf.mxu0
  %v4826 = vadd.f32 %v4723, %v4825
  %v4827 = vand.u32 %v4672, 4294901760
  %4828 = vmatmul.f32.gmra.mxu0 %v4827
  %v4829 = vpop.f32.mrf.mxu0
  %v4830 = vadd.f32 %v4731, %v4829
  %v4831 = vand.u32 %v4675, 4294901760
  %4832 = vmatmul.f32.gmra.mxu0 %v4831
  %v4833 = vpop.f32.mrf.mxu0
  %v4834 = vadd.f32 %v4739, %v4833
  %v4835 = vand.u32 %v4678, 4294901760
  %4836 = vmatmul.f32.gmra.mxu0 %v4835
  %v4837 = vpop.f32.mrf.mxu0
  %v4838 = vadd.f32 %v4747, %v4837
  %v4839 = vand.u32 %v4681, 4294901760
  %4840 = vmatmul.f32.gmra.mxu0 %v4839
  %v4841 = vpop.f32.mrf.mxu0
  %v4842 = vadd.f32 %v4755, %v4841
  %v4843 = vand.u32 %v4684, 4294901760
  %4844 = vmatmul.f32.gmra.mxu0 %v4843
  %v4845 = vpop.f32.mrf.mxu0
  %v4846 = vadd.f32 %v4763, %v4845
  %v4847 = vand.u32 %v4687, 4294901760
  %4848 = vmatmul.f32.gmra.mxu0 %v4847
  %v4849 = vpop.f32.mrf.mxu0
  %v4850 = vadd.f32 %v4771, %v4849
  %v4851 = vand.u32 %v4690, 4294901760
  %4852 = vmatmul.f32.gmra.mxu0 %v4851
  %v4853 = vpop.f32.mrf.mxu0
  %v4854 = vadd.f32 %v4779, %v4853
  %v4855 = vand.u32 %v4693, 4294901760
  %4856 = vmatmul.f32.gmra.mxu0 %v4855
  %v4857 = vpop.f32.mrf.mxu0
  %v4858 = vadd.f32 %v4787, %v4857
  %v4859 = vand.u32 %v4696, 4294901760
  %4860 = vmatmul.f32.gmra.mxu0 %v4859
  %v4861 = vpop.f32.mrf.mxu0
  %v4862 = vadd.f32 %v4795, %v4861
  %4863 = vdwg.mxu0
  %4864 = vmatpush.msra.mxu0 0.0
  %4865 = vmatpush.msra.mxu0 0.0
  %4866 = vmatpush.msra.mxu0 0.0
  %4867 = vmatpush.msra.mxu0 0.0
  %4868 = vmatpush.msra.mxu0 0.0
  %4869 = vmatpush.msra.mxu0 0.0
  %4870 = vmatpush.msra.mxu0 0.0
  %4871 = vmatpush.msra.mxu0 0.0
  %4872 = vmatpush.msra.mxu0 0.0
  %4873 = vmatpush.msra.mxu0 0.0
  %4874 = vmatpush.msra.mxu0 0.0
  %4875 = vmatpush.msra.mxu0 0.0
  %4876 = vmatpush.msra.mxu0 0.0
  %4877 = vmatpush.msra.mxu0 0.0
  %v4878 = vand.u32 %v30, 4294901760
  %v4879 = vsub.f32 %v30, %v4878
  %4880 = vmatpush.msra.mxu0 %v4879
  %v4881 = vand.u32 %v29, 4294901760
  %v4882 = vsub.f32 %v29, %v4881
  %4883 = vmatpush.msra.mxu0 %v4882
  %v4884 = vand.u32 %v4669, 4294901760
  %v4885 = vsub.f32 %v4669, %v4884
  %4886 = vmatmul.f32.gmra.mxu0 %v4885
  %v4887 = vpop.f32.mrf.mxu0
  %v4888 = vadd.f32 %v4826, %v4887
  %v4889 = vand.u32 %v4672, 4294901760
  %v4890 = vsub.f32 %v4672, %v4889
  %4891 = vmatmul.f32.gmra.mxu0 %v4890
  %v4892 = vpop.f32.mrf.mxu0
  %v4893 = vadd.f32 %v4830, %v4892
  %v4894 = vand.u32 %v4675, 4294901760
  %v4895 = vsub.f32 %v4675, %v4894
  %4896 = vmatmul.f32.gmra.mxu0 %v4895
  %v4897 = vpop.f32.mrf.mxu0
  %v4898 = vadd.f32 %v4834, %v4897
  %v4899 = vand.u32 %v4678, 4294901760
  %v4900 = vsub.f32 %v4678, %v4899
  %4901 = vmatmul.f32.gmra.mxu0 %v4900
  %v4902 = vpop.f32.mrf.mxu0
  %v4903 = vadd.f32 %v4838, %v4902
  %v4904 = vand.u32 %v4681, 4294901760
  %v4905 = vsub.f32 %v4681, %v4904
  %4906 = vmatmul.f32.gmra.mxu0 %v4905
  %v4907 = vpop.f32.mrf.mxu0
  %v4908 = vadd.f32 %v4842, %v4907
  %v4909 = vand.u32 %v4684, 4294901760
  %v4910 = vsub.f32 %v4684, %v4909
  %4911 = vmatmul.f32.gmra.mxu0 %v4910
  %v4912 = vpop.f32.mrf.mxu0
  %v4913 = vadd.f32 %v4846, %v4912
  %v4914 = vand.u32 %v4687, 4294901760
  %v4915 = vsub.f32 %v4687, %v4914
  %4916 = vmatmul.f32.gmra.mxu0 %v4915
  %v4917 = vpop.f32.mrf.mxu0
  %v4918 = vadd.f32 %v4850, %v4917
  %v4919 = vand.u32 %v4690, 4294901760
  %v4920 = vsub.f32 %v4690, %v4919
  %4921 = vmatmul.f32.gmra.mxu0 %v4920
  %v4922 = vpop.f32.mrf.mxu0
  %v4923 = vadd.f32 %v4854, %v4922
  %v4924 = vand.u32 %v4693, 4294901760
  %v4925 = vsub.f32 %v4693, %v4924
  %4926 = vmatmul.f32.gmra.mxu0 %v4925
  %v4927 = vpop.f32.mrf.mxu0
  %v4928 = vadd.f32 %v4858, %v4927
  %v4929 = vand.u32 %v4696, 4294901760
  %v4930 = vsub.f32 %v4696, %v4929
  %4931 = vmatmul.f32.gmra.mxu0 %v4930
  %v4932 = vpop.f32.mrf.mxu0
  %v4933 = vadd.f32 %v4862, %v4932
  %4934 = vdwg.mxu0
  %4935 = vmatpush.msra.mxu0 0.0
  %4936 = vmatpush.msra.mxu0 0.0
  %4937 = vmatpush.msra.mxu0 0.0
  %4938 = vmatpush.msra.mxu0 0.0
  %4939 = vmatpush.msra.mxu0 0.0
  %4940 = vmatpush.msra.mxu0 0.0
  %4941 = vmatpush.msra.mxu0 0.0
  %4942 = vmatpush.msra.mxu0 0.0
  %4943 = vmatpush.msra.mxu0 0.0
  %4944 = vmatpush.msra.mxu0 0.0
  %4945 = vmatpush.msra.mxu0 0.0
  %4946 = vmatpush.msra.mxu0 0.0
  %4947 = vmatpush.msra.mxu0 0.0
  %4948 = vmatpush.msra.mxu0 0.0
  %v4949 = vand.u32 %v30, 4294901760
  %4950 = vmatpush.msra.mxu0 %v4949
  %v4951 = vand.u32 %v29, 4294901760
  %4952 = vmatpush.msra.mxu0 %v4951
  %v4953 = vand.u32 %v4669, 4294901760
  %v4954 = vsub.f32 %v4669, %v4953
  %v4955 = vand.u32 %v4954, 4294901760
  %4956 = vmatmul.f32.gmra.mxu0 %v4955
  %v4957 = vpop.f32.mrf.mxu0
  %v4958 = vadd.f32 %v4888, %v4957
  %v4959 = vand.u32 %v4672, 4294901760
  %v4960 = vsub.f32 %v4672, %v4959
  %v4961 = vand.u32 %v4960, 4294901760
  %4962 = vmatmul.f32.gmra.mxu0 %v4961
  %v4963 = vpop.f32.mrf.mxu0
  %v4964 = vadd.f32 %v4893, %v4963
  %v4965 = vand.u32 %v4675, 4294901760
  %v4966 = vsub.f32 %v4675, %v4965
  %v4967 = vand.u32 %v4966, 4294901760
  %4968 = vmatmul.f32.gmra.mxu0 %v4967
  %v4969 = vpop.f32.mrf.mxu0
  %v4970 = vadd.f32 %v4898, %v4969
  %v4971 = vand.u32 %v4678, 4294901760
  %v4972 = vsub.f32 %v4678, %v4971
  %v4973 = vand.u32 %v4972, 4294901760
  %4974 = vmatmul.f32.gmra.mxu0 %v4973
  %v4975 = vpop.f32.mrf.mxu0
  %v4976 = vadd.f32 %v4903, %v4975
  %v4977 = vand.u32 %v4681, 4294901760
  %v4978 = vsub.f32 %v4681, %v4977
  %v4979 = vand.u32 %v4978, 4294901760
  %4980 = vmatmul.f32.gmra.mxu0 %v4979
  %v4981 = vpop.f32.mrf.mxu0
  %v4982 = vadd.f32 %v4908, %v4981
  %v4983 = vand.u32 %v4684, 4294901760
  %v4984 = vsub.f32 %v4684, %v4983
  %v4985 = vand.u32 %v4984, 4294901760
  %4986 = vmatmul.f32.gmra.mxu0 %v4985
  %v4987 = vpop.f32.mrf.mxu0
  %v4988 = vadd.f32 %v4913, %v4987
  %v4989 = vand.u32 %v4687, 4294901760
  %v4990 = vsub.f32 %v4687, %v4989
  %v4991 = vand.u32 %v4990, 4294901760
  %4992 = vmatmul.f32.gmra.mxu0 %v4991
  %v4993 = vpop.f32.mrf.mxu0
  %v4994 = vadd.f32 %v4918, %v4993
  %v4995 = vand.u32 %v4690, 4294901760
  %v4996 = vsub.f32 %v4690, %v4995
  %v4997 = vand.u32 %v4996, 4294901760
  %4998 = vmatmul.f32.gmra.mxu0 %v4997
  %v4999 = vpop.f32.mrf.mxu0
  %v5000 = vadd.f32 %v4923, %v4999
  %v5001 = vand.u32 %v4693, 4294901760
  %v5002 = vsub.f32 %v4693, %v5001
  %v5003 = vand.u32 %v5002, 4294901760
  %5004 = vmatmul.f32.gmra.mxu0 %v5003
  %v5005 = vpop.f32.mrf.mxu0
  %v5006 = vadd.f32 %v4928, %v5005
  %v5007 = vand.u32 %v4696, 4294901760
  %v5008 = vsub.f32 %v4696, %v5007
  %v5009 = vand.u32 %v5008, 4294901760
  %5010 = vmatmul.f32.gmra.mxu0 %v5009
  %v5011 = vpop.f32.mrf.mxu0
  %v5012 = vadd.f32 %v4933, %v5011
  %5013 = vdwg.mxu0
  %5014 = vmatpush.msra.mxu0 0.0
  %5015 = vmatpush.msra.mxu0 0.0
  %5016 = vmatpush.msra.mxu0 0.0
  %5017 = vmatpush.msra.mxu0 0.0
  %5018 = vmatpush.msra.mxu0 0.0
  %5019 = vmatpush.msra.mxu0 0.0
  %5020 = vmatpush.msra.mxu0 0.0
  %5021 = vmatpush.msra.mxu0 0.0
  %5022 = vmatpush.msra.mxu0 0.0
  %5023 = vmatpush.msra.mxu0 0.0
  %5024 = vmatpush.msra.mxu0 0.0
  %5025 = vmatpush.msra.mxu0 0.0
  %5026 = vmatpush.msra.mxu0 0.0
  %5027 = vmatpush.msra.mxu0 0.0
  %v5028 = vand.u32 %v30, 4294901760
  %v5029 = vsub.f32 %v30, %v5028
  %v5030 = vand.u32 %v5029, 4294901760
  %5031 = vmatpush.msra.mxu0 %v5030
  %v5032 = vand.u32 %v29, 4294901760
  %v5033 = vsub.f32 %v29, %v5032
  %v5034 = vand.u32 %v5033, 4294901760
  %5035 = vmatpush.msra.mxu0 %v5034
  %v5036 = vand.u32 %v4669, 4294901760
  %5037 = vmatmul.f32.gmra.mxu0 %v5036
  %v5038 = vpop.f32.mrf.mxu0
  %v5039 = vadd.f32 %v4958, %v5038
  %v5040 = vand.u32 %v4672, 4294901760
  %5041 = vmatmul.f32.gmra.mxu0 %v5040
  %v5042 = vpop.f32.mrf.mxu0
  %v5043 = vadd.f32 %v4964, %v5042
  %v5044 = vand.u32 %v4675, 4294901760
  %5045 = vmatmul.f32.gmra.mxu0 %v5044
  %v5046 = vpop.f32.mrf.mxu0
  %v5047 = vadd.f32 %v4970, %v5046
  %v5048 = vand.u32 %v4678, 4294901760
  %5049 = vmatmul.f32.gmra.mxu0 %v5048
  %v5050 = vpop.f32.mrf.mxu0
  %v5051 = vadd.f32 %v4976, %v5050
  %v5052 = vand.u32 %v4681, 4294901760
  %5053 = vmatmul.f32.gmra.mxu0 %v5052
  %v5054 = vpop.f32.mrf.mxu0
  %v5055 = vadd.f32 %v4982, %v5054
  %v5056 = vand.u32 %v4684, 4294901760
  %5057 = vmatmul.f32.gmra.mxu0 %v5056
  %v5058 = vpop.f32.mrf.mxu0
  %v5059 = vadd.f32 %v4988, %v5058
  %v5060 = vand.u32 %v4687, 4294901760
  %5061 = vmatmul.f32.gmra.mxu0 %v5060
  %v5062 = vpop.f32.mrf.mxu0
  %v5063 = vadd.f32 %v4994, %v5062
  %v5064 = vand.u32 %v4690, 4294901760
  %5065 = vmatmul.f32.gmra.mxu0 %v5064
  %v5066 = vpop.f32.mrf.mxu0
  %v5067 = vadd.f32 %v5000, %v5066
  %v5068 = vand.u32 %v4693, 4294901760
  %5069 = vmatmul.f32.gmra.mxu0 %v5068
  %v5070 = vpop.f32.mrf.mxu0
  %v5071 = vadd.f32 %v5006, %v5070
  %v5072 = vand.u32 %v4696, 4294901760
  %5073 = vmatmul.f32.gmra.mxu0 %v5072
  %v5074 = vpop.f32.mrf.mxu0
  %v5075 = vadd.f32 %v5012, %v5074
  %5076 = vdwg.mxu0
  %5077 = vmatpush.msra.mxu0 0.0
  %5078 = vmatpush.msra.mxu0 0.0
  %5079 = vmatpush.msra.mxu0 0.0
  %5080 = vmatpush.msra.mxu0 0.0
  %5081 = vmatpush.msra.mxu0 0.0
  %5082 = vmatpush.msra.mxu0 0.0
  %5083 = vmatpush.msra.mxu0 0.0
  %5084 = vmatpush.msra.mxu0 0.0
  %5085 = vmatpush.msra.mxu0 0.0
  %5086 = vmatpush.msra.mxu0 0.0
  %5087 = vmatpush.msra.mxu0 0.0
  %5088 = vmatpush.msra.mxu0 0.0
  %5089 = vmatpush.msra.mxu0 0.0
  %5090 = vmatpush.msra.mxu0 0.0
  %v5091 = vand.u32 %v30, 4294901760
  %5092 = vmatpush.msra.mxu0 %v5091
  %v5093 = vand.u32 %v29, 4294901760
  %5094 = vmatpush.msra.mxu0 %v5093
  %v5095 = vand.u32 %v4669, 4294901760
  %5096 = vmatmul.f32.gmra.mxu0 %v5095
  %v5097 = vpop.f32.mrf.mxu0
  %v5098 = vadd.f32 %v5039, %v5097
  %v5099 = vand.u32 %v4672, 4294901760
  %5100 = vmatmul.f32.gmra.mxu0 %v5099
  %v5101 = vpop.f32.mrf.mxu0
  %v5102 = vadd.f32 %v5043, %v5101
  %v5103 = vand.u32 %v4675, 4294901760
  %5104 = vmatmul.f32.gmra.mxu0 %v5103
  %v5105 = vpop.f32.mrf.mxu0
  %v5106 = vadd.f32 %v5047, %v5105
  %v5107 = vand.u32 %v4678, 4294901760
  %5108 = vmatmul.f32.gmra.mxu0 %v5107
  %v5109 = vpop.f32.mrf.mxu0
  %v5110 = vadd.f32 %v5051, %v5109
  %v5111 = vand.u32 %v4681, 4294901760
  %5112 = vmatmul.f32.gmra.mxu0 %v5111
  %v5113 = vpop.f32.mrf.mxu0
  %v5114 = vadd.f32 %v5055, %v5113
  %v5115 = vand.u32 %v4684, 4294901760
  %5116 = vmatmul.f32.gmra.mxu0 %v5115
  %v5117 = vpop.f32.mrf.mxu0
  %v5118 = vadd.f32 %v5059, %v5117
  %v5119 = vand.u32 %v4687, 4294901760
  %5120 = vmatmul.f32.gmra.mxu0 %v5119
  %v5121 = vpop.f32.mrf.mxu0
  %v5122 = vadd.f32 %v5063, %v5121
  %v5123 = vand.u32 %v4690, 4294901760
  %5124 = vmatmul.f32.gmra.mxu0 %v5123
  %v5125 = vpop.f32.mrf.mxu0
  %v5126 = vadd.f32 %v5067, %v5125
  %v5127 = vand.u32 %v4693, 4294901760
  %5128 = vmatmul.f32.gmra.mxu0 %v5127
  %v5129 = vpop.f32.mrf.mxu0
  %v5130 = vadd.f32 %v5071, %v5129
  %v5131 = vand.u32 %v4696, 4294901760
  %5132 = vmatmul.f32.gmra.mxu0 %v5131
  %v5133 = vpop.f32.mrf.mxu0
  %v5134 = vadd.f32 %v5075, %v5133
  %5135 = vdwg.mxu0
  %v5136 = vmax.f32 %v5098, 0.0
  %v5137 = vmax.f32 %v5102, 0.0
  %v5138 = vmax.f32 %v5106, 0.0
  %v5139 = vmax.f32 %v5110, 0.0
  %v5140 = vmax.f32 %v5114, 0.0
  %v5141 = vmax.f32 %v5118, 0.0
  %v5142 = vmax.f32 %v5122, 0.0
  %v5143 = vmax.f32 %v5126, 0.0
  %v5144 = vmax.f32 %v5130, 0.0
  %v5145 = vmax.f32 %v5134, 0.0
  %v5147 = vsel %vm289, %v287, 0
  %v5150 = vsel %vm289, %v303, 0
  %v5153 = vsel %vm289, %v304, 0
  %5155 = vmatpush.msra.mxu0 0.0
  %5156 = vmatpush.msra.mxu0 0.0
  %5157 = vmatpush.msra.mxu0 0.0
  %5158 = vmatpush.msra.mxu0 0.0
  %5159 = vmatpush.msra.mxu0 0.0
  %5160 = vmatpush.msra.mxu0 0.0
  %v5161 = vand.u32 %v5145, 4294901760
  %5162 = vmatpush.msra.mxu0 %v5161
  %v5163 = vand.u32 %v5144, 4294901760
  %5164 = vmatpush.msra.mxu0 %v5163
  %v5165 = vand.u32 %v5143, 4294901760
  %5166 = vmatpush.msra.mxu0 %v5165
  %v5167 = vand.u32 %v5142, 4294901760
  %5168 = vmatpush.msra.mxu0 %v5167
  %v5169 = vand.u32 %v5141, 4294901760
  %5170 = vmatpush.msra.mxu0 %v5169
  %v5171 = vand.u32 %v5140, 4294901760
  %5172 = vmatpush.msra.mxu0 %v5171
  %v5173 = vand.u32 %v5139, 4294901760
  %5174 = vmatpush.msra.mxu0 %v5173
  %v5175 = vand.u32 %v5138, 4294901760
  %5176 = vmatpush.msra.mxu0 %v5175
  %v5177 = vand.u32 %v5137, 4294901760
  %5178 = vmatpush.msra.mxu0 %v5177
  %v5179 = vand.u32 %v5136, 4294901760
  %5180 = vmatpush.msra.mxu0 %v5179
  %v5181 = vand.u32 %v5147, 4294901760
  %v5182 = vsub.f32 %v5147, %v5181
  %v5183 = vand.u32 %v5182, 4294901760
  %v5184 = vsub.f32 %v5182, %v5183
  %v5185 = vand.u32 %v5184, 4294901760
  %5186 = vmatmul.f32.gmra.mxu0 %v5185
  %v5187 = vpop.f32.mrf.mxu0
  %v5188 = vadd.f32 0.0, %v5187
  %v5189 = vand.u32 %v5150, 4294901760
  %v5190 = vsub.f32 %v5150, %v5189
  %v5191 = vand.u32 %v5190, 4294901760
  %v5192 = vsub.f32 %v5190, %v5191
  %v5193 = vand.u32 %v5192, 4294901760
  %5194 = vmatmul.f32.gmra.mxu0 %v5193
  %v5195 = vpop.f32.mrf.mxu0
  %v5196 = vadd.f32 0.0, %v5195
  %v5197 = vand.u32 %v5153, 4294901760
  %v5198 = vsub.f32 %v5153, %v5197
  %v5199 = vand.u32 %v5198, 4294901760
  %v5200 = vsub.f32 %v5198, %v5199
  %v5201 = vand.u32 %v5200, 4294901760
  %5202 = vmatmul.f32.gmra.mxu0 %v5201
  %v5203 = vpop.f32.mrf.mxu0
  %v5204 = vadd.f32 0.0, %v5203
  %5205 = vdwg.mxu0
  %5206 = vmatpush.msra.mxu0 0.0
  %5207 = vmatpush.msra.mxu0 0.0
  %5208 = vmatpush.msra.mxu0 0.0
  %5209 = vmatpush.msra.mxu0 0.0
  %5210 = vmatpush.msra.mxu0 0.0
  %5211 = vmatpush.msra.mxu0 0.0
  %v5212 = vand.u32 %v5145, 4294901760
  %v5213 = vsub.f32 %v5145, %v5212
  %v5214 = vand.u32 %v5213, 4294901760
  %v5215 = vsub.f32 %v5213, %v5214
  %v5216 = vand.u32 %v5215, 4294901760
  %5217 = vmatpush.msra.mxu0 %v5216
  %v5218 = vand.u32 %v5144, 4294901760
  %v5219 = vsub.f32 %v5144, %v5218
  %v5220 = vand.u32 %v5219, 4294901760
  %v5221 = vsub.f32 %v5219, %v5220
  %v5222 = vand.u32 %v5221, 4294901760
  %5223 = vmatpush.msra.mxu0 %v5222
  %v5224 = vand.u32 %v5143, 4294901760
  %v5225 = vsub.f32 %v5143, %v5224
  %v5226 = vand.u32 %v5225, 4294901760
  %v5227 = vsub.f32 %v5225, %v5226
  %v5228 = vand.u32 %v5227, 4294901760
  %5229 = vmatpush.msra.mxu0 %v5228
  %v5230 = vand.u32 %v5142, 4294901760
  %v5231 = vsub.f32 %v5142, %v5230
  %v5232 = vand.u32 %v5231, 4294901760
  %v5233 = vsub.f32 %v5231, %v5232
  %v5234 = vand.u32 %v5233, 4294901760
  %5235 = vmatpush.msra.mxu0 %v5234
  %v5236 = vand.u32 %v5141, 4294901760
  %v5237 = vsub.f32 %v5141, %v5236
  %v5238 = vand.u32 %v5237, 4294901760
  %v5239 = vsub.f32 %v5237, %v5238
  %v5240 = vand.u32 %v5239, 4294901760
  %5241 = vmatpush.msra.mxu0 %v5240
  %v5242 = vand.u32 %v5140, 4294901760
  %v5243 = vsub.f32 %v5140, %v5242
  %v5244 = vand.u32 %v5243, 4294901760
  %v5245 = vsub.f32 %v5243, %v5244
  %v5246 = vand.u32 %v5245, 4294901760
  %5247 = vmatpush.msra.mxu0 %v5246
  %v5248 = vand.u32 %v5139, 4294901760
  %v5249 = vsub.f32 %v5139, %v5248
  %v5250 = vand.u32 %v5249, 4294901760
  %v5251 = vsub.f32 %v5249, %v5250
  %v5252 = vand.u32 %v5251, 4294901760
  %5253 = vmatpush.msra.mxu0 %v5252
  %v5254 = vand.u32 %v5138, 4294901760
  %v5255 = vsub.f32 %v5138, %v5254
  %v5256 = vand.u32 %v5255, 4294901760
  %v5257 = vsub.f32 %v5255, %v5256
  %v5258 = vand.u32 %v5257, 4294901760
  %5259 = vmatpush.msra.mxu0 %v5258
  %v5260 = vand.u32 %v5137, 4294901760
  %v5261 = vsub.f32 %v5137, %v5260
  %v5262 = vand.u32 %v5261, 4294901760
  %v5263 = vsub.f32 %v5261, %v5262
  %v5264 = vand.u32 %v5263, 4294901760
  %5265 = vmatpush.msra.mxu0 %v5264
  %v5266 = vand.u32 %v5136, 4294901760
  %v5267 = vsub.f32 %v5136, %v5266
  %v5268 = vand.u32 %v5267, 4294901760
  %v5269 = vsub.f32 %v5267, %v5268
  %v5270 = vand.u32 %v5269, 4294901760
  %5271 = vmatpush.msra.mxu0 %v5270
  %v5272 = vand.u32 %v5147, 4294901760
  %5273 = vmatmul.f32.gmra.mxu0 %v5272
  %v5274 = vpop.f32.mrf.mxu0
  %v5275 = vadd.f32 %v5188, %v5274
  %v5276 = vand.u32 %v5150, 4294901760
  %5277 = vmatmul.f32.gmra.mxu0 %v5276
  %v5278 = vpop.f32.mrf.mxu0
  %v5279 = vadd.f32 %v5196, %v5278
  %v5280 = vand.u32 %v5153, 4294901760
  %5281 = vmatmul.f32.gmra.mxu0 %v5280
  %v5282 = vpop.f32.mrf.mxu0
  %v5283 = vadd.f32 %v5204, %v5282
  %5284 = vdwg.mxu0
  %5285 = vmatpush.msra.mxu0 0.0
  %5286 = vmatpush.msra.mxu0 0.0
  %5287 = vmatpush.msra.mxu0 0.0
  %5288 = vmatpush.msra.mxu0 0.0
  %5289 = vmatpush.msra.mxu0 0.0
  %5290 = vmatpush.msra.mxu0 0.0
  %v5291 = vand.u32 %v5145, 4294901760
  %v5292 = vsub.f32 %v5145, %v5291
  %5293 = vmatpush.msra.mxu0 %v5292
  %v5294 = vand.u32 %v5144, 4294901760
  %v5295 = vsub.f32 %v5144, %v5294
  %5296 = vmatpush.msra.mxu0 %v5295
  %v5297 = vand.u32 %v5143, 4294901760
  %v5298 = vsub.f32 %v5143, %v5297
  %5299 = vmatpush.msra.mxu0 %v5298
  %v5300 = vand.u32 %v5142, 4294901760
  %v5301 = vsub.f32 %v5142, %v5300
  %5302 = vmatpush.msra.mxu0 %v5301
  %v5303 = vand.u32 %v5141, 4294901760
  %v5304 = vsub.f32 %v5141, %v5303
  %5305 = vmatpush.msra.mxu0 %v5304
  %v5306 = vand.u32 %v5140, 4294901760
  %v5307 = vsub.f32 %v5140, %v5306
  %5308 = vmatpush.msra.mxu0 %v5307
  %v5309 = vand.u32 %v5139, 4294901760
  %v5310 = vsub.f32 %v5139, %v5309
  %5311 = vmatpush.msra.mxu0 %v5310
  %v5312 = vand.u32 %v5138, 4294901760
  %v5313 = vsub.f32 %v5138, %v5312
  %5314 = vmatpush.msra.mxu0 %v5313
  %v5315 = vand.u32 %v5137, 4294901760
  %v5316 = vsub.f32 %v5137, %v5315
  %5317 = vmatpush.msra.mxu0 %v5316
  %v5318 = vand.u32 %v5136, 4294901760
  %v5319 = vsub.f32 %v5136, %v5318
  %5320 = vmatpush.msra.mxu0 %v5319
  %v5321 = vand.u32 %v5147, 4294901760
  %v5322 = vsub.f32 %v5147, %v5321
  %5323 = vmatmul.f32.gmra.mxu0 %v5322
  %v5324 = vpop.f32.mrf.mxu0
  %v5325 = vadd.f32 %v5275, %v5324
  %v5326 = vand.u32 %v5150, 4294901760
  %v5327 = vsub.f32 %v5150, %v5326
  %5328 = vmatmul.f32.gmra.mxu0 %v5327
  %v5329 = vpop.f32.mrf.mxu0
  %v5330 = vadd.f32 %v5279, %v5329
  %v5331 = vand.u32 %v5153, 4294901760
  %v5332 = vsub.f32 %v5153, %v5331
  %5333 = vmatmul.f32.gmra.mxu0 %v5332
  %v5334 = vpop.f32.mrf.mxu0
  %v5335 = vadd.f32 %v5283, %v5334
  %5336 = vdwg.mxu0
  %5337 = vmatpush.msra.mxu0 0.0
  %5338 = vmatpush.msra.mxu0 0.0
  %5339 = vmatpush.msra.mxu0 0.0
  %5340 = vmatpush.msra.mxu0 0.0
  %5341 = vmatpush.msra.mxu0 0.0
  %5342 = vmatpush.msra.mxu0 0.0
  %v5343 = vand.u32 %v5145, 4294901760
  %5344 = vmatpush.msra.mxu0 %v5343
  %v5345 = vand.u32 %v5144, 4294901760
  %5346 = vmatpush.msra.mxu0 %v5345
  %v5347 = vand.u32 %v5143, 4294901760
  %5348 = vmatpush.msra.mxu0 %v5347
  %v5349 = vand.u32 %v5142, 4294901760
  %5350 = vmatpush.msra.mxu0 %v5349
  %v5351 = vand.u32 %v5141, 4294901760
  %5352 = vmatpush.msra.mxu0 %v5351
  %v5353 = vand.u32 %v5140, 4294901760
  %5354 = vmatpush.msra.mxu0 %v5353
  %v5355 = vand.u32 %v5139, 4294901760
  %5356 = vmatpush.msra.mxu0 %v5355
  %v5357 = vand.u32 %v5138, 4294901760
  %5358 = vmatpush.msra.mxu0 %v5357
  %v5359 = vand.u32 %v5137, 4294901760
  %5360 = vmatpush.msra.mxu0 %v5359
  %v5361 = vand.u32 %v5136, 4294901760
  %5362 = vmatpush.msra.mxu0 %v5361
  %v5363 = vand.u32 %v5147, 4294901760
  %v5364 = vsub.f32 %v5147, %v5363
  %v5365 = vand.u32 %v5364, 4294901760
  %5366 = vmatmul.f32.gmra.mxu0 %v5365
  %v5367 = vpop.f32.mrf.mxu0
  %v5368 = vadd.f32 %v5325, %v5367
  %v5369 = vand.u32 %v5150, 4294901760
  %v5370 = vsub.f32 %v5150, %v5369
  %v5371 = vand.u32 %v5370, 4294901760
  %5372 = vmatmul.f32.gmra.mxu0 %v5371
  %v5373 = vpop.f32.mrf.mxu0
  %v5374 = vadd.f32 %v5330, %v5373
  %v5375 = vand.u32 %v5153, 4294901760
  %v5376 = vsub.f32 %v5153, %v5375
  %v5377 = vand.u32 %v5376, 4294901760
  %5378 = vmatmul.f32.gmra.mxu0 %v5377
  %v5379 = vpop.f32.mrf.mxu0
  %v5380 = vadd.f32 %v5335, %v5379
  %5381 = vdwg.mxu0
  %5382 = vmatpush.msra.mxu0 0.0
  %5383 = vmatpush.msra.mxu0 0.0
  %5384 = vmatpush.msra.mxu0 0.0
  %5385 = vmatpush.msra.mxu0 0.0
  %5386 = vmatpush.msra.mxu0 0.0
  %5387 = vmatpush.msra.mxu0 0.0
  %v5388 = vand.u32 %v5145, 4294901760
  %v5389 = vsub.f32 %v5145, %v5388
  %v5390 = vand.u32 %v5389, 4294901760
  %5391 = vmatpush.msra.mxu0 %v5390
  %v5392 = vand.u32 %v5144, 4294901760
  %v5393 = vsub.f32 %v5144, %v5392
  %v5394 = vand.u32 %v5393, 4294901760
  %5395 = vmatpush.msra.mxu0 %v5394
  %v5396 = vand.u32 %v5143, 4294901760
  %v5397 = vsub.f32 %v5143, %v5396
  %v5398 = vand.u32 %v5397, 4294901760
  %5399 = vmatpush.msra.mxu0 %v5398
  %v5400 = vand.u32 %v5142, 4294901760
  %v5401 = vsub.f32 %v5142, %v5400
  %v5402 = vand.u32 %v5401, 4294901760
  %5403 = vmatpush.msra.mxu0 %v5402
  %v5404 = vand.u32 %v5141, 4294901760
  %v5405 = vsub.f32 %v5141, %v5404
  %v5406 = vand.u32 %v5405, 4294901760
  %5407 = vmatpush.msra.mxu0 %v5406
  %v5408 = vand.u32 %v5140, 4294901760
  %v5409 = vsub.f32 %v5140, %v5408
  %v5410 = vand.u32 %v5409, 4294901760
  %5411 = vmatpush.msra.mxu0 %v5410
  %v5412 = vand.u32 %v5139, 4294901760
  %v5413 = vsub.f32 %v5139, %v5412
  %v5414 = vand.u32 %v5413, 4294901760
  %5415 = vmatpush.msra.mxu0 %v5414
  %v5416 = vand.u32 %v5138, 4294901760
  %v5417 = vsub.f32 %v5138, %v5416
  %v5418 = vand.u32 %v5417, 4294901760
  %5419 = vmatpush.msra.mxu0 %v5418
  %v5420 = vand.u32 %v5137, 4294901760
  %v5421 = vsub.f32 %v5137, %v5420
  %v5422 = vand.u32 %v5421, 4294901760
  %5423 = vmatpush.msra.mxu0 %v5422
  %v5424 = vand.u32 %v5136, 4294901760
  %v5425 = vsub.f32 %v5136, %v5424
  %v5426 = vand.u32 %v5425, 4294901760
  %5427 = vmatpush.msra.mxu0 %v5426
  %v5428 = vand.u32 %v5147, 4294901760
  %5429 = vmatmul.f32.gmra.mxu0 %v5428
  %v5430 = vpop.f32.mrf.mxu0
  %v5431 = vadd.f32 %v5368, %v5430
  %v5432 = vand.u32 %v5150, 4294901760
  %5433 = vmatmul.f32.gmra.mxu0 %v5432
  %v5434 = vpop.f32.mrf.mxu0
  %v5435 = vadd.f32 %v5374, %v5434
  %v5436 = vand.u32 %v5153, 4294901760
  %5437 = vmatmul.f32.gmra.mxu0 %v5436
  %v5438 = vpop.f32.mrf.mxu0
  %v5439 = vadd.f32 %v5380, %v5438
  %5440 = vdwg.mxu0
  %5441 = vmatpush.msra.mxu0 0.0
  %5442 = vmatpush.msra.mxu0 0.0
  %5443 = vmatpush.msra.mxu0 0.0
  %5444 = vmatpush.msra.mxu0 0.0
  %5445 = vmatpush.msra.mxu0 0.0
  %5446 = vmatpush.msra.mxu0 0.0
  %v5447 = vand.u32 %v5145, 4294901760
  %5448 = vmatpush.msra.mxu0 %v5447
  %v5449 = vand.u32 %v5144, 4294901760
  %5450 = vmatpush.msra.mxu0 %v5449
  %v5451 = vand.u32 %v5143, 4294901760
  %5452 = vmatpush.msra.mxu0 %v5451
  %v5453 = vand.u32 %v5142, 4294901760
  %5454 = vmatpush.msra.mxu0 %v5453
  %v5455 = vand.u32 %v5141, 4294901760
  %5456 = vmatpush.msra.mxu0 %v5455
  %v5457 = vand.u32 %v5140, 4294901760
  %5458 = vmatpush.msra.mxu0 %v5457
  %v5459 = vand.u32 %v5139, 4294901760
  %5460 = vmatpush.msra.mxu0 %v5459
  %v5461 = vand.u32 %v5138, 4294901760
  %5462 = vmatpush.msra.mxu0 %v5461
  %v5463 = vand.u32 %v5137, 4294901760
  %5464 = vmatpush.msra.mxu0 %v5463
  %v5465 = vand.u32 %v5136, 4294901760
  %5466 = vmatpush.msra.mxu0 %v5465
  %v5467 = vand.u32 %v5147, 4294901760
  %5468 = vmatmul.f32.gmra.mxu0 %v5467
  %v5469 = vpop.f32.mrf.mxu0
  %v5470 = vadd.f32 %v5431, %v5469
  %v5471 = vand.u32 %v5150, 4294901760
  %5472 = vmatmul.f32.gmra.mxu0 %v5471
  %v5473 = vpop.f32.mrf.mxu0
  %v5474 = vadd.f32 %v5435, %v5473
  %v5475 = vand.u32 %v5153, 4294901760
  %5476 = vmatmul.f32.gmra.mxu0 %v5475
  %v5477 = vpop.f32.mrf.mxu0
  %v5478 = vadd.f32 %v5439, %v5477
  %5479 = vdwg.mxu0
  %5483 = vrot.lane.b32.xlu0 %v5470, 32
  %v5484 = vpop.permute.xlu0 %5483
  %5485 = vrot.lane.b32.xlu0 %v5474, 32
  %v5486 = vpop.permute.xlu0 %5485
  %5487 = vrot.lane.b32.xlu0 %v5478, 32
  %v5488 = vpop.permute.xlu0 %5487
  %v5492 = vsel %vm3483, %v2991, %v5484
  %v5493 = vsel %vm3483, %v2992, %v5486
  %v5494 = vsel %vm3483, %v2993, %v5488
  %v5495 = vperm.slane %v54, 0
  %vm5496 = vcmask 392192
  %v5498 = vsel %vm5496, %v5492, 0
  %v5501 = vsel %vm5496, %v5493, 0
  %v5504 = vsel %vm5496, %v5494, 0
  %5506 = vmatpush.msra.mxu0 0.0
  %5507 = vmatpush.msra.mxu0 0.0
  %5508 = vmatpush.msra.mxu0 0.0
  %5509 = vmatpush.msra.mxu0 0.0
  %5510 = vmatpush.msra.mxu0 0.0
  %5511 = vmatpush.msra.mxu0 0.0
  %5512 = vmatpush.msra.mxu0 0.0
  %5513 = vmatpush.msra.mxu0 0.0
  %5514 = vmatpush.msra.mxu0 0.0
  %5515 = vmatpush.msra.mxu0 0.0
  %v5516 = vand.u32 %v48, 4294901760
  %5517 = vmatpush.msra.mxu0 %v5516
  %v5518 = vand.u32 %v47, 4294901760
  %5519 = vmatpush.msra.mxu0 %v5518
  %v5520 = vand.u32 %v46, 4294901760
  %5521 = vmatpush.msra.mxu0 %v5520
  %v5522 = vand.u32 %v45, 4294901760
  %5523 = vmatpush.msra.mxu0 %v5522
  %v5524 = vand.u32 %v44, 4294901760
  %5525 = vmatpush.msra.mxu0 %v5524
  %v5526 = vand.u32 %v43, 4294901760
  %5527 = vmatpush.msra.mxu0 %v5526
  %v5528 = vand.u32 %v5498, 4294901760
  %v5529 = vsub.f32 %v5498, %v5528
  %v5530 = vand.u32 %v5529, 4294901760
  %v5531 = vsub.f32 %v5529, %v5530
  %v5532 = vand.u32 %v5531, 4294901760
  %5533 = vmatmul.f32.gmra.mxu0 %v5532
  %v5534 = vpop.f32.mrf.mxu0
  %v5535 = vadd.f32 %v5495, %v5534
  %v5536 = vand.u32 %v5501, 4294901760
  %v5537 = vsub.f32 %v5501, %v5536
  %v5538 = vand.u32 %v5537, 4294901760
  %v5539 = vsub.f32 %v5537, %v5538
  %v5540 = vand.u32 %v5539, 4294901760
  %5541 = vmatmul.f32.gmra.mxu0 %v5540
  %v5542 = vpop.f32.mrf.mxu0
  %v5543 = vadd.f32 %v5495, %v5542
  %v5544 = vand.u32 %v5504, 4294901760
  %v5545 = vsub.f32 %v5504, %v5544
  %v5546 = vand.u32 %v5545, 4294901760
  %v5547 = vsub.f32 %v5545, %v5546
  %v5548 = vand.u32 %v5547, 4294901760
  %5549 = vmatmul.f32.gmra.mxu0 %v5548
  %v5550 = vpop.f32.mrf.mxu0
  %v5551 = vadd.f32 %v5495, %v5550
  %5552 = vdwg.mxu0
  %5553 = vmatpush.msra.mxu0 0.0
  %5554 = vmatpush.msra.mxu0 0.0
  %5555 = vmatpush.msra.mxu0 0.0
  %5556 = vmatpush.msra.mxu0 0.0
  %5557 = vmatpush.msra.mxu0 0.0
  %5558 = vmatpush.msra.mxu0 0.0
  %5559 = vmatpush.msra.mxu0 0.0
  %5560 = vmatpush.msra.mxu0 0.0
  %5561 = vmatpush.msra.mxu0 0.0
  %5562 = vmatpush.msra.mxu0 0.0
  %v5563 = vand.u32 %v48, 4294901760
  %v5564 = vsub.f32 %v48, %v5563
  %v5565 = vand.u32 %v5564, 4294901760
  %v5566 = vsub.f32 %v5564, %v5565
  %v5567 = vand.u32 %v5566, 4294901760
  %5568 = vmatpush.msra.mxu0 %v5567
  %v5569 = vand.u32 %v47, 4294901760
  %v5570 = vsub.f32 %v47, %v5569
  %v5571 = vand.u32 %v5570, 4294901760
  %v5572 = vsub.f32 %v5570, %v5571
  %v5573 = vand.u32 %v5572, 4294901760
  %5574 = vmatpush.msra.mxu0 %v5573
  %v5575 = vand.u32 %v46, 4294901760
  %v5576 = vsub.f32 %v46, %v5575
  %v5577 = vand.u32 %v5576, 4294901760
  %v5578 = vsub.f32 %v5576, %v5577
  %v5579 = vand.u32 %v5578, 4294901760
  %5580 = vmatpush.msra.mxu0 %v5579
  %v5581 = vand.u32 %v45, 4294901760
  %v5582 = vsub.f32 %v45, %v5581
  %v5583 = vand.u32 %v5582, 4294901760
  %v5584 = vsub.f32 %v5582, %v5583
  %v5585 = vand.u32 %v5584, 4294901760
  %5586 = vmatpush.msra.mxu0 %v5585
  %v5587 = vand.u32 %v44, 4294901760
  %v5588 = vsub.f32 %v44, %v5587
  %v5589 = vand.u32 %v5588, 4294901760
  %v5590 = vsub.f32 %v5588, %v5589
  %v5591 = vand.u32 %v5590, 4294901760
  %5592 = vmatpush.msra.mxu0 %v5591
  %v5593 = vand.u32 %v43, 4294901760
  %v5594 = vsub.f32 %v43, %v5593
  %v5595 = vand.u32 %v5594, 4294901760
  %v5596 = vsub.f32 %v5594, %v5595
  %v5597 = vand.u32 %v5596, 4294901760
  %5598 = vmatpush.msra.mxu0 %v5597
  %v5599 = vand.u32 %v5498, 4294901760
  %5600 = vmatmul.f32.gmra.mxu0 %v5599
  %v5601 = vpop.f32.mrf.mxu0
  %v5602 = vadd.f32 %v5535, %v5601
  %v5603 = vand.u32 %v5501, 4294901760
  %5604 = vmatmul.f32.gmra.mxu0 %v5603
  %v5605 = vpop.f32.mrf.mxu0
  %v5606 = vadd.f32 %v5543, %v5605
  %v5607 = vand.u32 %v5504, 4294901760
  %5608 = vmatmul.f32.gmra.mxu0 %v5607
  %v5609 = vpop.f32.mrf.mxu0
  %v5610 = vadd.f32 %v5551, %v5609
  %5611 = vdwg.mxu0
  %5612 = vmatpush.msra.mxu0 0.0
  %5613 = vmatpush.msra.mxu0 0.0
  %5614 = vmatpush.msra.mxu0 0.0
  %5615 = vmatpush.msra.mxu0 0.0
  %5616 = vmatpush.msra.mxu0 0.0
  %5617 = vmatpush.msra.mxu0 0.0
  %5618 = vmatpush.msra.mxu0 0.0
  %5619 = vmatpush.msra.mxu0 0.0
  %5620 = vmatpush.msra.mxu0 0.0
  %5621 = vmatpush.msra.mxu0 0.0
  %v5622 = vand.u32 %v48, 4294901760
  %v5623 = vsub.f32 %v48, %v5622
  %5624 = vmatpush.msra.mxu0 %v5623
  %v5625 = vand.u32 %v47, 4294901760
  %v5626 = vsub.f32 %v47, %v5625
  %5627 = vmatpush.msra.mxu0 %v5626
  %v5628 = vand.u32 %v46, 4294901760
  %v5629 = vsub.f32 %v46, %v5628
  %5630 = vmatpush.msra.mxu0 %v5629
  %v5631 = vand.u32 %v45, 4294901760
  %v5632 = vsub.f32 %v45, %v5631
  %5633 = vmatpush.msra.mxu0 %v5632
  %v5634 = vand.u32 %v44, 4294901760
  %v5635 = vsub.f32 %v44, %v5634
  %5636 = vmatpush.msra.mxu0 %v5635
  %v5637 = vand.u32 %v43, 4294901760
  %v5638 = vsub.f32 %v43, %v5637
  %5639 = vmatpush.msra.mxu0 %v5638
  %v5640 = vand.u32 %v5498, 4294901760
  %v5641 = vsub.f32 %v5498, %v5640
  %5642 = vmatmul.f32.gmra.mxu0 %v5641
  %v5643 = vpop.f32.mrf.mxu0
  %v5644 = vadd.f32 %v5602, %v5643
  %v5645 = vand.u32 %v5501, 4294901760
  %v5646 = vsub.f32 %v5501, %v5645
  %5647 = vmatmul.f32.gmra.mxu0 %v5646
  %v5648 = vpop.f32.mrf.mxu0
  %v5649 = vadd.f32 %v5606, %v5648
  %v5650 = vand.u32 %v5504, 4294901760
  %v5651 = vsub.f32 %v5504, %v5650
  %5652 = vmatmul.f32.gmra.mxu0 %v5651
  %v5653 = vpop.f32.mrf.mxu0
  %v5654 = vadd.f32 %v5610, %v5653
  %5655 = vdwg.mxu0
  %5656 = vmatpush.msra.mxu0 0.0
  %5657 = vmatpush.msra.mxu0 0.0
  %5658 = vmatpush.msra.mxu0 0.0
  %5659 = vmatpush.msra.mxu0 0.0
  %5660 = vmatpush.msra.mxu0 0.0
  %5661 = vmatpush.msra.mxu0 0.0
  %5662 = vmatpush.msra.mxu0 0.0
  %5663 = vmatpush.msra.mxu0 0.0
  %5664 = vmatpush.msra.mxu0 0.0
  %5665 = vmatpush.msra.mxu0 0.0
  %v5666 = vand.u32 %v48, 4294901760
  %5667 = vmatpush.msra.mxu0 %v5666
  %v5668 = vand.u32 %v47, 4294901760
  %5669 = vmatpush.msra.mxu0 %v5668
  %v5670 = vand.u32 %v46, 4294901760
  %5671 = vmatpush.msra.mxu0 %v5670
  %v5672 = vand.u32 %v45, 4294901760
  %5673 = vmatpush.msra.mxu0 %v5672
  %v5674 = vand.u32 %v44, 4294901760
  %5675 = vmatpush.msra.mxu0 %v5674
  %v5676 = vand.u32 %v43, 4294901760
  %5677 = vmatpush.msra.mxu0 %v5676
  %v5678 = vand.u32 %v5498, 4294901760
  %v5679 = vsub.f32 %v5498, %v5678
  %v5680 = vand.u32 %v5679, 4294901760
  %5681 = vmatmul.f32.gmra.mxu0 %v5680
  %v5682 = vpop.f32.mrf.mxu0
  %v5683 = vadd.f32 %v5644, %v5682
  %v5684 = vand.u32 %v5501, 4294901760
  %v5685 = vsub.f32 %v5501, %v5684
  %v5686 = vand.u32 %v5685, 4294901760
  %5687 = vmatmul.f32.gmra.mxu0 %v5686
  %v5688 = vpop.f32.mrf.mxu0
  %v5689 = vadd.f32 %v5649, %v5688
  %v5690 = vand.u32 %v5504, 4294901760
  %v5691 = vsub.f32 %v5504, %v5690
  %v5692 = vand.u32 %v5691, 4294901760
  %5693 = vmatmul.f32.gmra.mxu0 %v5692
  %v5694 = vpop.f32.mrf.mxu0
  %v5695 = vadd.f32 %v5654, %v5694
  %5696 = vdwg.mxu0
  %5697 = vmatpush.msra.mxu0 0.0
  %5698 = vmatpush.msra.mxu0 0.0
  %5699 = vmatpush.msra.mxu0 0.0
  %5700 = vmatpush.msra.mxu0 0.0
  %5701 = vmatpush.msra.mxu0 0.0
  %5702 = vmatpush.msra.mxu0 0.0
  %5703 = vmatpush.msra.mxu0 0.0
  %5704 = vmatpush.msra.mxu0 0.0
  %5705 = vmatpush.msra.mxu0 0.0
  %5706 = vmatpush.msra.mxu0 0.0
  %v5707 = vand.u32 %v48, 4294901760
  %v5708 = vsub.f32 %v48, %v5707
  %v5709 = vand.u32 %v5708, 4294901760
  %5710 = vmatpush.msra.mxu0 %v5709
  %v5711 = vand.u32 %v47, 4294901760
  %v5712 = vsub.f32 %v47, %v5711
  %v5713 = vand.u32 %v5712, 4294901760
  %5714 = vmatpush.msra.mxu0 %v5713
  %v5715 = vand.u32 %v46, 4294901760
  %v5716 = vsub.f32 %v46, %v5715
  %v5717 = vand.u32 %v5716, 4294901760
  %5718 = vmatpush.msra.mxu0 %v5717
  %v5719 = vand.u32 %v45, 4294901760
  %v5720 = vsub.f32 %v45, %v5719
  %v5721 = vand.u32 %v5720, 4294901760
  %5722 = vmatpush.msra.mxu0 %v5721
  %v5723 = vand.u32 %v44, 4294901760
  %v5724 = vsub.f32 %v44, %v5723
  %v5725 = vand.u32 %v5724, 4294901760
  %5726 = vmatpush.msra.mxu0 %v5725
  %v5727 = vand.u32 %v43, 4294901760
  %v5728 = vsub.f32 %v43, %v5727
  %v5729 = vand.u32 %v5728, 4294901760
  %5730 = vmatpush.msra.mxu0 %v5729
  %v5731 = vand.u32 %v5498, 4294901760
  %5732 = vmatmul.f32.gmra.mxu0 %v5731
  %v5733 = vpop.f32.mrf.mxu0
  %v5734 = vadd.f32 %v5683, %v5733
  %v5735 = vand.u32 %v5501, 4294901760
  %5736 = vmatmul.f32.gmra.mxu0 %v5735
  %v5737 = vpop.f32.mrf.mxu0
  %v5738 = vadd.f32 %v5689, %v5737
  %v5739 = vand.u32 %v5504, 4294901760
  %5740 = vmatmul.f32.gmra.mxu0 %v5739
  %v5741 = vpop.f32.mrf.mxu0
  %v5742 = vadd.f32 %v5695, %v5741
  %5743 = vdwg.mxu0
  %5744 = vmatpush.msra.mxu0 0.0
  %5745 = vmatpush.msra.mxu0 0.0
  %5746 = vmatpush.msra.mxu0 0.0
  %5747 = vmatpush.msra.mxu0 0.0
  %5748 = vmatpush.msra.mxu0 0.0
  %5749 = vmatpush.msra.mxu0 0.0
  %5750 = vmatpush.msra.mxu0 0.0
  %5751 = vmatpush.msra.mxu0 0.0
  %5752 = vmatpush.msra.mxu0 0.0
  %5753 = vmatpush.msra.mxu0 0.0
  %v5754 = vand.u32 %v48, 4294901760
  %5755 = vmatpush.msra.mxu0 %v5754
  %v5756 = vand.u32 %v47, 4294901760
  %5757 = vmatpush.msra.mxu0 %v5756
  %v5758 = vand.u32 %v46, 4294901760
  %5759 = vmatpush.msra.mxu0 %v5758
  %v5760 = vand.u32 %v45, 4294901760
  %5761 = vmatpush.msra.mxu0 %v5760
  %v5762 = vand.u32 %v44, 4294901760
  %5763 = vmatpush.msra.mxu0 %v5762
  %v5764 = vand.u32 %v43, 4294901760
  %5765 = vmatpush.msra.mxu0 %v5764
  %v5766 = vand.u32 %v5498, 4294901760
  %5767 = vmatmul.f32.gmra.mxu0 %v5766
  %v5768 = vpop.f32.mrf.mxu0
  %v5769 = vadd.f32 %v5734, %v5768
  %v5770 = vand.u32 %v5501, 4294901760
  %5771 = vmatmul.f32.gmra.mxu0 %v5770
  %v5772 = vpop.f32.mrf.mxu0
  %v5773 = vadd.f32 %v5738, %v5772
  %v5774 = vand.u32 %v5504, 4294901760
  %5775 = vmatmul.f32.gmra.mxu0 %v5774
  %v5776 = vpop.f32.mrf.mxu0
  %v5777 = vadd.f32 %v5742, %v5776
  %5778 = vdwg.mxu0
  %v5779 = vmax.f32 %v5769, 0.0
  %v5780 = vmax.f32 %v5773, 0.0
  %v5781 = vmax.f32 %v5777, 0.0
  %v5782 = vperm.slane %v55, 0
  %v5784 = vsel %vm3483, %v5779, 0
  %v5787 = vsel %vm3483, %v5780, 0
  %v5790 = vsel %vm3483, %v5781, 0
  %5792 = vmatpush.msra.mxu0 0.0
  %5793 = vmatpush.msra.mxu0 0.0
  %5794 = vmatpush.msra.mxu0 0.0
  %5795 = vmatpush.msra.mxu0 0.0
  %5796 = vmatpush.msra.mxu0 0.0
  %5797 = vmatpush.msra.mxu0 0.0
  %5798 = vmatpush.msra.mxu0 0.0
  %5799 = vmatpush.msra.mxu0 0.0
  %5800 = vmatpush.msra.mxu0 0.0
  %5801 = vmatpush.msra.mxu0 0.0
  %5802 = vmatpush.msra.mxu0 0.0
  %5803 = vmatpush.msra.mxu0 0.0
  %v5804 = vand.u32 %v52, 4294901760
  %5805 = vmatpush.msra.mxu0 %v5804
  %v5806 = vand.u32 %v51, 4294901760
  %5807 = vmatpush.msra.mxu0 %v5806
  %v5808 = vand.u32 %v50, 4294901760
  %5809 = vmatpush.msra.mxu0 %v5808
  %v5810 = vand.u32 %v49, 4294901760
  %5811 = vmatpush.msra.mxu0 %v5810
  %v5812 = vand.u32 %v5784, 4294901760
  %v5813 = vsub.f32 %v5784, %v5812
  %v5814 = vand.u32 %v5813, 4294901760
  %v5815 = vsub.f32 %v5813, %v5814
  %v5816 = vand.u32 %v5815, 4294901760
  %5817 = vmatmul.f32.gmra.mxu0 %v5816
  %v5818 = vpop.f32.mrf.mxu0
  %v5819 = vadd.f32 %v5782, %v5818
  %v5820 = vand.u32 %v5787, 4294901760
  %v5821 = vsub.f32 %v5787, %v5820
  %v5822 = vand.u32 %v5821, 4294901760
  %v5823 = vsub.f32 %v5821, %v5822
  %v5824 = vand.u32 %v5823, 4294901760
  %5825 = vmatmul.f32.gmra.mxu0 %v5824
  %v5826 = vpop.f32.mrf.mxu0
  %v5827 = vadd.f32 %v5782, %v5826
  %v5828 = vand.u32 %v5790, 4294901760
  %v5829 = vsub.f32 %v5790, %v5828
  %v5830 = vand.u32 %v5829, 4294901760
  %v5831 = vsub.f32 %v5829, %v5830
  %v5832 = vand.u32 %v5831, 4294901760
  %5833 = vmatmul.f32.gmra.mxu0 %v5832
  %v5834 = vpop.f32.mrf.mxu0
  %v5835 = vadd.f32 %v5782, %v5834
  %5836 = vdwg.mxu0
  %5837 = vmatpush.msra.mxu0 0.0
  %5838 = vmatpush.msra.mxu0 0.0
  %5839 = vmatpush.msra.mxu0 0.0
  %5840 = vmatpush.msra.mxu0 0.0
  %5841 = vmatpush.msra.mxu0 0.0
  %5842 = vmatpush.msra.mxu0 0.0
  %5843 = vmatpush.msra.mxu0 0.0
  %5844 = vmatpush.msra.mxu0 0.0
  %5845 = vmatpush.msra.mxu0 0.0
  %5846 = vmatpush.msra.mxu0 0.0
  %5847 = vmatpush.msra.mxu0 0.0
  %5848 = vmatpush.msra.mxu0 0.0
  %v5849 = vand.u32 %v52, 4294901760
  %v5850 = vsub.f32 %v52, %v5849
  %v5851 = vand.u32 %v5850, 4294901760
  %v5852 = vsub.f32 %v5850, %v5851
  %v5853 = vand.u32 %v5852, 4294901760
  %5854 = vmatpush.msra.mxu0 %v5853
  %v5855 = vand.u32 %v51, 4294901760
  %v5856 = vsub.f32 %v51, %v5855
  %v5857 = vand.u32 %v5856, 4294901760
  %v5858 = vsub.f32 %v5856, %v5857
  %v5859 = vand.u32 %v5858, 4294901760
  %5860 = vmatpush.msra.mxu0 %v5859
  %v5861 = vand.u32 %v50, 4294901760
  %v5862 = vsub.f32 %v50, %v5861
  %v5863 = vand.u32 %v5862, 4294901760
  %v5864 = vsub.f32 %v5862, %v5863
  %v5865 = vand.u32 %v5864, 4294901760
  %5866 = vmatpush.msra.mxu0 %v5865
  %v5867 = vand.u32 %v49, 4294901760
  %v5868 = vsub.f32 %v49, %v5867
  %v5869 = vand.u32 %v5868, 4294901760
  %v5870 = vsub.f32 %v5868, %v5869
  %v5871 = vand.u32 %v5870, 4294901760
  %5872 = vmatpush.msra.mxu0 %v5871
  %v5873 = vand.u32 %v5784, 4294901760
  %5874 = vmatmul.f32.gmra.mxu0 %v5873
  %v5875 = vpop.f32.mrf.mxu0
  %v5876 = vadd.f32 %v5819, %v5875
  %v5877 = vand.u32 %v5787, 4294901760
  %5878 = vmatmul.f32.gmra.mxu0 %v5877
  %v5879 = vpop.f32.mrf.mxu0
  %v5880 = vadd.f32 %v5827, %v5879
  %v5881 = vand.u32 %v5790, 4294901760
  %5882 = vmatmul.f32.gmra.mxu0 %v5881
  %v5883 = vpop.f32.mrf.mxu0
  %v5884 = vadd.f32 %v5835, %v5883
  %5885 = vdwg.mxu0
  %5886 = vmatpush.msra.mxu0 0.0
  %5887 = vmatpush.msra.mxu0 0.0
  %5888 = vmatpush.msra.mxu0 0.0
  %5889 = vmatpush.msra.mxu0 0.0
  %5890 = vmatpush.msra.mxu0 0.0
  %5891 = vmatpush.msra.mxu0 0.0
  %5892 = vmatpush.msra.mxu0 0.0
  %5893 = vmatpush.msra.mxu0 0.0
  %5894 = vmatpush.msra.mxu0 0.0
  %5895 = vmatpush.msra.mxu0 0.0
  %5896 = vmatpush.msra.mxu0 0.0
  %5897 = vmatpush.msra.mxu0 0.0
  %v5898 = vand.u32 %v52, 4294901760
  %v5899 = vsub.f32 %v52, %v5898
  %5900 = vmatpush.msra.mxu0 %v5899
  %v5901 = vand.u32 %v51, 4294901760
  %v5902 = vsub.f32 %v51, %v5901
  %5903 = vmatpush.msra.mxu0 %v5902
  %v5904 = vand.u32 %v50, 4294901760
  %v5905 = vsub.f32 %v50, %v5904
  %5906 = vmatpush.msra.mxu0 %v5905
  %v5907 = vand.u32 %v49, 4294901760
  %v5908 = vsub.f32 %v49, %v5907
  %5909 = vmatpush.msra.mxu0 %v5908
  %v5910 = vand.u32 %v5784, 4294901760
  %v5911 = vsub.f32 %v5784, %v5910
  %5912 = vmatmul.f32.gmra.mxu0 %v5911
  %v5913 = vpop.f32.mrf.mxu0
  %v5914 = vadd.f32 %v5876, %v5913
  %v5915 = vand.u32 %v5787, 4294901760
  %v5916 = vsub.f32 %v5787, %v5915
  %5917 = vmatmul.f32.gmra.mxu0 %v5916
  %v5918 = vpop.f32.mrf.mxu0
  %v5919 = vadd.f32 %v5880, %v5918
  %v5920 = vand.u32 %v5790, 4294901760
  %v5921 = vsub.f32 %v5790, %v5920
  %5922 = vmatmul.f32.gmra.mxu0 %v5921
  %v5923 = vpop.f32.mrf.mxu0
  %v5924 = vadd.f32 %v5884, %v5923
  %5925 = vdwg.mxu0
  %5926 = vmatpush.msra.mxu0 0.0
  %5927 = vmatpush.msra.mxu0 0.0
  %5928 = vmatpush.msra.mxu0 0.0
  %5929 = vmatpush.msra.mxu0 0.0
  %5930 = vmatpush.msra.mxu0 0.0
  %5931 = vmatpush.msra.mxu0 0.0
  %5932 = vmatpush.msra.mxu0 0.0
  %5933 = vmatpush.msra.mxu0 0.0
  %5934 = vmatpush.msra.mxu0 0.0
  %5935 = vmatpush.msra.mxu0 0.0
  %5936 = vmatpush.msra.mxu0 0.0
  %5937 = vmatpush.msra.mxu0 0.0
  %v5938 = vand.u32 %v52, 4294901760
  %5939 = vmatpush.msra.mxu0 %v5938
  %v5940 = vand.u32 %v51, 4294901760
  %5941 = vmatpush.msra.mxu0 %v5940
  %v5942 = vand.u32 %v50, 4294901760
  %5943 = vmatpush.msra.mxu0 %v5942
  %v5944 = vand.u32 %v49, 4294901760
  %5945 = vmatpush.msra.mxu0 %v5944
  %v5946 = vand.u32 %v5784, 4294901760
  %v5947 = vsub.f32 %v5784, %v5946
  %v5948 = vand.u32 %v5947, 4294901760
  %5949 = vmatmul.f32.gmra.mxu0 %v5948
  %v5950 = vpop.f32.mrf.mxu0
  %v5951 = vadd.f32 %v5914, %v5950
  %v5952 = vand.u32 %v5787, 4294901760
  %v5953 = vsub.f32 %v5787, %v5952
  %v5954 = vand.u32 %v5953, 4294901760
  %5955 = vmatmul.f32.gmra.mxu0 %v5954
  %v5956 = vpop.f32.mrf.mxu0
  %v5957 = vadd.f32 %v5919, %v5956
  %v5958 = vand.u32 %v5790, 4294901760
  %v5959 = vsub.f32 %v5790, %v5958
  %v5960 = vand.u32 %v5959, 4294901760
  %5961 = vmatmul.f32.gmra.mxu0 %v5960
  %v5962 = vpop.f32.mrf.mxu0
  %v5963 = vadd.f32 %v5924, %v5962
  %5964 = vdwg.mxu0
  %5965 = vmatpush.msra.mxu0 0.0
  %5966 = vmatpush.msra.mxu0 0.0
  %5967 = vmatpush.msra.mxu0 0.0
  %5968 = vmatpush.msra.mxu0 0.0
  %5969 = vmatpush.msra.mxu0 0.0
  %5970 = vmatpush.msra.mxu0 0.0
  %5971 = vmatpush.msra.mxu0 0.0
  %5972 = vmatpush.msra.mxu0 0.0
  %5973 = vmatpush.msra.mxu0 0.0
  %5974 = vmatpush.msra.mxu0 0.0
  %5975 = vmatpush.msra.mxu0 0.0
  %5976 = vmatpush.msra.mxu0 0.0
  %v5977 = vand.u32 %v52, 4294901760
  %v5978 = vsub.f32 %v52, %v5977
  %v5979 = vand.u32 %v5978, 4294901760
  %5980 = vmatpush.msra.mxu0 %v5979
  %v5981 = vand.u32 %v51, 4294901760
  %v5982 = vsub.f32 %v51, %v5981
  %v5983 = vand.u32 %v5982, 4294901760
  %5984 = vmatpush.msra.mxu0 %v5983
  %v5985 = vand.u32 %v50, 4294901760
  %v5986 = vsub.f32 %v50, %v5985
  %v5987 = vand.u32 %v5986, 4294901760
  %5988 = vmatpush.msra.mxu0 %v5987
  %v5989 = vand.u32 %v49, 4294901760
  %v5990 = vsub.f32 %v49, %v5989
  %v5991 = vand.u32 %v5990, 4294901760
  %5992 = vmatpush.msra.mxu0 %v5991
  %v5993 = vand.u32 %v5784, 4294901760
  %5994 = vmatmul.f32.gmra.mxu0 %v5993
  %v5995 = vpop.f32.mrf.mxu0
  %v5996 = vadd.f32 %v5951, %v5995
  %v5997 = vand.u32 %v5787, 4294901760
  %5998 = vmatmul.f32.gmra.mxu0 %v5997
  %v5999 = vpop.f32.mrf.mxu0
  %v6000 = vadd.f32 %v5957, %v5999
  %v6001 = vand.u32 %v5790, 4294901760
  %6002 = vmatmul.f32.gmra.mxu0 %v6001
  %v6003 = vpop.f32.mrf.mxu0
  %v6004 = vadd.f32 %v5963, %v6003
  %6005 = vdwg.mxu0
  %6006 = vmatpush.msra.mxu0 0.0
  %6007 = vmatpush.msra.mxu0 0.0
  %6008 = vmatpush.msra.mxu0 0.0
  %6009 = vmatpush.msra.mxu0 0.0
  %6010 = vmatpush.msra.mxu0 0.0
  %6011 = vmatpush.msra.mxu0 0.0
  %6012 = vmatpush.msra.mxu0 0.0
  %6013 = vmatpush.msra.mxu0 0.0
  %6014 = vmatpush.msra.mxu0 0.0
  %6015 = vmatpush.msra.mxu0 0.0
  %6016 = vmatpush.msra.mxu0 0.0
  %6017 = vmatpush.msra.mxu0 0.0
  %v6018 = vand.u32 %v52, 4294901760
  %6019 = vmatpush.msra.mxu0 %v6018
  %v6020 = vand.u32 %v51, 4294901760
  %6021 = vmatpush.msra.mxu0 %v6020
  %v6022 = vand.u32 %v50, 4294901760
  %6023 = vmatpush.msra.mxu0 %v6022
  %v6024 = vand.u32 %v49, 4294901760
  %6025 = vmatpush.msra.mxu0 %v6024
  %v6026 = vand.u32 %v5784, 4294901760
  %6027 = vmatmul.f32.gmra.mxu0 %v6026
  %v6028 = vpop.f32.mrf.mxu0
  %v6029 = vadd.f32 %v5996, %v6028
  %v6030 = vand.u32 %v5787, 4294901760
  %6031 = vmatmul.f32.gmra.mxu0 %v6030
  %v6032 = vpop.f32.mrf.mxu0
  %v6033 = vadd.f32 %v6000, %v6032
  %v6034 = vand.u32 %v5790, 4294901760
  %6035 = vmatmul.f32.gmra.mxu0 %v6034
  %v6036 = vpop.f32.mrf.mxu0
  %v6037 = vadd.f32 %v6004, %v6036
  %6038 = vdwg.mxu0
  %v6039 = vmax.f32 %v6029, 0.0
  %v6040 = vmax.f32 %v6033, 0.0
  %v6041 = vmax.f32 %v6037, 0.0
  %v6043 = vsel %vm3483, %v6039, 0
  %v6046 = vsel %vm3483, %v6040, 0
  %v6049 = vsel %vm3483, %v6041, 0
  %6051 = vmatpush.msra.mxu0 0.0
  %6052 = vmatpush.msra.mxu0 0.0
  %6053 = vmatpush.msra.mxu0 0.0
  %6054 = vmatpush.msra.mxu0 0.0
  %6055 = vmatpush.msra.mxu0 0.0
  %6056 = vmatpush.msra.mxu0 0.0
  %6057 = vmatpush.msra.mxu0 0.0
  %6058 = vmatpush.msra.mxu0 0.0
  %6059 = vmatpush.msra.mxu0 0.0
  %6060 = vmatpush.msra.mxu0 0.0
  %6061 = vmatpush.msra.mxu0 0.0
  %6062 = vmatpush.msra.mxu0 0.0
  %v6063 = vand.u32 %v3482, 4294901760
  %6064 = vmatpush.msra.mxu0 %v6063
  %v6065 = vand.u32 %v3481, 4294901760
  %6066 = vmatpush.msra.mxu0 %v6065
  %v6067 = vand.u32 %v3480, 4294901760
  %6068 = vmatpush.msra.mxu0 %v6067
  %v6069 = vand.u32 %v3479, 4294901760
  %6070 = vmatpush.msra.mxu0 %v6069
  %v6071 = vand.u32 %v6043, 4294901760
  %v6072 = vsub.f32 %v6043, %v6071
  %v6073 = vand.u32 %v6072, 4294901760
  %v6074 = vsub.f32 %v6072, %v6073
  %v6075 = vand.u32 %v6074, 4294901760
  %6076 = vmatmul.f32.gmra.mxu0 %v6075
  %v6077 = vpop.f32.mrf.mxu0
  %v6078 = vadd.f32 0.0, %v6077
  %v6079 = vand.u32 %v6046, 4294901760
  %v6080 = vsub.f32 %v6046, %v6079
  %v6081 = vand.u32 %v6080, 4294901760
  %v6082 = vsub.f32 %v6080, %v6081
  %v6083 = vand.u32 %v6082, 4294901760
  %6084 = vmatmul.f32.gmra.mxu0 %v6083
  %v6085 = vpop.f32.mrf.mxu0
  %v6086 = vadd.f32 0.0, %v6085
  %v6087 = vand.u32 %v6049, 4294901760
  %v6088 = vsub.f32 %v6049, %v6087
  %v6089 = vand.u32 %v6088, 4294901760
  %v6090 = vsub.f32 %v6088, %v6089
  %v6091 = vand.u32 %v6090, 4294901760
  %6092 = vmatmul.f32.gmra.mxu0 %v6091
  %v6093 = vpop.f32.mrf.mxu0
  %v6094 = vadd.f32 0.0, %v6093
  %6095 = vdwg.mxu0
  %6096 = vmatpush.msra.mxu0 0.0
  %6097 = vmatpush.msra.mxu0 0.0
  %6098 = vmatpush.msra.mxu0 0.0
  %6099 = vmatpush.msra.mxu0 0.0
  %6100 = vmatpush.msra.mxu0 0.0
  %6101 = vmatpush.msra.mxu0 0.0
  %6102 = vmatpush.msra.mxu0 0.0
  %6103 = vmatpush.msra.mxu0 0.0
  %6104 = vmatpush.msra.mxu0 0.0
  %6105 = vmatpush.msra.mxu0 0.0
  %6106 = vmatpush.msra.mxu0 0.0
  %6107 = vmatpush.msra.mxu0 0.0
  %v6108 = vand.u32 %v3482, 4294901760
  %v6109 = vsub.f32 %v3482, %v6108
  %v6110 = vand.u32 %v6109, 4294901760
  %v6111 = vsub.f32 %v6109, %v6110
  %v6112 = vand.u32 %v6111, 4294901760
  %6113 = vmatpush.msra.mxu0 %v6112
  %v6114 = vand.u32 %v3481, 4294901760
  %v6115 = vsub.f32 %v3481, %v6114
  %v6116 = vand.u32 %v6115, 4294901760
  %v6117 = vsub.f32 %v6115, %v6116
  %v6118 = vand.u32 %v6117, 4294901760
  %6119 = vmatpush.msra.mxu0 %v6118
  %v6120 = vand.u32 %v3480, 4294901760
  %v6121 = vsub.f32 %v3480, %v6120
  %v6122 = vand.u32 %v6121, 4294901760
  %v6123 = vsub.f32 %v6121, %v6122
  %v6124 = vand.u32 %v6123, 4294901760
  %6125 = vmatpush.msra.mxu0 %v6124
  %v6126 = vand.u32 %v3479, 4294901760
  %v6127 = vsub.f32 %v3479, %v6126
  %v6128 = vand.u32 %v6127, 4294901760
  %v6129 = vsub.f32 %v6127, %v6128
  %v6130 = vand.u32 %v6129, 4294901760
  %6131 = vmatpush.msra.mxu0 %v6130
  %v6132 = vand.u32 %v6043, 4294901760
  %6133 = vmatmul.f32.gmra.mxu0 %v6132
  %v6134 = vpop.f32.mrf.mxu0
  %v6135 = vadd.f32 %v6078, %v6134
  %v6136 = vand.u32 %v6046, 4294901760
  %6137 = vmatmul.f32.gmra.mxu0 %v6136
  %v6138 = vpop.f32.mrf.mxu0
  %v6139 = vadd.f32 %v6086, %v6138
  %v6140 = vand.u32 %v6049, 4294901760
  %6141 = vmatmul.f32.gmra.mxu0 %v6140
  %v6142 = vpop.f32.mrf.mxu0
  %v6143 = vadd.f32 %v6094, %v6142
  %6144 = vdwg.mxu0
  %6145 = vmatpush.msra.mxu0 0.0
  %6146 = vmatpush.msra.mxu0 0.0
  %6147 = vmatpush.msra.mxu0 0.0
  %6148 = vmatpush.msra.mxu0 0.0
  %6149 = vmatpush.msra.mxu0 0.0
  %6150 = vmatpush.msra.mxu0 0.0
  %6151 = vmatpush.msra.mxu0 0.0
  %6152 = vmatpush.msra.mxu0 0.0
  %6153 = vmatpush.msra.mxu0 0.0
  %6154 = vmatpush.msra.mxu0 0.0
  %6155 = vmatpush.msra.mxu0 0.0
  %6156 = vmatpush.msra.mxu0 0.0
  %v6157 = vand.u32 %v3482, 4294901760
  %v6158 = vsub.f32 %v3482, %v6157
  %6159 = vmatpush.msra.mxu0 %v6158
  %v6160 = vand.u32 %v3481, 4294901760
  %v6161 = vsub.f32 %v3481, %v6160
  %6162 = vmatpush.msra.mxu0 %v6161
  %v6163 = vand.u32 %v3480, 4294901760
  %v6164 = vsub.f32 %v3480, %v6163
  %6165 = vmatpush.msra.mxu0 %v6164
  %v6166 = vand.u32 %v3479, 4294901760
  %v6167 = vsub.f32 %v3479, %v6166
  %6168 = vmatpush.msra.mxu0 %v6167
  %v6169 = vand.u32 %v6043, 4294901760
  %v6170 = vsub.f32 %v6043, %v6169
  %6171 = vmatmul.f32.gmra.mxu0 %v6170
  %v6172 = vpop.f32.mrf.mxu0
  %v6173 = vadd.f32 %v6135, %v6172
  %v6174 = vand.u32 %v6046, 4294901760
  %v6175 = vsub.f32 %v6046, %v6174
  %6176 = vmatmul.f32.gmra.mxu0 %v6175
  %v6177 = vpop.f32.mrf.mxu0
  %v6178 = vadd.f32 %v6139, %v6177
  %v6179 = vand.u32 %v6049, 4294901760
  %v6180 = vsub.f32 %v6049, %v6179
  %6181 = vmatmul.f32.gmra.mxu0 %v6180
  %v6182 = vpop.f32.mrf.mxu0
  %v6183 = vadd.f32 %v6143, %v6182
  %6184 = vdwg.mxu0
  %6185 = vmatpush.msra.mxu0 0.0
  %6186 = vmatpush.msra.mxu0 0.0
  %6187 = vmatpush.msra.mxu0 0.0
  %6188 = vmatpush.msra.mxu0 0.0
  %6189 = vmatpush.msra.mxu0 0.0
  %6190 = vmatpush.msra.mxu0 0.0
  %6191 = vmatpush.msra.mxu0 0.0
  %6192 = vmatpush.msra.mxu0 0.0
  %6193 = vmatpush.msra.mxu0 0.0
  %6194 = vmatpush.msra.mxu0 0.0
  %6195 = vmatpush.msra.mxu0 0.0
  %6196 = vmatpush.msra.mxu0 0.0
  %v6197 = vand.u32 %v3482, 4294901760
  %6198 = vmatpush.msra.mxu0 %v6197
  %v6199 = vand.u32 %v3481, 4294901760
  %6200 = vmatpush.msra.mxu0 %v6199
  %v6201 = vand.u32 %v3480, 4294901760
  %6202 = vmatpush.msra.mxu0 %v6201
  %v6203 = vand.u32 %v3479, 4294901760
  %6204 = vmatpush.msra.mxu0 %v6203
  %v6205 = vand.u32 %v6043, 4294901760
  %v6206 = vsub.f32 %v6043, %v6205
  %v6207 = vand.u32 %v6206, 4294901760
  %6208 = vmatmul.f32.gmra.mxu0 %v6207
  %v6209 = vpop.f32.mrf.mxu0
  %v6210 = vadd.f32 %v6173, %v6209
  %v6211 = vand.u32 %v6046, 4294901760
  %v6212 = vsub.f32 %v6046, %v6211
  %v6213 = vand.u32 %v6212, 4294901760
  %6214 = vmatmul.f32.gmra.mxu0 %v6213
  %v6215 = vpop.f32.mrf.mxu0
  %v6216 = vadd.f32 %v6178, %v6215
  %v6217 = vand.u32 %v6049, 4294901760
  %v6218 = vsub.f32 %v6049, %v6217
  %v6219 = vand.u32 %v6218, 4294901760
  %6220 = vmatmul.f32.gmra.mxu0 %v6219
  %v6221 = vpop.f32.mrf.mxu0
  %v6222 = vadd.f32 %v6183, %v6221
  %6223 = vdwg.mxu0
  %6224 = vmatpush.msra.mxu0 0.0
  %6225 = vmatpush.msra.mxu0 0.0
  %6226 = vmatpush.msra.mxu0 0.0
  %6227 = vmatpush.msra.mxu0 0.0
  %6228 = vmatpush.msra.mxu0 0.0
  %6229 = vmatpush.msra.mxu0 0.0
  %6230 = vmatpush.msra.mxu0 0.0
  %6231 = vmatpush.msra.mxu0 0.0
  %6232 = vmatpush.msra.mxu0 0.0
  %6233 = vmatpush.msra.mxu0 0.0
  %6234 = vmatpush.msra.mxu0 0.0
  %6235 = vmatpush.msra.mxu0 0.0
  %v6236 = vand.u32 %v3482, 4294901760
  %v6237 = vsub.f32 %v3482, %v6236
  %v6238 = vand.u32 %v6237, 4294901760
  %6239 = vmatpush.msra.mxu0 %v6238
  %v6240 = vand.u32 %v3481, 4294901760
  %v6241 = vsub.f32 %v3481, %v6240
  %v6242 = vand.u32 %v6241, 4294901760
  %6243 = vmatpush.msra.mxu0 %v6242
  %v6244 = vand.u32 %v3480, 4294901760
  %v6245 = vsub.f32 %v3480, %v6244
  %v6246 = vand.u32 %v6245, 4294901760
  %6247 = vmatpush.msra.mxu0 %v6246
  %v6248 = vand.u32 %v3479, 4294901760
  %v6249 = vsub.f32 %v3479, %v6248
  %v6250 = vand.u32 %v6249, 4294901760
  %6251 = vmatpush.msra.mxu0 %v6250
  %v6252 = vand.u32 %v6043, 4294901760
  %6253 = vmatmul.f32.gmra.mxu0 %v6252
  %v6254 = vpop.f32.mrf.mxu0
  %v6255 = vadd.f32 %v6210, %v6254
  %v6256 = vand.u32 %v6046, 4294901760
  %6257 = vmatmul.f32.gmra.mxu0 %v6256
  %v6258 = vpop.f32.mrf.mxu0
  %v6259 = vadd.f32 %v6216, %v6258
  %v6260 = vand.u32 %v6049, 4294901760
  %6261 = vmatmul.f32.gmra.mxu0 %v6260
  %v6262 = vpop.f32.mrf.mxu0
  %v6263 = vadd.f32 %v6222, %v6262
  %6264 = vdwg.mxu0
  %6265 = vmatpush.msra.mxu0 0.0
  %6266 = vmatpush.msra.mxu0 0.0
  %6267 = vmatpush.msra.mxu0 0.0
  %6268 = vmatpush.msra.mxu0 0.0
  %6269 = vmatpush.msra.mxu0 0.0
  %6270 = vmatpush.msra.mxu0 0.0
  %6271 = vmatpush.msra.mxu0 0.0
  %6272 = vmatpush.msra.mxu0 0.0
  %6273 = vmatpush.msra.mxu0 0.0
  %6274 = vmatpush.msra.mxu0 0.0
  %6275 = vmatpush.msra.mxu0 0.0
  %6276 = vmatpush.msra.mxu0 0.0
  %v6277 = vand.u32 %v3482, 4294901760
  %6278 = vmatpush.msra.mxu0 %v6277
  %v6279 = vand.u32 %v3481, 4294901760
  %6280 = vmatpush.msra.mxu0 %v6279
  %v6281 = vand.u32 %v3480, 4294901760
  %6282 = vmatpush.msra.mxu0 %v6281
  %v6283 = vand.u32 %v3479, 4294901760
  %6284 = vmatpush.msra.mxu0 %v6283
  %v6285 = vand.u32 %v6043, 4294901760
  %6286 = vmatmul.f32.gmra.mxu0 %v6285
  %v6287 = vpop.f32.mrf.mxu0
  %v6288 = vadd.f32 %v6255, %v6287
  %v6289 = vand.u32 %v6046, 4294901760
  %6290 = vmatmul.f32.gmra.mxu0 %v6289
  %v6291 = vpop.f32.mrf.mxu0
  %v6292 = vadd.f32 %v6259, %v6291
  %v6293 = vand.u32 %v6049, 4294901760
  %6294 = vmatmul.f32.gmra.mxu0 %v6293
  %v6295 = vpop.f32.mrf.mxu0
  %v6296 = vadd.f32 %v6263, %v6295
  %6297 = vdwg.mxu0
  %6301 = vrot.lane.b32.xlu0 %v6288, 112
  %v6302 = vpop.permute.xlu0 %6301
  %6303 = vrot.lane.b32.xlu0 %v6292, 112
  %v6304 = vpop.permute.xlu0 %6303
  %6305 = vrot.lane.b32.xlu0 %v6296, 112
  %v6306 = vpop.permute.xlu0 %6305
  %v6310 = vsel %vm1068, %v6288, %v6302
  %v6311 = vsel %vm1069, %v6292, %v6304
  %v6312 = vsel %vm1070, %v6296, %v6306
  %v6314 = vsel %vm1169, %v6312, 0
  %6316 = vmatpush.msra.mxu0 0.0
  %6317 = vmatpush.msra.mxu0 0.0
  %6318 = vmatpush.msra.mxu0 0.0
  %6319 = vmatpush.msra.mxu0 0.0
  %6320 = vmatpush.msra.mxu0 0.0
  %6321 = vmatpush.msra.mxu0 0.0
  %6322 = vmatpush.msra.mxu0 0.0
  %6323 = vmatpush.msra.mxu0 0.0
  %6324 = vmatpush.msra.mxu0 0.0
  %6325 = vmatpush.msra.mxu0 0.0
  %6326 = vmatpush.msra.mxu0 0.0
  %6327 = vmatpush.msra.mxu0 0.0
  %6328 = vmatpush.msra.mxu0 0.0
  %v6329 = vand.u32 %v6314, 4294901760
  %6330 = vmatpush.msra.mxu0 %v6329
  %v6331 = vand.u32 %v6311, 4294901760
  %6332 = vmatpush.msra.mxu0 %v6331
  %v6333 = vand.u32 %v6310, 4294901760
  %6334 = vmatpush.msra.mxu0 %v6333
  %v6335 = vand.u32 %v1140, 4294901760
  %v6336 = vsub.f32 %v1140, %v6335
  %v6337 = vand.u32 %v6336, 4294901760
  %v6338 = vsub.f32 %v6336, %v6337
  %v6339 = vand.u32 %v6338, 4294901760
  %6340 = vmatmul.f32.gmra.mxu0 %v6339
  %v6341 = vpop.f32.mrf.mxu0
  %v6342 = vadd.f32 0.0, %v6341
  %v6343 = vand.u32 %v1143, 4294901760
  %v6344 = vsub.f32 %v1143, %v6343
  %v6345 = vand.u32 %v6344, 4294901760
  %v6346 = vsub.f32 %v6344, %v6345
  %v6347 = vand.u32 %v6346, 4294901760
  %6348 = vmatmul.f32.gmra.mxu0 %v6347
  %v6349 = vpop.f32.mrf.mxu0
  %v6350 = vadd.f32 0.0, %v6349
  %v6351 = vand.u32 %v1146, 4294901760
  %v6352 = vsub.f32 %v1146, %v6351
  %v6353 = vand.u32 %v6352, 4294901760
  %v6354 = vsub.f32 %v6352, %v6353
  %v6355 = vand.u32 %v6354, 4294901760
  %6356 = vmatmul.f32.gmra.mxu0 %v6355
  %v6357 = vpop.f32.mrf.mxu0
  %v6358 = vadd.f32 0.0, %v6357
  %v6359 = vand.u32 %v1149, 4294901760
  %v6360 = vsub.f32 %v1149, %v6359
  %v6361 = vand.u32 %v6360, 4294901760
  %v6362 = vsub.f32 %v6360, %v6361
  %v6363 = vand.u32 %v6362, 4294901760
  %6364 = vmatmul.f32.gmra.mxu0 %v6363
  %v6365 = vpop.f32.mrf.mxu0
  %v6366 = vadd.f32 0.0, %v6365
  %v6367 = vand.u32 %v1152, 4294901760
  %v6368 = vsub.f32 %v1152, %v6367
  %v6369 = vand.u32 %v6368, 4294901760
  %v6370 = vsub.f32 %v6368, %v6369
  %v6371 = vand.u32 %v6370, 4294901760
  %6372 = vmatmul.f32.gmra.mxu0 %v6371
  %v6373 = vpop.f32.mrf.mxu0
  %v6374 = vadd.f32 0.0, %v6373
  %v6375 = vand.u32 %v1155, 4294901760
  %v6376 = vsub.f32 %v1155, %v6375
  %v6377 = vand.u32 %v6376, 4294901760
  %v6378 = vsub.f32 %v6376, %v6377
  %v6379 = vand.u32 %v6378, 4294901760
  %6380 = vmatmul.f32.gmra.mxu0 %v6379
  %v6381 = vpop.f32.mrf.mxu0
  %v6382 = vadd.f32 0.0, %v6381
  %v6383 = vand.u32 %v1158, 4294901760
  %v6384 = vsub.f32 %v1158, %v6383
  %v6385 = vand.u32 %v6384, 4294901760
  %v6386 = vsub.f32 %v6384, %v6385
  %v6387 = vand.u32 %v6386, 4294901760
  %6388 = vmatmul.f32.gmra.mxu0 %v6387
  %v6389 = vpop.f32.mrf.mxu0
  %v6390 = vadd.f32 0.0, %v6389
  %v6391 = vand.u32 %v1161, 4294901760
  %v6392 = vsub.f32 %v1161, %v6391
  %v6393 = vand.u32 %v6392, 4294901760
  %v6394 = vsub.f32 %v6392, %v6393
  %v6395 = vand.u32 %v6394, 4294901760
  %6396 = vmatmul.f32.gmra.mxu0 %v6395
  %v6397 = vpop.f32.mrf.mxu0
  %v6398 = vadd.f32 0.0, %v6397
  %v6399 = vand.u32 %v1164, 4294901760
  %v6400 = vsub.f32 %v1164, %v6399
  %v6401 = vand.u32 %v6400, 4294901760
  %v6402 = vsub.f32 %v6400, %v6401
  %v6403 = vand.u32 %v6402, 4294901760
  %6404 = vmatmul.f32.gmra.mxu0 %v6403
  %v6405 = vpop.f32.mrf.mxu0
  %v6406 = vadd.f32 0.0, %v6405
  %v6407 = vand.u32 %v1167, 4294901760
  %v6408 = vsub.f32 %v1167, %v6407
  %v6409 = vand.u32 %v6408, 4294901760
  %v6410 = vsub.f32 %v6408, %v6409
  %v6411 = vand.u32 %v6410, 4294901760
  %6412 = vmatmul.f32.gmra.mxu0 %v6411
  %v6413 = vpop.f32.mrf.mxu0
  %v6414 = vadd.f32 0.0, %v6413
  %6415 = vdwg.mxu0
  %6416 = vmatpush.msra.mxu0 0.0
  %6417 = vmatpush.msra.mxu0 0.0
  %6418 = vmatpush.msra.mxu0 0.0
  %6419 = vmatpush.msra.mxu0 0.0
  %6420 = vmatpush.msra.mxu0 0.0
  %6421 = vmatpush.msra.mxu0 0.0
  %6422 = vmatpush.msra.mxu0 0.0
  %6423 = vmatpush.msra.mxu0 0.0
  %6424 = vmatpush.msra.mxu0 0.0
  %6425 = vmatpush.msra.mxu0 0.0
  %6426 = vmatpush.msra.mxu0 0.0
  %6427 = vmatpush.msra.mxu0 0.0
  %6428 = vmatpush.msra.mxu0 0.0
  %v6429 = vand.u32 %v6314, 4294901760
  %v6430 = vsub.f32 %v6314, %v6429
  %v6431 = vand.u32 %v6430, 4294901760
  %v6432 = vsub.f32 %v6430, %v6431
  %v6433 = vand.u32 %v6432, 4294901760
  %6434 = vmatpush.msra.mxu0 %v6433
  %v6435 = vand.u32 %v6311, 4294901760
  %v6436 = vsub.f32 %v6311, %v6435
  %v6437 = vand.u32 %v6436, 4294901760
  %v6438 = vsub.f32 %v6436, %v6437
  %v6439 = vand.u32 %v6438, 4294901760
  %6440 = vmatpush.msra.mxu0 %v6439
  %v6441 = vand.u32 %v6310, 4294901760
  %v6442 = vsub.f32 %v6310, %v6441
  %v6443 = vand.u32 %v6442, 4294901760
  %v6444 = vsub.f32 %v6442, %v6443
  %v6445 = vand.u32 %v6444, 4294901760
  %6446 = vmatpush.msra.mxu0 %v6445
  %v6447 = vand.u32 %v1140, 4294901760
  %6448 = vmatmul.f32.gmra.mxu0 %v6447
  %v6449 = vpop.f32.mrf.mxu0
  %v6450 = vadd.f32 %v6342, %v6449
  %v6451 = vand.u32 %v1143, 4294901760
  %6452 = vmatmul.f32.gmra.mxu0 %v6451
  %v6453 = vpop.f32.mrf.mxu0
  %v6454 = vadd.f32 %v6350, %v6453
  %v6455 = vand.u32 %v1146, 4294901760
  %6456 = vmatmul.f32.gmra.mxu0 %v6455
  %v6457 = vpop.f32.mrf.mxu0
  %v6458 = vadd.f32 %v6358, %v6457
  %v6459 = vand.u32 %v1149, 4294901760
  %6460 = vmatmul.f32.gmra.mxu0 %v6459
  %v6461 = vpop.f32.mrf.mxu0
  %v6462 = vadd.f32 %v6366, %v6461
  %v6463 = vand.u32 %v1152, 4294901760
  %6464 = vmatmul.f32.gmra.mxu0 %v6463
  %v6465 = vpop.f32.mrf.mxu0
  %v6466 = vadd.f32 %v6374, %v6465
  %v6467 = vand.u32 %v1155, 4294901760
  %6468 = vmatmul.f32.gmra.mxu0 %v6467
  %v6469 = vpop.f32.mrf.mxu0
  %v6470 = vadd.f32 %v6382, %v6469
  %v6471 = vand.u32 %v1158, 4294901760
  %6472 = vmatmul.f32.gmra.mxu0 %v6471
  %v6473 = vpop.f32.mrf.mxu0
  %v6474 = vadd.f32 %v6390, %v6473
  %v6475 = vand.u32 %v1161, 4294901760
  %6476 = vmatmul.f32.gmra.mxu0 %v6475
  %v6477 = vpop.f32.mrf.mxu0
  %v6478 = vadd.f32 %v6398, %v6477
  %v6479 = vand.u32 %v1164, 4294901760
  %6480 = vmatmul.f32.gmra.mxu0 %v6479
  %v6481 = vpop.f32.mrf.mxu0
  %v6482 = vadd.f32 %v6406, %v6481
  %v6483 = vand.u32 %v1167, 4294901760
  %6484 = vmatmul.f32.gmra.mxu0 %v6483
  %v6485 = vpop.f32.mrf.mxu0
  %v6486 = vadd.f32 %v6414, %v6485
  %6487 = vdwg.mxu0
  %6488 = vmatpush.msra.mxu0 0.0
  %6489 = vmatpush.msra.mxu0 0.0
  %6490 = vmatpush.msra.mxu0 0.0
  %6491 = vmatpush.msra.mxu0 0.0
  %6492 = vmatpush.msra.mxu0 0.0
  %6493 = vmatpush.msra.mxu0 0.0
  %6494 = vmatpush.msra.mxu0 0.0
  %6495 = vmatpush.msra.mxu0 0.0
  %6496 = vmatpush.msra.mxu0 0.0
  %6497 = vmatpush.msra.mxu0 0.0
  %6498 = vmatpush.msra.mxu0 0.0
  %6499 = vmatpush.msra.mxu0 0.0
  %6500 = vmatpush.msra.mxu0 0.0
  %v6501 = vand.u32 %v6314, 4294901760
  %v6502 = vsub.f32 %v6314, %v6501
  %6503 = vmatpush.msra.mxu0 %v6502
  %v6504 = vand.u32 %v6311, 4294901760
  %v6505 = vsub.f32 %v6311, %v6504
  %6506 = vmatpush.msra.mxu0 %v6505
  %v6507 = vand.u32 %v6310, 4294901760
  %v6508 = vsub.f32 %v6310, %v6507
  %6509 = vmatpush.msra.mxu0 %v6508
  %v6510 = vand.u32 %v1140, 4294901760
  %v6511 = vsub.f32 %v1140, %v6510
  %6512 = vmatmul.f32.gmra.mxu0 %v6511
  %v6513 = vpop.f32.mrf.mxu0
  %v6514 = vadd.f32 %v6450, %v6513
  %v6515 = vand.u32 %v1143, 4294901760
  %v6516 = vsub.f32 %v1143, %v6515
  %6517 = vmatmul.f32.gmra.mxu0 %v6516
  %v6518 = vpop.f32.mrf.mxu0
  %v6519 = vadd.f32 %v6454, %v6518
  %v6520 = vand.u32 %v1146, 4294901760
  %v6521 = vsub.f32 %v1146, %v6520
  %6522 = vmatmul.f32.gmra.mxu0 %v6521
  %v6523 = vpop.f32.mrf.mxu0
  %v6524 = vadd.f32 %v6458, %v6523
  %v6525 = vand.u32 %v1149, 4294901760
  %v6526 = vsub.f32 %v1149, %v6525
  %6527 = vmatmul.f32.gmra.mxu0 %v6526
  %v6528 = vpop.f32.mrf.mxu0
  %v6529 = vadd.f32 %v6462, %v6528
  %v6530 = vand.u32 %v1152, 4294901760
  %v6531 = vsub.f32 %v1152, %v6530
  %6532 = vmatmul.f32.gmra.mxu0 %v6531
  %v6533 = vpop.f32.mrf.mxu0
  %v6534 = vadd.f32 %v6466, %v6533
  %v6535 = vand.u32 %v1155, 4294901760
  %v6536 = vsub.f32 %v1155, %v6535
  %6537 = vmatmul.f32.gmra.mxu0 %v6536
  %v6538 = vpop.f32.mrf.mxu0
  %v6539 = vadd.f32 %v6470, %v6538
  %v6540 = vand.u32 %v1158, 4294901760
  %v6541 = vsub.f32 %v1158, %v6540
  %6542 = vmatmul.f32.gmra.mxu0 %v6541
  %v6543 = vpop.f32.mrf.mxu0
  %v6544 = vadd.f32 %v6474, %v6543
  %v6545 = vand.u32 %v1161, 4294901760
  %v6546 = vsub.f32 %v1161, %v6545
  %6547 = vmatmul.f32.gmra.mxu0 %v6546
  %v6548 = vpop.f32.mrf.mxu0
  %v6549 = vadd.f32 %v6478, %v6548
  %v6550 = vand.u32 %v1164, 4294901760
  %v6551 = vsub.f32 %v1164, %v6550
  %6552 = vmatmul.f32.gmra.mxu0 %v6551
  %v6553 = vpop.f32.mrf.mxu0
  %v6554 = vadd.f32 %v6482, %v6553
  %v6555 = vand.u32 %v1167, 4294901760
  %v6556 = vsub.f32 %v1167, %v6555
  %6557 = vmatmul.f32.gmra.mxu0 %v6556
  %v6558 = vpop.f32.mrf.mxu0
  %v6559 = vadd.f32 %v6486, %v6558
  %6560 = vdwg.mxu0
  %6561 = vmatpush.msra.mxu0 0.0
  %6562 = vmatpush.msra.mxu0 0.0
  %6563 = vmatpush.msra.mxu0 0.0
  %6564 = vmatpush.msra.mxu0 0.0
  %6565 = vmatpush.msra.mxu0 0.0
  %6566 = vmatpush.msra.mxu0 0.0
  %6567 = vmatpush.msra.mxu0 0.0
  %6568 = vmatpush.msra.mxu0 0.0
  %6569 = vmatpush.msra.mxu0 0.0
  %6570 = vmatpush.msra.mxu0 0.0
  %6571 = vmatpush.msra.mxu0 0.0
  %6572 = vmatpush.msra.mxu0 0.0
  %6573 = vmatpush.msra.mxu0 0.0
  %v6574 = vand.u32 %v6314, 4294901760
  %6575 = vmatpush.msra.mxu0 %v6574
  %v6576 = vand.u32 %v6311, 4294901760
  %6577 = vmatpush.msra.mxu0 %v6576
  %v6578 = vand.u32 %v6310, 4294901760
  %6579 = vmatpush.msra.mxu0 %v6578
  %v6580 = vand.u32 %v1140, 4294901760
  %v6581 = vsub.f32 %v1140, %v6580
  %v6582 = vand.u32 %v6581, 4294901760
  %6583 = vmatmul.f32.gmra.mxu0 %v6582
  %v6584 = vpop.f32.mrf.mxu0
  %v6585 = vadd.f32 %v6514, %v6584
  %v6586 = vand.u32 %v1143, 4294901760
  %v6587 = vsub.f32 %v1143, %v6586
  %v6588 = vand.u32 %v6587, 4294901760
  %6589 = vmatmul.f32.gmra.mxu0 %v6588
  %v6590 = vpop.f32.mrf.mxu0
  %v6591 = vadd.f32 %v6519, %v6590
  %v6592 = vand.u32 %v1146, 4294901760
  %v6593 = vsub.f32 %v1146, %v6592
  %v6594 = vand.u32 %v6593, 4294901760
  %6595 = vmatmul.f32.gmra.mxu0 %v6594
  %v6596 = vpop.f32.mrf.mxu0
  %v6597 = vadd.f32 %v6524, %v6596
  %v6598 = vand.u32 %v1149, 4294901760
  %v6599 = vsub.f32 %v1149, %v6598
  %v6600 = vand.u32 %v6599, 4294901760
  %6601 = vmatmul.f32.gmra.mxu0 %v6600
  %v6602 = vpop.f32.mrf.mxu0
  %v6603 = vadd.f32 %v6529, %v6602
  %v6604 = vand.u32 %v1152, 4294901760
  %v6605 = vsub.f32 %v1152, %v6604
  %v6606 = vand.u32 %v6605, 4294901760
  %6607 = vmatmul.f32.gmra.mxu0 %v6606
  %v6608 = vpop.f32.mrf.mxu0
  %v6609 = vadd.f32 %v6534, %v6608
  %v6610 = vand.u32 %v1155, 4294901760
  %v6611 = vsub.f32 %v1155, %v6610
  %v6612 = vand.u32 %v6611, 4294901760
  %6613 = vmatmul.f32.gmra.mxu0 %v6612
  %v6614 = vpop.f32.mrf.mxu0
  %v6615 = vadd.f32 %v6539, %v6614
  %v6616 = vand.u32 %v1158, 4294901760
  %v6617 = vsub.f32 %v1158, %v6616
  %v6618 = vand.u32 %v6617, 4294901760
  %6619 = vmatmul.f32.gmra.mxu0 %v6618
  %v6620 = vpop.f32.mrf.mxu0
  %v6621 = vadd.f32 %v6544, %v6620
  %v6622 = vand.u32 %v1161, 4294901760
  %v6623 = vsub.f32 %v1161, %v6622
  %v6624 = vand.u32 %v6623, 4294901760
  %6625 = vmatmul.f32.gmra.mxu0 %v6624
  %v6626 = vpop.f32.mrf.mxu0
  %v6627 = vadd.f32 %v6549, %v6626
  %v6628 = vand.u32 %v1164, 4294901760
  %v6629 = vsub.f32 %v1164, %v6628
  %v6630 = vand.u32 %v6629, 4294901760
  %6631 = vmatmul.f32.gmra.mxu0 %v6630
  %v6632 = vpop.f32.mrf.mxu0
  %v6633 = vadd.f32 %v6554, %v6632
  %v6634 = vand.u32 %v1167, 4294901760
  %v6635 = vsub.f32 %v1167, %v6634
  %v6636 = vand.u32 %v6635, 4294901760
  %6637 = vmatmul.f32.gmra.mxu0 %v6636
  %v6638 = vpop.f32.mrf.mxu0
  %v6639 = vadd.f32 %v6559, %v6638
  %6640 = vdwg.mxu0
  %6641 = vmatpush.msra.mxu0 0.0
  %6642 = vmatpush.msra.mxu0 0.0
  %6643 = vmatpush.msra.mxu0 0.0
  %6644 = vmatpush.msra.mxu0 0.0
  %6645 = vmatpush.msra.mxu0 0.0
  %6646 = vmatpush.msra.mxu0 0.0
  %6647 = vmatpush.msra.mxu0 0.0
  %6648 = vmatpush.msra.mxu0 0.0
  %6649 = vmatpush.msra.mxu0 0.0
  %6650 = vmatpush.msra.mxu0 0.0
  %6651 = vmatpush.msra.mxu0 0.0
  %6652 = vmatpush.msra.mxu0 0.0
  %6653 = vmatpush.msra.mxu0 0.0
  %v6654 = vand.u32 %v6314, 4294901760
  %v6655 = vsub.f32 %v6314, %v6654
  %v6656 = vand.u32 %v6655, 4294901760
  %6657 = vmatpush.msra.mxu0 %v6656
  %v6658 = vand.u32 %v6311, 4294901760
  %v6659 = vsub.f32 %v6311, %v6658
  %v6660 = vand.u32 %v6659, 4294901760
  %6661 = vmatpush.msra.mxu0 %v6660
  %v6662 = vand.u32 %v6310, 4294901760
  %v6663 = vsub.f32 %v6310, %v6662
  %v6664 = vand.u32 %v6663, 4294901760
  %6665 = vmatpush.msra.mxu0 %v6664
  %v6666 = vand.u32 %v1140, 4294901760
  %6667 = vmatmul.f32.gmra.mxu0 %v6666
  %v6668 = vpop.f32.mrf.mxu0
  %v6669 = vadd.f32 %v6585, %v6668
  %v6670 = vand.u32 %v1143, 4294901760
  %6671 = vmatmul.f32.gmra.mxu0 %v6670
  %v6672 = vpop.f32.mrf.mxu0
  %v6673 = vadd.f32 %v6591, %v6672
  %v6674 = vand.u32 %v1146, 4294901760
  %6675 = vmatmul.f32.gmra.mxu0 %v6674
  %v6676 = vpop.f32.mrf.mxu0
  %v6677 = vadd.f32 %v6597, %v6676
  %v6678 = vand.u32 %v1149, 4294901760
  %6679 = vmatmul.f32.gmra.mxu0 %v6678
  %v6680 = vpop.f32.mrf.mxu0
  %v6681 = vadd.f32 %v6603, %v6680
  %v6682 = vand.u32 %v1152, 4294901760
  %6683 = vmatmul.f32.gmra.mxu0 %v6682
  %v6684 = vpop.f32.mrf.mxu0
  %v6685 = vadd.f32 %v6609, %v6684
  %v6686 = vand.u32 %v1155, 4294901760
  %6687 = vmatmul.f32.gmra.mxu0 %v6686
  %v6688 = vpop.f32.mrf.mxu0
  %v6689 = vadd.f32 %v6615, %v6688
  %v6690 = vand.u32 %v1158, 4294901760
  %6691 = vmatmul.f32.gmra.mxu0 %v6690
  %v6692 = vpop.f32.mrf.mxu0
  %v6693 = vadd.f32 %v6621, %v6692
  %v6694 = vand.u32 %v1161, 4294901760
  %6695 = vmatmul.f32.gmra.mxu0 %v6694
  %v6696 = vpop.f32.mrf.mxu0
  %v6697 = vadd.f32 %v6627, %v6696
  %v6698 = vand.u32 %v1164, 4294901760
  %6699 = vmatmul.f32.gmra.mxu0 %v6698
  %v6700 = vpop.f32.mrf.mxu0
  %v6701 = vadd.f32 %v6633, %v6700
  %v6702 = vand.u32 %v1167, 4294901760
  %6703 = vmatmul.f32.gmra.mxu0 %v6702
  %v6704 = vpop.f32.mrf.mxu0
  %v6705 = vadd.f32 %v6639, %v6704
  %6706 = vdwg.mxu0
  %6707 = vmatpush.msra.mxu0 0.0
  %6708 = vmatpush.msra.mxu0 0.0
  %6709 = vmatpush.msra.mxu0 0.0
  %6710 = vmatpush.msra.mxu0 0.0
  %6711 = vmatpush.msra.mxu0 0.0
  %6712 = vmatpush.msra.mxu0 0.0
  %6713 = vmatpush.msra.mxu0 0.0
  %6714 = vmatpush.msra.mxu0 0.0
  %6715 = vmatpush.msra.mxu0 0.0
  %6716 = vmatpush.msra.mxu0 0.0
  %6717 = vmatpush.msra.mxu0 0.0
  %6718 = vmatpush.msra.mxu0 0.0
  %6719 = vmatpush.msra.mxu0 0.0
  %v6720 = vand.u32 %v6314, 4294901760
  %6721 = vmatpush.msra.mxu0 %v6720
  %v6722 = vand.u32 %v6311, 4294901760
  %6723 = vmatpush.msra.mxu0 %v6722
  %v6724 = vand.u32 %v6310, 4294901760
  %6725 = vmatpush.msra.mxu0 %v6724
  %v6726 = vand.u32 %v1140, 4294901760
  %6727 = vmatmul.f32.gmra.mxu0 %v6726
  %v6728 = vpop.f32.mrf.mxu0
  %v6729 = vadd.f32 %v6669, %v6728
  %v6730 = vand.u32 %v1143, 4294901760
  %6731 = vmatmul.f32.gmra.mxu0 %v6730
  %v6732 = vpop.f32.mrf.mxu0
  %v6733 = vadd.f32 %v6673, %v6732
  %v6734 = vand.u32 %v1146, 4294901760
  %6735 = vmatmul.f32.gmra.mxu0 %v6734
  %v6736 = vpop.f32.mrf.mxu0
  %v6737 = vadd.f32 %v6677, %v6736
  %v6738 = vand.u32 %v1149, 4294901760
  %6739 = vmatmul.f32.gmra.mxu0 %v6738
  %v6740 = vpop.f32.mrf.mxu0
  %v6741 = vadd.f32 %v6681, %v6740
  %v6742 = vand.u32 %v1152, 4294901760
  %6743 = vmatmul.f32.gmra.mxu0 %v6742
  %v6744 = vpop.f32.mrf.mxu0
  %v6745 = vadd.f32 %v6685, %v6744
  %v6746 = vand.u32 %v1155, 4294901760
  %6747 = vmatmul.f32.gmra.mxu0 %v6746
  %v6748 = vpop.f32.mrf.mxu0
  %v6749 = vadd.f32 %v6689, %v6748
  %v6750 = vand.u32 %v1158, 4294901760
  %6751 = vmatmul.f32.gmra.mxu0 %v6750
  %v6752 = vpop.f32.mrf.mxu0
  %v6753 = vadd.f32 %v6693, %v6752
  %v6754 = vand.u32 %v1161, 4294901760
  %6755 = vmatmul.f32.gmra.mxu0 %v6754
  %v6756 = vpop.f32.mrf.mxu0
  %v6757 = vadd.f32 %v6697, %v6756
  %v6758 = vand.u32 %v1164, 4294901760
  %6759 = vmatmul.f32.gmra.mxu0 %v6758
  %v6760 = vpop.f32.mrf.mxu0
  %v6761 = vadd.f32 %v6701, %v6760
  %v6762 = vand.u32 %v1167, 4294901760
  %6763 = vmatmul.f32.gmra.mxu0 %v6762
  %v6764 = vpop.f32.mrf.mxu0
  %v6765 = vadd.f32 %v6705, %v6764
  %6766 = vdwg.mxu0
  %v6768 = vsel %vm2206, %v5136, 0
  %v6771 = vsel %vm2206, %v5137, 0
  %v6774 = vsel %vm2206, %v5138, 0
  %v6777 = vsel %vm2206, %v5139, 0
  %v6780 = vsel %vm2206, %v5140, 0
  %v6783 = vsel %vm2206, %v5141, 0
  %v6786 = vsel %vm2206, %v5142, 0
  %v6789 = vsel %vm2206, %v5143, 0
  %v6792 = vsel %vm2206, %v5144, 0
  %v6795 = vsel %vm2206, %v5145, 0
  %6797 = vmatpush.msra.mxu0 0.0
  %6798 = vmatpush.msra.mxu0 0.0
  %6799 = vmatpush.msra.mxu0 0.0
  %6800 = vmatpush.msra.mxu0 0.0
  %6801 = vmatpush.msra.mxu0 0.0
  %6802 = vmatpush.msra.mxu0 0.0
  %6803 = vmatpush.msra.mxu0 0.0
  %6804 = vmatpush.msra.mxu0 0.0
  %6805 = vmatpush.msra.mxu0 0.0
  %6806 = vmatpush.msra.mxu0 0.0
  %6807 = vmatpush.msra.mxu0 0.0
  %6808 = vmatpush.msra.mxu0 0.0
  %6809 = vmatpush.msra.mxu0 0.0
  %6810 = vmatpush.msra.mxu0 0.0
  %v6811 = vand.u32 %v20, 4294901760
  %6812 = vmatpush.msra.mxu0 %v6811
  %v6813 = vand.u32 %v19, 4294901760
  %6814 = vmatpush.msra.mxu0 %v6813
  %v6815 = vand.u32 %v6768, 4294901760
  %v6816 = vsub.f32 %v6768, %v6815
  %v6817 = vand.u32 %v6816, 4294901760
  %v6818 = vsub.f32 %v6816, %v6817
  %v6819 = vand.u32 %v6818, 4294901760
  %6820 = vmatmul.f32.gmra.mxu0 %v6819
  %v6821 = vpop.f32.mrf.mxu0
  %v6822 = vadd.f32 %v6729, %v6821
  %v6823 = vand.u32 %v6771, 4294901760
  %v6824 = vsub.f32 %v6771, %v6823
  %v6825 = vand.u32 %v6824, 4294901760
  %v6826 = vsub.f32 %v6824, %v6825
  %v6827 = vand.u32 %v6826, 4294901760
  %6828 = vmatmul.f32.gmra.mxu0 %v6827
  %v6829 = vpop.f32.mrf.mxu0
  %v6830 = vadd.f32 %v6733, %v6829
  %v6831 = vand.u32 %v6774, 4294901760
  %v6832 = vsub.f32 %v6774, %v6831
  %v6833 = vand.u32 %v6832, 4294901760
  %v6834 = vsub.f32 %v6832, %v6833
  %v6835 = vand.u32 %v6834, 4294901760
  %6836 = vmatmul.f32.gmra.mxu0 %v6835
  %v6837 = vpop.f32.mrf.mxu0
  %v6838 = vadd.f32 %v6737, %v6837
  %v6839 = vand.u32 %v6777, 4294901760
  %v6840 = vsub.f32 %v6777, %v6839
  %v6841 = vand.u32 %v6840, 4294901760
  %v6842 = vsub.f32 %v6840, %v6841
  %v6843 = vand.u32 %v6842, 4294901760
  %6844 = vmatmul.f32.gmra.mxu0 %v6843
  %v6845 = vpop.f32.mrf.mxu0
  %v6846 = vadd.f32 %v6741, %v6845
  %v6847 = vand.u32 %v6780, 4294901760
  %v6848 = vsub.f32 %v6780, %v6847
  %v6849 = vand.u32 %v6848, 4294901760
  %v6850 = vsub.f32 %v6848, %v6849
  %v6851 = vand.u32 %v6850, 4294901760
  %6852 = vmatmul.f32.gmra.mxu0 %v6851
  %v6853 = vpop.f32.mrf.mxu0
  %v6854 = vadd.f32 %v6745, %v6853
  %v6855 = vand.u32 %v6783, 4294901760
  %v6856 = vsub.f32 %v6783, %v6855
  %v6857 = vand.u32 %v6856, 4294901760
  %v6858 = vsub.f32 %v6856, %v6857
  %v6859 = vand.u32 %v6858, 4294901760
  %6860 = vmatmul.f32.gmra.mxu0 %v6859
  %v6861 = vpop.f32.mrf.mxu0
  %v6862 = vadd.f32 %v6749, %v6861
  %v6863 = vand.u32 %v6786, 4294901760
  %v6864 = vsub.f32 %v6786, %v6863
  %v6865 = vand.u32 %v6864, 4294901760
  %v6866 = vsub.f32 %v6864, %v6865
  %v6867 = vand.u32 %v6866, 4294901760
  %6868 = vmatmul.f32.gmra.mxu0 %v6867
  %v6869 = vpop.f32.mrf.mxu0
  %v6870 = vadd.f32 %v6753, %v6869
  %v6871 = vand.u32 %v6789, 4294901760
  %v6872 = vsub.f32 %v6789, %v6871
  %v6873 = vand.u32 %v6872, 4294901760
  %v6874 = vsub.f32 %v6872, %v6873
  %v6875 = vand.u32 %v6874, 4294901760
  %6876 = vmatmul.f32.gmra.mxu0 %v6875
  %v6877 = vpop.f32.mrf.mxu0
  %v6878 = vadd.f32 %v6757, %v6877
  %v6879 = vand.u32 %v6792, 4294901760
  %v6880 = vsub.f32 %v6792, %v6879
  %v6881 = vand.u32 %v6880, 4294901760
  %v6882 = vsub.f32 %v6880, %v6881
  %v6883 = vand.u32 %v6882, 4294901760
  %6884 = vmatmul.f32.gmra.mxu0 %v6883
  %v6885 = vpop.f32.mrf.mxu0
  %v6886 = vadd.f32 %v6761, %v6885
  %v6887 = vand.u32 %v6795, 4294901760
  %v6888 = vsub.f32 %v6795, %v6887
  %v6889 = vand.u32 %v6888, 4294901760
  %v6890 = vsub.f32 %v6888, %v6889
  %v6891 = vand.u32 %v6890, 4294901760
  %6892 = vmatmul.f32.gmra.mxu0 %v6891
  %v6893 = vpop.f32.mrf.mxu0
  %v6894 = vadd.f32 %v6765, %v6893
  %6895 = vdwg.mxu0
  %6896 = vmatpush.msra.mxu0 0.0
  %6897 = vmatpush.msra.mxu0 0.0
  %6898 = vmatpush.msra.mxu0 0.0
  %6899 = vmatpush.msra.mxu0 0.0
  %6900 = vmatpush.msra.mxu0 0.0
  %6901 = vmatpush.msra.mxu0 0.0
  %6902 = vmatpush.msra.mxu0 0.0
  %6903 = vmatpush.msra.mxu0 0.0
  %6904 = vmatpush.msra.mxu0 0.0
  %6905 = vmatpush.msra.mxu0 0.0
  %6906 = vmatpush.msra.mxu0 0.0
  %6907 = vmatpush.msra.mxu0 0.0
  %6908 = vmatpush.msra.mxu0 0.0
  %6909 = vmatpush.msra.mxu0 0.0
  %v6910 = vand.u32 %v20, 4294901760
  %v6911 = vsub.f32 %v20, %v6910
  %v6912 = vand.u32 %v6911, 4294901760
  %v6913 = vsub.f32 %v6911, %v6912
  %v6914 = vand.u32 %v6913, 4294901760
  %6915 = vmatpush.msra.mxu0 %v6914
  %v6916 = vand.u32 %v19, 4294901760
  %v6917 = vsub.f32 %v19, %v6916
  %v6918 = vand.u32 %v6917, 4294901760
  %v6919 = vsub.f32 %v6917, %v6918
  %v6920 = vand.u32 %v6919, 4294901760
  %6921 = vmatpush.msra.mxu0 %v6920
  %v6922 = vand.u32 %v6768, 4294901760
  %6923 = vmatmul.f32.gmra.mxu0 %v6922
  %v6924 = vpop.f32.mrf.mxu0
  %v6925 = vadd.f32 %v6822, %v6924
  %v6926 = vand.u32 %v6771, 4294901760
  %6927 = vmatmul.f32.gmra.mxu0 %v6926
  %v6928 = vpop.f32.mrf.mxu0
  %v6929 = vadd.f32 %v6830, %v6928
  %v6930 = vand.u32 %v6774, 4294901760
  %6931 = vmatmul.f32.gmra.mxu0 %v6930
  %v6932 = vpop.f32.mrf.mxu0
  %v6933 = vadd.f32 %v6838, %v6932
  %v6934 = vand.u32 %v6777, 4294901760
  %6935 = vmatmul.f32.gmra.mxu0 %v6934
  %v6936 = vpop.f32.mrf.mxu0
  %v6937 = vadd.f32 %v6846, %v6936
  %v6938 = vand.u32 %v6780, 4294901760
  %6939 = vmatmul.f32.gmra.mxu0 %v6938
  %v6940 = vpop.f32.mrf.mxu0
  %v6941 = vadd.f32 %v6854, %v6940
  %v6942 = vand.u32 %v6783, 4294901760
  %6943 = vmatmul.f32.gmra.mxu0 %v6942
  %v6944 = vpop.f32.mrf.mxu0
  %v6945 = vadd.f32 %v6862, %v6944
  %v6946 = vand.u32 %v6786, 4294901760
  %6947 = vmatmul.f32.gmra.mxu0 %v6946
  %v6948 = vpop.f32.mrf.mxu0
  %v6949 = vadd.f32 %v6870, %v6948
  %v6950 = vand.u32 %v6789, 4294901760
  %6951 = vmatmul.f32.gmra.mxu0 %v6950
  %v6952 = vpop.f32.mrf.mxu0
  %v6953 = vadd.f32 %v6878, %v6952
  %v6954 = vand.u32 %v6792, 4294901760
  %6955 = vmatmul.f32.gmra.mxu0 %v6954
  %v6956 = vpop.f32.mrf.mxu0
  %v6957 = vadd.f32 %v6886, %v6956
  %v6958 = vand.u32 %v6795, 4294901760
  %6959 = vmatmul.f32.gmra.mxu0 %v6958
  %v6960 = vpop.f32.mrf.mxu0
  %v6961 = vadd.f32 %v6894, %v6960
  %6962 = vdwg.mxu0
  %6963 = vmatpush.msra.mxu0 0.0
  %6964 = vmatpush.msra.mxu0 0.0
  %6965 = vmatpush.msra.mxu0 0.0
  %6966 = vmatpush.msra.mxu0 0.0
  %6967 = vmatpush.msra.mxu0 0.0
  %6968 = vmatpush.msra.mxu0 0.0
  %6969 = vmatpush.msra.mxu0 0.0
  %6970 = vmatpush.msra.mxu0 0.0
  %6971 = vmatpush.msra.mxu0 0.0
  %6972 = vmatpush.msra.mxu0 0.0
  %6973 = vmatpush.msra.mxu0 0.0
  %6974 = vmatpush.msra.mxu0 0.0
  %6975 = vmatpush.msra.mxu0 0.0
  %6976 = vmatpush.msra.mxu0 0.0
  %v6977 = vand.u32 %v20, 4294901760
  %v6978 = vsub.f32 %v20, %v6977
  %6979 = vmatpush.msra.mxu0 %v6978
  %v6980 = vand.u32 %v19, 4294901760
  %v6981 = vsub.f32 %v19, %v6980
  %6982 = vmatpush.msra.mxu0 %v6981
  %v6983 = vand.u32 %v6768, 4294901760
  %v6984 = vsub.f32 %v6768, %v6983
  %6985 = vmatmul.f32.gmra.mxu0 %v6984
  %v6986 = vpop.f32.mrf.mxu0
  %v6987 = vadd.f32 %v6925, %v6986
  %v6988 = vand.u32 %v6771, 4294901760
  %v6989 = vsub.f32 %v6771, %v6988
  %6990 = vmatmul.f32.gmra.mxu0 %v6989
  %v6991 = vpop.f32.mrf.mxu0
  %v6992 = vadd.f32 %v6929, %v6991
  %v6993 = vand.u32 %v6774, 4294901760
  %v6994 = vsub.f32 %v6774, %v6993
  %6995 = vmatmul.f32.gmra.mxu0 %v6994
  %v6996 = vpop.f32.mrf.mxu0
  %v6997 = vadd.f32 %v6933, %v6996
  %v6998 = vand.u32 %v6777, 4294901760
  %v6999 = vsub.f32 %v6777, %v6998
  %7000 = vmatmul.f32.gmra.mxu0 %v6999
  %v7001 = vpop.f32.mrf.mxu0
  %v7002 = vadd.f32 %v6937, %v7001
  %v7003 = vand.u32 %v6780, 4294901760
  %v7004 = vsub.f32 %v6780, %v7003
  %7005 = vmatmul.f32.gmra.mxu0 %v7004
  %v7006 = vpop.f32.mrf.mxu0
  %v7007 = vadd.f32 %v6941, %v7006
  %v7008 = vand.u32 %v6783, 4294901760
  %v7009 = vsub.f32 %v6783, %v7008
  %7010 = vmatmul.f32.gmra.mxu0 %v7009
  %v7011 = vpop.f32.mrf.mxu0
  %v7012 = vadd.f32 %v6945, %v7011
  %v7013 = vand.u32 %v6786, 4294901760
  %v7014 = vsub.f32 %v6786, %v7013
  %7015 = vmatmul.f32.gmra.mxu0 %v7014
  %v7016 = vpop.f32.mrf.mxu0
  %v7017 = vadd.f32 %v6949, %v7016
  %v7018 = vand.u32 %v6789, 4294901760
  %v7019 = vsub.f32 %v6789, %v7018
  %7020 = vmatmul.f32.gmra.mxu0 %v7019
  %v7021 = vpop.f32.mrf.mxu0
  %v7022 = vadd.f32 %v6953, %v7021
  %v7023 = vand.u32 %v6792, 4294901760
  %v7024 = vsub.f32 %v6792, %v7023
  %7025 = vmatmul.f32.gmra.mxu0 %v7024
  %v7026 = vpop.f32.mrf.mxu0
  %v7027 = vadd.f32 %v6957, %v7026
  %v7028 = vand.u32 %v6795, 4294901760
  %v7029 = vsub.f32 %v6795, %v7028
  %7030 = vmatmul.f32.gmra.mxu0 %v7029
  %v7031 = vpop.f32.mrf.mxu0
  %v7032 = vadd.f32 %v6961, %v7031
  %7033 = vdwg.mxu0
  %7034 = vmatpush.msra.mxu0 0.0
  %7035 = vmatpush.msra.mxu0 0.0
  %7036 = vmatpush.msra.mxu0 0.0
  %7037 = vmatpush.msra.mxu0 0.0
  %7038 = vmatpush.msra.mxu0 0.0
  %7039 = vmatpush.msra.mxu0 0.0
  %7040 = vmatpush.msra.mxu0 0.0
  %7041 = vmatpush.msra.mxu0 0.0
  %7042 = vmatpush.msra.mxu0 0.0
  %7043 = vmatpush.msra.mxu0 0.0
  %7044 = vmatpush.msra.mxu0 0.0
  %7045 = vmatpush.msra.mxu0 0.0
  %7046 = vmatpush.msra.mxu0 0.0
  %7047 = vmatpush.msra.mxu0 0.0
  %v7048 = vand.u32 %v20, 4294901760
  %7049 = vmatpush.msra.mxu0 %v7048
  %v7050 = vand.u32 %v19, 4294901760
  %7051 = vmatpush.msra.mxu0 %v7050
  %v7052 = vand.u32 %v6768, 4294901760
  %v7053 = vsub.f32 %v6768, %v7052
  %v7054 = vand.u32 %v7053, 4294901760
  %7055 = vmatmul.f32.gmra.mxu0 %v7054
  %v7056 = vpop.f32.mrf.mxu0
  %v7057 = vadd.f32 %v6987, %v7056
  %v7058 = vand.u32 %v6771, 4294901760
  %v7059 = vsub.f32 %v6771, %v7058
  %v7060 = vand.u32 %v7059, 4294901760
  %7061 = vmatmul.f32.gmra.mxu0 %v7060
  %v7062 = vpop.f32.mrf.mxu0
  %v7063 = vadd.f32 %v6992, %v7062
  %v7064 = vand.u32 %v6774, 4294901760
  %v7065 = vsub.f32 %v6774, %v7064
  %v7066 = vand.u32 %v7065, 4294901760
  %7067 = vmatmul.f32.gmra.mxu0 %v7066
  %v7068 = vpop.f32.mrf.mxu0
  %v7069 = vadd.f32 %v6997, %v7068
  %v7070 = vand.u32 %v6777, 4294901760
  %v7071 = vsub.f32 %v6777, %v7070
  %v7072 = vand.u32 %v7071, 4294901760
  %7073 = vmatmul.f32.gmra.mxu0 %v7072
  %v7074 = vpop.f32.mrf.mxu0
  %v7075 = vadd.f32 %v7002, %v7074
  %v7076 = vand.u32 %v6780, 4294901760
  %v7077 = vsub.f32 %v6780, %v7076
  %v7078 = vand.u32 %v7077, 4294901760
  %7079 = vmatmul.f32.gmra.mxu0 %v7078
  %v7080 = vpop.f32.mrf.mxu0
  %v7081 = vadd.f32 %v7007, %v7080
  %v7082 = vand.u32 %v6783, 4294901760
  %v7083 = vsub.f32 %v6783, %v7082
  %v7084 = vand.u32 %v7083, 4294901760
  %7085 = vmatmul.f32.gmra.mxu0 %v7084
  %v7086 = vpop.f32.mrf.mxu0
  %v7087 = vadd.f32 %v7012, %v7086
  %v7088 = vand.u32 %v6786, 4294901760
  %v7089 = vsub.f32 %v6786, %v7088
  %v7090 = vand.u32 %v7089, 4294901760
  %7091 = vmatmul.f32.gmra.mxu0 %v7090
  %v7092 = vpop.f32.mrf.mxu0
  %v7093 = vadd.f32 %v7017, %v7092
  %v7094 = vand.u32 %v6789, 4294901760
  %v7095 = vsub.f32 %v6789, %v7094
  %v7096 = vand.u32 %v7095, 4294901760
  %7097 = vmatmul.f32.gmra.mxu0 %v7096
  %v7098 = vpop.f32.mrf.mxu0
  %v7099 = vadd.f32 %v7022, %v7098
  %v7100 = vand.u32 %v6792, 4294901760
  %v7101 = vsub.f32 %v6792, %v7100
  %v7102 = vand.u32 %v7101, 4294901760
  %7103 = vmatmul.f32.gmra.mxu0 %v7102
  %v7104 = vpop.f32.mrf.mxu0
  %v7105 = vadd.f32 %v7027, %v7104
  %v7106 = vand.u32 %v6795, 4294901760
  %v7107 = vsub.f32 %v6795, %v7106
  %v7108 = vand.u32 %v7107, 4294901760
  %7109 = vmatmul.f32.gmra.mxu0 %v7108
  %v7110 = vpop.f32.mrf.mxu0
  %v7111 = vadd.f32 %v7032, %v7110
  %7112 = vdwg.mxu0
  %7113 = vmatpush.msra.mxu0 0.0
  %7114 = vmatpush.msra.mxu0 0.0
  %7115 = vmatpush.msra.mxu0 0.0
  %7116 = vmatpush.msra.mxu0 0.0
  %7117 = vmatpush.msra.mxu0 0.0
  %7118 = vmatpush.msra.mxu0 0.0
  %7119 = vmatpush.msra.mxu0 0.0
  %7120 = vmatpush.msra.mxu0 0.0
  %7121 = vmatpush.msra.mxu0 0.0
  %7122 = vmatpush.msra.mxu0 0.0
  %7123 = vmatpush.msra.mxu0 0.0
  %7124 = vmatpush.msra.mxu0 0.0
  %7125 = vmatpush.msra.mxu0 0.0
  %7126 = vmatpush.msra.mxu0 0.0
  %v7127 = vand.u32 %v20, 4294901760
  %v7128 = vsub.f32 %v20, %v7127
  %v7129 = vand.u32 %v7128, 4294901760
  %7130 = vmatpush.msra.mxu0 %v7129
  %v7131 = vand.u32 %v19, 4294901760
  %v7132 = vsub.f32 %v19, %v7131
  %v7133 = vand.u32 %v7132, 4294901760
  %7134 = vmatpush.msra.mxu0 %v7133
  %v7135 = vand.u32 %v6768, 4294901760
  %7136 = vmatmul.f32.gmra.mxu0 %v7135
  %v7137 = vpop.f32.mrf.mxu0
  %v7138 = vadd.f32 %v7057, %v7137
  %v7139 = vand.u32 %v6771, 4294901760
  %7140 = vmatmul.f32.gmra.mxu0 %v7139
  %v7141 = vpop.f32.mrf.mxu0
  %v7142 = vadd.f32 %v7063, %v7141
  %v7143 = vand.u32 %v6774, 4294901760
  %7144 = vmatmul.f32.gmra.mxu0 %v7143
  %v7145 = vpop.f32.mrf.mxu0
  %v7146 = vadd.f32 %v7069, %v7145
  %v7147 = vand.u32 %v6777, 4294901760
  %7148 = vmatmul.f32.gmra.mxu0 %v7147
  %v7149 = vpop.f32.mrf.mxu0
  %v7150 = vadd.f32 %v7075, %v7149
  %v7151 = vand.u32 %v6780, 4294901760
  %7152 = vmatmul.f32.gmra.mxu0 %v7151
  %v7153 = vpop.f32.mrf.mxu0
  %v7154 = vadd.f32 %v7081, %v7153
  %v7155 = vand.u32 %v6783, 4294901760
  %7156 = vmatmul.f32.gmra.mxu0 %v7155
  %v7157 = vpop.f32.mrf.mxu0
  %v7158 = vadd.f32 %v7087, %v7157
  %v7159 = vand.u32 %v6786, 4294901760
  %7160 = vmatmul.f32.gmra.mxu0 %v7159
  %v7161 = vpop.f32.mrf.mxu0
  %v7162 = vadd.f32 %v7093, %v7161
  %v7163 = vand.u32 %v6789, 4294901760
  %7164 = vmatmul.f32.gmra.mxu0 %v7163
  %v7165 = vpop.f32.mrf.mxu0
  %v7166 = vadd.f32 %v7099, %v7165
  %v7167 = vand.u32 %v6792, 4294901760
  %7168 = vmatmul.f32.gmra.mxu0 %v7167
  %v7169 = vpop.f32.mrf.mxu0
  %v7170 = vadd.f32 %v7105, %v7169
  %v7171 = vand.u32 %v6795, 4294901760
  %7172 = vmatmul.f32.gmra.mxu0 %v7171
  %v7173 = vpop.f32.mrf.mxu0
  %v7174 = vadd.f32 %v7111, %v7173
  %7175 = vdwg.mxu0
  %7176 = vmatpush.msra.mxu0 0.0
  %7177 = vmatpush.msra.mxu0 0.0
  %7178 = vmatpush.msra.mxu0 0.0
  %7179 = vmatpush.msra.mxu0 0.0
  %7180 = vmatpush.msra.mxu0 0.0
  %7181 = vmatpush.msra.mxu0 0.0
  %7182 = vmatpush.msra.mxu0 0.0
  %7183 = vmatpush.msra.mxu0 0.0
  %7184 = vmatpush.msra.mxu0 0.0
  %7185 = vmatpush.msra.mxu0 0.0
  %7186 = vmatpush.msra.mxu0 0.0
  %7187 = vmatpush.msra.mxu0 0.0
  %7188 = vmatpush.msra.mxu0 0.0
  %7189 = vmatpush.msra.mxu0 0.0
  %v7190 = vand.u32 %v20, 4294901760
  %7191 = vmatpush.msra.mxu0 %v7190
  %v7192 = vand.u32 %v19, 4294901760
  %7193 = vmatpush.msra.mxu0 %v7192
  %v7194 = vand.u32 %v6768, 4294901760
  %7195 = vmatmul.f32.gmra.mxu0 %v7194
  %v7196 = vpop.f32.mrf.mxu0
  %v7197 = vadd.f32 %v7138, %v7196
  %v7198 = vand.u32 %v6771, 4294901760
  %7199 = vmatmul.f32.gmra.mxu0 %v7198
  %v7200 = vpop.f32.mrf.mxu0
  %v7201 = vadd.f32 %v7142, %v7200
  %v7202 = vand.u32 %v6774, 4294901760
  %7203 = vmatmul.f32.gmra.mxu0 %v7202
  %v7204 = vpop.f32.mrf.mxu0
  %v7205 = vadd.f32 %v7146, %v7204
  %v7206 = vand.u32 %v6777, 4294901760
  %7207 = vmatmul.f32.gmra.mxu0 %v7206
  %v7208 = vpop.f32.mrf.mxu0
  %v7209 = vadd.f32 %v7150, %v7208
  %v7210 = vand.u32 %v6780, 4294901760
  %7211 = vmatmul.f32.gmra.mxu0 %v7210
  %v7212 = vpop.f32.mrf.mxu0
  %v7213 = vadd.f32 %v7154, %v7212
  %v7214 = vand.u32 %v6783, 4294901760
  %7215 = vmatmul.f32.gmra.mxu0 %v7214
  %v7216 = vpop.f32.mrf.mxu0
  %v7217 = vadd.f32 %v7158, %v7216
  %v7218 = vand.u32 %v6786, 4294901760
  %7219 = vmatmul.f32.gmra.mxu0 %v7218
  %v7220 = vpop.f32.mrf.mxu0
  %v7221 = vadd.f32 %v7162, %v7220
  %v7222 = vand.u32 %v6789, 4294901760
  %7223 = vmatmul.f32.gmra.mxu0 %v7222
  %v7224 = vpop.f32.mrf.mxu0
  %v7225 = vadd.f32 %v7166, %v7224
  %v7226 = vand.u32 %v6792, 4294901760
  %7227 = vmatmul.f32.gmra.mxu0 %v7226
  %v7228 = vpop.f32.mrf.mxu0
  %v7229 = vadd.f32 %v7170, %v7228
  %v7230 = vand.u32 %v6795, 4294901760
  %7231 = vmatmul.f32.gmra.mxu0 %v7230
  %v7232 = vpop.f32.mrf.mxu0
  %v7233 = vadd.f32 %v7174, %v7232
  %7234 = vdwg.mxu0
  %v7235 = vadd.f32 %v7197, %v3425
  %v7236 = vadd.f32 %v7201, %v3429
  %v7237 = vadd.f32 %v7205, %v3433
  %v7238 = vadd.f32 %v7209, %v3437
  %v7239 = vadd.f32 %v7213, %v3441
  %v7240 = vadd.f32 %v7217, %v3445
  %v7241 = vadd.f32 %v7221, %v3449
  %v7242 = vadd.f32 %v7225, %v3453
  %v7243 = vadd.f32 %v7229, %v3457
  %v7244 = vadd.f32 %v7233, %v3461
  %v7245 = vmax.f32 %v7235, 0.0
  %v7246 = vmax.f32 %v7236, 0.0
  %v7247 = vmax.f32 %v7237, 0.0
  %v7248 = vmax.f32 %v7238, 0.0
  %v7249 = vmax.f32 %v7239, 0.0
  %v7250 = vmax.f32 %v7240, 0.0
  %v7251 = vmax.f32 %v7241, 0.0
  %v7252 = vmax.f32 %v7242, 0.0
  %v7253 = vmax.f32 %v7243, 0.0
  %v7254 = vmax.f32 %v7244, 0.0
  %v7256 = vsel %vm2206, %v7245, 0
  %v7259 = vsel %vm2206, %v7246, 0
  %v7262 = vsel %vm2206, %v7247, 0
  %v7265 = vsel %vm2206, %v7248, 0
  %v7268 = vsel %vm2206, %v7249, 0
  %v7271 = vsel %vm2206, %v7250, 0
  %v7274 = vsel %vm2206, %v7251, 0
  %v7277 = vsel %vm2206, %v7252, 0
  %v7280 = vsel %vm2206, %v7253, 0
  %v7283 = vsel %vm2206, %v7254, 0
  %7285 = vmatpush.msra.mxu0 0.0
  %7286 = vmatpush.msra.mxu0 0.0
  %7287 = vmatpush.msra.mxu0 0.0
  %7288 = vmatpush.msra.mxu0 0.0
  %7289 = vmatpush.msra.mxu0 0.0
  %7290 = vmatpush.msra.mxu0 0.0
  %7291 = vmatpush.msra.mxu0 0.0
  %7292 = vmatpush.msra.mxu0 0.0
  %7293 = vmatpush.msra.mxu0 0.0
  %7294 = vmatpush.msra.mxu0 0.0
  %7295 = vmatpush.msra.mxu0 0.0
  %7296 = vmatpush.msra.mxu0 0.0
  %7297 = vmatpush.msra.mxu0 0.0
  %7298 = vmatpush.msra.mxu0 0.0
  %v7299 = vand.u32 %v30, 4294901760
  %7300 = vmatpush.msra.mxu0 %v7299
  %v7301 = vand.u32 %v29, 4294901760
  %7302 = vmatpush.msra.mxu0 %v7301
  %v7303 = vand.u32 %v7256, 4294901760
  %v7304 = vsub.f32 %v7256, %v7303
  %v7305 = vand.u32 %v7304, 4294901760
  %v7306 = vsub.f32 %v7304, %v7305
  %v7307 = vand.u32 %v7306, 4294901760
  %7308 = vmatmul.f32.gmra.mxu0 %v7307
  %v7309 = vpop.f32.mrf.mxu0
  %v7310 = vadd.f32 %v4667, %v7309
  %v7311 = vand.u32 %v7259, 4294901760
  %v7312 = vsub.f32 %v7259, %v7311
  %v7313 = vand.u32 %v7312, 4294901760
  %v7314 = vsub.f32 %v7312, %v7313
  %v7315 = vand.u32 %v7314, 4294901760
  %7316 = vmatmul.f32.gmra.mxu0 %v7315
  %v7317 = vpop.f32.mrf.mxu0
  %v7318 = vadd.f32 %v4667, %v7317
  %v7319 = vand.u32 %v7262, 4294901760
  %v7320 = vsub.f32 %v7262, %v7319
  %v7321 = vand.u32 %v7320, 4294901760
  %v7322 = vsub.f32 %v7320, %v7321
  %v7323 = vand.u32 %v7322, 4294901760
  %7324 = vmatmul.f32.gmra.mxu0 %v7323
  %v7325 = vpop.f32.mrf.mxu0
  %v7326 = vadd.f32 %v4667, %v7325
  %v7327 = vand.u32 %v7265, 4294901760
  %v7328 = vsub.f32 %v7265, %v7327
  %v7329 = vand.u32 %v7328, 4294901760
  %v7330 = vsub.f32 %v7328, %v7329
  %v7331 = vand.u32 %v7330, 4294901760
  %7332 = vmatmul.f32.gmra.mxu0 %v7331
  %v7333 = vpop.f32.mrf.mxu0
  %v7334 = vadd.f32 %v4667, %v7333
  %v7335 = vand.u32 %v7268, 4294901760
  %v7336 = vsub.f32 %v7268, %v7335
  %v7337 = vand.u32 %v7336, 4294901760
  %v7338 = vsub.f32 %v7336, %v7337
  %v7339 = vand.u32 %v7338, 4294901760
  %7340 = vmatmul.f32.gmra.mxu0 %v7339
  %v7341 = vpop.f32.mrf.mxu0
  %v7342 = vadd.f32 %v4667, %v7341
  %v7343 = vand.u32 %v7271, 4294901760
  %v7344 = vsub.f32 %v7271, %v7343
  %v7345 = vand.u32 %v7344, 4294901760
  %v7346 = vsub.f32 %v7344, %v7345
  %v7347 = vand.u32 %v7346, 4294901760
  %7348 = vmatmul.f32.gmra.mxu0 %v7347
  %v7349 = vpop.f32.mrf.mxu0
  %v7350 = vadd.f32 %v4667, %v7349
  %v7351 = vand.u32 %v7274, 4294901760
  %v7352 = vsub.f32 %v7274, %v7351
  %v7353 = vand.u32 %v7352, 4294901760
  %v7354 = vsub.f32 %v7352, %v7353
  %v7355 = vand.u32 %v7354, 4294901760
  %7356 = vmatmul.f32.gmra.mxu0 %v7355
  %v7357 = vpop.f32.mrf.mxu0
  %v7358 = vadd.f32 %v4667, %v7357
  %v7359 = vand.u32 %v7277, 4294901760
  %v7360 = vsub.f32 %v7277, %v7359
  %v7361 = vand.u32 %v7360, 4294901760
  %v7362 = vsub.f32 %v7360, %v7361
  %v7363 = vand.u32 %v7362, 4294901760
  %7364 = vmatmul.f32.gmra.mxu0 %v7363
  %v7365 = vpop.f32.mrf.mxu0
  %v7366 = vadd.f32 %v4667, %v7365
  %v7367 = vand.u32 %v7280, 4294901760
  %v7368 = vsub.f32 %v7280, %v7367
  %v7369 = vand.u32 %v7368, 4294901760
  %v7370 = vsub.f32 %v7368, %v7369
  %v7371 = vand.u32 %v7370, 4294901760
  %7372 = vmatmul.f32.gmra.mxu0 %v7371
  %v7373 = vpop.f32.mrf.mxu0
  %v7374 = vadd.f32 %v4667, %v7373
  %v7375 = vand.u32 %v7283, 4294901760
  %v7376 = vsub.f32 %v7283, %v7375
  %v7377 = vand.u32 %v7376, 4294901760
  %v7378 = vsub.f32 %v7376, %v7377
  %v7379 = vand.u32 %v7378, 4294901760
  %7380 = vmatmul.f32.gmra.mxu0 %v7379
  %v7381 = vpop.f32.mrf.mxu0
  %v7382 = vadd.f32 %v4667, %v7381
  %7383 = vdwg.mxu0
  %7384 = vmatpush.msra.mxu0 0.0
  %7385 = vmatpush.msra.mxu0 0.0
  %7386 = vmatpush.msra.mxu0 0.0
  %7387 = vmatpush.msra.mxu0 0.0
  %7388 = vmatpush.msra.mxu0 0.0
  %7389 = vmatpush.msra.mxu0 0.0
  %7390 = vmatpush.msra.mxu0 0.0
  %7391 = vmatpush.msra.mxu0 0.0
  %7392 = vmatpush.msra.mxu0 0.0
  %7393 = vmatpush.msra.mxu0 0.0
  %7394 = vmatpush.msra.mxu0 0.0
  %7395 = vmatpush.msra.mxu0 0.0
  %7396 = vmatpush.msra.mxu0 0.0
  %7397 = vmatpush.msra.mxu0 0.0
  %v7398 = vand.u32 %v30, 4294901760
  %v7399 = vsub.f32 %v30, %v7398
  %v7400 = vand.u32 %v7399, 4294901760
  %v7401 = vsub.f32 %v7399, %v7400
  %v7402 = vand.u32 %v7401, 4294901760
  %7403 = vmatpush.msra.mxu0 %v7402
  %v7404 = vand.u32 %v29, 4294901760
  %v7405 = vsub.f32 %v29, %v7404
  %v7406 = vand.u32 %v7405, 4294901760
  %v7407 = vsub.f32 %v7405, %v7406
  %v7408 = vand.u32 %v7407, 4294901760
  %7409 = vmatpush.msra.mxu0 %v7408
  %v7410 = vand.u32 %v7256, 4294901760
  %7411 = vmatmul.f32.gmra.mxu0 %v7410
  %v7412 = vpop.f32.mrf.mxu0
  %v7413 = vadd.f32 %v7310, %v7412
  %v7414 = vand.u32 %v7259, 4294901760
  %7415 = vmatmul.f32.gmra.mxu0 %v7414
  %v7416 = vpop.f32.mrf.mxu0
  %v7417 = vadd.f32 %v7318, %v7416
  %v7418 = vand.u32 %v7262, 4294901760
  %7419 = vmatmul.f32.gmra.mxu0 %v7418
  %v7420 = vpop.f32.mrf.mxu0
  %v7421 = vadd.f32 %v7326, %v7420
  %v7422 = vand.u32 %v7265, 4294901760
  %7423 = vmatmul.f32.gmra.mxu0 %v7422
  %v7424 = vpop.f32.mrf.mxu0
  %v7425 = vadd.f32 %v7334, %v7424
  %v7426 = vand.u32 %v7268, 4294901760
  %7427 = vmatmul.f32.gmra.mxu0 %v7426
  %v7428 = vpop.f32.mrf.mxu0
  %v7429 = vadd.f32 %v7342, %v7428
  %v7430 = vand.u32 %v7271, 4294901760
  %7431 = vmatmul.f32.gmra.mxu0 %v7430
  %v7432 = vpop.f32.mrf.mxu0
  %v7433 = vadd.f32 %v7350, %v7432
  %v7434 = vand.u32 %v7274, 4294901760
  %7435 = vmatmul.f32.gmra.mxu0 %v7434
  %v7436 = vpop.f32.mrf.mxu0
  %v7437 = vadd.f32 %v7358, %v7436
  %v7438 = vand.u32 %v7277, 4294901760
  %7439 = vmatmul.f32.gmra.mxu0 %v7438
  %v7440 = vpop.f32.mrf.mxu0
  %v7441 = vadd.f32 %v7366, %v7440
  %v7442 = vand.u32 %v7280, 4294901760
  %7443 = vmatmul.f32.gmra.mxu0 %v7442
  %v7444 = vpop.f32.mrf.mxu0
  %v7445 = vadd.f32 %v7374, %v7444
  %v7446 = vand.u32 %v7283, 4294901760
  %7447 = vmatmul.f32.gmra.mxu0 %v7446
  %v7448 = vpop.f32.mrf.mxu0
  %v7449 = vadd.f32 %v7382, %v7448
  %7450 = vdwg.mxu0
  %7451 = vmatpush.msra.mxu0 0.0
  %7452 = vmatpush.msra.mxu0 0.0
  %7453 = vmatpush.msra.mxu0 0.0
  %7454 = vmatpush.msra.mxu0 0.0
  %7455 = vmatpush.msra.mxu0 0.0
  %7456 = vmatpush.msra.mxu0 0.0
  %7457 = vmatpush.msra.mxu0 0.0
  %7458 = vmatpush.msra.mxu0 0.0
  %7459 = vmatpush.msra.mxu0 0.0
  %7460 = vmatpush.msra.mxu0 0.0
  %7461 = vmatpush.msra.mxu0 0.0
  %7462 = vmatpush.msra.mxu0 0.0
  %7463 = vmatpush.msra.mxu0 0.0
  %7464 = vmatpush.msra.mxu0 0.0
  %v7465 = vand.u32 %v30, 4294901760
  %v7466 = vsub.f32 %v30, %v7465
  %7467 = vmatpush.msra.mxu0 %v7466
  %v7468 = vand.u32 %v29, 4294901760
  %v7469 = vsub.f32 %v29, %v7468
  %7470 = vmatpush.msra.mxu0 %v7469
  %v7471 = vand.u32 %v7256, 4294901760
  %v7472 = vsub.f32 %v7256, %v7471
  %7473 = vmatmul.f32.gmra.mxu0 %v7472
  %v7474 = vpop.f32.mrf.mxu0
  %v7475 = vadd.f32 %v7413, %v7474
  %v7476 = vand.u32 %v7259, 4294901760
  %v7477 = vsub.f32 %v7259, %v7476
  %7478 = vmatmul.f32.gmra.mxu0 %v7477
  %v7479 = vpop.f32.mrf.mxu0
  %v7480 = vadd.f32 %v7417, %v7479
  %v7481 = vand.u32 %v7262, 4294901760
  %v7482 = vsub.f32 %v7262, %v7481
  %7483 = vmatmul.f32.gmra.mxu0 %v7482
  %v7484 = vpop.f32.mrf.mxu0
  %v7485 = vadd.f32 %v7421, %v7484
  %v7486 = vand.u32 %v7265, 4294901760
  %v7487 = vsub.f32 %v7265, %v7486
  %7488 = vmatmul.f32.gmra.mxu0 %v7487
  %v7489 = vpop.f32.mrf.mxu0
  %v7490 = vadd.f32 %v7425, %v7489
  %v7491 = vand.u32 %v7268, 4294901760
  %v7492 = vsub.f32 %v7268, %v7491
  %7493 = vmatmul.f32.gmra.mxu0 %v7492
  %v7494 = vpop.f32.mrf.mxu0
  %v7495 = vadd.f32 %v7429, %v7494
  %v7496 = vand.u32 %v7271, 4294901760
  %v7497 = vsub.f32 %v7271, %v7496
  %7498 = vmatmul.f32.gmra.mxu0 %v7497
  %v7499 = vpop.f32.mrf.mxu0
  %v7500 = vadd.f32 %v7433, %v7499
  %v7501 = vand.u32 %v7274, 4294901760
  %v7502 = vsub.f32 %v7274, %v7501
  %7503 = vmatmul.f32.gmra.mxu0 %v7502
  %v7504 = vpop.f32.mrf.mxu0
  %v7505 = vadd.f32 %v7437, %v7504
  %v7506 = vand.u32 %v7277, 4294901760
  %v7507 = vsub.f32 %v7277, %v7506
  %7508 = vmatmul.f32.gmra.mxu0 %v7507
  %v7509 = vpop.f32.mrf.mxu0
  %v7510 = vadd.f32 %v7441, %v7509
  %v7511 = vand.u32 %v7280, 4294901760
  %v7512 = vsub.f32 %v7280, %v7511
  %7513 = vmatmul.f32.gmra.mxu0 %v7512
  %v7514 = vpop.f32.mrf.mxu0
  %v7515 = vadd.f32 %v7445, %v7514
  %v7516 = vand.u32 %v7283, 4294901760
  %v7517 = vsub.f32 %v7283, %v7516
  %7518 = vmatmul.f32.gmra.mxu0 %v7517
  %v7519 = vpop.f32.mrf.mxu0
  %v7520 = vadd.f32 %v7449, %v7519
  %7521 = vdwg.mxu0
  %7522 = vmatpush.msra.mxu0 0.0
  %7523 = vmatpush.msra.mxu0 0.0
  %7524 = vmatpush.msra.mxu0 0.0
  %7525 = vmatpush.msra.mxu0 0.0
  %7526 = vmatpush.msra.mxu0 0.0
  %7527 = vmatpush.msra.mxu0 0.0
  %7528 = vmatpush.msra.mxu0 0.0
  %7529 = vmatpush.msra.mxu0 0.0
  %7530 = vmatpush.msra.mxu0 0.0
  %7531 = vmatpush.msra.mxu0 0.0
  %7532 = vmatpush.msra.mxu0 0.0
  %7533 = vmatpush.msra.mxu0 0.0
  %7534 = vmatpush.msra.mxu0 0.0
  %7535 = vmatpush.msra.mxu0 0.0
  %v7536 = vand.u32 %v30, 4294901760
  %7537 = vmatpush.msra.mxu0 %v7536
  %v7538 = vand.u32 %v29, 4294901760
  %7539 = vmatpush.msra.mxu0 %v7538
  %v7540 = vand.u32 %v7256, 4294901760
  %v7541 = vsub.f32 %v7256, %v7540
  %v7542 = vand.u32 %v7541, 4294901760
  %7543 = vmatmul.f32.gmra.mxu0 %v7542
  %v7544 = vpop.f32.mrf.mxu0
  %v7545 = vadd.f32 %v7475, %v7544
  %v7546 = vand.u32 %v7259, 4294901760
  %v7547 = vsub.f32 %v7259, %v7546
  %v7548 = vand.u32 %v7547, 4294901760
  %7549 = vmatmul.f32.gmra.mxu0 %v7548
  %v7550 = vpop.f32.mrf.mxu0
  %v7551 = vadd.f32 %v7480, %v7550
  %v7552 = vand.u32 %v7262, 4294901760
  %v7553 = vsub.f32 %v7262, %v7552
  %v7554 = vand.u32 %v7553, 4294901760
  %7555 = vmatmul.f32.gmra.mxu0 %v7554
  %v7556 = vpop.f32.mrf.mxu0
  %v7557 = vadd.f32 %v7485, %v7556
  %v7558 = vand.u32 %v7265, 4294901760
  %v7559 = vsub.f32 %v7265, %v7558
  %v7560 = vand.u32 %v7559, 4294901760
  %7561 = vmatmul.f32.gmra.mxu0 %v7560
  %v7562 = vpop.f32.mrf.mxu0
  %v7563 = vadd.f32 %v7490, %v7562
  %v7564 = vand.u32 %v7268, 4294901760
  %v7565 = vsub.f32 %v7268, %v7564
  %v7566 = vand.u32 %v7565, 4294901760
  %7567 = vmatmul.f32.gmra.mxu0 %v7566
  %v7568 = vpop.f32.mrf.mxu0
  %v7569 = vadd.f32 %v7495, %v7568
  %v7570 = vand.u32 %v7271, 4294901760
  %v7571 = vsub.f32 %v7271, %v7570
  %v7572 = vand.u32 %v7571, 4294901760
  %7573 = vmatmul.f32.gmra.mxu0 %v7572
  %v7574 = vpop.f32.mrf.mxu0
  %v7575 = vadd.f32 %v7500, %v7574
  %v7576 = vand.u32 %v7274, 4294901760
  %v7577 = vsub.f32 %v7274, %v7576
  %v7578 = vand.u32 %v7577, 4294901760
  %7579 = vmatmul.f32.gmra.mxu0 %v7578
  %v7580 = vpop.f32.mrf.mxu0
  %v7581 = vadd.f32 %v7505, %v7580
  %v7582 = vand.u32 %v7277, 4294901760
  %v7583 = vsub.f32 %v7277, %v7582
  %v7584 = vand.u32 %v7583, 4294901760
  %7585 = vmatmul.f32.gmra.mxu0 %v7584
  %v7586 = vpop.f32.mrf.mxu0
  %v7587 = vadd.f32 %v7510, %v7586
  %v7588 = vand.u32 %v7280, 4294901760
  %v7589 = vsub.f32 %v7280, %v7588
  %v7590 = vand.u32 %v7589, 4294901760
  %7591 = vmatmul.f32.gmra.mxu0 %v7590
  %v7592 = vpop.f32.mrf.mxu0
  %v7593 = vadd.f32 %v7515, %v7592
  %v7594 = vand.u32 %v7283, 4294901760
  %v7595 = vsub.f32 %v7283, %v7594
  %v7596 = vand.u32 %v7595, 4294901760
  %7597 = vmatmul.f32.gmra.mxu0 %v7596
  %v7598 = vpop.f32.mrf.mxu0
  %v7599 = vadd.f32 %v7520, %v7598
  %7600 = vdwg.mxu0
  %7601 = vmatpush.msra.mxu0 0.0
  %7602 = vmatpush.msra.mxu0 0.0
  %7603 = vmatpush.msra.mxu0 0.0
  %7604 = vmatpush.msra.mxu0 0.0
  %7605 = vmatpush.msra.mxu0 0.0
  %7606 = vmatpush.msra.mxu0 0.0
  %7607 = vmatpush.msra.mxu0 0.0
  %7608 = vmatpush.msra.mxu0 0.0
  %7609 = vmatpush.msra.mxu0 0.0
  %7610 = vmatpush.msra.mxu0 0.0
  %7611 = vmatpush.msra.mxu0 0.0
  %7612 = vmatpush.msra.mxu0 0.0
  %7613 = vmatpush.msra.mxu0 0.0
  %7614 = vmatpush.msra.mxu0 0.0
  %v7615 = vand.u32 %v30, 4294901760
  %v7616 = vsub.f32 %v30, %v7615
  %v7617 = vand.u32 %v7616, 4294901760
  %7618 = vmatpush.msra.mxu0 %v7617
  %v7619 = vand.u32 %v29, 4294901760
  %v7620 = vsub.f32 %v29, %v7619
  %v7621 = vand.u32 %v7620, 4294901760
  %7622 = vmatpush.msra.mxu0 %v7621
  %v7623 = vand.u32 %v7256, 4294901760
  %7624 = vmatmul.f32.gmra.mxu0 %v7623
  %v7625 = vpop.f32.mrf.mxu0
  %v7626 = vadd.f32 %v7545, %v7625
  %v7627 = vand.u32 %v7259, 4294901760
  %7628 = vmatmul.f32.gmra.mxu0 %v7627
  %v7629 = vpop.f32.mrf.mxu0
  %v7630 = vadd.f32 %v7551, %v7629
  %v7631 = vand.u32 %v7262, 4294901760
  %7632 = vmatmul.f32.gmra.mxu0 %v7631
  %v7633 = vpop.f32.mrf.mxu0
  %v7634 = vadd.f32 %v7557, %v7633
  %v7635 = vand.u32 %v7265, 4294901760
  %7636 = vmatmul.f32.gmra.mxu0 %v7635
  %v7637 = vpop.f32.mrf.mxu0
  %v7638 = vadd.f32 %v7563, %v7637
  %v7639 = vand.u32 %v7268, 4294901760
  %7640 = vmatmul.f32.gmra.mxu0 %v7639
  %v7641 = vpop.f32.mrf.mxu0
  %v7642 = vadd.f32 %v7569, %v7641
  %v7643 = vand.u32 %v7271, 4294901760
  %7644 = vmatmul.f32.gmra.mxu0 %v7643
  %v7645 = vpop.f32.mrf.mxu0
  %v7646 = vadd.f32 %v7575, %v7645
  %v7647 = vand.u32 %v7274, 4294901760
  %7648 = vmatmul.f32.gmra.mxu0 %v7647
  %v7649 = vpop.f32.mrf.mxu0
  %v7650 = vadd.f32 %v7581, %v7649
  %v7651 = vand.u32 %v7277, 4294901760
  %7652 = vmatmul.f32.gmra.mxu0 %v7651
  %v7653 = vpop.f32.mrf.mxu0
  %v7654 = vadd.f32 %v7587, %v7653
  %v7655 = vand.u32 %v7280, 4294901760
  %7656 = vmatmul.f32.gmra.mxu0 %v7655
  %v7657 = vpop.f32.mrf.mxu0
  %v7658 = vadd.f32 %v7593, %v7657
  %v7659 = vand.u32 %v7283, 4294901760
  %7660 = vmatmul.f32.gmra.mxu0 %v7659
  %v7661 = vpop.f32.mrf.mxu0
  %v7662 = vadd.f32 %v7599, %v7661
  %7663 = vdwg.mxu0
  %7664 = vmatpush.msra.mxu0 0.0
  %7665 = vmatpush.msra.mxu0 0.0
  %7666 = vmatpush.msra.mxu0 0.0
  %7667 = vmatpush.msra.mxu0 0.0
  %7668 = vmatpush.msra.mxu0 0.0
  %7669 = vmatpush.msra.mxu0 0.0
  %7670 = vmatpush.msra.mxu0 0.0
  %7671 = vmatpush.msra.mxu0 0.0
  %7672 = vmatpush.msra.mxu0 0.0
  %7673 = vmatpush.msra.mxu0 0.0
  %7674 = vmatpush.msra.mxu0 0.0
  %7675 = vmatpush.msra.mxu0 0.0
  %7676 = vmatpush.msra.mxu0 0.0
  %7677 = vmatpush.msra.mxu0 0.0
  %v7678 = vand.u32 %v30, 4294901760
  %7679 = vmatpush.msra.mxu0 %v7678
  %v7680 = vand.u32 %v29, 4294901760
  %7681 = vmatpush.msra.mxu0 %v7680
  %v7682 = vand.u32 %v7256, 4294901760
  %7683 = vmatmul.f32.gmra.mxu0 %v7682
  %v7684 = vpop.f32.mrf.mxu0
  %v7685 = vadd.f32 %v7626, %v7684
  %v7686 = vand.u32 %v7259, 4294901760
  %7687 = vmatmul.f32.gmra.mxu0 %v7686
  %v7688 = vpop.f32.mrf.mxu0
  %v7689 = vadd.f32 %v7630, %v7688
  %v7690 = vand.u32 %v7262, 4294901760
  %7691 = vmatmul.f32.gmra.mxu0 %v7690
  %v7692 = vpop.f32.mrf.mxu0
  %v7693 = vadd.f32 %v7634, %v7692
  %v7694 = vand.u32 %v7265, 4294901760
  %7695 = vmatmul.f32.gmra.mxu0 %v7694
  %v7696 = vpop.f32.mrf.mxu0
  %v7697 = vadd.f32 %v7638, %v7696
  %v7698 = vand.u32 %v7268, 4294901760
  %7699 = vmatmul.f32.gmra.mxu0 %v7698
  %v7700 = vpop.f32.mrf.mxu0
  %v7701 = vadd.f32 %v7642, %v7700
  %v7702 = vand.u32 %v7271, 4294901760
  %7703 = vmatmul.f32.gmra.mxu0 %v7702
  %v7704 = vpop.f32.mrf.mxu0
  %v7705 = vadd.f32 %v7646, %v7704
  %v7706 = vand.u32 %v7274, 4294901760
  %7707 = vmatmul.f32.gmra.mxu0 %v7706
  %v7708 = vpop.f32.mrf.mxu0
  %v7709 = vadd.f32 %v7650, %v7708
  %v7710 = vand.u32 %v7277, 4294901760
  %7711 = vmatmul.f32.gmra.mxu0 %v7710
  %v7712 = vpop.f32.mrf.mxu0
  %v7713 = vadd.f32 %v7654, %v7712
  %v7714 = vand.u32 %v7280, 4294901760
  %7715 = vmatmul.f32.gmra.mxu0 %v7714
  %v7716 = vpop.f32.mrf.mxu0
  %v7717 = vadd.f32 %v7658, %v7716
  %v7718 = vand.u32 %v7283, 4294901760
  %7719 = vmatmul.f32.gmra.mxu0 %v7718
  %v7720 = vpop.f32.mrf.mxu0
  %v7721 = vadd.f32 %v7662, %v7720
  %7722 = vdwg.mxu0
  %v7723 = vmax.f32 %v7685, 0.0
  %v7724 = vmax.f32 %v7689, 0.0
  %v7725 = vmax.f32 %v7693, 0.0
  %v7726 = vmax.f32 %v7697, 0.0
  %v7727 = vmax.f32 %v7701, 0.0
  %v7728 = vmax.f32 %v7705, 0.0
  %v7729 = vmax.f32 %v7709, 0.0
  %v7730 = vmax.f32 %v7713, 0.0
  %v7731 = vmax.f32 %v7717, 0.0
  %v7732 = vmax.f32 %v7721, 0.0
  %7733 = vmatpush.msra.mxu0 0.0
  %7734 = vmatpush.msra.mxu0 0.0
  %7735 = vmatpush.msra.mxu0 0.0
  %7736 = vmatpush.msra.mxu0 0.0
  %7737 = vmatpush.msra.mxu0 0.0
  %7738 = vmatpush.msra.mxu0 0.0
  %v7739 = vand.u32 %v7732, 4294901760
  %7740 = vmatpush.msra.mxu0 %v7739
  %v7741 = vand.u32 %v7731, 4294901760
  %7742 = vmatpush.msra.mxu0 %v7741
  %v7743 = vand.u32 %v7730, 4294901760
  %7744 = vmatpush.msra.mxu0 %v7743
  %v7745 = vand.u32 %v7729, 4294901760
  %7746 = vmatpush.msra.mxu0 %v7745
  %v7747 = vand.u32 %v7728, 4294901760
  %7748 = vmatpush.msra.mxu0 %v7747
  %v7749 = vand.u32 %v7727, 4294901760
  %7750 = vmatpush.msra.mxu0 %v7749
  %v7751 = vand.u32 %v7726, 4294901760
  %7752 = vmatpush.msra.mxu0 %v7751
  %v7753 = vand.u32 %v7725, 4294901760
  %7754 = vmatpush.msra.mxu0 %v7753
  %v7755 = vand.u32 %v7724, 4294901760
  %7756 = vmatpush.msra.mxu0 %v7755
  %v7757 = vand.u32 %v7723, 4294901760
  %7758 = vmatpush.msra.mxu0 %v7757
  %v7759 = vand.u32 %v5147, 4294901760
  %v7760 = vsub.f32 %v5147, %v7759
  %v7761 = vand.u32 %v7760, 4294901760
  %v7762 = vsub.f32 %v7760, %v7761
  %v7763 = vand.u32 %v7762, 4294901760
  %7764 = vmatmul.f32.gmra.mxu0 %v7763
  %v7765 = vpop.f32.mrf.mxu0
  %v7766 = vadd.f32 0.0, %v7765
  %v7767 = vand.u32 %v5150, 4294901760
  %v7768 = vsub.f32 %v5150, %v7767
  %v7769 = vand.u32 %v7768, 4294901760
  %v7770 = vsub.f32 %v7768, %v7769
  %v7771 = vand.u32 %v7770, 4294901760
  %7772 = vmatmul.f32.gmra.mxu0 %v7771
  %v7773 = vpop.f32.mrf.mxu0
  %v7774 = vadd.f32 0.0, %v7773
  %v7775 = vand.u32 %v5153, 4294901760
  %v7776 = vsub.f32 %v5153, %v7775
  %v7777 = vand.u32 %v7776, 4294901760
  %v7778 = vsub.f32 %v7776, %v7777
  %v7779 = vand.u32 %v7778, 4294901760
  %7780 = vmatmul.f32.gmra.mxu0 %v7779
  %v7781 = vpop.f32.mrf.mxu0
  %v7782 = vadd.f32 0.0, %v7781
  %7783 = vdwg.mxu0
  %7784 = vmatpush.msra.mxu0 0.0
  %7785 = vmatpush.msra.mxu0 0.0
  %7786 = vmatpush.msra.mxu0 0.0
  %7787 = vmatpush.msra.mxu0 0.0
  %7788 = vmatpush.msra.mxu0 0.0
  %7789 = vmatpush.msra.mxu0 0.0
  %v7790 = vand.u32 %v7732, 4294901760
  %v7791 = vsub.f32 %v7732, %v7790
  %v7792 = vand.u32 %v7791, 4294901760
  %v7793 = vsub.f32 %v7791, %v7792
  %v7794 = vand.u32 %v7793, 4294901760
  %7795 = vmatpush.msra.mxu0 %v7794
  %v7796 = vand.u32 %v7731, 4294901760
  %v7797 = vsub.f32 %v7731, %v7796
  %v7798 = vand.u32 %v7797, 4294901760
  %v7799 = vsub.f32 %v7797, %v7798
  %v7800 = vand.u32 %v7799, 4294901760
  %7801 = vmatpush.msra.mxu0 %v7800
  %v7802 = vand.u32 %v7730, 4294901760
  %v7803 = vsub.f32 %v7730, %v7802
  %v7804 = vand.u32 %v7803, 4294901760
  %v7805 = vsub.f32 %v7803, %v7804
  %v7806 = vand.u32 %v7805, 4294901760
  %7807 = vmatpush.msra.mxu0 %v7806
  %v7808 = vand.u32 %v7729, 4294901760
  %v7809 = vsub.f32 %v7729, %v7808
  %v7810 = vand.u32 %v7809, 4294901760
  %v7811 = vsub.f32 %v7809, %v7810
  %v7812 = vand.u32 %v7811, 4294901760
  %7813 = vmatpush.msra.mxu0 %v7812
  %v7814 = vand.u32 %v7728, 4294901760
  %v7815 = vsub.f32 %v7728, %v7814
  %v7816 = vand.u32 %v7815, 4294901760
  %v7817 = vsub.f32 %v7815, %v7816
  %v7818 = vand.u32 %v7817, 4294901760
  %7819 = vmatpush.msra.mxu0 %v7818
  %v7820 = vand.u32 %v7727, 4294901760
  %v7821 = vsub.f32 %v7727, %v7820
  %v7822 = vand.u32 %v7821, 4294901760
  %v7823 = vsub.f32 %v7821, %v7822
  %v7824 = vand.u32 %v7823, 4294901760
  %7825 = vmatpush.msra.mxu0 %v7824
  %v7826 = vand.u32 %v7726, 4294901760
  %v7827 = vsub.f32 %v7726, %v7826
  %v7828 = vand.u32 %v7827, 4294901760
  %v7829 = vsub.f32 %v7827, %v7828
  %v7830 = vand.u32 %v7829, 4294901760
  %7831 = vmatpush.msra.mxu0 %v7830
  %v7832 = vand.u32 %v7725, 4294901760
  %v7833 = vsub.f32 %v7725, %v7832
  %v7834 = vand.u32 %v7833, 4294901760
  %v7835 = vsub.f32 %v7833, %v7834
  %v7836 = vand.u32 %v7835, 4294901760
  %7837 = vmatpush.msra.mxu0 %v7836
  %v7838 = vand.u32 %v7724, 4294901760
  %v7839 = vsub.f32 %v7724, %v7838
  %v7840 = vand.u32 %v7839, 4294901760
  %v7841 = vsub.f32 %v7839, %v7840
  %v7842 = vand.u32 %v7841, 4294901760
  %7843 = vmatpush.msra.mxu0 %v7842
  %v7844 = vand.u32 %v7723, 4294901760
  %v7845 = vsub.f32 %v7723, %v7844
  %v7846 = vand.u32 %v7845, 4294901760
  %v7847 = vsub.f32 %v7845, %v7846
  %v7848 = vand.u32 %v7847, 4294901760
  %7849 = vmatpush.msra.mxu0 %v7848
  %v7850 = vand.u32 %v5147, 4294901760
  %7851 = vmatmul.f32.gmra.mxu0 %v7850
  %v7852 = vpop.f32.mrf.mxu0
  %v7853 = vadd.f32 %v7766, %v7852
  %v7854 = vand.u32 %v5150, 4294901760
  %7855 = vmatmul.f32.gmra.mxu0 %v7854
  %v7856 = vpop.f32.mrf.mxu0
  %v7857 = vadd.f32 %v7774, %v7856
  %v7858 = vand.u32 %v5153, 4294901760
  %7859 = vmatmul.f32.gmra.mxu0 %v7858
  %v7860 = vpop.f32.mrf.mxu0
  %v7861 = vadd.f32 %v7782, %v7860
  %7862 = vdwg.mxu0
  %7863 = vmatpush.msra.mxu0 0.0
  %7864 = vmatpush.msra.mxu0 0.0
  %7865 = vmatpush.msra.mxu0 0.0
  %7866 = vmatpush.msra.mxu0 0.0
  %7867 = vmatpush.msra.mxu0 0.0
  %7868 = vmatpush.msra.mxu0 0.0
  %v7869 = vand.u32 %v7732, 4294901760
  %v7870 = vsub.f32 %v7732, %v7869
  %7871 = vmatpush.msra.mxu0 %v7870
  %v7872 = vand.u32 %v7731, 4294901760
  %v7873 = vsub.f32 %v7731, %v7872
  %7874 = vmatpush.msra.mxu0 %v7873
  %v7875 = vand.u32 %v7730, 4294901760
  %v7876 = vsub.f32 %v7730, %v7875
  %7877 = vmatpush.msra.mxu0 %v7876
  %v7878 = vand.u32 %v7729, 4294901760
  %v7879 = vsub.f32 %v7729, %v7878
  %7880 = vmatpush.msra.mxu0 %v7879
  %v7881 = vand.u32 %v7728, 4294901760
  %v7882 = vsub.f32 %v7728, %v7881
  %7883 = vmatpush.msra.mxu0 %v7882
  %v7884 = vand.u32 %v7727, 4294901760
  %v7885 = vsub.f32 %v7727, %v7884
  %7886 = vmatpush.msra.mxu0 %v7885
  %v7887 = vand.u32 %v7726, 4294901760
  %v7888 = vsub.f32 %v7726, %v7887
  %7889 = vmatpush.msra.mxu0 %v7888
  %v7890 = vand.u32 %v7725, 4294901760
  %v7891 = vsub.f32 %v7725, %v7890
  %7892 = vmatpush.msra.mxu0 %v7891
  %v7893 = vand.u32 %v7724, 4294901760
  %v7894 = vsub.f32 %v7724, %v7893
  %7895 = vmatpush.msra.mxu0 %v7894
  %v7896 = vand.u32 %v7723, 4294901760
  %v7897 = vsub.f32 %v7723, %v7896
  %7898 = vmatpush.msra.mxu0 %v7897
  %v7899 = vand.u32 %v5147, 4294901760
  %v7900 = vsub.f32 %v5147, %v7899
  %7901 = vmatmul.f32.gmra.mxu0 %v7900
  %v7902 = vpop.f32.mrf.mxu0
  %v7903 = vadd.f32 %v7853, %v7902
  %v7904 = vand.u32 %v5150, 4294901760
  %v7905 = vsub.f32 %v5150, %v7904
  %7906 = vmatmul.f32.gmra.mxu0 %v7905
  %v7907 = vpop.f32.mrf.mxu0
  %v7908 = vadd.f32 %v7857, %v7907
  %v7909 = vand.u32 %v5153, 4294901760
  %v7910 = vsub.f32 %v5153, %v7909
  %7911 = vmatmul.f32.gmra.mxu0 %v7910
  %v7912 = vpop.f32.mrf.mxu0
  %v7913 = vadd.f32 %v7861, %v7912
  %7914 = vdwg.mxu0
  %7915 = vmatpush.msra.mxu0 0.0
  %7916 = vmatpush.msra.mxu0 0.0
  %7917 = vmatpush.msra.mxu0 0.0
  %7918 = vmatpush.msra.mxu0 0.0
  %7919 = vmatpush.msra.mxu0 0.0
  %7920 = vmatpush.msra.mxu0 0.0
  %v7921 = vand.u32 %v7732, 4294901760
  %7922 = vmatpush.msra.mxu0 %v7921
  %v7923 = vand.u32 %v7731, 4294901760
  %7924 = vmatpush.msra.mxu0 %v7923
  %v7925 = vand.u32 %v7730, 4294901760
  %7926 = vmatpush.msra.mxu0 %v7925
  %v7927 = vand.u32 %v7729, 4294901760
  %7928 = vmatpush.msra.mxu0 %v7927
  %v7929 = vand.u32 %v7728, 4294901760
  %7930 = vmatpush.msra.mxu0 %v7929
  %v7931 = vand.u32 %v7727, 4294901760
  %7932 = vmatpush.msra.mxu0 %v7931
  %v7933 = vand.u32 %v7726, 4294901760
  %7934 = vmatpush.msra.mxu0 %v7933
  %v7935 = vand.u32 %v7725, 4294901760
  %7936 = vmatpush.msra.mxu0 %v7935
  %v7937 = vand.u32 %v7724, 4294901760
  %7938 = vmatpush.msra.mxu0 %v7937
  %v7939 = vand.u32 %v7723, 4294901760
  %7940 = vmatpush.msra.mxu0 %v7939
  %v7941 = vand.u32 %v5147, 4294901760
  %v7942 = vsub.f32 %v5147, %v7941
  %v7943 = vand.u32 %v7942, 4294901760
  %7944 = vmatmul.f32.gmra.mxu0 %v7943
  %v7945 = vpop.f32.mrf.mxu0
  %v7946 = vadd.f32 %v7903, %v7945
  %v7947 = vand.u32 %v5150, 4294901760
  %v7948 = vsub.f32 %v5150, %v7947
  %v7949 = vand.u32 %v7948, 4294901760
  %7950 = vmatmul.f32.gmra.mxu0 %v7949
  %v7951 = vpop.f32.mrf.mxu0
  %v7952 = vadd.f32 %v7908, %v7951
  %v7953 = vand.u32 %v5153, 4294901760
  %v7954 = vsub.f32 %v5153, %v7953
  %v7955 = vand.u32 %v7954, 4294901760
  %7956 = vmatmul.f32.gmra.mxu0 %v7955
  %v7957 = vpop.f32.mrf.mxu0
  %v7958 = vadd.f32 %v7913, %v7957
  %7959 = vdwg.mxu0
  %7960 = vmatpush.msra.mxu0 0.0
  %7961 = vmatpush.msra.mxu0 0.0
  %7962 = vmatpush.msra.mxu0 0.0
  %7963 = vmatpush.msra.mxu0 0.0
  %7964 = vmatpush.msra.mxu0 0.0
  %7965 = vmatpush.msra.mxu0 0.0
  %v7966 = vand.u32 %v7732, 4294901760
  %v7967 = vsub.f32 %v7732, %v7966
  %v7968 = vand.u32 %v7967, 4294901760
  %7969 = vmatpush.msra.mxu0 %v7968
  %v7970 = vand.u32 %v7731, 4294901760
  %v7971 = vsub.f32 %v7731, %v7970
  %v7972 = vand.u32 %v7971, 4294901760
  %7973 = vmatpush.msra.mxu0 %v7972
  %v7974 = vand.u32 %v7730, 4294901760
  %v7975 = vsub.f32 %v7730, %v7974
  %v7976 = vand.u32 %v7975, 4294901760
  %7977 = vmatpush.msra.mxu0 %v7976
  %v7978 = vand.u32 %v7729, 4294901760
  %v7979 = vsub.f32 %v7729, %v7978
  %v7980 = vand.u32 %v7979, 4294901760
  %7981 = vmatpush.msra.mxu0 %v7980
  %v7982 = vand.u32 %v7728, 4294901760
  %v7983 = vsub.f32 %v7728, %v7982
  %v7984 = vand.u32 %v7983, 4294901760
  %7985 = vmatpush.msra.mxu0 %v7984
  %v7986 = vand.u32 %v7727, 4294901760
  %v7987 = vsub.f32 %v7727, %v7986
  %v7988 = vand.u32 %v7987, 4294901760
  %7989 = vmatpush.msra.mxu0 %v7988
  %v7990 = vand.u32 %v7726, 4294901760
  %v7991 = vsub.f32 %v7726, %v7990
  %v7992 = vand.u32 %v7991, 4294901760
  %7993 = vmatpush.msra.mxu0 %v7992
  %v7994 = vand.u32 %v7725, 4294901760
  %v7995 = vsub.f32 %v7725, %v7994
  %v7996 = vand.u32 %v7995, 4294901760
  %7997 = vmatpush.msra.mxu0 %v7996
  %v7998 = vand.u32 %v7724, 4294901760
  %v7999 = vsub.f32 %v7724, %v7998
  %v8000 = vand.u32 %v7999, 4294901760
  %8001 = vmatpush.msra.mxu0 %v8000
  %v8002 = vand.u32 %v7723, 4294901760
  %v8003 = vsub.f32 %v7723, %v8002
  %v8004 = vand.u32 %v8003, 4294901760
  %8005 = vmatpush.msra.mxu0 %v8004
  %v8006 = vand.u32 %v5147, 4294901760
  %8007 = vmatmul.f32.gmra.mxu0 %v8006
  %v8008 = vpop.f32.mrf.mxu0
  %v8009 = vadd.f32 %v7946, %v8008
  %v8010 = vand.u32 %v5150, 4294901760
  %8011 = vmatmul.f32.gmra.mxu0 %v8010
  %v8012 = vpop.f32.mrf.mxu0
  %v8013 = vadd.f32 %v7952, %v8012
  %v8014 = vand.u32 %v5153, 4294901760
  %8015 = vmatmul.f32.gmra.mxu0 %v8014
  %v8016 = vpop.f32.mrf.mxu0
  %v8017 = vadd.f32 %v7958, %v8016
  %8018 = vdwg.mxu0
  %8019 = vmatpush.msra.mxu0 0.0
  %8020 = vmatpush.msra.mxu0 0.0
  %8021 = vmatpush.msra.mxu0 0.0
  %8022 = vmatpush.msra.mxu0 0.0
  %8023 = vmatpush.msra.mxu0 0.0
  %8024 = vmatpush.msra.mxu0 0.0
  %v8025 = vand.u32 %v7732, 4294901760
  %8026 = vmatpush.msra.mxu0 %v8025
  %v8027 = vand.u32 %v7731, 4294901760
  %8028 = vmatpush.msra.mxu0 %v8027
  %v8029 = vand.u32 %v7730, 4294901760
  %8030 = vmatpush.msra.mxu0 %v8029
  %v8031 = vand.u32 %v7729, 4294901760
  %8032 = vmatpush.msra.mxu0 %v8031
  %v8033 = vand.u32 %v7728, 4294901760
  %8034 = vmatpush.msra.mxu0 %v8033
  %v8035 = vand.u32 %v7727, 4294901760
  %8036 = vmatpush.msra.mxu0 %v8035
  %v8037 = vand.u32 %v7726, 4294901760
  %8038 = vmatpush.msra.mxu0 %v8037
  %v8039 = vand.u32 %v7725, 4294901760
  %8040 = vmatpush.msra.mxu0 %v8039
  %v8041 = vand.u32 %v7724, 4294901760
  %8042 = vmatpush.msra.mxu0 %v8041
  %v8043 = vand.u32 %v7723, 4294901760
  %8044 = vmatpush.msra.mxu0 %v8043
  %v8045 = vand.u32 %v5147, 4294901760
  %8046 = vmatmul.f32.gmra.mxu0 %v8045
  %v8047 = vpop.f32.mrf.mxu0
  %v8048 = vadd.f32 %v8009, %v8047
  %v8049 = vand.u32 %v5150, 4294901760
  %8050 = vmatmul.f32.gmra.mxu0 %v8049
  %v8051 = vpop.f32.mrf.mxu0
  %v8052 = vadd.f32 %v8013, %v8051
  %v8053 = vand.u32 %v5153, 4294901760
  %8054 = vmatmul.f32.gmra.mxu0 %v8053
  %v8055 = vpop.f32.mrf.mxu0
  %v8056 = vadd.f32 %v8017, %v8055
  %8057 = vdwg.mxu0
  %8061 = vrot.lane.b32.xlu0 %v8048, 32
  %v8062 = vpop.permute.xlu0 %8061
  %8063 = vrot.lane.b32.xlu0 %v8052, 32
  %v8064 = vpop.permute.xlu0 %8063
  %8065 = vrot.lane.b32.xlu0 %v8056, 32
  %v8066 = vpop.permute.xlu0 %8065
  %v8070 = vsel %vm3483, %v6039, %v8062
  %v8071 = vsel %vm3483, %v6040, %v8064
  %v8072 = vsel %vm3483, %v6041, %v8066
  %v8074 = vsel %vm5496, %v8070, 0
  %v8077 = vsel %vm5496, %v8071, 0
  %v8080 = vsel %vm5496, %v8072, 0
  %8082 = vmatpush.msra.mxu0 0.0
  %8083 = vmatpush.msra.mxu0 0.0
  %8084 = vmatpush.msra.mxu0 0.0
  %8085 = vmatpush.msra.mxu0 0.0
  %8086 = vmatpush.msra.mxu0 0.0
  %8087 = vmatpush.msra.mxu0 0.0
  %8088 = vmatpush.msra.mxu0 0.0
  %8089 = vmatpush.msra.mxu0 0.0
  %8090 = vmatpush.msra.mxu0 0.0
  %8091 = vmatpush.msra.mxu0 0.0
  %v8092 = vand.u32 %v48, 4294901760
  %8093 = vmatpush.msra.mxu0 %v8092
  %v8094 = vand.u32 %v47, 4294901760
  %8095 = vmatpush.msra.mxu0 %v8094
  %v8096 = vand.u32 %v46, 4294901760
  %8097 = vmatpush.msra.mxu0 %v8096
  %v8098 = vand.u32 %v45, 4294901760
  %8099 = vmatpush.msra.mxu0 %v8098
  %v8100 = vand.u32 %v44, 4294901760
  %8101 = vmatpush.msra.mxu0 %v8100
  %v8102 = vand.u32 %v43, 4294901760
  %8103 = vmatpush.msra.mxu0 %v8102
  %v8104 = vand.u32 %v8074, 4294901760
  %v8105 = vsub.f32 %v8074, %v8104
  %v8106 = vand.u32 %v8105, 4294901760
  %v8107 = vsub.f32 %v8105, %v8106
  %v8108 = vand.u32 %v8107, 4294901760
  %8109 = vmatmul.f32.gmra.mxu0 %v8108
  %v8110 = vpop.f32.mrf.mxu0
  %v8111 = vadd.f32 %v5495, %v8110
  %v8112 = vand.u32 %v8077, 4294901760
  %v8113 = vsub.f32 %v8077, %v8112
  %v8114 = vand.u32 %v8113, 4294901760
  %v8115 = vsub.f32 %v8113, %v8114
  %v8116 = vand.u32 %v8115, 4294901760
  %8117 = vmatmul.f32.gmra.mxu0 %v8116
  %v8118 = vpop.f32.mrf.mxu0
  %v8119 = vadd.f32 %v5495, %v8118
  %v8120 = vand.u32 %v8080, 4294901760
  %v8121 = vsub.f32 %v8080, %v8120
  %v8122 = vand.u32 %v8121, 4294901760
  %v8123 = vsub.f32 %v8121, %v8122
  %v8124 = vand.u32 %v8123, 4294901760
  %8125 = vmatmul.f32.gmra.mxu0 %v8124
  %v8126 = vpop.f32.mrf.mxu0
  %v8127 = vadd.f32 %v5495, %v8126
  %8128 = vdwg.mxu0
  %8129 = vmatpush.msra.mxu0 0.0
  %8130 = vmatpush.msra.mxu0 0.0
  %8131 = vmatpush.msra.mxu0 0.0
  %8132 = vmatpush.msra.mxu0 0.0
  %8133 = vmatpush.msra.mxu0 0.0
  %8134 = vmatpush.msra.mxu0 0.0
  %8135 = vmatpush.msra.mxu0 0.0
  %8136 = vmatpush.msra.mxu0 0.0
  %8137 = vmatpush.msra.mxu0 0.0
  %8138 = vmatpush.msra.mxu0 0.0
  %v8139 = vand.u32 %v48, 4294901760
  %v8140 = vsub.f32 %v48, %v8139
  %v8141 = vand.u32 %v8140, 4294901760
  %v8142 = vsub.f32 %v8140, %v8141
  %v8143 = vand.u32 %v8142, 4294901760
  %8144 = vmatpush.msra.mxu0 %v8143
  %v8145 = vand.u32 %v47, 4294901760
  %v8146 = vsub.f32 %v47, %v8145
  %v8147 = vand.u32 %v8146, 4294901760
  %v8148 = vsub.f32 %v8146, %v8147
  %v8149 = vand.u32 %v8148, 4294901760
  %8150 = vmatpush.msra.mxu0 %v8149
  %v8151 = vand.u32 %v46, 4294901760
  %v8152 = vsub.f32 %v46, %v8151
  %v8153 = vand.u32 %v8152, 4294901760
  %v8154 = vsub.f32 %v8152, %v8153
  %v8155 = vand.u32 %v8154, 4294901760
  %8156 = vmatpush.msra.mxu0 %v8155
  %v8157 = vand.u32 %v45, 4294901760
  %v8158 = vsub.f32 %v45, %v8157
  %v8159 = vand.u32 %v8158, 4294901760
  %v8160 = vsub.f32 %v8158, %v8159
  %v8161 = vand.u32 %v8160, 4294901760
  %8162 = vmatpush.msra.mxu0 %v8161
  %v8163 = vand.u32 %v44, 4294901760
  %v8164 = vsub.f32 %v44, %v8163
  %v8165 = vand.u32 %v8164, 4294901760
  %v8166 = vsub.f32 %v8164, %v8165
  %v8167 = vand.u32 %v8166, 4294901760
  %8168 = vmatpush.msra.mxu0 %v8167
  %v8169 = vand.u32 %v43, 4294901760
  %v8170 = vsub.f32 %v43, %v8169
  %v8171 = vand.u32 %v8170, 4294901760
  %v8172 = vsub.f32 %v8170, %v8171
  %v8173 = vand.u32 %v8172, 4294901760
  %8174 = vmatpush.msra.mxu0 %v8173
  %v8175 = vand.u32 %v8074, 4294901760
  %8176 = vmatmul.f32.gmra.mxu0 %v8175
  %v8177 = vpop.f32.mrf.mxu0
  %v8178 = vadd.f32 %v8111, %v8177
  %v8179 = vand.u32 %v8077, 4294901760
  %8180 = vmatmul.f32.gmra.mxu0 %v8179
  %v8181 = vpop.f32.mrf.mxu0
  %v8182 = vadd.f32 %v8119, %v8181
  %v8183 = vand.u32 %v8080, 4294901760
  %8184 = vmatmul.f32.gmra.mxu0 %v8183
  %v8185 = vpop.f32.mrf.mxu0
  %v8186 = vadd.f32 %v8127, %v8185
  %8187 = vdwg.mxu0
  %8188 = vmatpush.msra.mxu0 0.0
  %8189 = vmatpush.msra.mxu0 0.0
  %8190 = vmatpush.msra.mxu0 0.0
  %8191 = vmatpush.msra.mxu0 0.0
  %8192 = vmatpush.msra.mxu0 0.0
  %8193 = vmatpush.msra.mxu0 0.0
  %8194 = vmatpush.msra.mxu0 0.0
  %8195 = vmatpush.msra.mxu0 0.0
  %8196 = vmatpush.msra.mxu0 0.0
  %8197 = vmatpush.msra.mxu0 0.0
  %v8198 = vand.u32 %v48, 4294901760
  %v8199 = vsub.f32 %v48, %v8198
  %8200 = vmatpush.msra.mxu0 %v8199
  %v8201 = vand.u32 %v47, 4294901760
  %v8202 = vsub.f32 %v47, %v8201
  %8203 = vmatpush.msra.mxu0 %v8202
  %v8204 = vand.u32 %v46, 4294901760
  %v8205 = vsub.f32 %v46, %v8204
  %8206 = vmatpush.msra.mxu0 %v8205
  %v8207 = vand.u32 %v45, 4294901760
  %v8208 = vsub.f32 %v45, %v8207
  %8209 = vmatpush.msra.mxu0 %v8208
  %v8210 = vand.u32 %v44, 4294901760
  %v8211 = vsub.f32 %v44, %v8210
  %8212 = vmatpush.msra.mxu0 %v8211
  %v8213 = vand.u32 %v43, 4294901760
  %v8214 = vsub.f32 %v43, %v8213
  %8215 = vmatpush.msra.mxu0 %v8214
  %v8216 = vand.u32 %v8074, 4294901760
  %v8217 = vsub.f32 %v8074, %v8216
  %8218 = vmatmul.f32.gmra.mxu0 %v8217
  %v8219 = vpop.f32.mrf.mxu0
  %v8220 = vadd.f32 %v8178, %v8219
  %v8221 = vand.u32 %v8077, 4294901760
  %v8222 = vsub.f32 %v8077, %v8221
  %8223 = vmatmul.f32.gmra.mxu0 %v8222
  %v8224 = vpop.f32.mrf.mxu0
  %v8225 = vadd.f32 %v8182, %v8224
  %v8226 = vand.u32 %v8080, 4294901760
  %v8227 = vsub.f32 %v8080, %v8226
  %8228 = vmatmul.f32.gmra.mxu0 %v8227
  %v8229 = vpop.f32.mrf.mxu0
  %v8230 = vadd.f32 %v8186, %v8229
  %8231 = vdwg.mxu0
  %8232 = vmatpush.msra.mxu0 0.0
  %8233 = vmatpush.msra.mxu0 0.0
  %8234 = vmatpush.msra.mxu0 0.0
  %8235 = vmatpush.msra.mxu0 0.0
  %8236 = vmatpush.msra.mxu0 0.0
  %8237 = vmatpush.msra.mxu0 0.0
  %8238 = vmatpush.msra.mxu0 0.0
  %8239 = vmatpush.msra.mxu0 0.0
  %8240 = vmatpush.msra.mxu0 0.0
  %8241 = vmatpush.msra.mxu0 0.0
  %v8242 = vand.u32 %v48, 4294901760
  %8243 = vmatpush.msra.mxu0 %v8242
  %v8244 = vand.u32 %v47, 4294901760
  %8245 = vmatpush.msra.mxu0 %v8244
  %v8246 = vand.u32 %v46, 4294901760
  %8247 = vmatpush.msra.mxu0 %v8246
  %v8248 = vand.u32 %v45, 4294901760
  %8249 = vmatpush.msra.mxu0 %v8248
  %v8250 = vand.u32 %v44, 4294901760
  %8251 = vmatpush.msra.mxu0 %v8250
  %v8252 = vand.u32 %v43, 4294901760
  %8253 = vmatpush.msra.mxu0 %v8252
  %v8254 = vand.u32 %v8074, 4294901760
  %v8255 = vsub.f32 %v8074, %v8254
  %v8256 = vand.u32 %v8255, 4294901760
  %8257 = vmatmul.f32.gmra.mxu0 %v8256
  %v8258 = vpop.f32.mrf.mxu0
  %v8259 = vadd.f32 %v8220, %v8258
  %v8260 = vand.u32 %v8077, 4294901760
  %v8261 = vsub.f32 %v8077, %v8260
  %v8262 = vand.u32 %v8261, 4294901760
  %8263 = vmatmul.f32.gmra.mxu0 %v8262
  %v8264 = vpop.f32.mrf.mxu0
  %v8265 = vadd.f32 %v8225, %v8264
  %v8266 = vand.u32 %v8080, 4294901760
  %v8267 = vsub.f32 %v8080, %v8266
  %v8268 = vand.u32 %v8267, 4294901760
  %8269 = vmatmul.f32.gmra.mxu0 %v8268
  %v8270 = vpop.f32.mrf.mxu0
  %v8271 = vadd.f32 %v8230, %v8270
  %8272 = vdwg.mxu0
  %8273 = vmatpush.msra.mxu0 0.0
  %8274 = vmatpush.msra.mxu0 0.0
  %8275 = vmatpush.msra.mxu0 0.0
  %8276 = vmatpush.msra.mxu0 0.0
  %8277 = vmatpush.msra.mxu0 0.0
  %8278 = vmatpush.msra.mxu0 0.0
  %8279 = vmatpush.msra.mxu0 0.0
  %8280 = vmatpush.msra.mxu0 0.0
  %8281 = vmatpush.msra.mxu0 0.0
  %8282 = vmatpush.msra.mxu0 0.0
  %v8283 = vand.u32 %v48, 4294901760
  %v8284 = vsub.f32 %v48, %v8283
  %v8285 = vand.u32 %v8284, 4294901760
  %8286 = vmatpush.msra.mxu0 %v8285
  %v8287 = vand.u32 %v47, 4294901760
  %v8288 = vsub.f32 %v47, %v8287
  %v8289 = vand.u32 %v8288, 4294901760
  %8290 = vmatpush.msra.mxu0 %v8289
  %v8291 = vand.u32 %v46, 4294901760
  %v8292 = vsub.f32 %v46, %v8291
  %v8293 = vand.u32 %v8292, 4294901760
  %8294 = vmatpush.msra.mxu0 %v8293
  %v8295 = vand.u32 %v45, 4294901760
  %v8296 = vsub.f32 %v45, %v8295
  %v8297 = vand.u32 %v8296, 4294901760
  %8298 = vmatpush.msra.mxu0 %v8297
  %v8299 = vand.u32 %v44, 4294901760
  %v8300 = vsub.f32 %v44, %v8299
  %v8301 = vand.u32 %v8300, 4294901760
  %8302 = vmatpush.msra.mxu0 %v8301
  %v8303 = vand.u32 %v43, 4294901760
  %v8304 = vsub.f32 %v43, %v8303
  %v8305 = vand.u32 %v8304, 4294901760
  %8306 = vmatpush.msra.mxu0 %v8305
  %v8307 = vand.u32 %v8074, 4294901760
  %8308 = vmatmul.f32.gmra.mxu0 %v8307
  %v8309 = vpop.f32.mrf.mxu0
  %v8310 = vadd.f32 %v8259, %v8309
  %v8311 = vand.u32 %v8077, 4294901760
  %8312 = vmatmul.f32.gmra.mxu0 %v8311
  %v8313 = vpop.f32.mrf.mxu0
  %v8314 = vadd.f32 %v8265, %v8313
  %v8315 = vand.u32 %v8080, 4294901760
  %8316 = vmatmul.f32.gmra.mxu0 %v8315
  %v8317 = vpop.f32.mrf.mxu0
  %v8318 = vadd.f32 %v8271, %v8317
  %8319 = vdwg.mxu0
  %8320 = vmatpush.msra.mxu0 0.0
  %8321 = vmatpush.msra.mxu0 0.0
  %8322 = vmatpush.msra.mxu0 0.0
  %8323 = vmatpush.msra.mxu0 0.0
  %8324 = vmatpush.msra.mxu0 0.0
  %8325 = vmatpush.msra.mxu0 0.0
  %8326 = vmatpush.msra.mxu0 0.0
  %8327 = vmatpush.msra.mxu0 0.0
  %8328 = vmatpush.msra.mxu0 0.0
  %8329 = vmatpush.msra.mxu0 0.0
  %v8330 = vand.u32 %v48, 4294901760
  %8331 = vmatpush.msra.mxu0 %v8330
  %v8332 = vand.u32 %v47, 4294901760
  %8333 = vmatpush.msra.mxu0 %v8332
  %v8334 = vand.u32 %v46, 4294901760
  %8335 = vmatpush.msra.mxu0 %v8334
  %v8336 = vand.u32 %v45, 4294901760
  %8337 = vmatpush.msra.mxu0 %v8336
  %v8338 = vand.u32 %v44, 4294901760
  %8339 = vmatpush.msra.mxu0 %v8338
  %v8340 = vand.u32 %v43, 4294901760
  %8341 = vmatpush.msra.mxu0 %v8340
  %v8342 = vand.u32 %v8074, 4294901760
  %8343 = vmatmul.f32.gmra.mxu0 %v8342
  %v8344 = vpop.f32.mrf.mxu0
  %v8345 = vadd.f32 %v8310, %v8344
  %v8346 = vand.u32 %v8077, 4294901760
  %8347 = vmatmul.f32.gmra.mxu0 %v8346
  %v8348 = vpop.f32.mrf.mxu0
  %v8349 = vadd.f32 %v8314, %v8348
  %v8350 = vand.u32 %v8080, 4294901760
  %8351 = vmatmul.f32.gmra.mxu0 %v8350
  %v8352 = vpop.f32.mrf.mxu0
  %v8353 = vadd.f32 %v8318, %v8352
  %8354 = vdwg.mxu0
  %v8355 = vmax.f32 %v8345, 0.0
  %v8356 = vmax.f32 %v8349, 0.0
  %v8357 = vmax.f32 %v8353, 0.0
  %v8359 = vsel %vm3483, %v8355, 0
  %v8362 = vsel %vm3483, %v8356, 0
  %v8365 = vsel %vm3483, %v8357, 0
  %8367 = vmatpush.msra.mxu0 0.0
  %8368 = vmatpush.msra.mxu0 0.0
  %8369 = vmatpush.msra.mxu0 0.0
  %8370 = vmatpush.msra.mxu0 0.0
  %8371 = vmatpush.msra.mxu0 0.0
  %8372 = vmatpush.msra.mxu0 0.0
  %8373 = vmatpush.msra.mxu0 0.0
  %8374 = vmatpush.msra.mxu0 0.0
  %8375 = vmatpush.msra.mxu0 0.0
  %8376 = vmatpush.msra.mxu0 0.0
  %8377 = vmatpush.msra.mxu0 0.0
  %8378 = vmatpush.msra.mxu0 0.0
  %v8379 = vand.u32 %v52, 4294901760
  %8380 = vmatpush.msra.mxu0 %v8379
  %v8381 = vand.u32 %v51, 4294901760
  %8382 = vmatpush.msra.mxu0 %v8381
  %v8383 = vand.u32 %v50, 4294901760
  %8384 = vmatpush.msra.mxu0 %v8383
  %v8385 = vand.u32 %v49, 4294901760
  %8386 = vmatpush.msra.mxu0 %v8385
  %v8387 = vand.u32 %v8359, 4294901760
  %v8388 = vsub.f32 %v8359, %v8387
  %v8389 = vand.u32 %v8388, 4294901760
  %v8390 = vsub.f32 %v8388, %v8389
  %v8391 = vand.u32 %v8390, 4294901760
  %8392 = vmatmul.f32.gmra.mxu0 %v8391
  %v8393 = vpop.f32.mrf.mxu0
  %v8394 = vadd.f32 %v5782, %v8393
  %v8395 = vand.u32 %v8362, 4294901760
  %v8396 = vsub.f32 %v8362, %v8395
  %v8397 = vand.u32 %v8396, 4294901760
  %v8398 = vsub.f32 %v8396, %v8397
  %v8399 = vand.u32 %v8398, 4294901760
  %8400 = vmatmul.f32.gmra.mxu0 %v8399
  %v8401 = vpop.f32.mrf.mxu0
  %v8402 = vadd.f32 %v5782, %v8401
  %v8403 = vand.u32 %v8365, 4294901760
  %v8404 = vsub.f32 %v8365, %v8403
  %v8405 = vand.u32 %v8404, 4294901760
  %v8406 = vsub.f32 %v8404, %v8405
  %v8407 = vand.u32 %v8406, 4294901760
  %8408 = vmatmul.f32.gmra.mxu0 %v8407
  %v8409 = vpop.f32.mrf.mxu0
  %v8410 = vadd.f32 %v5782, %v8409
  %8411 = vdwg.mxu0
  %8412 = vmatpush.msra.mxu0 0.0
  %8413 = vmatpush.msra.mxu0 0.0
  %8414 = vmatpush.msra.mxu0 0.0
  %8415 = vmatpush.msra.mxu0 0.0
  %8416 = vmatpush.msra.mxu0 0.0
  %8417 = vmatpush.msra.mxu0 0.0
  %8418 = vmatpush.msra.mxu0 0.0
  %8419 = vmatpush.msra.mxu0 0.0
  %8420 = vmatpush.msra.mxu0 0.0
  %8421 = vmatpush.msra.mxu0 0.0
  %8422 = vmatpush.msra.mxu0 0.0
  %8423 = vmatpush.msra.mxu0 0.0
  %v8424 = vand.u32 %v52, 4294901760
  %v8425 = vsub.f32 %v52, %v8424
  %v8426 = vand.u32 %v8425, 4294901760
  %v8427 = vsub.f32 %v8425, %v8426
  %v8428 = vand.u32 %v8427, 4294901760
  %8429 = vmatpush.msra.mxu0 %v8428
  %v8430 = vand.u32 %v51, 4294901760
  %v8431 = vsub.f32 %v51, %v8430
  %v8432 = vand.u32 %v8431, 4294901760
  %v8433 = vsub.f32 %v8431, %v8432
  %v8434 = vand.u32 %v8433, 4294901760
  %8435 = vmatpush.msra.mxu0 %v8434
  %v8436 = vand.u32 %v50, 4294901760
  %v8437 = vsub.f32 %v50, %v8436
  %v8438 = vand.u32 %v8437, 4294901760
  %v8439 = vsub.f32 %v8437, %v8438
  %v8440 = vand.u32 %v8439, 4294901760
  %8441 = vmatpush.msra.mxu0 %v8440
  %v8442 = vand.u32 %v49, 4294901760
  %v8443 = vsub.f32 %v49, %v8442
  %v8444 = vand.u32 %v8443, 4294901760
  %v8445 = vsub.f32 %v8443, %v8444
  %v8446 = vand.u32 %v8445, 4294901760
  %8447 = vmatpush.msra.mxu0 %v8446
  %v8448 = vand.u32 %v8359, 4294901760
  %8449 = vmatmul.f32.gmra.mxu0 %v8448
  %v8450 = vpop.f32.mrf.mxu0
  %v8451 = vadd.f32 %v8394, %v8450
  %v8452 = vand.u32 %v8362, 4294901760
  %8453 = vmatmul.f32.gmra.mxu0 %v8452
  %v8454 = vpop.f32.mrf.mxu0
  %v8455 = vadd.f32 %v8402, %v8454
  %v8456 = vand.u32 %v8365, 4294901760
  %8457 = vmatmul.f32.gmra.mxu0 %v8456
  %v8458 = vpop.f32.mrf.mxu0
  %v8459 = vadd.f32 %v8410, %v8458
  %8460 = vdwg.mxu0
  %8461 = vmatpush.msra.mxu0 0.0
  %8462 = vmatpush.msra.mxu0 0.0
  %8463 = vmatpush.msra.mxu0 0.0
  %8464 = vmatpush.msra.mxu0 0.0
  %8465 = vmatpush.msra.mxu0 0.0
  %8466 = vmatpush.msra.mxu0 0.0
  %8467 = vmatpush.msra.mxu0 0.0
  %8468 = vmatpush.msra.mxu0 0.0
  %8469 = vmatpush.msra.mxu0 0.0
  %8470 = vmatpush.msra.mxu0 0.0
  %8471 = vmatpush.msra.mxu0 0.0
  %8472 = vmatpush.msra.mxu0 0.0
  %v8473 = vand.u32 %v52, 4294901760
  %v8474 = vsub.f32 %v52, %v8473
  %8475 = vmatpush.msra.mxu0 %v8474
  %v8476 = vand.u32 %v51, 4294901760
  %v8477 = vsub.f32 %v51, %v8476
  %8478 = vmatpush.msra.mxu0 %v8477
  %v8479 = vand.u32 %v50, 4294901760
  %v8480 = vsub.f32 %v50, %v8479
  %8481 = vmatpush.msra.mxu0 %v8480
  %v8482 = vand.u32 %v49, 4294901760
  %v8483 = vsub.f32 %v49, %v8482
  %8484 = vmatpush.msra.mxu0 %v8483
  %v8485 = vand.u32 %v8359, 4294901760
  %v8486 = vsub.f32 %v8359, %v8485
  %8487 = vmatmul.f32.gmra.mxu0 %v8486
  %v8488 = vpop.f32.mrf.mxu0
  %v8489 = vadd.f32 %v8451, %v8488
  %v8490 = vand.u32 %v8362, 4294901760
  %v8491 = vsub.f32 %v8362, %v8490
  %8492 = vmatmul.f32.gmra.mxu0 %v8491
  %v8493 = vpop.f32.mrf.mxu0
  %v8494 = vadd.f32 %v8455, %v8493
  %v8495 = vand.u32 %v8365, 4294901760
  %v8496 = vsub.f32 %v8365, %v8495
  %8497 = vmatmul.f32.gmra.mxu0 %v8496
  %v8498 = vpop.f32.mrf.mxu0
  %v8499 = vadd.f32 %v8459, %v8498
  %8500 = vdwg.mxu0
  %8501 = vmatpush.msra.mxu0 0.0
  %8502 = vmatpush.msra.mxu0 0.0
  %8503 = vmatpush.msra.mxu0 0.0
  %8504 = vmatpush.msra.mxu0 0.0
  %8505 = vmatpush.msra.mxu0 0.0
  %8506 = vmatpush.msra.mxu0 0.0
  %8507 = vmatpush.msra.mxu0 0.0
  %8508 = vmatpush.msra.mxu0 0.0
  %8509 = vmatpush.msra.mxu0 0.0
  %8510 = vmatpush.msra.mxu0 0.0
  %8511 = vmatpush.msra.mxu0 0.0
  %8512 = vmatpush.msra.mxu0 0.0
  %v8513 = vand.u32 %v52, 4294901760
  %8514 = vmatpush.msra.mxu0 %v8513
  %v8515 = vand.u32 %v51, 4294901760
  %8516 = vmatpush.msra.mxu0 %v8515
  %v8517 = vand.u32 %v50, 4294901760
  %8518 = vmatpush.msra.mxu0 %v8517
  %v8519 = vand.u32 %v49, 4294901760
  %8520 = vmatpush.msra.mxu0 %v8519
  %v8521 = vand.u32 %v8359, 4294901760
  %v8522 = vsub.f32 %v8359, %v8521
  %v8523 = vand.u32 %v8522, 4294901760
  %8524 = vmatmul.f32.gmra.mxu0 %v8523
  %v8525 = vpop.f32.mrf.mxu0
  %v8526 = vadd.f32 %v8489, %v8525
  %v8527 = vand.u32 %v8362, 4294901760
  %v8528 = vsub.f32 %v8362, %v8527
  %v8529 = vand.u32 %v8528, 4294901760
  %8530 = vmatmul.f32.gmra.mxu0 %v8529
  %v8531 = vpop.f32.mrf.mxu0
  %v8532 = vadd.f32 %v8494, %v8531
  %v8533 = vand.u32 %v8365, 4294901760
  %v8534 = vsub.f32 %v8365, %v8533
  %v8535 = vand.u32 %v8534, 4294901760
  %8536 = vmatmul.f32.gmra.mxu0 %v8535
  %v8537 = vpop.f32.mrf.mxu0
  %v8538 = vadd.f32 %v8499, %v8537
  %8539 = vdwg.mxu0
  %8540 = vmatpush.msra.mxu0 0.0
  %8541 = vmatpush.msra.mxu0 0.0
  %8542 = vmatpush.msra.mxu0 0.0
  %8543 = vmatpush.msra.mxu0 0.0
  %8544 = vmatpush.msra.mxu0 0.0
  %8545 = vmatpush.msra.mxu0 0.0
  %8546 = vmatpush.msra.mxu0 0.0
  %8547 = vmatpush.msra.mxu0 0.0
  %8548 = vmatpush.msra.mxu0 0.0
  %8549 = vmatpush.msra.mxu0 0.0
  %8550 = vmatpush.msra.mxu0 0.0
  %8551 = vmatpush.msra.mxu0 0.0
  %v8552 = vand.u32 %v52, 4294901760
  %v8553 = vsub.f32 %v52, %v8552
  %v8554 = vand.u32 %v8553, 4294901760
  %8555 = vmatpush.msra.mxu0 %v8554
  %v8556 = vand.u32 %v51, 4294901760
  %v8557 = vsub.f32 %v51, %v8556
  %v8558 = vand.u32 %v8557, 4294901760
  %8559 = vmatpush.msra.mxu0 %v8558
  %v8560 = vand.u32 %v50, 4294901760
  %v8561 = vsub.f32 %v50, %v8560
  %v8562 = vand.u32 %v8561, 4294901760
  %8563 = vmatpush.msra.mxu0 %v8562
  %v8564 = vand.u32 %v49, 4294901760
  %v8565 = vsub.f32 %v49, %v8564
  %v8566 = vand.u32 %v8565, 4294901760
  %8567 = vmatpush.msra.mxu0 %v8566
  %v8568 = vand.u32 %v8359, 4294901760
  %8569 = vmatmul.f32.gmra.mxu0 %v8568
  %v8570 = vpop.f32.mrf.mxu0
  %v8571 = vadd.f32 %v8526, %v8570
  %v8572 = vand.u32 %v8362, 4294901760
  %8573 = vmatmul.f32.gmra.mxu0 %v8572
  %v8574 = vpop.f32.mrf.mxu0
  %v8575 = vadd.f32 %v8532, %v8574
  %v8576 = vand.u32 %v8365, 4294901760
  %8577 = vmatmul.f32.gmra.mxu0 %v8576
  %v8578 = vpop.f32.mrf.mxu0
  %v8579 = vadd.f32 %v8538, %v8578
  %8580 = vdwg.mxu0
  %8581 = vmatpush.msra.mxu0 0.0
  %8582 = vmatpush.msra.mxu0 0.0
  %8583 = vmatpush.msra.mxu0 0.0
  %8584 = vmatpush.msra.mxu0 0.0
  %8585 = vmatpush.msra.mxu0 0.0
  %8586 = vmatpush.msra.mxu0 0.0
  %8587 = vmatpush.msra.mxu0 0.0
  %8588 = vmatpush.msra.mxu0 0.0
  %8589 = vmatpush.msra.mxu0 0.0
  %8590 = vmatpush.msra.mxu0 0.0
  %8591 = vmatpush.msra.mxu0 0.0
  %8592 = vmatpush.msra.mxu0 0.0
  %v8593 = vand.u32 %v52, 4294901760
  %8594 = vmatpush.msra.mxu0 %v8593
  %v8595 = vand.u32 %v51, 4294901760
  %8596 = vmatpush.msra.mxu0 %v8595
  %v8597 = vand.u32 %v50, 4294901760
  %8598 = vmatpush.msra.mxu0 %v8597
  %v8599 = vand.u32 %v49, 4294901760
  %8600 = vmatpush.msra.mxu0 %v8599
  %v8601 = vand.u32 %v8359, 4294901760
  %8602 = vmatmul.f32.gmra.mxu0 %v8601
  %v8603 = vpop.f32.mrf.mxu0
  %v8604 = vadd.f32 %v8571, %v8603
  %v8605 = vand.u32 %v8362, 4294901760
  %8606 = vmatmul.f32.gmra.mxu0 %v8605
  %v8607 = vpop.f32.mrf.mxu0
  %v8608 = vadd.f32 %v8575, %v8607
  %v8609 = vand.u32 %v8365, 4294901760
  %8610 = vmatmul.f32.gmra.mxu0 %v8609
  %v8611 = vpop.f32.mrf.mxu0
  %v8612 = vadd.f32 %v8579, %v8611
  %8613 = vdwg.mxu0
  %v8614 = vmax.f32 %v8604, 0.0
  %v8615 = vmax.f32 %v8608, 0.0
  %v8616 = vmax.f32 %v8612, 0.0
  %v8618 = vsel %vm3483, %v8614, 0
  %v8621 = vsel %vm3483, %v8615, 0
  %v8624 = vsel %vm3483, %v8616, 0
  %8626 = vmatpush.msra.mxu0 0.0
  %8627 = vmatpush.msra.mxu0 0.0
  %8628 = vmatpush.msra.mxu0 0.0
  %8629 = vmatpush.msra.mxu0 0.0
  %8630 = vmatpush.msra.mxu0 0.0
  %8631 = vmatpush.msra.mxu0 0.0
  %8632 = vmatpush.msra.mxu0 0.0
  %8633 = vmatpush.msra.mxu0 0.0
  %8634 = vmatpush.msra.mxu0 0.0
  %8635 = vmatpush.msra.mxu0 0.0
  %8636 = vmatpush.msra.mxu0 0.0
  %8637 = vmatpush.msra.mxu0 0.0
  %v8638 = vand.u32 %v3482, 4294901760
  %8639 = vmatpush.msra.mxu0 %v8638
  %v8640 = vand.u32 %v3481, 4294901760
  %8641 = vmatpush.msra.mxu0 %v8640
  %v8642 = vand.u32 %v3480, 4294901760
  %8643 = vmatpush.msra.mxu0 %v8642
  %v8644 = vand.u32 %v3479, 4294901760
  %8645 = vmatpush.msra.mxu0 %v8644
  %v8646 = vand.u32 %v8618, 4294901760
  %v8647 = vsub.f32 %v8618, %v8646
  %v8648 = vand.u32 %v8647, 4294901760
  %v8649 = vsub.f32 %v8647, %v8648
  %v8650 = vand.u32 %v8649, 4294901760
  %8651 = vmatmul.f32.gmra.mxu0 %v8650
  %v8652 = vpop.f32.mrf.mxu0
  %v8653 = vadd.f32 0.0, %v8652
  %v8654 = vand.u32 %v8621, 4294901760
  %v8655 = vsub.f32 %v8621, %v8654
  %v8656 = vand.u32 %v8655, 4294901760
  %v8657 = vsub.f32 %v8655, %v8656
  %v8658 = vand.u32 %v8657, 4294901760
  %8659 = vmatmul.f32.gmra.mxu0 %v8658
  %v8660 = vpop.f32.mrf.mxu0
  %v8661 = vadd.f32 0.0, %v8660
  %v8662 = vand.u32 %v8624, 4294901760
  %v8663 = vsub.f32 %v8624, %v8662
  %v8664 = vand.u32 %v8663, 4294901760
  %v8665 = vsub.f32 %v8663, %v8664
  %v8666 = vand.u32 %v8665, 4294901760
  %8667 = vmatmul.f32.gmra.mxu0 %v8666
  %v8668 = vpop.f32.mrf.mxu0
  %v8669 = vadd.f32 0.0, %v8668
  %8670 = vdwg.mxu0
  %8671 = vmatpush.msra.mxu0 0.0
  %8672 = vmatpush.msra.mxu0 0.0
  %8673 = vmatpush.msra.mxu0 0.0
  %8674 = vmatpush.msra.mxu0 0.0
  %8675 = vmatpush.msra.mxu0 0.0
  %8676 = vmatpush.msra.mxu0 0.0
  %8677 = vmatpush.msra.mxu0 0.0
  %8678 = vmatpush.msra.mxu0 0.0
  %8679 = vmatpush.msra.mxu0 0.0
  %8680 = vmatpush.msra.mxu0 0.0
  %8681 = vmatpush.msra.mxu0 0.0
  %8682 = vmatpush.msra.mxu0 0.0
  %v8683 = vand.u32 %v3482, 4294901760
  %v8684 = vsub.f32 %v3482, %v8683
  %v8685 = vand.u32 %v8684, 4294901760
  %v8686 = vsub.f32 %v8684, %v8685
  %v8687 = vand.u32 %v8686, 4294901760
  %8688 = vmatpush.msra.mxu0 %v8687
  %v8689 = vand.u32 %v3481, 4294901760
  %v8690 = vsub.f32 %v3481, %v8689
  %v8691 = vand.u32 %v8690, 4294901760
  %v8692 = vsub.f32 %v8690, %v8691
  %v8693 = vand.u32 %v8692, 4294901760
  %8694 = vmatpush.msra.mxu0 %v8693
  %v8695 = vand.u32 %v3480, 4294901760
  %v8696 = vsub.f32 %v3480, %v8695
  %v8697 = vand.u32 %v8696, 4294901760
  %v8698 = vsub.f32 %v8696, %v8697
  %v8699 = vand.u32 %v8698, 4294901760
  %8700 = vmatpush.msra.mxu0 %v8699
  %v8701 = vand.u32 %v3479, 4294901760
  %v8702 = vsub.f32 %v3479, %v8701
  %v8703 = vand.u32 %v8702, 4294901760
  %v8704 = vsub.f32 %v8702, %v8703
  %v8705 = vand.u32 %v8704, 4294901760
  %8706 = vmatpush.msra.mxu0 %v8705
  %v8707 = vand.u32 %v8618, 4294901760
  %8708 = vmatmul.f32.gmra.mxu0 %v8707
  %v8709 = vpop.f32.mrf.mxu0
  %v8710 = vadd.f32 %v8653, %v8709
  %v8711 = vand.u32 %v8621, 4294901760
  %8712 = vmatmul.f32.gmra.mxu0 %v8711
  %v8713 = vpop.f32.mrf.mxu0
  %v8714 = vadd.f32 %v8661, %v8713
  %v8715 = vand.u32 %v8624, 4294901760
  %8716 = vmatmul.f32.gmra.mxu0 %v8715
  %v8717 = vpop.f32.mrf.mxu0
  %v8718 = vadd.f32 %v8669, %v8717
  %8719 = vdwg.mxu0
  %8720 = vmatpush.msra.mxu0 0.0
  %8721 = vmatpush.msra.mxu0 0.0
  %8722 = vmatpush.msra.mxu0 0.0
  %8723 = vmatpush.msra.mxu0 0.0
  %8724 = vmatpush.msra.mxu0 0.0
  %8725 = vmatpush.msra.mxu0 0.0
  %8726 = vmatpush.msra.mxu0 0.0
  %8727 = vmatpush.msra.mxu0 0.0
  %8728 = vmatpush.msra.mxu0 0.0
  %8729 = vmatpush.msra.mxu0 0.0
  %8730 = vmatpush.msra.mxu0 0.0
  %8731 = vmatpush.msra.mxu0 0.0
  %v8732 = vand.u32 %v3482, 4294901760
  %v8733 = vsub.f32 %v3482, %v8732
  %8734 = vmatpush.msra.mxu0 %v8733
  %v8735 = vand.u32 %v3481, 4294901760
  %v8736 = vsub.f32 %v3481, %v8735
  %8737 = vmatpush.msra.mxu0 %v8736
  %v8738 = vand.u32 %v3480, 4294901760
  %v8739 = vsub.f32 %v3480, %v8738
  %8740 = vmatpush.msra.mxu0 %v8739
  %v8741 = vand.u32 %v3479, 4294901760
  %v8742 = vsub.f32 %v3479, %v8741
  %8743 = vmatpush.msra.mxu0 %v8742
  %v8744 = vand.u32 %v8618, 4294901760
  %v8745 = vsub.f32 %v8618, %v8744
  %8746 = vmatmul.f32.gmra.mxu0 %v8745
  %v8747 = vpop.f32.mrf.mxu0
  %v8748 = vadd.f32 %v8710, %v8747
  %v8749 = vand.u32 %v8621, 4294901760
  %v8750 = vsub.f32 %v8621, %v8749
  %8751 = vmatmul.f32.gmra.mxu0 %v8750
  %v8752 = vpop.f32.mrf.mxu0
  %v8753 = vadd.f32 %v8714, %v8752
  %v8754 = vand.u32 %v8624, 4294901760
  %v8755 = vsub.f32 %v8624, %v8754
  %8756 = vmatmul.f32.gmra.mxu0 %v8755
  %v8757 = vpop.f32.mrf.mxu0
  %v8758 = vadd.f32 %v8718, %v8757
  %8759 = vdwg.mxu0
  %8760 = vmatpush.msra.mxu0 0.0
  %8761 = vmatpush.msra.mxu0 0.0
  %8762 = vmatpush.msra.mxu0 0.0
  %8763 = vmatpush.msra.mxu0 0.0
  %8764 = vmatpush.msra.mxu0 0.0
  %8765 = vmatpush.msra.mxu0 0.0
  %8766 = vmatpush.msra.mxu0 0.0
  %8767 = vmatpush.msra.mxu0 0.0
  %8768 = vmatpush.msra.mxu0 0.0
  %8769 = vmatpush.msra.mxu0 0.0
  %8770 = vmatpush.msra.mxu0 0.0
  %8771 = vmatpush.msra.mxu0 0.0
  %v8772 = vand.u32 %v3482, 4294901760
  %8773 = vmatpush.msra.mxu0 %v8772
  %v8774 = vand.u32 %v3481, 4294901760
  %8775 = vmatpush.msra.mxu0 %v8774
  %v8776 = vand.u32 %v3480, 4294901760
  %8777 = vmatpush.msra.mxu0 %v8776
  %v8778 = vand.u32 %v3479, 4294901760
  %8779 = vmatpush.msra.mxu0 %v8778
  %v8780 = vand.u32 %v8618, 4294901760
  %v8781 = vsub.f32 %v8618, %v8780
  %v8782 = vand.u32 %v8781, 4294901760
  %8783 = vmatmul.f32.gmra.mxu0 %v8782
  %v8784 = vpop.f32.mrf.mxu0
  %v8785 = vadd.f32 %v8748, %v8784
  %v8786 = vand.u32 %v8621, 4294901760
  %v8787 = vsub.f32 %v8621, %v8786
  %v8788 = vand.u32 %v8787, 4294901760
  %8789 = vmatmul.f32.gmra.mxu0 %v8788
  %v8790 = vpop.f32.mrf.mxu0
  %v8791 = vadd.f32 %v8753, %v8790
  %v8792 = vand.u32 %v8624, 4294901760
  %v8793 = vsub.f32 %v8624, %v8792
  %v8794 = vand.u32 %v8793, 4294901760
  %8795 = vmatmul.f32.gmra.mxu0 %v8794
  %v8796 = vpop.f32.mrf.mxu0
  %v8797 = vadd.f32 %v8758, %v8796
  %8798 = vdwg.mxu0
  %8799 = vmatpush.msra.mxu0 0.0
  %8800 = vmatpush.msra.mxu0 0.0
  %8801 = vmatpush.msra.mxu0 0.0
  %8802 = vmatpush.msra.mxu0 0.0
  %8803 = vmatpush.msra.mxu0 0.0
  %8804 = vmatpush.msra.mxu0 0.0
  %8805 = vmatpush.msra.mxu0 0.0
  %8806 = vmatpush.msra.mxu0 0.0
  %8807 = vmatpush.msra.mxu0 0.0
  %8808 = vmatpush.msra.mxu0 0.0
  %8809 = vmatpush.msra.mxu0 0.0
  %8810 = vmatpush.msra.mxu0 0.0
  %v8811 = vand.u32 %v3482, 4294901760
  %v8812 = vsub.f32 %v3482, %v8811
  %v8813 = vand.u32 %v8812, 4294901760
  %8814 = vmatpush.msra.mxu0 %v8813
  %v8815 = vand.u32 %v3481, 4294901760
  %v8816 = vsub.f32 %v3481, %v8815
  %v8817 = vand.u32 %v8816, 4294901760
  %8818 = vmatpush.msra.mxu0 %v8817
  %v8819 = vand.u32 %v3480, 4294901760
  %v8820 = vsub.f32 %v3480, %v8819
  %v8821 = vand.u32 %v8820, 4294901760
  %8822 = vmatpush.msra.mxu0 %v8821
  %v8823 = vand.u32 %v3479, 4294901760
  %v8824 = vsub.f32 %v3479, %v8823
  %v8825 = vand.u32 %v8824, 4294901760
  %8826 = vmatpush.msra.mxu0 %v8825
  %v8827 = vand.u32 %v8618, 4294901760
  %8828 = vmatmul.f32.gmra.mxu0 %v8827
  %v8829 = vpop.f32.mrf.mxu0
  %v8830 = vadd.f32 %v8785, %v8829
  %v8831 = vand.u32 %v8621, 4294901760
  %8832 = vmatmul.f32.gmra.mxu0 %v8831
  %v8833 = vpop.f32.mrf.mxu0
  %v8834 = vadd.f32 %v8791, %v8833
  %v8835 = vand.u32 %v8624, 4294901760
  %8836 = vmatmul.f32.gmra.mxu0 %v8835
  %v8837 = vpop.f32.mrf.mxu0
  %v8838 = vadd.f32 %v8797, %v8837
  %8839 = vdwg.mxu0
  %8840 = vmatpush.msra.mxu0 0.0
  %8841 = vmatpush.msra.mxu0 0.0
  %8842 = vmatpush.msra.mxu0 0.0
  %8843 = vmatpush.msra.mxu0 0.0
  %8844 = vmatpush.msra.mxu0 0.0
  %8845 = vmatpush.msra.mxu0 0.0
  %8846 = vmatpush.msra.mxu0 0.0
  %8847 = vmatpush.msra.mxu0 0.0
  %8848 = vmatpush.msra.mxu0 0.0
  %8849 = vmatpush.msra.mxu0 0.0
  %8850 = vmatpush.msra.mxu0 0.0
  %8851 = vmatpush.msra.mxu0 0.0
  %v8852 = vand.u32 %v3482, 4294901760
  %8853 = vmatpush.msra.mxu0 %v8852
  %v8854 = vand.u32 %v3481, 4294901760
  %8855 = vmatpush.msra.mxu0 %v8854
  %v8856 = vand.u32 %v3480, 4294901760
  %8857 = vmatpush.msra.mxu0 %v8856
  %v8858 = vand.u32 %v3479, 4294901760
  %8859 = vmatpush.msra.mxu0 %v8858
  %v8860 = vand.u32 %v8618, 4294901760
  %8861 = vmatmul.f32.gmra.mxu0 %v8860
  %v8862 = vpop.f32.mrf.mxu0
  %v8863 = vadd.f32 %v8830, %v8862
  %v8864 = vand.u32 %v8621, 4294901760
  %8865 = vmatmul.f32.gmra.mxu0 %v8864
  %v8866 = vpop.f32.mrf.mxu0
  %v8867 = vadd.f32 %v8834, %v8866
  %v8868 = vand.u32 %v8624, 4294901760
  %8869 = vmatmul.f32.gmra.mxu0 %v8868
  %v8870 = vpop.f32.mrf.mxu0
  %v8871 = vadd.f32 %v8838, %v8870
  %8872 = vdwg.mxu0
  %8876 = vrot.lane.b32.xlu0 %v8863, 112
  %v8877 = vpop.permute.xlu0 %8876
  %8878 = vrot.lane.b32.xlu0 %v8867, 112
  %v8879 = vpop.permute.xlu0 %8878
  %8880 = vrot.lane.b32.xlu0 %v8871, 112
  %v8881 = vpop.permute.xlu0 %8880
  %v8885 = vsel %vm1068, %v8863, %v8877
  %v8886 = vsel %vm1069, %v8867, %v8879
  %v8887 = vsel %vm1070, %v8871, %v8881
  %v8889 = vsel %vm1169, %v8887, 0
  %8891 = vmatpush.msra.mxu0 0.0
  %8892 = vmatpush.msra.mxu0 0.0
  %8893 = vmatpush.msra.mxu0 0.0
  %8894 = vmatpush.msra.mxu0 0.0
  %8895 = vmatpush.msra.mxu0 0.0
  %8896 = vmatpush.msra.mxu0 0.0
  %8897 = vmatpush.msra.mxu0 0.0
  %8898 = vmatpush.msra.mxu0 0.0
  %8899 = vmatpush.msra.mxu0 0.0
  %8900 = vmatpush.msra.mxu0 0.0
  %8901 = vmatpush.msra.mxu0 0.0
  %8902 = vmatpush.msra.mxu0 0.0
  %8903 = vmatpush.msra.mxu0 0.0
  %v8904 = vand.u32 %v8889, 4294901760
  %8905 = vmatpush.msra.mxu0 %v8904
  %v8906 = vand.u32 %v8886, 4294901760
  %8907 = vmatpush.msra.mxu0 %v8906
  %v8908 = vand.u32 %v8885, 4294901760
  %8909 = vmatpush.msra.mxu0 %v8908
  %v8910 = vand.u32 %v1140, 4294901760
  %v8911 = vsub.f32 %v1140, %v8910
  %v8912 = vand.u32 %v8911, 4294901760
  %v8913 = vsub.f32 %v8911, %v8912
  %v8914 = vand.u32 %v8913, 4294901760
  %8915 = vmatmul.f32.gmra.mxu0 %v8914
  %v8916 = vpop.f32.mrf.mxu0
  %v8917 = vadd.f32 0.0, %v8916
  %v8918 = vand.u32 %v1143, 4294901760
  %v8919 = vsub.f32 %v1143, %v8918
  %v8920 = vand.u32 %v8919, 4294901760
  %v8921 = vsub.f32 %v8919, %v8920
  %v8922 = vand.u32 %v8921, 4294901760
  %8923 = vmatmul.f32.gmra.mxu0 %v8922
  %v8924 = vpop.f32.mrf.mxu0
  %v8925 = vadd.f32 0.0, %v8924
  %v8926 = vand.u32 %v1146, 4294901760
  %v8927 = vsub.f32 %v1146, %v8926
  %v8928 = vand.u32 %v8927, 4294901760
  %v8929 = vsub.f32 %v8927, %v8928
  %v8930 = vand.u32 %v8929, 4294901760
  %8931 = vmatmul.f32.gmra.mxu0 %v8930
  %v8932 = vpop.f32.mrf.mxu0
  %v8933 = vadd.f32 0.0, %v8932
  %v8934 = vand.u32 %v1149, 4294901760
  %v8935 = vsub.f32 %v1149, %v8934
  %v8936 = vand.u32 %v8935, 4294901760
  %v8937 = vsub.f32 %v8935, %v8936
  %v8938 = vand.u32 %v8937, 4294901760
  %8939 = vmatmul.f32.gmra.mxu0 %v8938
  %v8940 = vpop.f32.mrf.mxu0
  %v8941 = vadd.f32 0.0, %v8940
  %v8942 = vand.u32 %v1152, 4294901760
  %v8943 = vsub.f32 %v1152, %v8942
  %v8944 = vand.u32 %v8943, 4294901760
  %v8945 = vsub.f32 %v8943, %v8944
  %v8946 = vand.u32 %v8945, 4294901760
  %8947 = vmatmul.f32.gmra.mxu0 %v8946
  %v8948 = vpop.f32.mrf.mxu0
  %v8949 = vadd.f32 0.0, %v8948
  %v8950 = vand.u32 %v1155, 4294901760
  %v8951 = vsub.f32 %v1155, %v8950
  %v8952 = vand.u32 %v8951, 4294901760
  %v8953 = vsub.f32 %v8951, %v8952
  %v8954 = vand.u32 %v8953, 4294901760
  %8955 = vmatmul.f32.gmra.mxu0 %v8954
  %v8956 = vpop.f32.mrf.mxu0
  %v8957 = vadd.f32 0.0, %v8956
  %v8958 = vand.u32 %v1158, 4294901760
  %v8959 = vsub.f32 %v1158, %v8958
  %v8960 = vand.u32 %v8959, 4294901760
  %v8961 = vsub.f32 %v8959, %v8960
  %v8962 = vand.u32 %v8961, 4294901760
  %8963 = vmatmul.f32.gmra.mxu0 %v8962
  %v8964 = vpop.f32.mrf.mxu0
  %v8965 = vadd.f32 0.0, %v8964
  %v8966 = vand.u32 %v1161, 4294901760
  %v8967 = vsub.f32 %v1161, %v8966
  %v8968 = vand.u32 %v8967, 4294901760
  %v8969 = vsub.f32 %v8967, %v8968
  %v8970 = vand.u32 %v8969, 4294901760
  %8971 = vmatmul.f32.gmra.mxu0 %v8970
  %v8972 = vpop.f32.mrf.mxu0
  %v8973 = vadd.f32 0.0, %v8972
  %v8974 = vand.u32 %v1164, 4294901760
  %v8975 = vsub.f32 %v1164, %v8974
  %v8976 = vand.u32 %v8975, 4294901760
  %v8977 = vsub.f32 %v8975, %v8976
  %v8978 = vand.u32 %v8977, 4294901760
  %8979 = vmatmul.f32.gmra.mxu0 %v8978
  %v8980 = vpop.f32.mrf.mxu0
  %v8981 = vadd.f32 0.0, %v8980
  %v8982 = vand.u32 %v1167, 4294901760
  %v8983 = vsub.f32 %v1167, %v8982
  %v8984 = vand.u32 %v8983, 4294901760
  %v8985 = vsub.f32 %v8983, %v8984
  %v8986 = vand.u32 %v8985, 4294901760
  %8987 = vmatmul.f32.gmra.mxu0 %v8986
  %v8988 = vpop.f32.mrf.mxu0
  %v8989 = vadd.f32 0.0, %v8988
  %8990 = vdwg.mxu0
  %8991 = vmatpush.msra.mxu0 0.0
  %8992 = vmatpush.msra.mxu0 0.0
  %8993 = vmatpush.msra.mxu0 0.0
  %8994 = vmatpush.msra.mxu0 0.0
  %8995 = vmatpush.msra.mxu0 0.0
  %8996 = vmatpush.msra.mxu0 0.0
  %8997 = vmatpush.msra.mxu0 0.0
  %8998 = vmatpush.msra.mxu0 0.0
  %8999 = vmatpush.msra.mxu0 0.0
  %9000 = vmatpush.msra.mxu0 0.0
  %9001 = vmatpush.msra.mxu0 0.0
  %9002 = vmatpush.msra.mxu0 0.0
  %9003 = vmatpush.msra.mxu0 0.0
  %v9004 = vand.u32 %v8889, 4294901760
  %v9005 = vsub.f32 %v8889, %v9004
  %v9006 = vand.u32 %v9005, 4294901760
  %v9007 = vsub.f32 %v9005, %v9006
  %v9008 = vand.u32 %v9007, 4294901760
  %9009 = vmatpush.msra.mxu0 %v9008
  %v9010 = vand.u32 %v8886, 4294901760
  %v9011 = vsub.f32 %v8886, %v9010
  %v9012 = vand.u32 %v9011, 4294901760
  %v9013 = vsub.f32 %v9011, %v9012
  %v9014 = vand.u32 %v9013, 4294901760
  %9015 = vmatpush.msra.mxu0 %v9014
  %v9016 = vand.u32 %v8885, 4294901760
  %v9017 = vsub.f32 %v8885, %v9016
  %v9018 = vand.u32 %v9017, 4294901760
  %v9019 = vsub.f32 %v9017, %v9018
  %v9020 = vand.u32 %v9019, 4294901760
  %9021 = vmatpush.msra.mxu0 %v9020
  %v9022 = vand.u32 %v1140, 4294901760
  %9023 = vmatmul.f32.gmra.mxu0 %v9022
  %v9024 = vpop.f32.mrf.mxu0
  %v9025 = vadd.f32 %v8917, %v9024
  %v9026 = vand.u32 %v1143, 4294901760
  %9027 = vmatmul.f32.gmra.mxu0 %v9026
  %v9028 = vpop.f32.mrf.mxu0
  %v9029 = vadd.f32 %v8925, %v9028
  %v9030 = vand.u32 %v1146, 4294901760
  %9031 = vmatmul.f32.gmra.mxu0 %v9030
  %v9032 = vpop.f32.mrf.mxu0
  %v9033 = vadd.f32 %v8933, %v9032
  %v9034 = vand.u32 %v1149, 4294901760
  %9035 = vmatmul.f32.gmra.mxu0 %v9034
  %v9036 = vpop.f32.mrf.mxu0
  %v9037 = vadd.f32 %v8941, %v9036
  %v9038 = vand.u32 %v1152, 4294901760
  %9039 = vmatmul.f32.gmra.mxu0 %v9038
  %v9040 = vpop.f32.mrf.mxu0
  %v9041 = vadd.f32 %v8949, %v9040
  %v9042 = vand.u32 %v1155, 4294901760
  %9043 = vmatmul.f32.gmra.mxu0 %v9042
  %v9044 = vpop.f32.mrf.mxu0
  %v9045 = vadd.f32 %v8957, %v9044
  %v9046 = vand.u32 %v1158, 4294901760
  %9047 = vmatmul.f32.gmra.mxu0 %v9046
  %v9048 = vpop.f32.mrf.mxu0
  %v9049 = vadd.f32 %v8965, %v9048
  %v9050 = vand.u32 %v1161, 4294901760
  %9051 = vmatmul.f32.gmra.mxu0 %v9050
  %v9052 = vpop.f32.mrf.mxu0
  %v9053 = vadd.f32 %v8973, %v9052
  %v9054 = vand.u32 %v1164, 4294901760
  %9055 = vmatmul.f32.gmra.mxu0 %v9054
  %v9056 = vpop.f32.mrf.mxu0
  %v9057 = vadd.f32 %v8981, %v9056
  %v9058 = vand.u32 %v1167, 4294901760
  %9059 = vmatmul.f32.gmra.mxu0 %v9058
  %v9060 = vpop.f32.mrf.mxu0
  %v9061 = vadd.f32 %v8989, %v9060
  %9062 = vdwg.mxu0
  %9063 = vmatpush.msra.mxu0 0.0
  %9064 = vmatpush.msra.mxu0 0.0
  %9065 = vmatpush.msra.mxu0 0.0
  %9066 = vmatpush.msra.mxu0 0.0
  %9067 = vmatpush.msra.mxu0 0.0
  %9068 = vmatpush.msra.mxu0 0.0
  %9069 = vmatpush.msra.mxu0 0.0
  %9070 = vmatpush.msra.mxu0 0.0
  %9071 = vmatpush.msra.mxu0 0.0
  %9072 = vmatpush.msra.mxu0 0.0
  %9073 = vmatpush.msra.mxu0 0.0
  %9074 = vmatpush.msra.mxu0 0.0
  %9075 = vmatpush.msra.mxu0 0.0
  %v9076 = vand.u32 %v8889, 4294901760
  %v9077 = vsub.f32 %v8889, %v9076
  %9078 = vmatpush.msra.mxu0 %v9077
  %v9079 = vand.u32 %v8886, 4294901760
  %v9080 = vsub.f32 %v8886, %v9079
  %9081 = vmatpush.msra.mxu0 %v9080
  %v9082 = vand.u32 %v8885, 4294901760
  %v9083 = vsub.f32 %v8885, %v9082
  %9084 = vmatpush.msra.mxu0 %v9083
  %v9085 = vand.u32 %v1140, 4294901760
  %v9086 = vsub.f32 %v1140, %v9085
  %9087 = vmatmul.f32.gmra.mxu0 %v9086
  %v9088 = vpop.f32.mrf.mxu0
  %v9089 = vadd.f32 %v9025, %v9088
  %v9090 = vand.u32 %v1143, 4294901760
  %v9091 = vsub.f32 %v1143, %v9090
  %9092 = vmatmul.f32.gmra.mxu0 %v9091
  %v9093 = vpop.f32.mrf.mxu0
  %v9094 = vadd.f32 %v9029, %v9093
  %v9095 = vand.u32 %v1146, 4294901760
  %v9096 = vsub.f32 %v1146, %v9095
  %9097 = vmatmul.f32.gmra.mxu0 %v9096
  %v9098 = vpop.f32.mrf.mxu0
  %v9099 = vadd.f32 %v9033, %v9098
  %v9100 = vand.u32 %v1149, 4294901760
  %v9101 = vsub.f32 %v1149, %v9100
  %9102 = vmatmul.f32.gmra.mxu0 %v9101
  %v9103 = vpop.f32.mrf.mxu0
  %v9104 = vadd.f32 %v9037, %v9103
  %v9105 = vand.u32 %v1152, 4294901760
  %v9106 = vsub.f32 %v1152, %v9105
  %9107 = vmatmul.f32.gmra.mxu0 %v9106
  %v9108 = vpop.f32.mrf.mxu0
  %v9109 = vadd.f32 %v9041, %v9108
  %v9110 = vand.u32 %v1155, 4294901760
  %v9111 = vsub.f32 %v1155, %v9110
  %9112 = vmatmul.f32.gmra.mxu0 %v9111
  %v9113 = vpop.f32.mrf.mxu0
  %v9114 = vadd.f32 %v9045, %v9113
  %v9115 = vand.u32 %v1158, 4294901760
  %v9116 = vsub.f32 %v1158, %v9115
  %9117 = vmatmul.f32.gmra.mxu0 %v9116
  %v9118 = vpop.f32.mrf.mxu0
  %v9119 = vadd.f32 %v9049, %v9118
  %v9120 = vand.u32 %v1161, 4294901760
  %v9121 = vsub.f32 %v1161, %v9120
  %9122 = vmatmul.f32.gmra.mxu0 %v9121
  %v9123 = vpop.f32.mrf.mxu0
  %v9124 = vadd.f32 %v9053, %v9123
  %v9125 = vand.u32 %v1164, 4294901760
  %v9126 = vsub.f32 %v1164, %v9125
  %9127 = vmatmul.f32.gmra.mxu0 %v9126
  %v9128 = vpop.f32.mrf.mxu0
  %v9129 = vadd.f32 %v9057, %v9128
  %v9130 = vand.u32 %v1167, 4294901760
  %v9131 = vsub.f32 %v1167, %v9130
  %9132 = vmatmul.f32.gmra.mxu0 %v9131
  %v9133 = vpop.f32.mrf.mxu0
  %v9134 = vadd.f32 %v9061, %v9133
  %9135 = vdwg.mxu0
  %9136 = vmatpush.msra.mxu0 0.0
  %9137 = vmatpush.msra.mxu0 0.0
  %9138 = vmatpush.msra.mxu0 0.0
  %9139 = vmatpush.msra.mxu0 0.0
  %9140 = vmatpush.msra.mxu0 0.0
  %9141 = vmatpush.msra.mxu0 0.0
  %9142 = vmatpush.msra.mxu0 0.0
  %9143 = vmatpush.msra.mxu0 0.0
  %9144 = vmatpush.msra.mxu0 0.0
  %9145 = vmatpush.msra.mxu0 0.0
  %9146 = vmatpush.msra.mxu0 0.0
  %9147 = vmatpush.msra.mxu0 0.0
  %9148 = vmatpush.msra.mxu0 0.0
  %v9149 = vand.u32 %v8889, 4294901760
  %9150 = vmatpush.msra.mxu0 %v9149
  %v9151 = vand.u32 %v8886, 4294901760
  %9152 = vmatpush.msra.mxu0 %v9151
  %v9153 = vand.u32 %v8885, 4294901760
  %9154 = vmatpush.msra.mxu0 %v9153
  %v9155 = vand.u32 %v1140, 4294901760
  %v9156 = vsub.f32 %v1140, %v9155
  %v9157 = vand.u32 %v9156, 4294901760
  %9158 = vmatmul.f32.gmra.mxu0 %v9157
  %v9159 = vpop.f32.mrf.mxu0
  %v9160 = vadd.f32 %v9089, %v9159
  %v9161 = vand.u32 %v1143, 4294901760
  %v9162 = vsub.f32 %v1143, %v9161
  %v9163 = vand.u32 %v9162, 4294901760
  %9164 = vmatmul.f32.gmra.mxu0 %v9163
  %v9165 = vpop.f32.mrf.mxu0
  %v9166 = vadd.f32 %v9094, %v9165
  %v9167 = vand.u32 %v1146, 4294901760
  %v9168 = vsub.f32 %v1146, %v9167
  %v9169 = vand.u32 %v9168, 4294901760
  %9170 = vmatmul.f32.gmra.mxu0 %v9169
  %v9171 = vpop.f32.mrf.mxu0
  %v9172 = vadd.f32 %v9099, %v9171
  %v9173 = vand.u32 %v1149, 4294901760
  %v9174 = vsub.f32 %v1149, %v9173
  %v9175 = vand.u32 %v9174, 4294901760
  %9176 = vmatmul.f32.gmra.mxu0 %v9175
  %v9177 = vpop.f32.mrf.mxu0
  %v9178 = vadd.f32 %v9104, %v9177
  %v9179 = vand.u32 %v1152, 4294901760
  %v9180 = vsub.f32 %v1152, %v9179
  %v9181 = vand.u32 %v9180, 4294901760
  %9182 = vmatmul.f32.gmra.mxu0 %v9181
  %v9183 = vpop.f32.mrf.mxu0
  %v9184 = vadd.f32 %v9109, %v9183
  %v9185 = vand.u32 %v1155, 4294901760
  %v9186 = vsub.f32 %v1155, %v9185
  %v9187 = vand.u32 %v9186, 4294901760
  %9188 = vmatmul.f32.gmra.mxu0 %v9187
  %v9189 = vpop.f32.mrf.mxu0
  %v9190 = vadd.f32 %v9114, %v9189
  %v9191 = vand.u32 %v1158, 4294901760
  %v9192 = vsub.f32 %v1158, %v9191
  %v9193 = vand.u32 %v9192, 4294901760
  %9194 = vmatmul.f32.gmra.mxu0 %v9193
  %v9195 = vpop.f32.mrf.mxu0
  %v9196 = vadd.f32 %v9119, %v9195
  %v9197 = vand.u32 %v1161, 4294901760
  %v9198 = vsub.f32 %v1161, %v9197
  %v9199 = vand.u32 %v9198, 4294901760
  %9200 = vmatmul.f32.gmra.mxu0 %v9199
  %v9201 = vpop.f32.mrf.mxu0
  %v9202 = vadd.f32 %v9124, %v9201
  %v9203 = vand.u32 %v1164, 4294901760
  %v9204 = vsub.f32 %v1164, %v9203
  %v9205 = vand.u32 %v9204, 4294901760
  %9206 = vmatmul.f32.gmra.mxu0 %v9205
  %v9207 = vpop.f32.mrf.mxu0
  %v9208 = vadd.f32 %v9129, %v9207
  %v9209 = vand.u32 %v1167, 4294901760
  %v9210 = vsub.f32 %v1167, %v9209
  %v9211 = vand.u32 %v9210, 4294901760
  %9212 = vmatmul.f32.gmra.mxu0 %v9211
  %v9213 = vpop.f32.mrf.mxu0
  %v9214 = vadd.f32 %v9134, %v9213
  %9215 = vdwg.mxu0
  %9216 = vmatpush.msra.mxu0 0.0
  %9217 = vmatpush.msra.mxu0 0.0
  %9218 = vmatpush.msra.mxu0 0.0
  %9219 = vmatpush.msra.mxu0 0.0
  %9220 = vmatpush.msra.mxu0 0.0
  %9221 = vmatpush.msra.mxu0 0.0
  %9222 = vmatpush.msra.mxu0 0.0
  %9223 = vmatpush.msra.mxu0 0.0
  %9224 = vmatpush.msra.mxu0 0.0
  %9225 = vmatpush.msra.mxu0 0.0
  %9226 = vmatpush.msra.mxu0 0.0
  %9227 = vmatpush.msra.mxu0 0.0
  %9228 = vmatpush.msra.mxu0 0.0
  %v9229 = vand.u32 %v8889, 4294901760
  %v9230 = vsub.f32 %v8889, %v9229
  %v9231 = vand.u32 %v9230, 4294901760
  %9232 = vmatpush.msra.mxu0 %v9231
  %v9233 = vand.u32 %v8886, 4294901760
  %v9234 = vsub.f32 %v8886, %v9233
  %v9235 = vand.u32 %v9234, 4294901760
  %9236 = vmatpush.msra.mxu0 %v9235
  %v9237 = vand.u32 %v8885, 4294901760
  %v9238 = vsub.f32 %v8885, %v9237
  %v9239 = vand.u32 %v9238, 4294901760
  %9240 = vmatpush.msra.mxu0 %v9239
  %v9241 = vand.u32 %v1140, 4294901760
  %9242 = vmatmul.f32.gmra.mxu0 %v9241
  %v9243 = vpop.f32.mrf.mxu0
  %v9244 = vadd.f32 %v9160, %v9243
  %v9245 = vand.u32 %v1143, 4294901760
  %9246 = vmatmul.f32.gmra.mxu0 %v9245
  %v9247 = vpop.f32.mrf.mxu0
  %v9248 = vadd.f32 %v9166, %v9247
  %v9249 = vand.u32 %v1146, 4294901760
  %9250 = vmatmul.f32.gmra.mxu0 %v9249
  %v9251 = vpop.f32.mrf.mxu0
  %v9252 = vadd.f32 %v9172, %v9251
  %v9253 = vand.u32 %v1149, 4294901760
  %9254 = vmatmul.f32.gmra.mxu0 %v9253
  %v9255 = vpop.f32.mrf.mxu0
  %v9256 = vadd.f32 %v9178, %v9255
  %v9257 = vand.u32 %v1152, 4294901760
  %9258 = vmatmul.f32.gmra.mxu0 %v9257
  %v9259 = vpop.f32.mrf.mxu0
  %v9260 = vadd.f32 %v9184, %v9259
  %v9261 = vand.u32 %v1155, 4294901760
  %9262 = vmatmul.f32.gmra.mxu0 %v9261
  %v9263 = vpop.f32.mrf.mxu0
  %v9264 = vadd.f32 %v9190, %v9263
  %v9265 = vand.u32 %v1158, 4294901760
  %9266 = vmatmul.f32.gmra.mxu0 %v9265
  %v9267 = vpop.f32.mrf.mxu0
  %v9268 = vadd.f32 %v9196, %v9267
  %v9269 = vand.u32 %v1161, 4294901760
  %9270 = vmatmul.f32.gmra.mxu0 %v9269
  %v9271 = vpop.f32.mrf.mxu0
  %v9272 = vadd.f32 %v9202, %v9271
  %v9273 = vand.u32 %v1164, 4294901760
  %9274 = vmatmul.f32.gmra.mxu0 %v9273
  %v9275 = vpop.f32.mrf.mxu0
  %v9276 = vadd.f32 %v9208, %v9275
  %v9277 = vand.u32 %v1167, 4294901760
  %9278 = vmatmul.f32.gmra.mxu0 %v9277
  %v9279 = vpop.f32.mrf.mxu0
  %v9280 = vadd.f32 %v9214, %v9279
  %9281 = vdwg.mxu0
  %9282 = vmatpush.msra.mxu0 0.0
  %9283 = vmatpush.msra.mxu0 0.0
  %9284 = vmatpush.msra.mxu0 0.0
  %9285 = vmatpush.msra.mxu0 0.0
  %9286 = vmatpush.msra.mxu0 0.0
  %9287 = vmatpush.msra.mxu0 0.0
  %9288 = vmatpush.msra.mxu0 0.0
  %9289 = vmatpush.msra.mxu0 0.0
  %9290 = vmatpush.msra.mxu0 0.0
  %9291 = vmatpush.msra.mxu0 0.0
  %9292 = vmatpush.msra.mxu0 0.0
  %9293 = vmatpush.msra.mxu0 0.0
  %9294 = vmatpush.msra.mxu0 0.0
  %v9295 = vand.u32 %v8889, 4294901760
  %9296 = vmatpush.msra.mxu0 %v9295
  %v9297 = vand.u32 %v8886, 4294901760
  %9298 = vmatpush.msra.mxu0 %v9297
  %v9299 = vand.u32 %v8885, 4294901760
  %9300 = vmatpush.msra.mxu0 %v9299
  %v9301 = vand.u32 %v1140, 4294901760
  %9302 = vmatmul.f32.gmra.mxu0 %v9301
  %v9303 = vpop.f32.mrf.mxu0
  %v9304 = vadd.f32 %v9244, %v9303
  %v9305 = vand.u32 %v1143, 4294901760
  %9306 = vmatmul.f32.gmra.mxu0 %v9305
  %v9307 = vpop.f32.mrf.mxu0
  %v9308 = vadd.f32 %v9248, %v9307
  %v9309 = vand.u32 %v1146, 4294901760
  %9310 = vmatmul.f32.gmra.mxu0 %v9309
  %v9311 = vpop.f32.mrf.mxu0
  %v9312 = vadd.f32 %v9252, %v9311
  %v9313 = vand.u32 %v1149, 4294901760
  %9314 = vmatmul.f32.gmra.mxu0 %v9313
  %v9315 = vpop.f32.mrf.mxu0
  %v9316 = vadd.f32 %v9256, %v9315
  %v9317 = vand.u32 %v1152, 4294901760
  %9318 = vmatmul.f32.gmra.mxu0 %v9317
  %v9319 = vpop.f32.mrf.mxu0
  %v9320 = vadd.f32 %v9260, %v9319
  %v9321 = vand.u32 %v1155, 4294901760
  %9322 = vmatmul.f32.gmra.mxu0 %v9321
  %v9323 = vpop.f32.mrf.mxu0
  %v9324 = vadd.f32 %v9264, %v9323
  %v9325 = vand.u32 %v1158, 4294901760
  %9326 = vmatmul.f32.gmra.mxu0 %v9325
  %v9327 = vpop.f32.mrf.mxu0
  %v9328 = vadd.f32 %v9268, %v9327
  %v9329 = vand.u32 %v1161, 4294901760
  %9330 = vmatmul.f32.gmra.mxu0 %v9329
  %v9331 = vpop.f32.mrf.mxu0
  %v9332 = vadd.f32 %v9272, %v9331
  %v9333 = vand.u32 %v1164, 4294901760
  %9334 = vmatmul.f32.gmra.mxu0 %v9333
  %v9335 = vpop.f32.mrf.mxu0
  %v9336 = vadd.f32 %v9276, %v9335
  %v9337 = vand.u32 %v1167, 4294901760
  %9338 = vmatmul.f32.gmra.mxu0 %v9337
  %v9339 = vpop.f32.mrf.mxu0
  %v9340 = vadd.f32 %v9280, %v9339
  %9341 = vdwg.mxu0
  %v9343 = vsel %vm2206, %v7723, 0
  %v9346 = vsel %vm2206, %v7724, 0
  %v9349 = vsel %vm2206, %v7725, 0
  %v9352 = vsel %vm2206, %v7726, 0
  %v9355 = vsel %vm2206, %v7727, 0
  %v9358 = vsel %vm2206, %v7728, 0
  %v9361 = vsel %vm2206, %v7729, 0
  %v9364 = vsel %vm2206, %v7730, 0
  %v9367 = vsel %vm2206, %v7731, 0
  %v9370 = vsel %vm2206, %v7732, 0
  %9372 = vmatpush.msra.mxu0 0.0
  %9373 = vmatpush.msra.mxu0 0.0
  %9374 = vmatpush.msra.mxu0 0.0
  %9375 = vmatpush.msra.mxu0 0.0
  %9376 = vmatpush.msra.mxu0 0.0
  %9377 = vmatpush.msra.mxu0 0.0
  %9378 = vmatpush.msra.mxu0 0.0
  %9379 = vmatpush.msra.mxu0 0.0
  %9380 = vmatpush.msra.mxu0 0.0
  %9381 = vmatpush.msra.mxu0 0.0
  %9382 = vmatpush.msra.mxu0 0.0
  %9383 = vmatpush.msra.mxu0 0.0
  %9384 = vmatpush.msra.mxu0 0.0
  %9385 = vmatpush.msra.mxu0 0.0
  %v9386 = vand.u32 %v20, 4294901760
  %9387 = vmatpush.msra.mxu0 %v9386
  %v9388 = vand.u32 %v19, 4294901760
  %9389 = vmatpush.msra.mxu0 %v9388
  %v9390 = vand.u32 %v9343, 4294901760
  %v9391 = vsub.f32 %v9343, %v9390
  %v9392 = vand.u32 %v9391, 4294901760
  %v9393 = vsub.f32 %v9391, %v9392
  %v9394 = vand.u32 %v9393, 4294901760
  %9395 = vmatmul.f32.gmra.mxu0 %v9394
  %v9396 = vpop.f32.mrf.mxu0
  %v9397 = vadd.f32 %v9304, %v9396
  %v9398 = vand.u32 %v9346, 4294901760
  %v9399 = vsub.f32 %v9346, %v9398
  %v9400 = vand.u32 %v9399, 4294901760
  %v9401 = vsub.f32 %v9399, %v9400
  %v9402 = vand.u32 %v9401, 4294901760
  %9403 = vmatmul.f32.gmra.mxu0 %v9402
  %v9404 = vpop.f32.mrf.mxu0
  %v9405 = vadd.f32 %v9308, %v9404
  %v9406 = vand.u32 %v9349, 4294901760
  %v9407 = vsub.f32 %v9349, %v9406
  %v9408 = vand.u32 %v9407, 4294901760
  %v9409 = vsub.f32 %v9407, %v9408
  %v9410 = vand.u32 %v9409, 4294901760
  %9411 = vmatmul.f32.gmra.mxu0 %v9410
  %v9412 = vpop.f32.mrf.mxu0
  %v9413 = vadd.f32 %v9312, %v9412
  %v9414 = vand.u32 %v9352, 4294901760
  %v9415 = vsub.f32 %v9352, %v9414
  %v9416 = vand.u32 %v9415, 4294901760
  %v9417 = vsub.f32 %v9415, %v9416
  %v9418 = vand.u32 %v9417, 4294901760
  %9419 = vmatmul.f32.gmra.mxu0 %v9418
  %v9420 = vpop.f32.mrf.mxu0
  %v9421 = vadd.f32 %v9316, %v9420
  %v9422 = vand.u32 %v9355, 4294901760
  %v9423 = vsub.f32 %v9355, %v9422
  %v9424 = vand.u32 %v9423, 4294901760
  %v9425 = vsub.f32 %v9423, %v9424
  %v9426 = vand.u32 %v9425, 4294901760
  %9427 = vmatmul.f32.gmra.mxu0 %v9426
  %v9428 = vpop.f32.mrf.mxu0
  %v9429 = vadd.f32 %v9320, %v9428
  %v9430 = vand.u32 %v9358, 4294901760
  %v9431 = vsub.f32 %v9358, %v9430
  %v9432 = vand.u32 %v9431, 4294901760
  %v9433 = vsub.f32 %v9431, %v9432
  %v9434 = vand.u32 %v9433, 4294901760
  %9435 = vmatmul.f32.gmra.mxu0 %v9434
  %v9436 = vpop.f32.mrf.mxu0
  %v9437 = vadd.f32 %v9324, %v9436
  %v9438 = vand.u32 %v9361, 4294901760
  %v9439 = vsub.f32 %v9361, %v9438
  %v9440 = vand.u32 %v9439, 4294901760
  %v9441 = vsub.f32 %v9439, %v9440
  %v9442 = vand.u32 %v9441, 4294901760
  %9443 = vmatmul.f32.gmra.mxu0 %v9442
  %v9444 = vpop.f32.mrf.mxu0
  %v9445 = vadd.f32 %v9328, %v9444
  %v9446 = vand.u32 %v9364, 4294901760
  %v9447 = vsub.f32 %v9364, %v9446
  %v9448 = vand.u32 %v9447, 4294901760
  %v9449 = vsub.f32 %v9447, %v9448
  %v9450 = vand.u32 %v9449, 4294901760
  %9451 = vmatmul.f32.gmra.mxu0 %v9450
  %v9452 = vpop.f32.mrf.mxu0
  %v9453 = vadd.f32 %v9332, %v9452
  %v9454 = vand.u32 %v9367, 4294901760
  %v9455 = vsub.f32 %v9367, %v9454
  %v9456 = vand.u32 %v9455, 4294901760
  %v9457 = vsub.f32 %v9455, %v9456
  %v9458 = vand.u32 %v9457, 4294901760
  %9459 = vmatmul.f32.gmra.mxu0 %v9458
  %v9460 = vpop.f32.mrf.mxu0
  %v9461 = vadd.f32 %v9336, %v9460
  %v9462 = vand.u32 %v9370, 4294901760
  %v9463 = vsub.f32 %v9370, %v9462
  %v9464 = vand.u32 %v9463, 4294901760
  %v9465 = vsub.f32 %v9463, %v9464
  %v9466 = vand.u32 %v9465, 4294901760
  %9467 = vmatmul.f32.gmra.mxu0 %v9466
  %v9468 = vpop.f32.mrf.mxu0
  %v9469 = vadd.f32 %v9340, %v9468
  %9470 = vdwg.mxu0
  %9471 = vmatpush.msra.mxu0 0.0
  %9472 = vmatpush.msra.mxu0 0.0
  %9473 = vmatpush.msra.mxu0 0.0
  %9474 = vmatpush.msra.mxu0 0.0
  %9475 = vmatpush.msra.mxu0 0.0
  %9476 = vmatpush.msra.mxu0 0.0
  %9477 = vmatpush.msra.mxu0 0.0
  %9478 = vmatpush.msra.mxu0 0.0
  %9479 = vmatpush.msra.mxu0 0.0
  %9480 = vmatpush.msra.mxu0 0.0
  %9481 = vmatpush.msra.mxu0 0.0
  %9482 = vmatpush.msra.mxu0 0.0
  %9483 = vmatpush.msra.mxu0 0.0
  %9484 = vmatpush.msra.mxu0 0.0
  %v9485 = vand.u32 %v20, 4294901760
  %v9486 = vsub.f32 %v20, %v9485
  %v9487 = vand.u32 %v9486, 4294901760
  %v9488 = vsub.f32 %v9486, %v9487
  %v9489 = vand.u32 %v9488, 4294901760
  %9490 = vmatpush.msra.mxu0 %v9489
  %v9491 = vand.u32 %v19, 4294901760
  %v9492 = vsub.f32 %v19, %v9491
  %v9493 = vand.u32 %v9492, 4294901760
  %v9494 = vsub.f32 %v9492, %v9493
  %v9495 = vand.u32 %v9494, 4294901760
  %9496 = vmatpush.msra.mxu0 %v9495
  %v9497 = vand.u32 %v9343, 4294901760
  %9498 = vmatmul.f32.gmra.mxu0 %v9497
  %v9499 = vpop.f32.mrf.mxu0
  %v9500 = vadd.f32 %v9397, %v9499
  %v9501 = vand.u32 %v9346, 4294901760
  %9502 = vmatmul.f32.gmra.mxu0 %v9501
  %v9503 = vpop.f32.mrf.mxu0
  %v9504 = vadd.f32 %v9405, %v9503
  %v9505 = vand.u32 %v9349, 4294901760
  %9506 = vmatmul.f32.gmra.mxu0 %v9505
  %v9507 = vpop.f32.mrf.mxu0
  %v9508 = vadd.f32 %v9413, %v9507
  %v9509 = vand.u32 %v9352, 4294901760
  %9510 = vmatmul.f32.gmra.mxu0 %v9509
  %v9511 = vpop.f32.mrf.mxu0
  %v9512 = vadd.f32 %v9421, %v9511
  %v9513 = vand.u32 %v9355, 4294901760
  %9514 = vmatmul.f32.gmra.mxu0 %v9513
  %v9515 = vpop.f32.mrf.mxu0
  %v9516 = vadd.f32 %v9429, %v9515
  %v9517 = vand.u32 %v9358, 4294901760
  %9518 = vmatmul.f32.gmra.mxu0 %v9517
  %v9519 = vpop.f32.mrf.mxu0
  %v9520 = vadd.f32 %v9437, %v9519
  %v9521 = vand.u32 %v9361, 4294901760
  %9522 = vmatmul.f32.gmra.mxu0 %v9521
  %v9523 = vpop.f32.mrf.mxu0
  %v9524 = vadd.f32 %v9445, %v9523
  %v9525 = vand.u32 %v9364, 4294901760
  %9526 = vmatmul.f32.gmra.mxu0 %v9525
  %v9527 = vpop.f32.mrf.mxu0
  %v9528 = vadd.f32 %v9453, %v9527
  %v9529 = vand.u32 %v9367, 4294901760
  %9530 = vmatmul.f32.gmra.mxu0 %v9529
  %v9531 = vpop.f32.mrf.mxu0
  %v9532 = vadd.f32 %v9461, %v9531
  %v9533 = vand.u32 %v9370, 4294901760
  %9534 = vmatmul.f32.gmra.mxu0 %v9533
  %v9535 = vpop.f32.mrf.mxu0
  %v9536 = vadd.f32 %v9469, %v9535
  %9537 = vdwg.mxu0
  %9538 = vmatpush.msra.mxu0 0.0
  %9539 = vmatpush.msra.mxu0 0.0
  %9540 = vmatpush.msra.mxu0 0.0
  %9541 = vmatpush.msra.mxu0 0.0
  %9542 = vmatpush.msra.mxu0 0.0
  %9543 = vmatpush.msra.mxu0 0.0
  %9544 = vmatpush.msra.mxu0 0.0
  %9545 = vmatpush.msra.mxu0 0.0
  %9546 = vmatpush.msra.mxu0 0.0
  %9547 = vmatpush.msra.mxu0 0.0
  %9548 = vmatpush.msra.mxu0 0.0
  %9549 = vmatpush.msra.mxu0 0.0
  %9550 = vmatpush.msra.mxu0 0.0
  %9551 = vmatpush.msra.mxu0 0.0
  %v9552 = vand.u32 %v20, 4294901760
  %v9553 = vsub.f32 %v20, %v9552
  %9554 = vmatpush.msra.mxu0 %v9553
  %v9555 = vand.u32 %v19, 4294901760
  %v9556 = vsub.f32 %v19, %v9555
  %9557 = vmatpush.msra.mxu0 %v9556
  %v9558 = vand.u32 %v9343, 4294901760
  %v9559 = vsub.f32 %v9343, %v9558
  %9560 = vmatmul.f32.gmra.mxu0 %v9559
  %v9561 = vpop.f32.mrf.mxu0
  %v9562 = vadd.f32 %v9500, %v9561
  %v9563 = vand.u32 %v9346, 4294901760
  %v9564 = vsub.f32 %v9346, %v9563
  %9565 = vmatmul.f32.gmra.mxu0 %v9564
  %v9566 = vpop.f32.mrf.mxu0
  %v9567 = vadd.f32 %v9504, %v9566
  %v9568 = vand.u32 %v9349, 4294901760
  %v9569 = vsub.f32 %v9349, %v9568
  %9570 = vmatmul.f32.gmra.mxu0 %v9569
  %v9571 = vpop.f32.mrf.mxu0
  %v9572 = vadd.f32 %v9508, %v9571
  %v9573 = vand.u32 %v9352, 4294901760
  %v9574 = vsub.f32 %v9352, %v9573
  %9575 = vmatmul.f32.gmra.mxu0 %v9574
  %v9576 = vpop.f32.mrf.mxu0
  %v9577 = vadd.f32 %v9512, %v9576
  %v9578 = vand.u32 %v9355, 4294901760
  %v9579 = vsub.f32 %v9355, %v9578
  %9580 = vmatmul.f32.gmra.mxu0 %v9579
  %v9581 = vpop.f32.mrf.mxu0
  %v9582 = vadd.f32 %v9516, %v9581
  %v9583 = vand.u32 %v9358, 4294901760
  %v9584 = vsub.f32 %v9358, %v9583
  %9585 = vmatmul.f32.gmra.mxu0 %v9584
  %v9586 = vpop.f32.mrf.mxu0
  %v9587 = vadd.f32 %v9520, %v9586
  %v9588 = vand.u32 %v9361, 4294901760
  %v9589 = vsub.f32 %v9361, %v9588
  %9590 = vmatmul.f32.gmra.mxu0 %v9589
  %v9591 = vpop.f32.mrf.mxu0
  %v9592 = vadd.f32 %v9524, %v9591
  %v9593 = vand.u32 %v9364, 4294901760
  %v9594 = vsub.f32 %v9364, %v9593
  %9595 = vmatmul.f32.gmra.mxu0 %v9594
  %v9596 = vpop.f32.mrf.mxu0
  %v9597 = vadd.f32 %v9528, %v9596
  %v9598 = vand.u32 %v9367, 4294901760
  %v9599 = vsub.f32 %v9367, %v9598
  %9600 = vmatmul.f32.gmra.mxu0 %v9599
  %v9601 = vpop.f32.mrf.mxu0
  %v9602 = vadd.f32 %v9532, %v9601
  %v9603 = vand.u32 %v9370, 4294901760
  %v9604 = vsub.f32 %v9370, %v9603
  %9605 = vmatmul.f32.gmra.mxu0 %v9604
  %v9606 = vpop.f32.mrf.mxu0
  %v9607 = vadd.f32 %v9536, %v9606
  %9608 = vdwg.mxu0
  %9609 = vmatpush.msra.mxu0 0.0
  %9610 = vmatpush.msra.mxu0 0.0
  %9611 = vmatpush.msra.mxu0 0.0
  %9612 = vmatpush.msra.mxu0 0.0
  %9613 = vmatpush.msra.mxu0 0.0
  %9614 = vmatpush.msra.mxu0 0.0
  %9615 = vmatpush.msra.mxu0 0.0
  %9616 = vmatpush.msra.mxu0 0.0
  %9617 = vmatpush.msra.mxu0 0.0
  %9618 = vmatpush.msra.mxu0 0.0
  %9619 = vmatpush.msra.mxu0 0.0
  %9620 = vmatpush.msra.mxu0 0.0
  %9621 = vmatpush.msra.mxu0 0.0
  %9622 = vmatpush.msra.mxu0 0.0
  %v9623 = vand.u32 %v20, 4294901760
  %9624 = vmatpush.msra.mxu0 %v9623
  %v9625 = vand.u32 %v19, 4294901760
  %9626 = vmatpush.msra.mxu0 %v9625
  %v9627 = vand.u32 %v9343, 4294901760
  %v9628 = vsub.f32 %v9343, %v9627
  %v9629 = vand.u32 %v9628, 4294901760
  %9630 = vmatmul.f32.gmra.mxu0 %v9629
  %v9631 = vpop.f32.mrf.mxu0
  %v9632 = vadd.f32 %v9562, %v9631
  %v9633 = vand.u32 %v9346, 4294901760
  %v9634 = vsub.f32 %v9346, %v9633
  %v9635 = vand.u32 %v9634, 4294901760
  %9636 = vmatmul.f32.gmra.mxu0 %v9635
  %v9637 = vpop.f32.mrf.mxu0
  %v9638 = vadd.f32 %v9567, %v9637
  %v9639 = vand.u32 %v9349, 4294901760
  %v9640 = vsub.f32 %v9349, %v9639
  %v9641 = vand.u32 %v9640, 4294901760
  %9642 = vmatmul.f32.gmra.mxu0 %v9641
  %v9643 = vpop.f32.mrf.mxu0
  %v9644 = vadd.f32 %v9572, %v9643
  %v9645 = vand.u32 %v9352, 4294901760
  %v9646 = vsub.f32 %v9352, %v9645
  %v9647 = vand.u32 %v9646, 4294901760
  %9648 = vmatmul.f32.gmra.mxu0 %v9647
  %v9649 = vpop.f32.mrf.mxu0
  %v9650 = vadd.f32 %v9577, %v9649
  %v9651 = vand.u32 %v9355, 4294901760
  %v9652 = vsub.f32 %v9355, %v9651
  %v9653 = vand.u32 %v9652, 4294901760
  %9654 = vmatmul.f32.gmra.mxu0 %v9653
  %v9655 = vpop.f32.mrf.mxu0
  %v9656 = vadd.f32 %v9582, %v9655
  %v9657 = vand.u32 %v9358, 4294901760
  %v9658 = vsub.f32 %v9358, %v9657
  %v9659 = vand.u32 %v9658, 4294901760
  %9660 = vmatmul.f32.gmra.mxu0 %v9659
  %v9661 = vpop.f32.mrf.mxu0
  %v9662 = vadd.f32 %v9587, %v9661
  %v9663 = vand.u32 %v9361, 4294901760
  %v9664 = vsub.f32 %v9361, %v9663
  %v9665 = vand.u32 %v9664, 4294901760
  %9666 = vmatmul.f32.gmra.mxu0 %v9665
  %v9667 = vpop.f32.mrf.mxu0
  %v9668 = vadd.f32 %v9592, %v9667
  %v9669 = vand.u32 %v9364, 4294901760
  %v9670 = vsub.f32 %v9364, %v9669
  %v9671 = vand.u32 %v9670, 4294901760
  %9672 = vmatmul.f32.gmra.mxu0 %v9671
  %v9673 = vpop.f32.mrf.mxu0
  %v9674 = vadd.f32 %v9597, %v9673
  %v9675 = vand.u32 %v9367, 4294901760
  %v9676 = vsub.f32 %v9367, %v9675
  %v9677 = vand.u32 %v9676, 4294901760
  %9678 = vmatmul.f32.gmra.mxu0 %v9677
  %v9679 = vpop.f32.mrf.mxu0
  %v9680 = vadd.f32 %v9602, %v9679
  %v9681 = vand.u32 %v9370, 4294901760
  %v9682 = vsub.f32 %v9370, %v9681
  %v9683 = vand.u32 %v9682, 4294901760
  %9684 = vmatmul.f32.gmra.mxu0 %v9683
  %v9685 = vpop.f32.mrf.mxu0
  %v9686 = vadd.f32 %v9607, %v9685
  %9687 = vdwg.mxu0
  %9688 = vmatpush.msra.mxu0 0.0
  %9689 = vmatpush.msra.mxu0 0.0
  %9690 = vmatpush.msra.mxu0 0.0
  %9691 = vmatpush.msra.mxu0 0.0
  %9692 = vmatpush.msra.mxu0 0.0
  %9693 = vmatpush.msra.mxu0 0.0
  %9694 = vmatpush.msra.mxu0 0.0
  %9695 = vmatpush.msra.mxu0 0.0
  %9696 = vmatpush.msra.mxu0 0.0
  %9697 = vmatpush.msra.mxu0 0.0
  %9698 = vmatpush.msra.mxu0 0.0
  %9699 = vmatpush.msra.mxu0 0.0
  %9700 = vmatpush.msra.mxu0 0.0
  %9701 = vmatpush.msra.mxu0 0.0
  %v9702 = vand.u32 %v20, 4294901760
  %v9703 = vsub.f32 %v20, %v9702
  %v9704 = vand.u32 %v9703, 4294901760
  %9705 = vmatpush.msra.mxu0 %v9704
  %v9706 = vand.u32 %v19, 4294901760
  %v9707 = vsub.f32 %v19, %v9706
  %v9708 = vand.u32 %v9707, 4294901760
  %9709 = vmatpush.msra.mxu0 %v9708
  %v9710 = vand.u32 %v9343, 4294901760
  %9711 = vmatmul.f32.gmra.mxu0 %v9710
  %v9712 = vpop.f32.mrf.mxu0
  %v9713 = vadd.f32 %v9632, %v9712
  %v9714 = vand.u32 %v9346, 4294901760
  %9715 = vmatmul.f32.gmra.mxu0 %v9714
  %v9716 = vpop.f32.mrf.mxu0
  %v9717 = vadd.f32 %v9638, %v9716
  %v9718 = vand.u32 %v9349, 4294901760
  %9719 = vmatmul.f32.gmra.mxu0 %v9718
  %v9720 = vpop.f32.mrf.mxu0
  %v9721 = vadd.f32 %v9644, %v9720
  %v9722 = vand.u32 %v9352, 4294901760
  %9723 = vmatmul.f32.gmra.mxu0 %v9722
  %v9724 = vpop.f32.mrf.mxu0
  %v9725 = vadd.f32 %v9650, %v9724
  %v9726 = vand.u32 %v9355, 4294901760
  %9727 = vmatmul.f32.gmra.mxu0 %v9726
  %v9728 = vpop.f32.mrf.mxu0
  %v9729 = vadd.f32 %v9656, %v9728
  %v9730 = vand.u32 %v9358, 4294901760
  %9731 = vmatmul.f32.gmra.mxu0 %v9730
  %v9732 = vpop.f32.mrf.mxu0
  %v9733 = vadd.f32 %v9662, %v9732
  %v9734 = vand.u32 %v9361, 4294901760
  %9735 = vmatmul.f32.gmra.mxu0 %v9734
  %v9736 = vpop.f32.mrf.mxu0
  %v9737 = vadd.f32 %v9668, %v9736
  %v9738 = vand.u32 %v9364, 4294901760
  %9739 = vmatmul.f32.gmra.mxu0 %v9738
  %v9740 = vpop.f32.mrf.mxu0
  %v9741 = vadd.f32 %v9674, %v9740
  %v9742 = vand.u32 %v9367, 4294901760
  %9743 = vmatmul.f32.gmra.mxu0 %v9742
  %v9744 = vpop.f32.mrf.mxu0
  %v9745 = vadd.f32 %v9680, %v9744
  %v9746 = vand.u32 %v9370, 4294901760
  %9747 = vmatmul.f32.gmra.mxu0 %v9746
  %v9748 = vpop.f32.mrf.mxu0
  %v9749 = vadd.f32 %v9686, %v9748
  %9750 = vdwg.mxu0
  %9751 = vmatpush.msra.mxu0 0.0
  %9752 = vmatpush.msra.mxu0 0.0
  %9753 = vmatpush.msra.mxu0 0.0
  %9754 = vmatpush.msra.mxu0 0.0
  %9755 = vmatpush.msra.mxu0 0.0
  %9756 = vmatpush.msra.mxu0 0.0
  %9757 = vmatpush.msra.mxu0 0.0
  %9758 = vmatpush.msra.mxu0 0.0
  %9759 = vmatpush.msra.mxu0 0.0
  %9760 = vmatpush.msra.mxu0 0.0
  %9761 = vmatpush.msra.mxu0 0.0
  %9762 = vmatpush.msra.mxu0 0.0
  %9763 = vmatpush.msra.mxu0 0.0
  %9764 = vmatpush.msra.mxu0 0.0
  %v9765 = vand.u32 %v20, 4294901760
  %9766 = vmatpush.msra.mxu0 %v9765
  %v9767 = vand.u32 %v19, 4294901760
  %9768 = vmatpush.msra.mxu0 %v9767
  %v9769 = vand.u32 %v9343, 4294901760
  %9770 = vmatmul.f32.gmra.mxu0 %v9769
  %v9771 = vpop.f32.mrf.mxu0
  %v9772 = vadd.f32 %v9713, %v9771
  %v9773 = vand.u32 %v9346, 4294901760
  %9774 = vmatmul.f32.gmra.mxu0 %v9773
  %v9775 = vpop.f32.mrf.mxu0
  %v9776 = vadd.f32 %v9717, %v9775
  %v9777 = vand.u32 %v9349, 4294901760
  %9778 = vmatmul.f32.gmra.mxu0 %v9777
  %v9779 = vpop.f32.mrf.mxu0
  %v9780 = vadd.f32 %v9721, %v9779
  %v9781 = vand.u32 %v9352, 4294901760
  %9782 = vmatmul.f32.gmra.mxu0 %v9781
  %v9783 = vpop.f32.mrf.mxu0
  %v9784 = vadd.f32 %v9725, %v9783
  %v9785 = vand.u32 %v9355, 4294901760
  %9786 = vmatmul.f32.gmra.mxu0 %v9785
  %v9787 = vpop.f32.mrf.mxu0
  %v9788 = vadd.f32 %v9729, %v9787
  %v9789 = vand.u32 %v9358, 4294901760
  %9790 = vmatmul.f32.gmra.mxu0 %v9789
  %v9791 = vpop.f32.mrf.mxu0
  %v9792 = vadd.f32 %v9733, %v9791
  %v9793 = vand.u32 %v9361, 4294901760
  %9794 = vmatmul.f32.gmra.mxu0 %v9793
  %v9795 = vpop.f32.mrf.mxu0
  %v9796 = vadd.f32 %v9737, %v9795
  %v9797 = vand.u32 %v9364, 4294901760
  %9798 = vmatmul.f32.gmra.mxu0 %v9797
  %v9799 = vpop.f32.mrf.mxu0
  %v9800 = vadd.f32 %v9741, %v9799
  %v9801 = vand.u32 %v9367, 4294901760
  %9802 = vmatmul.f32.gmra.mxu0 %v9801
  %v9803 = vpop.f32.mrf.mxu0
  %v9804 = vadd.f32 %v9745, %v9803
  %v9805 = vand.u32 %v9370, 4294901760
  %9806 = vmatmul.f32.gmra.mxu0 %v9805
  %v9807 = vpop.f32.mrf.mxu0
  %v9808 = vadd.f32 %v9749, %v9807
  %9809 = vdwg.mxu0
  %v9810 = vadd.f32 %v9772, %v3425
  %v9811 = vadd.f32 %v9776, %v3429
  %v9812 = vadd.f32 %v9780, %v3433
  %v9813 = vadd.f32 %v9784, %v3437
  %v9814 = vadd.f32 %v9788, %v3441
  %v9815 = vadd.f32 %v9792, %v3445
  %v9816 = vadd.f32 %v9796, %v3449
  %v9817 = vadd.f32 %v9800, %v3453
  %v9818 = vadd.f32 %v9804, %v3457
  %v9819 = vadd.f32 %v9808, %v3461
  %v9820 = vmax.f32 %v9810, 0.0
  %v9821 = vmax.f32 %v9811, 0.0
  %v9822 = vmax.f32 %v9812, 0.0
  %v9823 = vmax.f32 %v9813, 0.0
  %v9824 = vmax.f32 %v9814, 0.0
  %v9825 = vmax.f32 %v9815, 0.0
  %v9826 = vmax.f32 %v9816, 0.0
  %v9827 = vmax.f32 %v9817, 0.0
  %v9828 = vmax.f32 %v9818, 0.0
  %v9829 = vmax.f32 %v9819, 0.0
  %v9831 = vsel %vm2206, %v9820, 0
  %v9834 = vsel %vm2206, %v9821, 0
  %v9837 = vsel %vm2206, %v9822, 0
  %v9840 = vsel %vm2206, %v9823, 0
  %v9843 = vsel %vm2206, %v9824, 0
  %v9846 = vsel %vm2206, %v9825, 0
  %v9849 = vsel %vm2206, %v9826, 0
  %v9852 = vsel %vm2206, %v9827, 0
  %v9855 = vsel %vm2206, %v9828, 0
  %v9858 = vsel %vm2206, %v9829, 0
  %9860 = vmatpush.msra.mxu0 0.0
  %9861 = vmatpush.msra.mxu0 0.0
  %9862 = vmatpush.msra.mxu0 0.0
  %9863 = vmatpush.msra.mxu0 0.0
  %9864 = vmatpush.msra.mxu0 0.0
  %9865 = vmatpush.msra.mxu0 0.0
  %9866 = vmatpush.msra.mxu0 0.0
  %9867 = vmatpush.msra.mxu0 0.0
  %9868 = vmatpush.msra.mxu0 0.0
  %9869 = vmatpush.msra.mxu0 0.0
  %9870 = vmatpush.msra.mxu0 0.0
  %9871 = vmatpush.msra.mxu0 0.0
  %9872 = vmatpush.msra.mxu0 0.0
  %9873 = vmatpush.msra.mxu0 0.0
  %v9874 = vand.u32 %v30, 4294901760
  %9875 = vmatpush.msra.mxu0 %v9874
  %v9876 = vand.u32 %v29, 4294901760
  %9877 = vmatpush.msra.mxu0 %v9876
  %v9878 = vand.u32 %v9831, 4294901760
  %v9879 = vsub.f32 %v9831, %v9878
  %v9880 = vand.u32 %v9879, 4294901760
  %v9881 = vsub.f32 %v9879, %v9880
  %v9882 = vand.u32 %v9881, 4294901760
  %9883 = vmatmul.f32.gmra.mxu0 %v9882
  %v9884 = vpop.f32.mrf.mxu0
  %v9885 = vadd.f32 %v4667, %v9884
  %v9886 = vand.u32 %v9834, 4294901760
  %v9887 = vsub.f32 %v9834, %v9886
  %v9888 = vand.u32 %v9887, 4294901760
  %v9889 = vsub.f32 %v9887, %v9888
  %v9890 = vand.u32 %v9889, 4294901760
  %9891 = vmatmul.f32.gmra.mxu0 %v9890
  %v9892 = vpop.f32.mrf.mxu0
  %v9893 = vadd.f32 %v4667, %v9892
  %v9894 = vand.u32 %v9837, 4294901760
  %v9895 = vsub.f32 %v9837, %v9894
  %v9896 = vand.u32 %v9895, 4294901760
  %v9897 = vsub.f32 %v9895, %v9896
  %v9898 = vand.u32 %v9897, 4294901760
  %9899 = vmatmul.f32.gmra.mxu0 %v9898
  %v9900 = vpop.f32.mrf.mxu0
  %v9901 = vadd.f32 %v4667, %v9900
  %v9902 = vand.u32 %v9840, 4294901760
  %v9903 = vsub.f32 %v9840, %v9902
  %v9904 = vand.u32 %v9903, 4294901760
  %v9905 = vsub.f32 %v9903, %v9904
  %v9906 = vand.u32 %v9905, 4294901760
  %9907 = vmatmul.f32.gmra.mxu0 %v9906
  %v9908 = vpop.f32.mrf.mxu0
  %v9909 = vadd.f32 %v4667, %v9908
  %v9910 = vand.u32 %v9843, 4294901760
  %v9911 = vsub.f32 %v9843, %v9910
  %v9912 = vand.u32 %v9911, 4294901760
  %v9913 = vsub.f32 %v9911, %v9912
  %v9914 = vand.u32 %v9913, 4294901760
  %9915 = vmatmul.f32.gmra.mxu0 %v9914
  %v9916 = vpop.f32.mrf.mxu0
  %v9917 = vadd.f32 %v4667, %v9916
  %v9918 = vand.u32 %v9846, 4294901760
  %v9919 = vsub.f32 %v9846, %v9918
  %v9920 = vand.u32 %v9919, 4294901760
  %v9921 = vsub.f32 %v9919, %v9920
  %v9922 = vand.u32 %v9921, 4294901760
  %9923 = vmatmul.f32.gmra.mxu0 %v9922
  %v9924 = vpop.f32.mrf.mxu0
  %v9925 = vadd.f32 %v4667, %v9924
  %v9926 = vand.u32 %v9849, 4294901760
  %v9927 = vsub.f32 %v9849, %v9926
  %v9928 = vand.u32 %v9927, 4294901760
  %v9929 = vsub.f32 %v9927, %v9928
  %v9930 = vand.u32 %v9929, 4294901760
  %9931 = vmatmul.f32.gmra.mxu0 %v9930
  %v9932 = vpop.f32.mrf.mxu0
  %v9933 = vadd.f32 %v4667, %v9932
  %v9934 = vand.u32 %v9852, 4294901760
  %v9935 = vsub.f32 %v9852, %v9934
  %v9936 = vand.u32 %v9935, 4294901760
  %v9937 = vsub.f32 %v9935, %v9936
  %v9938 = vand.u32 %v9937, 4294901760
  %9939 = vmatmul.f32.gmra.mxu0 %v9938
  %v9940 = vpop.f32.mrf.mxu0
  %v9941 = vadd.f32 %v4667, %v9940
  %v9942 = vand.u32 %v9855, 4294901760
  %v9943 = vsub.f32 %v9855, %v9942
  %v9944 = vand.u32 %v9943, 4294901760
  %v9945 = vsub.f32 %v9943, %v9944
  %v9946 = vand.u32 %v9945, 4294901760
  %9947 = vmatmul.f32.gmra.mxu0 %v9946
  %v9948 = vpop.f32.mrf.mxu0
  %v9949 = vadd.f32 %v4667, %v9948
  %v9950 = vand.u32 %v9858, 4294901760
  %v9951 = vsub.f32 %v9858, %v9950
  %v9952 = vand.u32 %v9951, 4294901760
  %v9953 = vsub.f32 %v9951, %v9952
  %v9954 = vand.u32 %v9953, 4294901760
  %9955 = vmatmul.f32.gmra.mxu0 %v9954
  %v9956 = vpop.f32.mrf.mxu0
  %v9957 = vadd.f32 %v4667, %v9956
  %9958 = vdwg.mxu0
  %9959 = vmatpush.msra.mxu0 0.0
  %9960 = vmatpush.msra.mxu0 0.0
  %9961 = vmatpush.msra.mxu0 0.0
  %9962 = vmatpush.msra.mxu0 0.0
  %9963 = vmatpush.msra.mxu0 0.0
  %9964 = vmatpush.msra.mxu0 0.0
  %9965 = vmatpush.msra.mxu0 0.0
  %9966 = vmatpush.msra.mxu0 0.0
  %9967 = vmatpush.msra.mxu0 0.0
  %9968 = vmatpush.msra.mxu0 0.0
  %9969 = vmatpush.msra.mxu0 0.0
  %9970 = vmatpush.msra.mxu0 0.0
  %9971 = vmatpush.msra.mxu0 0.0
  %9972 = vmatpush.msra.mxu0 0.0
  %v9973 = vand.u32 %v30, 4294901760
  %v9974 = vsub.f32 %v30, %v9973
  %v9975 = vand.u32 %v9974, 4294901760
  %v9976 = vsub.f32 %v9974, %v9975
  %v9977 = vand.u32 %v9976, 4294901760
  %9978 = vmatpush.msra.mxu0 %v9977
  %v9979 = vand.u32 %v29, 4294901760
  %v9980 = vsub.f32 %v29, %v9979
  %v9981 = vand.u32 %v9980, 4294901760
  %v9982 = vsub.f32 %v9980, %v9981
  %v9983 = vand.u32 %v9982, 4294901760
  %9984 = vmatpush.msra.mxu0 %v9983
  %v9985 = vand.u32 %v9831, 4294901760
  %9986 = vmatmul.f32.gmra.mxu0 %v9985
  %v9987 = vpop.f32.mrf.mxu0
  %v9988 = vadd.f32 %v9885, %v9987
  %v9989 = vand.u32 %v9834, 4294901760
  %9990 = vmatmul.f32.gmra.mxu0 %v9989
  %v9991 = vpop.f32.mrf.mxu0
  %v9992 = vadd.f32 %v9893, %v9991
  %v9993 = vand.u32 %v9837, 4294901760
  %9994 = vmatmul.f32.gmra.mxu0 %v9993
  %v9995 = vpop.f32.mrf.mxu0
  %v9996 = vadd.f32 %v9901, %v9995
  %v9997 = vand.u32 %v9840, 4294901760
  %9998 = vmatmul.f32.gmra.mxu0 %v9997
  %v9999 = vpop.f32.mrf.mxu0
  %v10000 = vadd.f32 %v9909, %v9999
  %v10001 = vand.u32 %v9843, 4294901760
  %10002 = vmatmul.f32.gmra.mxu0 %v10001
  %v10003 = vpop.f32.mrf.mxu0
  %v10004 = vadd.f32 %v9917, %v10003
  %v10005 = vand.u32 %v9846, 4294901760
  %10006 = vmatmul.f32.gmra.mxu0 %v10005
  %v10007 = vpop.f32.mrf.mxu0
  %v10008 = vadd.f32 %v9925, %v10007
  %v10009 = vand.u32 %v9849, 4294901760
  %10010 = vmatmul.f32.gmra.mxu0 %v10009
  %v10011 = vpop.f32.mrf.mxu0
  %v10012 = vadd.f32 %v9933, %v10011
  %v10013 = vand.u32 %v9852, 4294901760
  %10014 = vmatmul.f32.gmra.mxu0 %v10013
  %v10015 = vpop.f32.mrf.mxu0
  %v10016 = vadd.f32 %v9941, %v10015
  %v10017 = vand.u32 %v9855, 4294901760
  %10018 = vmatmul.f32.gmra.mxu0 %v10017
  %v10019 = vpop.f32.mrf.mxu0
  %v10020 = vadd.f32 %v9949, %v10019
  %v10021 = vand.u32 %v9858, 4294901760
  %10022 = vmatmul.f32.gmra.mxu0 %v10021
  %v10023 = vpop.f32.mrf.mxu0
  %v10024 = vadd.f32 %v9957, %v10023
  %10025 = vdwg.mxu0
  %10026 = vmatpush.msra.mxu0 0.0
  %10027 = vmatpush.msra.mxu0 0.0
  %10028 = vmatpush.msra.mxu0 0.0
  %10029 = vmatpush.msra.mxu0 0.0
  %10030 = vmatpush.msra.mxu0 0.0
  %10031 = vmatpush.msra.mxu0 0.0
  %10032 = vmatpush.msra.mxu0 0.0
  %10033 = vmatpush.msra.mxu0 0.0
  %10034 = vmatpush.msra.mxu0 0.0
  %10035 = vmatpush.msra.mxu0 0.0
  %10036 = vmatpush.msra.mxu0 0.0
  %10037 = vmatpush.msra.mxu0 0.0
  %10038 = vmatpush.msra.mxu0 0.0
  %10039 = vmatpush.msra.mxu0 0.0
  %v10040 = vand.u32 %v30, 4294901760
  %v10041 = vsub.f32 %v30, %v10040
  %10042 = vmatpush.msra.mxu0 %v10041
  %v10043 = vand.u32 %v29, 4294901760
  %v10044 = vsub.f32 %v29, %v10043
  %10045 = vmatpush.msra.mxu0 %v10044
  %v10046 = vand.u32 %v9831, 4294901760
  %v10047 = vsub.f32 %v9831, %v10046
  %10048 = vmatmul.f32.gmra.mxu0 %v10047
  %v10049 = vpop.f32.mrf.mxu0
  %v10050 = vadd.f32 %v9988, %v10049
  %v10051 = vand.u32 %v9834, 4294901760
  %v10052 = vsub.f32 %v9834, %v10051
  %10053 = vmatmul.f32.gmra.mxu0 %v10052
  %v10054 = vpop.f32.mrf.mxu0
  %v10055 = vadd.f32 %v9992, %v10054
  %v10056 = vand.u32 %v9837, 4294901760
  %v10057 = vsub.f32 %v9837, %v10056
  %10058 = vmatmul.f32.gmra.mxu0 %v10057
  %v10059 = vpop.f32.mrf.mxu0
  %v10060 = vadd.f32 %v9996, %v10059
  %v10061 = vand.u32 %v9840, 4294901760
  %v10062 = vsub.f32 %v9840, %v10061
  %10063 = vmatmul.f32.gmra.mxu0 %v10062
  %v10064 = vpop.f32.mrf.mxu0
  %v10065 = vadd.f32 %v10000, %v10064
  %v10066 = vand.u32 %v9843, 4294901760
  %v10067 = vsub.f32 %v9843, %v10066
  %10068 = vmatmul.f32.gmra.mxu0 %v10067
  %v10069 = vpop.f32.mrf.mxu0
  %v10070 = vadd.f32 %v10004, %v10069
  %v10071 = vand.u32 %v9846, 4294901760
  %v10072 = vsub.f32 %v9846, %v10071
  %10073 = vmatmul.f32.gmra.mxu0 %v10072
  %v10074 = vpop.f32.mrf.mxu0
  %v10075 = vadd.f32 %v10008, %v10074
  %v10076 = vand.u32 %v9849, 4294901760
  %v10077 = vsub.f32 %v9849, %v10076
  %10078 = vmatmul.f32.gmra.mxu0 %v10077
  %v10079 = vpop.f32.mrf.mxu0
  %v10080 = vadd.f32 %v10012, %v10079
  %v10081 = vand.u32 %v9852, 4294901760
  %v10082 = vsub.f32 %v9852, %v10081
  %10083 = vmatmul.f32.gmra.mxu0 %v10082
  %v10084 = vpop.f32.mrf.mxu0
  %v10085 = vadd.f32 %v10016, %v10084
  %v10086 = vand.u32 %v9855, 4294901760
  %v10087 = vsub.f32 %v9855, %v10086
  %10088 = vmatmul.f32.gmra.mxu0 %v10087
  %v10089 = vpop.f32.mrf.mxu0
  %v10090 = vadd.f32 %v10020, %v10089
  %v10091 = vand.u32 %v9858, 4294901760
  %v10092 = vsub.f32 %v9858, %v10091
  %10093 = vmatmul.f32.gmra.mxu0 %v10092
  %v10094 = vpop.f32.mrf.mxu0
  %v10095 = vadd.f32 %v10024, %v10094
  %10096 = vdwg.mxu0
  %10097 = vmatpush.msra.mxu0 0.0
  %10098 = vmatpush.msra.mxu0 0.0
  %10099 = vmatpush.msra.mxu0 0.0
  %10100 = vmatpush.msra.mxu0 0.0
  %10101 = vmatpush.msra.mxu0 0.0
  %10102 = vmatpush.msra.mxu0 0.0
  %10103 = vmatpush.msra.mxu0 0.0
  %10104 = vmatpush.msra.mxu0 0.0
  %10105 = vmatpush.msra.mxu0 0.0
  %10106 = vmatpush.msra.mxu0 0.0
  %10107 = vmatpush.msra.mxu0 0.0
  %10108 = vmatpush.msra.mxu0 0.0
  %10109 = vmatpush.msra.mxu0 0.0
  %10110 = vmatpush.msra.mxu0 0.0
  %v10111 = vand.u32 %v30, 4294901760
  %10112 = vmatpush.msra.mxu0 %v10111
  %v10113 = vand.u32 %v29, 4294901760
  %10114 = vmatpush.msra.mxu0 %v10113
  %v10115 = vand.u32 %v9831, 4294901760
  %v10116 = vsub.f32 %v9831, %v10115
  %v10117 = vand.u32 %v10116, 4294901760
  %10118 = vmatmul.f32.gmra.mxu0 %v10117
  %v10119 = vpop.f32.mrf.mxu0
  %v10120 = vadd.f32 %v10050, %v10119
  %v10121 = vand.u32 %v9834, 4294901760
  %v10122 = vsub.f32 %v9834, %v10121
  %v10123 = vand.u32 %v10122, 4294901760
  %10124 = vmatmul.f32.gmra.mxu0 %v10123
  %v10125 = vpop.f32.mrf.mxu0
  %v10126 = vadd.f32 %v10055, %v10125
  %v10127 = vand.u32 %v9837, 4294901760
  %v10128 = vsub.f32 %v9837, %v10127
  %v10129 = vand.u32 %v10128, 4294901760
  %10130 = vmatmul.f32.gmra.mxu0 %v10129
  %v10131 = vpop.f32.mrf.mxu0
  %v10132 = vadd.f32 %v10060, %v10131
  %v10133 = vand.u32 %v9840, 4294901760
  %v10134 = vsub.f32 %v9840, %v10133
  %v10135 = vand.u32 %v10134, 4294901760
  %10136 = vmatmul.f32.gmra.mxu0 %v10135
  %v10137 = vpop.f32.mrf.mxu0
  %v10138 = vadd.f32 %v10065, %v10137
  %v10139 = vand.u32 %v9843, 4294901760
  %v10140 = vsub.f32 %v9843, %v10139
  %v10141 = vand.u32 %v10140, 4294901760
  %10142 = vmatmul.f32.gmra.mxu0 %v10141
  %v10143 = vpop.f32.mrf.mxu0
  %v10144 = vadd.f32 %v10070, %v10143
  %v10145 = vand.u32 %v9846, 4294901760
  %v10146 = vsub.f32 %v9846, %v10145
  %v10147 = vand.u32 %v10146, 4294901760
  %10148 = vmatmul.f32.gmra.mxu0 %v10147
  %v10149 = vpop.f32.mrf.mxu0
  %v10150 = vadd.f32 %v10075, %v10149
  %v10151 = vand.u32 %v9849, 4294901760
  %v10152 = vsub.f32 %v9849, %v10151
  %v10153 = vand.u32 %v10152, 4294901760
  %10154 = vmatmul.f32.gmra.mxu0 %v10153
  %v10155 = vpop.f32.mrf.mxu0
  %v10156 = vadd.f32 %v10080, %v10155
  %v10157 = vand.u32 %v9852, 4294901760
  %v10158 = vsub.f32 %v9852, %v10157
  %v10159 = vand.u32 %v10158, 4294901760
  %10160 = vmatmul.f32.gmra.mxu0 %v10159
  %v10161 = vpop.f32.mrf.mxu0
  %v10162 = vadd.f32 %v10085, %v10161
  %v10163 = vand.u32 %v9855, 4294901760
  %v10164 = vsub.f32 %v9855, %v10163
  %v10165 = vand.u32 %v10164, 4294901760
  %10166 = vmatmul.f32.gmra.mxu0 %v10165
  %v10167 = vpop.f32.mrf.mxu0
  %v10168 = vadd.f32 %v10090, %v10167
  %v10169 = vand.u32 %v9858, 4294901760
  %v10170 = vsub.f32 %v9858, %v10169
  %v10171 = vand.u32 %v10170, 4294901760
  %10172 = vmatmul.f32.gmra.mxu0 %v10171
  %v10173 = vpop.f32.mrf.mxu0
  %v10174 = vadd.f32 %v10095, %v10173
  %10175 = vdwg.mxu0
  %10176 = vmatpush.msra.mxu0 0.0
  %10177 = vmatpush.msra.mxu0 0.0
  %10178 = vmatpush.msra.mxu0 0.0
  %10179 = vmatpush.msra.mxu0 0.0
  %10180 = vmatpush.msra.mxu0 0.0
  %10181 = vmatpush.msra.mxu0 0.0
  %10182 = vmatpush.msra.mxu0 0.0
  %10183 = vmatpush.msra.mxu0 0.0
  %10184 = vmatpush.msra.mxu0 0.0
  %10185 = vmatpush.msra.mxu0 0.0
  %10186 = vmatpush.msra.mxu0 0.0
  %10187 = vmatpush.msra.mxu0 0.0
  %10188 = vmatpush.msra.mxu0 0.0
  %10189 = vmatpush.msra.mxu0 0.0
  %v10190 = vand.u32 %v30, 4294901760
  %v10191 = vsub.f32 %v30, %v10190
  %v10192 = vand.u32 %v10191, 4294901760
  %10193 = vmatpush.msra.mxu0 %v10192
  %v10194 = vand.u32 %v29, 4294901760
  %v10195 = vsub.f32 %v29, %v10194
  %v10196 = vand.u32 %v10195, 4294901760
  %10197 = vmatpush.msra.mxu0 %v10196
  %v10198 = vand.u32 %v9831, 4294901760
  %10199 = vmatmul.f32.gmra.mxu0 %v10198
  %v10200 = vpop.f32.mrf.mxu0
  %v10201 = vadd.f32 %v10120, %v10200
  %v10202 = vand.u32 %v9834, 4294901760
  %10203 = vmatmul.f32.gmra.mxu0 %v10202
  %v10204 = vpop.f32.mrf.mxu0
  %v10205 = vadd.f32 %v10126, %v10204
  %v10206 = vand.u32 %v9837, 4294901760
  %10207 = vmatmul.f32.gmra.mxu0 %v10206
  %v10208 = vpop.f32.mrf.mxu0
  %v10209 = vadd.f32 %v10132, %v10208
  %v10210 = vand.u32 %v9840, 4294901760
  %10211 = vmatmul.f32.gmra.mxu0 %v10210
  %v10212 = vpop.f32.mrf.mxu0
  %v10213 = vadd.f32 %v10138, %v10212
  %v10214 = vand.u32 %v9843, 4294901760
  %10215 = vmatmul.f32.gmra.mxu0 %v10214
  %v10216 = vpop.f32.mrf.mxu0
  %v10217 = vadd.f32 %v10144, %v10216
  %v10218 = vand.u32 %v9846, 4294901760
  %10219 = vmatmul.f32.gmra.mxu0 %v10218
  %v10220 = vpop.f32.mrf.mxu0
  %v10221 = vadd.f32 %v10150, %v10220
  %v10222 = vand.u32 %v9849, 4294901760
  %10223 = vmatmul.f32.gmra.mxu0 %v10222
  %v10224 = vpop.f32.mrf.mxu0
  %v10225 = vadd.f32 %v10156, %v10224
  %v10226 = vand.u32 %v9852, 4294901760
  %10227 = vmatmul.f32.gmra.mxu0 %v10226
  %v10228 = vpop.f32.mrf.mxu0
  %v10229 = vadd.f32 %v10162, %v10228
  %v10230 = vand.u32 %v9855, 4294901760
  %10231 = vmatmul.f32.gmra.mxu0 %v10230
  %v10232 = vpop.f32.mrf.mxu0
  %v10233 = vadd.f32 %v10168, %v10232
  %v10234 = vand.u32 %v9858, 4294901760
  %10235 = vmatmul.f32.gmra.mxu0 %v10234
  %v10236 = vpop.f32.mrf.mxu0
  %v10237 = vadd.f32 %v10174, %v10236
  %10238 = vdwg.mxu0
  %10239 = vmatpush.msra.mxu0 0.0
  %10240 = vmatpush.msra.mxu0 0.0
  %10241 = vmatpush.msra.mxu0 0.0
  %10242 = vmatpush.msra.mxu0 0.0
  %10243 = vmatpush.msra.mxu0 0.0
  %10244 = vmatpush.msra.mxu0 0.0
  %10245 = vmatpush.msra.mxu0 0.0
  %10246 = vmatpush.msra.mxu0 0.0
  %10247 = vmatpush.msra.mxu0 0.0
  %10248 = vmatpush.msra.mxu0 0.0
  %10249 = vmatpush.msra.mxu0 0.0
  %10250 = vmatpush.msra.mxu0 0.0
  %10251 = vmatpush.msra.mxu0 0.0
  %10252 = vmatpush.msra.mxu0 0.0
  %v10253 = vand.u32 %v30, 4294901760
  %10254 = vmatpush.msra.mxu0 %v10253
  %v10255 = vand.u32 %v29, 4294901760
  %10256 = vmatpush.msra.mxu0 %v10255
  %v10257 = vand.u32 %v9831, 4294901760
  %10258 = vmatmul.f32.gmra.mxu0 %v10257
  %v10259 = vpop.f32.mrf.mxu0
  %v10260 = vadd.f32 %v10201, %v10259
  %v10261 = vand.u32 %v9834, 4294901760
  %10262 = vmatmul.f32.gmra.mxu0 %v10261
  %v10263 = vpop.f32.mrf.mxu0
  %v10264 = vadd.f32 %v10205, %v10263
  %v10265 = vand.u32 %v9837, 4294901760
  %10266 = vmatmul.f32.gmra.mxu0 %v10265
  %v10267 = vpop.f32.mrf.mxu0
  %v10268 = vadd.f32 %v10209, %v10267
  %v10269 = vand.u32 %v9840, 4294901760
  %10270 = vmatmul.f32.gmra.mxu0 %v10269
  %v10271 = vpop.f32.mrf.mxu0
  %v10272 = vadd.f32 %v10213, %v10271
  %v10273 = vand.u32 %v9843, 4294901760
  %10274 = vmatmul.f32.gmra.mxu0 %v10273
  %v10275 = vpop.f32.mrf.mxu0
  %v10276 = vadd.f32 %v10217, %v10275
  %v10277 = vand.u32 %v9846, 4294901760
  %10278 = vmatmul.f32.gmra.mxu0 %v10277
  %v10279 = vpop.f32.mrf.mxu0
  %v10280 = vadd.f32 %v10221, %v10279
  %v10281 = vand.u32 %v9849, 4294901760
  %10282 = vmatmul.f32.gmra.mxu0 %v10281
  %v10283 = vpop.f32.mrf.mxu0
  %v10284 = vadd.f32 %v10225, %v10283
  %v10285 = vand.u32 %v9852, 4294901760
  %10286 = vmatmul.f32.gmra.mxu0 %v10285
  %v10287 = vpop.f32.mrf.mxu0
  %v10288 = vadd.f32 %v10229, %v10287
  %v10289 = vand.u32 %v9855, 4294901760
  %10290 = vmatmul.f32.gmra.mxu0 %v10289
  %v10291 = vpop.f32.mrf.mxu0
  %v10292 = vadd.f32 %v10233, %v10291
  %v10293 = vand.u32 %v9858, 4294901760
  %10294 = vmatmul.f32.gmra.mxu0 %v10293
  %v10295 = vpop.f32.mrf.mxu0
  %v10296 = vadd.f32 %v10237, %v10295
  %10297 = vdwg.mxu0
  %v10298 = vmax.f32 %v10260, 0.0
  %v10299 = vmax.f32 %v10264, 0.0
  %v10300 = vmax.f32 %v10268, 0.0
  %v10301 = vmax.f32 %v10272, 0.0
  %v10302 = vmax.f32 %v10276, 0.0
  %v10303 = vmax.f32 %v10280, 0.0
  %v10304 = vmax.f32 %v10284, 0.0
  %v10305 = vmax.f32 %v10288, 0.0
  %v10306 = vmax.f32 %v10292, 0.0
  %v10307 = vmax.f32 %v10296, 0.0
  %v10308 = vperm.slane %v60, 0
  %v10310 = vsel %vm2206, %v10298, 0
  %v10313 = vsel %vm2206, %v10299, 0
  %v10316 = vsel %vm2206, %v10300, 0
  %v10319 = vsel %vm2206, %v10301, 0
  %v10322 = vsel %vm2206, %v10302, 0
  %v10325 = vsel %vm2206, %v10303, 0
  %v10328 = vsel %vm2206, %v10304, 0
  %v10331 = vsel %vm2206, %v10305, 0
  %v10334 = vsel %vm2206, %v10306, 0
  %v10337 = vsel %vm2206, %v10307, 0
  %10339 = vmatpush.msra.mxu0 0.0
  %10340 = vmatpush.msra.mxu0 0.0
  %10341 = vmatpush.msra.mxu0 0.0
  %10342 = vmatpush.msra.mxu0 0.0
  %10343 = vmatpush.msra.mxu0 0.0
  %10344 = vmatpush.msra.mxu0 0.0
  %10345 = vmatpush.msra.mxu0 0.0
  %10346 = vmatpush.msra.mxu0 0.0
  %10347 = vmatpush.msra.mxu0 0.0
  %10348 = vmatpush.msra.mxu0 0.0
  %10349 = vmatpush.msra.mxu0 0.0
  %10350 = vmatpush.msra.mxu0 0.0
  %10351 = vmatpush.msra.mxu0 0.0
  %10352 = vmatpush.msra.mxu0 0.0
  %v10353 = vand.u32 %v32, 4294901760
  %10354 = vmatpush.msra.mxu0 %v10353
  %v10355 = vand.u32 %v31, 4294901760
  %10356 = vmatpush.msra.mxu0 %v10355
  %v10357 = vand.u32 %v6768, 4294901760
  %v10358 = vsub.f32 %v6768, %v10357
  %v10359 = vand.u32 %v10358, 4294901760
  %v10360 = vsub.f32 %v10358, %v10359
  %v10361 = vand.u32 %v10360, 4294901760
  %10362 = vmatmul.f32.gmra.mxu0 %v10361
  %v10363 = vpop.f32.mrf.mxu0
  %v10364 = vadd.f32 %v10308, %v10363
  %v10365 = vand.u32 %v6771, 4294901760
  %v10366 = vsub.f32 %v6771, %v10365
  %v10367 = vand.u32 %v10366, 4294901760
  %v10368 = vsub.f32 %v10366, %v10367
  %v10369 = vand.u32 %v10368, 4294901760
  %10370 = vmatmul.f32.gmra.mxu0 %v10369
  %v10371 = vpop.f32.mrf.mxu0
  %v10372 = vadd.f32 %v10308, %v10371
  %v10373 = vand.u32 %v6774, 4294901760
  %v10374 = vsub.f32 %v6774, %v10373
  %v10375 = vand.u32 %v10374, 4294901760
  %v10376 = vsub.f32 %v10374, %v10375
  %v10377 = vand.u32 %v10376, 4294901760
  %10378 = vmatmul.f32.gmra.mxu0 %v10377
  %v10379 = vpop.f32.mrf.mxu0
  %v10380 = vadd.f32 %v10308, %v10379
  %v10381 = vand.u32 %v6777, 4294901760
  %v10382 = vsub.f32 %v6777, %v10381
  %v10383 = vand.u32 %v10382, 4294901760
  %v10384 = vsub.f32 %v10382, %v10383
  %v10385 = vand.u32 %v10384, 4294901760
  %10386 = vmatmul.f32.gmra.mxu0 %v10385
  %v10387 = vpop.f32.mrf.mxu0
  %v10388 = vadd.f32 %v10308, %v10387
  %v10389 = vand.u32 %v6780, 4294901760
  %v10390 = vsub.f32 %v6780, %v10389
  %v10391 = vand.u32 %v10390, 4294901760
  %v10392 = vsub.f32 %v10390, %v10391
  %v10393 = vand.u32 %v10392, 4294901760
  %10394 = vmatmul.f32.gmra.mxu0 %v10393
  %v10395 = vpop.f32.mrf.mxu0
  %v10396 = vadd.f32 %v10308, %v10395
  %v10397 = vand.u32 %v6783, 4294901760
  %v10398 = vsub.f32 %v6783, %v10397
  %v10399 = vand.u32 %v10398, 4294901760
  %v10400 = vsub.f32 %v10398, %v10399
  %v10401 = vand.u32 %v10400, 4294901760
  %10402 = vmatmul.f32.gmra.mxu0 %v10401
  %v10403 = vpop.f32.mrf.mxu0
  %v10404 = vadd.f32 %v10308, %v10403
  %v10405 = vand.u32 %v6786, 4294901760
  %v10406 = vsub.f32 %v6786, %v10405
  %v10407 = vand.u32 %v10406, 4294901760
  %v10408 = vsub.f32 %v10406, %v10407
  %v10409 = vand.u32 %v10408, 4294901760
  %10410 = vmatmul.f32.gmra.mxu0 %v10409
  %v10411 = vpop.f32.mrf.mxu0
  %v10412 = vadd.f32 %v10308, %v10411
  %v10413 = vand.u32 %v6789, 4294901760
  %v10414 = vsub.f32 %v6789, %v10413
  %v10415 = vand.u32 %v10414, 4294901760
  %v10416 = vsub.f32 %v10414, %v10415
  %v10417 = vand.u32 %v10416, 4294901760
  %10418 = vmatmul.f32.gmra.mxu0 %v10417
  %v10419 = vpop.f32.mrf.mxu0
  %v10420 = vadd.f32 %v10308, %v10419
  %v10421 = vand.u32 %v6792, 4294901760
  %v10422 = vsub.f32 %v6792, %v10421
  %v10423 = vand.u32 %v10422, 4294901760
  %v10424 = vsub.f32 %v10422, %v10423
  %v10425 = vand.u32 %v10424, 4294901760
  %10426 = vmatmul.f32.gmra.mxu0 %v10425
  %v10427 = vpop.f32.mrf.mxu0
  %v10428 = vadd.f32 %v10308, %v10427
  %v10429 = vand.u32 %v6795, 4294901760
  %v10430 = vsub.f32 %v6795, %v10429
  %v10431 = vand.u32 %v10430, 4294901760
  %v10432 = vsub.f32 %v10430, %v10431
  %v10433 = vand.u32 %v10432, 4294901760
  %10434 = vmatmul.f32.gmra.mxu0 %v10433
  %v10435 = vpop.f32.mrf.mxu0
  %v10436 = vadd.f32 %v10308, %v10435
  %v10437 = vand.u32 %v9343, 4294901760
  %v10438 = vsub.f32 %v9343, %v10437
  %v10439 = vand.u32 %v10438, 4294901760
  %v10440 = vsub.f32 %v10438, %v10439
  %v10441 = vand.u32 %v10440, 4294901760
  %10442 = vmatmul.f32.gmra.mxu0 %v10441
  %v10443 = vpop.f32.mrf.mxu0
  %v10444 = vadd.f32 %v10308, %v10443
  %v10445 = vand.u32 %v9346, 4294901760
  %v10446 = vsub.f32 %v9346, %v10445
  %v10447 = vand.u32 %v10446, 4294901760
  %v10448 = vsub.f32 %v10446, %v10447
  %v10449 = vand.u32 %v10448, 4294901760
  %10450 = vmatmul.f32.gmra.mxu0 %v10449
  %v10451 = vpop.f32.mrf.mxu0
  %v10452 = vadd.f32 %v10308, %v10451
  %v10453 = vand.u32 %v9349, 4294901760
  %v10454 = vsub.f32 %v9349, %v10453
  %v10455 = vand.u32 %v10454, 4294901760
  %v10456 = vsub.f32 %v10454, %v10455
  %v10457 = vand.u32 %v10456, 4294901760
  %10458 = vmatmul.f32.gmra.mxu0 %v10457
  %v10459 = vpop.f32.mrf.mxu0
  %v10460 = vadd.f32 %v10308, %v10459
  %v10461 = vand.u32 %v9352, 4294901760
  %v10462 = vsub.f32 %v9352, %v10461
  %v10463 = vand.u32 %v10462, 4294901760
  %v10464 = vsub.f32 %v10462, %v10463
  %v10465 = vand.u32 %v10464, 4294901760
  %10466 = vmatmul.f32.gmra.mxu0 %v10465
  %v10467 = vpop.f32.mrf.mxu0
  %v10468 = vadd.f32 %v10308, %v10467
  %v10469 = vand.u32 %v9355, 4294901760
  %v10470 = vsub.f32 %v9355, %v10469
  %v10471 = vand.u32 %v10470, 4294901760
  %v10472 = vsub.f32 %v10470, %v10471
  %v10473 = vand.u32 %v10472, 4294901760
  %10474 = vmatmul.f32.gmra.mxu0 %v10473
  %v10475 = vpop.f32.mrf.mxu0
  %v10476 = vadd.f32 %v10308, %v10475
  %v10477 = vand.u32 %v9358, 4294901760
  %v10478 = vsub.f32 %v9358, %v10477
  %v10479 = vand.u32 %v10478, 4294901760
  %v10480 = vsub.f32 %v10478, %v10479
  %v10481 = vand.u32 %v10480, 4294901760
  %10482 = vmatmul.f32.gmra.mxu0 %v10481
  %v10483 = vpop.f32.mrf.mxu0
  %v10484 = vadd.f32 %v10308, %v10483
  %v10485 = vand.u32 %v9361, 4294901760
  %v10486 = vsub.f32 %v9361, %v10485
  %v10487 = vand.u32 %v10486, 4294901760
  %v10488 = vsub.f32 %v10486, %v10487
  %v10489 = vand.u32 %v10488, 4294901760
  %10490 = vmatmul.f32.gmra.mxu0 %v10489
  %v10491 = vpop.f32.mrf.mxu0
  %v10492 = vadd.f32 %v10308, %v10491
  %v10493 = vand.u32 %v9364, 4294901760
  %v10494 = vsub.f32 %v9364, %v10493
  %v10495 = vand.u32 %v10494, 4294901760
  %v10496 = vsub.f32 %v10494, %v10495
  %v10497 = vand.u32 %v10496, 4294901760
  %10498 = vmatmul.f32.gmra.mxu0 %v10497
  %v10499 = vpop.f32.mrf.mxu0
  %v10500 = vadd.f32 %v10308, %v10499
  %v10501 = vand.u32 %v9367, 4294901760
  %v10502 = vsub.f32 %v9367, %v10501
  %v10503 = vand.u32 %v10502, 4294901760
  %v10504 = vsub.f32 %v10502, %v10503
  %v10505 = vand.u32 %v10504, 4294901760
  %10506 = vmatmul.f32.gmra.mxu0 %v10505
  %v10507 = vpop.f32.mrf.mxu0
  %v10508 = vadd.f32 %v10308, %v10507
  %v10509 = vand.u32 %v9370, 4294901760
  %v10510 = vsub.f32 %v9370, %v10509
  %v10511 = vand.u32 %v10510, 4294901760
  %v10512 = vsub.f32 %v10510, %v10511
  %v10513 = vand.u32 %v10512, 4294901760
  %10514 = vmatmul.f32.gmra.mxu0 %v10513
  %v10515 = vpop.f32.mrf.mxu0
  %v10516 = vadd.f32 %v10308, %v10515
  %v10517 = vand.u32 %v10310, 4294901760
  %v10518 = vsub.f32 %v10310, %v10517
  %v10519 = vand.u32 %v10518, 4294901760
  %v10520 = vsub.f32 %v10518, %v10519
  %v10521 = vand.u32 %v10520, 4294901760
  %10522 = vmatmul.f32.gmra.mxu0 %v10521
  %v10523 = vpop.f32.mrf.mxu0
  %v10524 = vadd.f32 %v10308, %v10523
  %v10525 = vand.u32 %v10313, 4294901760
  %v10526 = vsub.f32 %v10313, %v10525
  %v10527 = vand.u32 %v10526, 4294901760
  %v10528 = vsub.f32 %v10526, %v10527
  %v10529 = vand.u32 %v10528, 4294901760
  %10530 = vmatmul.f32.gmra.mxu0 %v10529
  %v10531 = vpop.f32.mrf.mxu0
  %v10532 = vadd.f32 %v10308, %v10531
  %v10533 = vand.u32 %v10316, 4294901760
  %v10534 = vsub.f32 %v10316, %v10533
  %v10535 = vand.u32 %v10534, 4294901760
  %v10536 = vsub.f32 %v10534, %v10535
  %v10537 = vand.u32 %v10536, 4294901760
  %10538 = vmatmul.f32.gmra.mxu0 %v10537
  %v10539 = vpop.f32.mrf.mxu0
  %v10540 = vadd.f32 %v10308, %v10539
  %v10541 = vand.u32 %v10319, 4294901760
  %v10542 = vsub.f32 %v10319, %v10541
  %v10543 = vand.u32 %v10542, 4294901760
  %v10544 = vsub.f32 %v10542, %v10543
  %v10545 = vand.u32 %v10544, 4294901760
  %10546 = vmatmul.f32.gmra.mxu0 %v10545
  %v10547 = vpop.f32.mrf.mxu0
  %v10548 = vadd.f32 %v10308, %v10547
  %v10549 = vand.u32 %v10322, 4294901760
  %v10550 = vsub.f32 %v10322, %v10549
  %v10551 = vand.u32 %v10550, 4294901760
  %v10552 = vsub.f32 %v10550, %v10551
  %v10553 = vand.u32 %v10552, 4294901760
  %10554 = vmatmul.f32.gmra.mxu0 %v10553
  %v10555 = vpop.f32.mrf.mxu0
  %v10556 = vadd.f32 %v10308, %v10555
  %v10557 = vand.u32 %v10325, 4294901760
  %v10558 = vsub.f32 %v10325, %v10557
  %v10559 = vand.u32 %v10558, 4294901760
  %v10560 = vsub.f32 %v10558, %v10559
  %v10561 = vand.u32 %v10560, 4294901760
  %10562 = vmatmul.f32.gmra.mxu0 %v10561
  %v10563 = vpop.f32.mrf.mxu0
  %v10564 = vadd.f32 %v10308, %v10563
  %v10565 = vand.u32 %v10328, 4294901760
  %v10566 = vsub.f32 %v10328, %v10565
  %v10567 = vand.u32 %v10566, 4294901760
  %v10568 = vsub.f32 %v10566, %v10567
  %v10569 = vand.u32 %v10568, 4294901760
  %10570 = vmatmul.f32.gmra.mxu0 %v10569
  %v10571 = vpop.f32.mrf.mxu0
  %v10572 = vadd.f32 %v10308, %v10571
  %v10573 = vand.u32 %v10331, 4294901760
  %v10574 = vsub.f32 %v10331, %v10573
  %v10575 = vand.u32 %v10574, 4294901760
  %v10576 = vsub.f32 %v10574, %v10575
  %v10577 = vand.u32 %v10576, 4294901760
  %10578 = vmatmul.f32.gmra.mxu0 %v10577
  %v10579 = vpop.f32.mrf.mxu0
  %v10580 = vadd.f32 %v10308, %v10579
  %v10581 = vand.u32 %v10334, 4294901760
  %v10582 = vsub.f32 %v10334, %v10581
  %v10583 = vand.u32 %v10582, 4294901760
  %v10584 = vsub.f32 %v10582, %v10583
  %v10585 = vand.u32 %v10584, 4294901760
  %10586 = vmatmul.f32.gmra.mxu0 %v10585
  %v10587 = vpop.f32.mrf.mxu0
  %v10588 = vadd.f32 %v10308, %v10587
  %v10589 = vand.u32 %v10337, 4294901760
  %v10590 = vsub.f32 %v10337, %v10589
  %v10591 = vand.u32 %v10590, 4294901760
  %v10592 = vsub.f32 %v10590, %v10591
  %v10593 = vand.u32 %v10592, 4294901760
  %10594 = vmatmul.f32.gmra.mxu0 %v10593
  %v10595 = vpop.f32.mrf.mxu0
  %v10596 = vadd.f32 %v10308, %v10595
  %10597 = vdwg.mxu0
  %10598 = vmatpush.msra.mxu0 0.0
  %10599 = vmatpush.msra.mxu0 0.0
  %10600 = vmatpush.msra.mxu0 0.0
  %10601 = vmatpush.msra.mxu0 0.0
  %10602 = vmatpush.msra.mxu0 0.0
  %10603 = vmatpush.msra.mxu0 0.0
  %10604 = vmatpush.msra.mxu0 0.0
  %10605 = vmatpush.msra.mxu0 0.0
  %10606 = vmatpush.msra.mxu0 0.0
  %10607 = vmatpush.msra.mxu0 0.0
  %10608 = vmatpush.msra.mxu0 0.0
  %10609 = vmatpush.msra.mxu0 0.0
  %10610 = vmatpush.msra.mxu0 0.0
  %10611 = vmatpush.msra.mxu0 0.0
  %v10612 = vand.u32 %v32, 4294901760
  %v10613 = vsub.f32 %v32, %v10612
  %v10614 = vand.u32 %v10613, 4294901760
  %v10615 = vsub.f32 %v10613, %v10614
  %v10616 = vand.u32 %v10615, 4294901760
  %10617 = vmatpush.msra.mxu0 %v10616
  %v10618 = vand.u32 %v31, 4294901760
  %v10619 = vsub.f32 %v31, %v10618
  %v10620 = vand.u32 %v10619, 4294901760
  %v10621 = vsub.f32 %v10619, %v10620
  %v10622 = vand.u32 %v10621, 4294901760
  %10623 = vmatpush.msra.mxu0 %v10622
  %v10624 = vand.u32 %v6768, 4294901760
  %10625 = vmatmul.f32.gmra.mxu0 %v10624
  %v10626 = vpop.f32.mrf.mxu0
  %v10627 = vadd.f32 %v10364, %v10626
  %v10628 = vand.u32 %v6771, 4294901760
  %10629 = vmatmul.f32.gmra.mxu0 %v10628
  %v10630 = vpop.f32.mrf.mxu0
  %v10631 = vadd.f32 %v10372, %v10630
  %v10632 = vand.u32 %v6774, 4294901760
  %10633 = vmatmul.f32.gmra.mxu0 %v10632
  %v10634 = vpop.f32.mrf.mxu0
  %v10635 = vadd.f32 %v10380, %v10634
  %v10636 = vand.u32 %v6777, 4294901760
  %10637 = vmatmul.f32.gmra.mxu0 %v10636
  %v10638 = vpop.f32.mrf.mxu0
  %v10639 = vadd.f32 %v10388, %v10638
  %v10640 = vand.u32 %v6780, 4294901760
  %10641 = vmatmul.f32.gmra.mxu0 %v10640
  %v10642 = vpop.f32.mrf.mxu0
  %v10643 = vadd.f32 %v10396, %v10642
  %v10644 = vand.u32 %v6783, 4294901760
  %10645 = vmatmul.f32.gmra.mxu0 %v10644
  %v10646 = vpop.f32.mrf.mxu0
  %v10647 = vadd.f32 %v10404, %v10646
  %v10648 = vand.u32 %v6786, 4294901760
  %10649 = vmatmul.f32.gmra.mxu0 %v10648
  %v10650 = vpop.f32.mrf.mxu0
  %v10651 = vadd.f32 %v10412, %v10650
  %v10652 = vand.u32 %v6789, 4294901760
  %10653 = vmatmul.f32.gmra.mxu0 %v10652
  %v10654 = vpop.f32.mrf.mxu0
  %v10655 = vadd.f32 %v10420, %v10654
  %v10656 = vand.u32 %v6792, 4294901760
  %10657 = vmatmul.f32.gmra.mxu0 %v10656
  %v10658 = vpop.f32.mrf.mxu0
  %v10659 = vadd.f32 %v10428, %v10658
  %v10660 = vand.u32 %v6795, 4294901760
  %10661 = vmatmul.f32.gmra.mxu0 %v10660
  %v10662 = vpop.f32.mrf.mxu0
  %v10663 = vadd.f32 %v10436, %v10662
  %v10664 = vand.u32 %v9343, 4294901760
  %10665 = vmatmul.f32.gmra.mxu0 %v10664
  %v10666 = vpop.f32.mrf.mxu0
  %v10667 = vadd.f32 %v10444, %v10666
  %v10668 = vand.u32 %v9346, 4294901760
  %10669 = vmatmul.f32.gmra.mxu0 %v10668
  %v10670 = vpop.f32.mrf.mxu0
  %v10671 = vadd.f32 %v10452, %v10670
  %v10672 = vand.u32 %v9349, 4294901760
  %10673 = vmatmul.f32.gmra.mxu0 %v10672
  %v10674 = vpop.f32.mrf.mxu0
  %v10675 = vadd.f32 %v10460, %v10674
  %v10676 = vand.u32 %v9352, 4294901760
  %10677 = vmatmul.f32.gmra.mxu0 %v10676
  %v10678 = vpop.f32.mrf.mxu0
  %v10679 = vadd.f32 %v10468, %v10678
  %v10680 = vand.u32 %v9355, 4294901760
  %10681 = vmatmul.f32.gmra.mxu0 %v10680
  %v10682 = vpop.f32.mrf.mxu0
  %v10683 = vadd.f32 %v10476, %v10682
  %v10684 = vand.u32 %v9358, 4294901760
  %10685 = vmatmul.f32.gmra.mxu0 %v10684
  %v10686 = vpop.f32.mrf.mxu0
  %v10687 = vadd.f32 %v10484, %v10686
  %v10688 = vand.u32 %v9361, 4294901760
  %10689 = vmatmul.f32.gmra.mxu0 %v10688
  %v10690 = vpop.f32.mrf.mxu0
  %v10691 = vadd.f32 %v10492, %v10690
  %v10692 = vand.u32 %v9364, 4294901760
  %10693 = vmatmul.f32.gmra.mxu0 %v10692
  %v10694 = vpop.f32.mrf.mxu0
  %v10695 = vadd.f32 %v10500, %v10694
  %v10696 = vand.u32 %v9367, 4294901760
  %10697 = vmatmul.f32.gmra.mxu0 %v10696
  %v10698 = vpop.f32.mrf.mxu0
  %v10699 = vadd.f32 %v10508, %v10698
  %v10700 = vand.u32 %v9370, 4294901760
  %10701 = vmatmul.f32.gmra.mxu0 %v10700
  %v10702 = vpop.f32.mrf.mxu0
  %v10703 = vadd.f32 %v10516, %v10702
  %v10704 = vand.u32 %v10310, 4294901760
  %10705 = vmatmul.f32.gmra.mxu0 %v10704
  %v10706 = vpop.f32.mrf.mxu0
  %v10707 = vadd.f32 %v10524, %v10706
  %v10708 = vand.u32 %v10313, 4294901760
  %10709 = vmatmul.f32.gmra.mxu0 %v10708
  %v10710 = vpop.f32.mrf.mxu0
  %v10711 = vadd.f32 %v10532, %v10710
  %v10712 = vand.u32 %v10316, 4294901760
  %10713 = vmatmul.f32.gmra.mxu0 %v10712
  %v10714 = vpop.f32.mrf.mxu0
  %v10715 = vadd.f32 %v10540, %v10714
  %v10716 = vand.u32 %v10319, 4294901760
  %10717 = vmatmul.f32.gmra.mxu0 %v10716
  %v10718 = vpop.f32.mrf.mxu0
  %v10719 = vadd.f32 %v10548, %v10718
  %v10720 = vand.u32 %v10322, 4294901760
  %10721 = vmatmul.f32.gmra.mxu0 %v10720
  %v10722 = vpop.f32.mrf.mxu0
  %v10723 = vadd.f32 %v10556, %v10722
  %v10724 = vand.u32 %v10325, 4294901760
  %10725 = vmatmul.f32.gmra.mxu0 %v10724
  %v10726 = vpop.f32.mrf.mxu0
  %v10727 = vadd.f32 %v10564, %v10726
  %v10728 = vand.u32 %v10328, 4294901760
  %10729 = vmatmul.f32.gmra.mxu0 %v10728
  %v10730 = vpop.f32.mrf.mxu0
  %v10731 = vadd.f32 %v10572, %v10730
  %v10732 = vand.u32 %v10331, 4294901760
  %10733 = vmatmul.f32.gmra.mxu0 %v10732
  %v10734 = vpop.f32.mrf.mxu0
  %v10735 = vadd.f32 %v10580, %v10734
  %v10736 = vand.u32 %v10334, 4294901760
  %10737 = vmatmul.f32.gmra.mxu0 %v10736
  %v10738 = vpop.f32.mrf.mxu0
  %v10739 = vadd.f32 %v10588, %v10738
  %v10740 = vand.u32 %v10337, 4294901760
  %10741 = vmatmul.f32.gmra.mxu0 %v10740
  %v10742 = vpop.f32.mrf.mxu0
  %v10743 = vadd.f32 %v10596, %v10742
  %10744 = vdwg.mxu0
  %10745 = vmatpush.msra.mxu0 0.0
  %10746 = vmatpush.msra.mxu0 0.0
  %10747 = vmatpush.msra.mxu0 0.0
  %10748 = vmatpush.msra.mxu0 0.0
  %10749 = vmatpush.msra.mxu0 0.0
  %10750 = vmatpush.msra.mxu0 0.0
  %10751 = vmatpush.msra.mxu0 0.0
  %10752 = vmatpush.msra.mxu0 0.0
  %10753 = vmatpush.msra.mxu0 0.0
  %10754 = vmatpush.msra.mxu0 0.0
  %10755 = vmatpush.msra.mxu0 0.0
  %10756 = vmatpush.msra.mxu0 0.0
  %10757 = vmatpush.msra.mxu0 0.0
  %10758 = vmatpush.msra.mxu0 0.0
  %v10759 = vand.u32 %v32, 4294901760
  %v10760 = vsub.f32 %v32, %v10759
  %10761 = vmatpush.msra.mxu0 %v10760
  %v10762 = vand.u32 %v31, 4294901760
  %v10763 = vsub.f32 %v31, %v10762
  %10764 = vmatpush.msra.mxu0 %v10763
  %v10765 = vand.u32 %v6768, 4294901760
  %v10766 = vsub.f32 %v6768, %v10765
  %10767 = vmatmul.f32.gmra.mxu0 %v10766
  %v10768 = vpop.f32.mrf.mxu0
  %v10769 = vadd.f32 %v10627, %v10768
  %v10770 = vand.u32 %v6771, 4294901760
  %v10771 = vsub.f32 %v6771, %v10770
  %10772 = vmatmul.f32.gmra.mxu0 %v10771
  %v10773 = vpop.f32.mrf.mxu0
  %v10774 = vadd.f32 %v10631, %v10773
  %v10775 = vand.u32 %v6774, 4294901760
  %v10776 = vsub.f32 %v6774, %v10775
  %10777 = vmatmul.f32.gmra.mxu0 %v10776
  %v10778 = vpop.f32.mrf.mxu0
  %v10779 = vadd.f32 %v10635, %v10778
  %v10780 = vand.u32 %v6777, 4294901760
  %v10781 = vsub.f32 %v6777, %v10780
  %10782 = vmatmul.f32.gmra.mxu0 %v10781
  %v10783 = vpop.f32.mrf.mxu0
  %v10784 = vadd.f32 %v10639, %v10783
  %v10785 = vand.u32 %v6780, 4294901760
  %v10786 = vsub.f32 %v6780, %v10785
  %10787 = vmatmul.f32.gmra.mxu0 %v10786
  %v10788 = vpop.f32.mrf.mxu0
  %v10789 = vadd.f32 %v10643, %v10788
  %v10790 = vand.u32 %v6783, 4294901760
  %v10791 = vsub.f32 %v6783, %v10790
  %10792 = vmatmul.f32.gmra.mxu0 %v10791
  %v10793 = vpop.f32.mrf.mxu0
  %v10794 = vadd.f32 %v10647, %v10793
  %v10795 = vand.u32 %v6786, 4294901760
  %v10796 = vsub.f32 %v6786, %v10795
  %10797 = vmatmul.f32.gmra.mxu0 %v10796
  %v10798 = vpop.f32.mrf.mxu0
  %v10799 = vadd.f32 %v10651, %v10798
  %v10800 = vand.u32 %v6789, 4294901760
  %v10801 = vsub.f32 %v6789, %v10800
  %10802 = vmatmul.f32.gmra.mxu0 %v10801
  %v10803 = vpop.f32.mrf.mxu0
  %v10804 = vadd.f32 %v10655, %v10803
  %v10805 = vand.u32 %v6792, 4294901760
  %v10806 = vsub.f32 %v6792, %v10805
  %10807 = vmatmul.f32.gmra.mxu0 %v10806
  %v10808 = vpop.f32.mrf.mxu0
  %v10809 = vadd.f32 %v10659, %v10808
  %v10810 = vand.u32 %v6795, 4294901760
  %v10811 = vsub.f32 %v6795, %v10810
  %10812 = vmatmul.f32.gmra.mxu0 %v10811
  %v10813 = vpop.f32.mrf.mxu0
  %v10814 = vadd.f32 %v10663, %v10813
  %v10815 = vand.u32 %v9343, 4294901760
  %v10816 = vsub.f32 %v9343, %v10815
  %10817 = vmatmul.f32.gmra.mxu0 %v10816
  %v10818 = vpop.f32.mrf.mxu0
  %v10819 = vadd.f32 %v10667, %v10818
  %v10820 = vand.u32 %v9346, 4294901760
  %v10821 = vsub.f32 %v9346, %v10820
  %10822 = vmatmul.f32.gmra.mxu0 %v10821
  %v10823 = vpop.f32.mrf.mxu0
  %v10824 = vadd.f32 %v10671, %v10823
  %v10825 = vand.u32 %v9349, 4294901760
  %v10826 = vsub.f32 %v9349, %v10825
  %10827 = vmatmul.f32.gmra.mxu0 %v10826
  %v10828 = vpop.f32.mrf.mxu0
  %v10829 = vadd.f32 %v10675, %v10828
  %v10830 = vand.u32 %v9352, 4294901760
  %v10831 = vsub.f32 %v9352, %v10830
  %10832 = vmatmul.f32.gmra.mxu0 %v10831
  %v10833 = vpop.f32.mrf.mxu0
  %v10834 = vadd.f32 %v10679, %v10833
  %v10835 = vand.u32 %v9355, 4294901760
  %v10836 = vsub.f32 %v9355, %v10835
  %10837 = vmatmul.f32.gmra.mxu0 %v10836
  %v10838 = vpop.f32.mrf.mxu0
  %v10839 = vadd.f32 %v10683, %v10838
  %v10840 = vand.u32 %v9358, 4294901760
  %v10841 = vsub.f32 %v9358, %v10840
  %10842 = vmatmul.f32.gmra.mxu0 %v10841
  %v10843 = vpop.f32.mrf.mxu0
  %v10844 = vadd.f32 %v10687, %v10843
  %v10845 = vand.u32 %v9361, 4294901760
  %v10846 = vsub.f32 %v9361, %v10845
  %10847 = vmatmul.f32.gmra.mxu0 %v10846
  %v10848 = vpop.f32.mrf.mxu0
  %v10849 = vadd.f32 %v10691, %v10848
  %v10850 = vand.u32 %v9364, 4294901760
  %v10851 = vsub.f32 %v9364, %v10850
  %10852 = vmatmul.f32.gmra.mxu0 %v10851
  %v10853 = vpop.f32.mrf.mxu0
  %v10854 = vadd.f32 %v10695, %v10853
  %v10855 = vand.u32 %v9367, 4294901760
  %v10856 = vsub.f32 %v9367, %v10855
  %10857 = vmatmul.f32.gmra.mxu0 %v10856
  %v10858 = vpop.f32.mrf.mxu0
  %v10859 = vadd.f32 %v10699, %v10858
  %v10860 = vand.u32 %v9370, 4294901760
  %v10861 = vsub.f32 %v9370, %v10860
  %10862 = vmatmul.f32.gmra.mxu0 %v10861
  %v10863 = vpop.f32.mrf.mxu0
  %v10864 = vadd.f32 %v10703, %v10863
  %v10865 = vand.u32 %v10310, 4294901760
  %v10866 = vsub.f32 %v10310, %v10865
  %10867 = vmatmul.f32.gmra.mxu0 %v10866
  %v10868 = vpop.f32.mrf.mxu0
  %v10869 = vadd.f32 %v10707, %v10868
  %v10870 = vand.u32 %v10313, 4294901760
  %v10871 = vsub.f32 %v10313, %v10870
  %10872 = vmatmul.f32.gmra.mxu0 %v10871
  %v10873 = vpop.f32.mrf.mxu0
  %v10874 = vadd.f32 %v10711, %v10873
  %v10875 = vand.u32 %v10316, 4294901760
  %v10876 = vsub.f32 %v10316, %v10875
  %10877 = vmatmul.f32.gmra.mxu0 %v10876
  %v10878 = vpop.f32.mrf.mxu0
  %v10879 = vadd.f32 %v10715, %v10878
  %v10880 = vand.u32 %v10319, 4294901760
  %v10881 = vsub.f32 %v10319, %v10880
  %10882 = vmatmul.f32.gmra.mxu0 %v10881
  %v10883 = vpop.f32.mrf.mxu0
  %v10884 = vadd.f32 %v10719, %v10883
  %v10885 = vand.u32 %v10322, 4294901760
  %v10886 = vsub.f32 %v10322, %v10885
  %10887 = vmatmul.f32.gmra.mxu0 %v10886
  %v10888 = vpop.f32.mrf.mxu0
  %v10889 = vadd.f32 %v10723, %v10888
  %v10890 = vand.u32 %v10325, 4294901760
  %v10891 = vsub.f32 %v10325, %v10890
  %10892 = vmatmul.f32.gmra.mxu0 %v10891
  %v10893 = vpop.f32.mrf.mxu0
  %v10894 = vadd.f32 %v10727, %v10893
  %v10895 = vand.u32 %v10328, 4294901760
  %v10896 = vsub.f32 %v10328, %v10895
  %10897 = vmatmul.f32.gmra.mxu0 %v10896
  %v10898 = vpop.f32.mrf.mxu0
  %v10899 = vadd.f32 %v10731, %v10898
  %v10900 = vand.u32 %v10331, 4294901760
  %v10901 = vsub.f32 %v10331, %v10900
  %10902 = vmatmul.f32.gmra.mxu0 %v10901
  %v10903 = vpop.f32.mrf.mxu0
  %v10904 = vadd.f32 %v10735, %v10903
  %v10905 = vand.u32 %v10334, 4294901760
  %v10906 = vsub.f32 %v10334, %v10905
  %10907 = vmatmul.f32.gmra.mxu0 %v10906
  %v10908 = vpop.f32.mrf.mxu0
  %v10909 = vadd.f32 %v10739, %v10908
  %v10910 = vand.u32 %v10337, 4294901760
  %v10911 = vsub.f32 %v10337, %v10910
  %10912 = vmatmul.f32.gmra.mxu0 %v10911
  %v10913 = vpop.f32.mrf.mxu0
  %v10914 = vadd.f32 %v10743, %v10913
  %10915 = vdwg.mxu0
  %10916 = vmatpush.msra.mxu0 0.0
  %10917 = vmatpush.msra.mxu0 0.0
  %10918 = vmatpush.msra.mxu0 0.0
  %10919 = vmatpush.msra.mxu0 0.0
  %10920 = vmatpush.msra.mxu0 0.0
  %10921 = vmatpush.msra.mxu0 0.0
  %10922 = vmatpush.msra.mxu0 0.0
  %10923 = vmatpush.msra.mxu0 0.0
  %10924 = vmatpush.msra.mxu0 0.0
  %10925 = vmatpush.msra.mxu0 0.0
  %10926 = vmatpush.msra.mxu0 0.0
  %10927 = vmatpush.msra.mxu0 0.0
  %10928 = vmatpush.msra.mxu0 0.0
  %10929 = vmatpush.msra.mxu0 0.0
  %v10930 = vand.u32 %v32, 4294901760
  %10931 = vmatpush.msra.mxu0 %v10930
  %v10932 = vand.u32 %v31, 4294901760
  %10933 = vmatpush.msra.mxu0 %v10932
  %v10934 = vand.u32 %v6768, 4294901760
  %v10935 = vsub.f32 %v6768, %v10934
  %v10936 = vand.u32 %v10935, 4294901760
  %10937 = vmatmul.f32.gmra.mxu0 %v10936
  %v10938 = vpop.f32.mrf.mxu0
  %v10939 = vadd.f32 %v10769, %v10938
  %v10940 = vand.u32 %v6771, 4294901760
  %v10941 = vsub.f32 %v6771, %v10940
  %v10942 = vand.u32 %v10941, 4294901760
  %10943 = vmatmul.f32.gmra.mxu0 %v10942
  %v10944 = vpop.f32.mrf.mxu0
  %v10945 = vadd.f32 %v10774, %v10944
  %v10946 = vand.u32 %v6774, 4294901760
  %v10947 = vsub.f32 %v6774, %v10946
  %v10948 = vand.u32 %v10947, 4294901760
  %10949 = vmatmul.f32.gmra.mxu0 %v10948
  %v10950 = vpop.f32.mrf.mxu0
  %v10951 = vadd.f32 %v10779, %v10950
  %v10952 = vand.u32 %v6777, 4294901760
  %v10953 = vsub.f32 %v6777, %v10952
  %v10954 = vand.u32 %v10953, 4294901760
  %10955 = vmatmul.f32.gmra.mxu0 %v10954
  %v10956 = vpop.f32.mrf.mxu0
  %v10957 = vadd.f32 %v10784, %v10956
  %v10958 = vand.u32 %v6780, 4294901760
  %v10959 = vsub.f32 %v6780, %v10958
  %v10960 = vand.u32 %v10959, 4294901760
  %10961 = vmatmul.f32.gmra.mxu0 %v10960
  %v10962 = vpop.f32.mrf.mxu0
  %v10963 = vadd.f32 %v10789, %v10962
  %v10964 = vand.u32 %v6783, 4294901760
  %v10965 = vsub.f32 %v6783, %v10964
  %v10966 = vand.u32 %v10965, 4294901760
  %10967 = vmatmul.f32.gmra.mxu0 %v10966
  %v10968 = vpop.f32.mrf.mxu0
  %v10969 = vadd.f32 %v10794, %v10968
  %v10970 = vand.u32 %v6786, 4294901760
  %v10971 = vsub.f32 %v6786, %v10970
  %v10972 = vand.u32 %v10971, 4294901760
  %10973 = vmatmul.f32.gmra.mxu0 %v10972
  %v10974 = vpop.f32.mrf.mxu0
  %v10975 = vadd.f32 %v10799, %v10974
  %v10976 = vand.u32 %v6789, 4294901760
  %v10977 = vsub.f32 %v6789, %v10976
  %v10978 = vand.u32 %v10977, 4294901760
  %10979 = vmatmul.f32.gmra.mxu0 %v10978
  %v10980 = vpop.f32.mrf.mxu0
  %v10981 = vadd.f32 %v10804, %v10980
  %v10982 = vand.u32 %v6792, 4294901760
  %v10983 = vsub.f32 %v6792, %v10982
  %v10984 = vand.u32 %v10983, 4294901760
  %10985 = vmatmul.f32.gmra.mxu0 %v10984
  %v10986 = vpop.f32.mrf.mxu0
  %v10987 = vadd.f32 %v10809, %v10986
  %v10988 = vand.u32 %v6795, 4294901760
  %v10989 = vsub.f32 %v6795, %v10988
  %v10990 = vand.u32 %v10989, 4294901760
  %10991 = vmatmul.f32.gmra.mxu0 %v10990
  %v10992 = vpop.f32.mrf.mxu0
  %v10993 = vadd.f32 %v10814, %v10992
  %v10994 = vand.u32 %v9343, 4294901760
  %v10995 = vsub.f32 %v9343, %v10994
  %v10996 = vand.u32 %v10995, 4294901760
  %10997 = vmatmul.f32.gmra.mxu0 %v10996
  %v10998 = vpop.f32.mrf.mxu0
  %v10999 = vadd.f32 %v10819, %v10998
  %v11000 = vand.u32 %v9346, 4294901760
  %v11001 = vsub.f32 %v9346, %v11000
  %v11002 = vand.u32 %v11001, 4294901760
  %11003 = vmatmul.f32.gmra.mxu0 %v11002
  %v11004 = vpop.f32.mrf.mxu0
  %v11005 = vadd.f32 %v10824, %v11004
  %v11006 = vand.u32 %v9349, 4294901760
  %v11007 = vsub.f32 %v9349, %v11006
  %v11008 = vand.u32 %v11007, 4294901760
  %11009 = vmatmul.f32.gmra.mxu0 %v11008
  %v11010 = vpop.f32.mrf.mxu0
  %v11011 = vadd.f32 %v10829, %v11010
  %v11012 = vand.u32 %v9352, 4294901760
  %v11013 = vsub.f32 %v9352, %v11012
  %v11014 = vand.u32 %v11013, 4294901760
  %11015 = vmatmul.f32.gmra.mxu0 %v11014
  %v11016 = vpop.f32.mrf.mxu0
  %v11017 = vadd.f32 %v10834, %v11016
  %v11018 = vand.u32 %v9355, 4294901760
  %v11019 = vsub.f32 %v9355, %v11018
  %v11020 = vand.u32 %v11019, 4294901760
  %11021 = vmatmul.f32.gmra.mxu0 %v11020
  %v11022 = vpop.f32.mrf.mxu0
  %v11023 = vadd.f32 %v10839, %v11022
  %v11024 = vand.u32 %v9358, 4294901760
  %v11025 = vsub.f32 %v9358, %v11024
  %v11026 = vand.u32 %v11025, 4294901760
  %11027 = vmatmul.f32.gmra.mxu0 %v11026
  %v11028 = vpop.f32.mrf.mxu0
  %v11029 = vadd.f32 %v10844, %v11028
  %v11030 = vand.u32 %v9361, 4294901760
  %v11031 = vsub.f32 %v9361, %v11030
  %v11032 = vand.u32 %v11031, 4294901760
  %11033 = vmatmul.f32.gmra.mxu0 %v11032
  %v11034 = vpop.f32.mrf.mxu0
  %v11035 = vadd.f32 %v10849, %v11034
  %v11036 = vand.u32 %v9364, 4294901760
  %v11037 = vsub.f32 %v9364, %v11036
  %v11038 = vand.u32 %v11037, 4294901760
  %11039 = vmatmul.f32.gmra.mxu0 %v11038
  %v11040 = vpop.f32.mrf.mxu0
  %v11041 = vadd.f32 %v10854, %v11040
  %v11042 = vand.u32 %v9367, 4294901760
  %v11043 = vsub.f32 %v9367, %v11042
  %v11044 = vand.u32 %v11043, 4294901760
  %11045 = vmatmul.f32.gmra.mxu0 %v11044
  %v11046 = vpop.f32.mrf.mxu0
  %v11047 = vadd.f32 %v10859, %v11046
  %v11048 = vand.u32 %v9370, 4294901760
  %v11049 = vsub.f32 %v9370, %v11048
  %v11050 = vand.u32 %v11049, 4294901760
  %11051 = vmatmul.f32.gmra.mxu0 %v11050
  %v11052 = vpop.f32.mrf.mxu0
  %v11053 = vadd.f32 %v10864, %v11052
  %v11054 = vand.u32 %v10310, 4294901760
  %v11055 = vsub.f32 %v10310, %v11054
  %v11056 = vand.u32 %v11055, 4294901760
  %11057 = vmatmul.f32.gmra.mxu0 %v11056
  %v11058 = vpop.f32.mrf.mxu0
  %v11059 = vadd.f32 %v10869, %v11058
  %v11060 = vand.u32 %v10313, 4294901760
  %v11061 = vsub.f32 %v10313, %v11060
  %v11062 = vand.u32 %v11061, 4294901760
  %11063 = vmatmul.f32.gmra.mxu0 %v11062
  %v11064 = vpop.f32.mrf.mxu0
  %v11065 = vadd.f32 %v10874, %v11064
  %v11066 = vand.u32 %v10316, 4294901760
  %v11067 = vsub.f32 %v10316, %v11066
  %v11068 = vand.u32 %v11067, 4294901760
  %11069 = vmatmul.f32.gmra.mxu0 %v11068
  %v11070 = vpop.f32.mrf.mxu0
  %v11071 = vadd.f32 %v10879, %v11070
  %v11072 = vand.u32 %v10319, 4294901760
  %v11073 = vsub.f32 %v10319, %v11072
  %v11074 = vand.u32 %v11073, 4294901760
  %11075 = vmatmul.f32.gmra.mxu0 %v11074
  %v11076 = vpop.f32.mrf.mxu0
  %v11077 = vadd.f32 %v10884, %v11076
  %v11078 = vand.u32 %v10322, 4294901760
  %v11079 = vsub.f32 %v10322, %v11078
  %v11080 = vand.u32 %v11079, 4294901760
  %11081 = vmatmul.f32.gmra.mxu0 %v11080
  %v11082 = vpop.f32.mrf.mxu0
  %v11083 = vadd.f32 %v10889, %v11082
  %v11084 = vand.u32 %v10325, 4294901760
  %v11085 = vsub.f32 %v10325, %v11084
  %v11086 = vand.u32 %v11085, 4294901760
  %11087 = vmatmul.f32.gmra.mxu0 %v11086
  %v11088 = vpop.f32.mrf.mxu0
  %v11089 = vadd.f32 %v10894, %v11088
  %v11090 = vand.u32 %v10328, 4294901760
  %v11091 = vsub.f32 %v10328, %v11090
  %v11092 = vand.u32 %v11091, 4294901760
  %11093 = vmatmul.f32.gmra.mxu0 %v11092
  %v11094 = vpop.f32.mrf.mxu0
  %v11095 = vadd.f32 %v10899, %v11094
  %v11096 = vand.u32 %v10331, 4294901760
  %v11097 = vsub.f32 %v10331, %v11096
  %v11098 = vand.u32 %v11097, 4294901760
  %11099 = vmatmul.f32.gmra.mxu0 %v11098
  %v11100 = vpop.f32.mrf.mxu0
  %v11101 = vadd.f32 %v10904, %v11100
  %v11102 = vand.u32 %v10334, 4294901760
  %v11103 = vsub.f32 %v10334, %v11102
  %v11104 = vand.u32 %v11103, 4294901760
  %11105 = vmatmul.f32.gmra.mxu0 %v11104
  %v11106 = vpop.f32.mrf.mxu0
  %v11107 = vadd.f32 %v10909, %v11106
  %v11108 = vand.u32 %v10337, 4294901760
  %v11109 = vsub.f32 %v10337, %v11108
  %v11110 = vand.u32 %v11109, 4294901760
  %11111 = vmatmul.f32.gmra.mxu0 %v11110
  %v11112 = vpop.f32.mrf.mxu0
  %v11113 = vadd.f32 %v10914, %v11112
  %11114 = vdwg.mxu0
  %11115 = vmatpush.msra.mxu0 0.0
  %11116 = vmatpush.msra.mxu0 0.0
  %11117 = vmatpush.msra.mxu0 0.0
  %11118 = vmatpush.msra.mxu0 0.0
  %11119 = vmatpush.msra.mxu0 0.0
  %11120 = vmatpush.msra.mxu0 0.0
  %11121 = vmatpush.msra.mxu0 0.0
  %11122 = vmatpush.msra.mxu0 0.0
  %11123 = vmatpush.msra.mxu0 0.0
  %11124 = vmatpush.msra.mxu0 0.0
  %11125 = vmatpush.msra.mxu0 0.0
  %11126 = vmatpush.msra.mxu0 0.0
  %11127 = vmatpush.msra.mxu0 0.0
  %11128 = vmatpush.msra.mxu0 0.0
  %v11129 = vand.u32 %v32, 4294901760
  %v11130 = vsub.f32 %v32, %v11129
  %v11131 = vand.u32 %v11130, 4294901760
  %11132 = vmatpush.msra.mxu0 %v11131
  %v11133 = vand.u32 %v31, 4294901760
  %v11134 = vsub.f32 %v31, %v11133
  %v11135 = vand.u32 %v11134, 4294901760
  %11136 = vmatpush.msra.mxu0 %v11135
  %v11137 = vand.u32 %v6768, 4294901760
  %11138 = vmatmul.f32.gmra.mxu0 %v11137
  %v11139 = vpop.f32.mrf.mxu0
  %v11140 = vadd.f32 %v10939, %v11139
  %v11141 = vand.u32 %v6771, 4294901760
  %11142 = vmatmul.f32.gmra.mxu0 %v11141
  %v11143 = vpop.f32.mrf.mxu0
  %v11144 = vadd.f32 %v10945, %v11143
  %v11145 = vand.u32 %v6774, 4294901760
  %11146 = vmatmul.f32.gmra.mxu0 %v11145
  %v11147 = vpop.f32.mrf.mxu0
  %v11148 = vadd.f32 %v10951, %v11147
  %v11149 = vand.u32 %v6777, 4294901760
  %11150 = vmatmul.f32.gmra.mxu0 %v11149
  %v11151 = vpop.f32.mrf.mxu0
  %v11152 = vadd.f32 %v10957, %v11151
  %v11153 = vand.u32 %v6780, 4294901760
  %11154 = vmatmul.f32.gmra.mxu0 %v11153
  %v11155 = vpop.f32.mrf.mxu0
  %v11156 = vadd.f32 %v10963, %v11155
  %v11157 = vand.u32 %v6783, 4294901760
  %11158 = vmatmul.f32.gmra.mxu0 %v11157
  %v11159 = vpop.f32.mrf.mxu0
  %v11160 = vadd.f32 %v10969, %v11159
  %v11161 = vand.u32 %v6786, 4294901760
  %11162 = vmatmul.f32.gmra.mxu0 %v11161
  %v11163 = vpop.f32.mrf.mxu0
  %v11164 = vadd.f32 %v10975, %v11163
  %v11165 = vand.u32 %v6789, 4294901760
  %11166 = vmatmul.f32.gmra.mxu0 %v11165
  %v11167 = vpop.f32.mrf.mxu0
  %v11168 = vadd.f32 %v10981, %v11167
  %v11169 = vand.u32 %v6792, 4294901760
  %11170 = vmatmul.f32.gmra.mxu0 %v11169
  %v11171 = vpop.f32.mrf.mxu0
  %v11172 = vadd.f32 %v10987, %v11171
  %v11173 = vand.u32 %v6795, 4294901760
  %11174 = vmatmul.f32.gmra.mxu0 %v11173
  %v11175 = vpop.f32.mrf.mxu0
  %v11176 = vadd.f32 %v10993, %v11175
  %v11177 = vand.u32 %v9343, 4294901760
  %11178 = vmatmul.f32.gmra.mxu0 %v11177
  %v11179 = vpop.f32.mrf.mxu0
  %v11180 = vadd.f32 %v10999, %v11179
  %v11181 = vand.u32 %v9346, 4294901760
  %11182 = vmatmul.f32.gmra.mxu0 %v11181
  %v11183 = vpop.f32.mrf.mxu0
  %v11184 = vadd.f32 %v11005, %v11183
  %v11185 = vand.u32 %v9349, 4294901760
  %11186 = vmatmul.f32.gmra.mxu0 %v11185
  %v11187 = vpop.f32.mrf.mxu0
  %v11188 = vadd.f32 %v11011, %v11187
  %v11189 = vand.u32 %v9352, 4294901760
  %11190 = vmatmul.f32.gmra.mxu0 %v11189
  %v11191 = vpop.f32.mrf.mxu0
  %v11192 = vadd.f32 %v11017, %v11191
  %v11193 = vand.u32 %v9355, 4294901760
  %11194 = vmatmul.f32.gmra.mxu0 %v11193
  %v11195 = vpop.f32.mrf.mxu0
  %v11196 = vadd.f32 %v11023, %v11195
  %v11197 = vand.u32 %v9358, 4294901760
  %11198 = vmatmul.f32.gmra.mxu0 %v11197
  %v11199 = vpop.f32.mrf.mxu0
  %v11200 = vadd.f32 %v11029, %v11199
  %v11201 = vand.u32 %v9361, 4294901760
  %11202 = vmatmul.f32.gmra.mxu0 %v11201
  %v11203 = vpop.f32.mrf.mxu0
  %v11204 = vadd.f32 %v11035, %v11203
  %v11205 = vand.u32 %v9364, 4294901760
  %11206 = vmatmul.f32.gmra.mxu0 %v11205
  %v11207 = vpop.f32.mrf.mxu0
  %v11208 = vadd.f32 %v11041, %v11207
  %v11209 = vand.u32 %v9367, 4294901760
  %11210 = vmatmul.f32.gmra.mxu0 %v11209
  %v11211 = vpop.f32.mrf.mxu0
  %v11212 = vadd.f32 %v11047, %v11211
  %v11213 = vand.u32 %v9370, 4294901760
  %11214 = vmatmul.f32.gmra.mxu0 %v11213
  %v11215 = vpop.f32.mrf.mxu0
  %v11216 = vadd.f32 %v11053, %v11215
  %v11217 = vand.u32 %v10310, 4294901760
  %11218 = vmatmul.f32.gmra.mxu0 %v11217
  %v11219 = vpop.f32.mrf.mxu0
  %v11220 = vadd.f32 %v11059, %v11219
  %v11221 = vand.u32 %v10313, 4294901760
  %11222 = vmatmul.f32.gmra.mxu0 %v11221
  %v11223 = vpop.f32.mrf.mxu0
  %v11224 = vadd.f32 %v11065, %v11223
  %v11225 = vand.u32 %v10316, 4294901760
  %11226 = vmatmul.f32.gmra.mxu0 %v11225
  %v11227 = vpop.f32.mrf.mxu0
  %v11228 = vadd.f32 %v11071, %v11227
  %v11229 = vand.u32 %v10319, 4294901760
  %11230 = vmatmul.f32.gmra.mxu0 %v11229
  %v11231 = vpop.f32.mrf.mxu0
  %v11232 = vadd.f32 %v11077, %v11231
  %v11233 = vand.u32 %v10322, 4294901760
  %11234 = vmatmul.f32.gmra.mxu0 %v11233
  %v11235 = vpop.f32.mrf.mxu0
  %v11236 = vadd.f32 %v11083, %v11235
  %v11237 = vand.u32 %v10325, 4294901760
  %11238 = vmatmul.f32.gmra.mxu0 %v11237
  %v11239 = vpop.f32.mrf.mxu0
  %v11240 = vadd.f32 %v11089, %v11239
  %v11241 = vand.u32 %v10328, 4294901760
  %11242 = vmatmul.f32.gmra.mxu0 %v11241
  %v11243 = vpop.f32.mrf.mxu0
  %v11244 = vadd.f32 %v11095, %v11243
  %v11245 = vand.u32 %v10331, 4294901760
  %11246 = vmatmul.f32.gmra.mxu0 %v11245
  %v11247 = vpop.f32.mrf.mxu0
  %v11248 = vadd.f32 %v11101, %v11247
  %v11249 = vand.u32 %v10334, 4294901760
  %11250 = vmatmul.f32.gmra.mxu0 %v11249
  %v11251 = vpop.f32.mrf.mxu0
  %v11252 = vadd.f32 %v11107, %v11251
  %v11253 = vand.u32 %v10337, 4294901760
  %11254 = vmatmul.f32.gmra.mxu0 %v11253
  %v11255 = vpop.f32.mrf.mxu0
  %v11256 = vadd.f32 %v11113, %v11255
  %11257 = vdwg.mxu0
  %11258 = vmatpush.msra.mxu0 0.0
  %11259 = vmatpush.msra.mxu0 0.0
  %11260 = vmatpush.msra.mxu0 0.0
  %11261 = vmatpush.msra.mxu0 0.0
  %11262 = vmatpush.msra.mxu0 0.0
  %11263 = vmatpush.msra.mxu0 0.0
  %11264 = vmatpush.msra.mxu0 0.0
  %11265 = vmatpush.msra.mxu0 0.0
  %11266 = vmatpush.msra.mxu0 0.0
  %11267 = vmatpush.msra.mxu0 0.0
  %11268 = vmatpush.msra.mxu0 0.0
  %11269 = vmatpush.msra.mxu0 0.0
  %11270 = vmatpush.msra.mxu0 0.0
  %11271 = vmatpush.msra.mxu0 0.0
  %v11272 = vand.u32 %v32, 4294901760
  %11273 = vmatpush.msra.mxu0 %v11272
  %v11274 = vand.u32 %v31, 4294901760
  %11275 = vmatpush.msra.mxu0 %v11274
  %v11276 = vand.u32 %v6768, 4294901760
  %11277 = vmatmul.f32.gmra.mxu0 %v11276
  %v11278 = vpop.f32.mrf.mxu0
  %v11279 = vadd.f32 %v11140, %v11278
  %v11280 = vand.u32 %v6771, 4294901760
  %11281 = vmatmul.f32.gmra.mxu0 %v11280
  %v11282 = vpop.f32.mrf.mxu0
  %v11283 = vadd.f32 %v11144, %v11282
  %v11284 = vand.u32 %v6774, 4294901760
  %11285 = vmatmul.f32.gmra.mxu0 %v11284
  %v11286 = vpop.f32.mrf.mxu0
  %v11287 = vadd.f32 %v11148, %v11286
  %v11288 = vand.u32 %v6777, 4294901760
  %11289 = vmatmul.f32.gmra.mxu0 %v11288
  %v11290 = vpop.f32.mrf.mxu0
  %v11291 = vadd.f32 %v11152, %v11290
  %v11292 = vand.u32 %v6780, 4294901760
  %11293 = vmatmul.f32.gmra.mxu0 %v11292
  %v11294 = vpop.f32.mrf.mxu0
  %v11295 = vadd.f32 %v11156, %v11294
  %v11296 = vand.u32 %v6783, 4294901760
  %11297 = vmatmul.f32.gmra.mxu0 %v11296
  %v11298 = vpop.f32.mrf.mxu0
  %v11299 = vadd.f32 %v11160, %v11298
  %v11300 = vand.u32 %v6786, 4294901760
  %11301 = vmatmul.f32.gmra.mxu0 %v11300
  %v11302 = vpop.f32.mrf.mxu0
  %v11303 = vadd.f32 %v11164, %v11302
  %v11304 = vand.u32 %v6789, 4294901760
  %11305 = vmatmul.f32.gmra.mxu0 %v11304
  %v11306 = vpop.f32.mrf.mxu0
  %v11307 = vadd.f32 %v11168, %v11306
  %v11308 = vand.u32 %v6792, 4294901760
  %11309 = vmatmul.f32.gmra.mxu0 %v11308
  %v11310 = vpop.f32.mrf.mxu0
  %v11311 = vadd.f32 %v11172, %v11310
  %v11312 = vand.u32 %v6795, 4294901760
  %11313 = vmatmul.f32.gmra.mxu0 %v11312
  %v11314 = vpop.f32.mrf.mxu0
  %v11315 = vadd.f32 %v11176, %v11314
  %v11316 = vand.u32 %v9343, 4294901760
  %11317 = vmatmul.f32.gmra.mxu0 %v11316
  %v11318 = vpop.f32.mrf.mxu0
  %v11319 = vadd.f32 %v11180, %v11318
  %v11320 = vand.u32 %v9346, 4294901760
  %11321 = vmatmul.f32.gmra.mxu0 %v11320
  %v11322 = vpop.f32.mrf.mxu0
  %v11323 = vadd.f32 %v11184, %v11322
  %v11324 = vand.u32 %v9349, 4294901760
  %11325 = vmatmul.f32.gmra.mxu0 %v11324
  %v11326 = vpop.f32.mrf.mxu0
  %v11327 = vadd.f32 %v11188, %v11326
  %v11328 = vand.u32 %v9352, 4294901760
  %11329 = vmatmul.f32.gmra.mxu0 %v11328
  %v11330 = vpop.f32.mrf.mxu0
  %v11331 = vadd.f32 %v11192, %v11330
  %v11332 = vand.u32 %v9355, 4294901760
  %11333 = vmatmul.f32.gmra.mxu0 %v11332
  %v11334 = vpop.f32.mrf.mxu0
  %v11335 = vadd.f32 %v11196, %v11334
  %v11336 = vand.u32 %v9358, 4294901760
  %11337 = vmatmul.f32.gmra.mxu0 %v11336
  %v11338 = vpop.f32.mrf.mxu0
  %v11339 = vadd.f32 %v11200, %v11338
  %v11340 = vand.u32 %v9361, 4294901760
  %11341 = vmatmul.f32.gmra.mxu0 %v11340
  %v11342 = vpop.f32.mrf.mxu0
  %v11343 = vadd.f32 %v11204, %v11342
  %v11344 = vand.u32 %v9364, 4294901760
  %11345 = vmatmul.f32.gmra.mxu0 %v11344
  %v11346 = vpop.f32.mrf.mxu0
  %v11347 = vadd.f32 %v11208, %v11346
  %v11348 = vand.u32 %v9367, 4294901760
  %11349 = vmatmul.f32.gmra.mxu0 %v11348
  %v11350 = vpop.f32.mrf.mxu0
  %v11351 = vadd.f32 %v11212, %v11350
  %v11352 = vand.u32 %v9370, 4294901760
  %11353 = vmatmul.f32.gmra.mxu0 %v11352
  %v11354 = vpop.f32.mrf.mxu0
  %v11355 = vadd.f32 %v11216, %v11354
  %v11356 = vand.u32 %v10310, 4294901760
  %11357 = vmatmul.f32.gmra.mxu0 %v11356
  %v11358 = vpop.f32.mrf.mxu0
  %v11359 = vadd.f32 %v11220, %v11358
  %v11360 = vand.u32 %v10313, 4294901760
  %11361 = vmatmul.f32.gmra.mxu0 %v11360
  %v11362 = vpop.f32.mrf.mxu0
  %v11363 = vadd.f32 %v11224, %v11362
  %v11364 = vand.u32 %v10316, 4294901760
  %11365 = vmatmul.f32.gmra.mxu0 %v11364
  %v11366 = vpop.f32.mrf.mxu0
  %v11367 = vadd.f32 %v11228, %v11366
  %v11368 = vand.u32 %v10319, 4294901760
  %11369 = vmatmul.f32.gmra.mxu0 %v11368
  %v11370 = vpop.f32.mrf.mxu0
  %v11371 = vadd.f32 %v11232, %v11370
  %v11372 = vand.u32 %v10322, 4294901760
  %11373 = vmatmul.f32.gmra.mxu0 %v11372
  %v11374 = vpop.f32.mrf.mxu0
  %v11375 = vadd.f32 %v11236, %v11374
  %v11376 = vand.u32 %v10325, 4294901760
  %11377 = vmatmul.f32.gmra.mxu0 %v11376
  %v11378 = vpop.f32.mrf.mxu0
  %v11379 = vadd.f32 %v11240, %v11378
  %v11380 = vand.u32 %v10328, 4294901760
  %11381 = vmatmul.f32.gmra.mxu0 %v11380
  %v11382 = vpop.f32.mrf.mxu0
  %v11383 = vadd.f32 %v11244, %v11382
  %v11384 = vand.u32 %v10331, 4294901760
  %11385 = vmatmul.f32.gmra.mxu0 %v11384
  %v11386 = vpop.f32.mrf.mxu0
  %v11387 = vadd.f32 %v11248, %v11386
  %v11388 = vand.u32 %v10334, 4294901760
  %11389 = vmatmul.f32.gmra.mxu0 %v11388
  %v11390 = vpop.f32.mrf.mxu0
  %v11391 = vadd.f32 %v11252, %v11390
  %v11392 = vand.u32 %v10337, 4294901760
  %11393 = vmatmul.f32.gmra.mxu0 %v11392
  %v11394 = vpop.f32.mrf.mxu0
  %v11395 = vadd.f32 %v11256, %v11394
  %11396 = vdwg.mxu0
  %v11397 = vmax.f32 %v11279, 0.0
  %v11398 = vmax.f32 %v11283, 0.0
  %v11399 = vmax.f32 %v11287, 0.0
  %v11400 = vmax.f32 %v11291, 0.0
  %v11401 = vmax.f32 %v11295, 0.0
  %v11402 = vmax.f32 %v11299, 0.0
  %v11403 = vmax.f32 %v11303, 0.0
  %v11404 = vmax.f32 %v11307, 0.0
  %v11405 = vmax.f32 %v11311, 0.0
  %v11406 = vmax.f32 %v11315, 0.0
  %v11407 = vmax.f32 %v11319, 0.0
  %v11408 = vmax.f32 %v11323, 0.0
  %v11409 = vmax.f32 %v11327, 0.0
  %v11410 = vmax.f32 %v11331, 0.0
  %v11411 = vmax.f32 %v11335, 0.0
  %v11412 = vmax.f32 %v11339, 0.0
  %v11413 = vmax.f32 %v11343, 0.0
  %v11414 = vmax.f32 %v11347, 0.0
  %v11415 = vmax.f32 %v11351, 0.0
  %v11416 = vmax.f32 %v11355, 0.0
  %v11417 = vmax.f32 %v11359, 0.0
  %v11418 = vmax.f32 %v11363, 0.0
  %v11419 = vmax.f32 %v11367, 0.0
  %v11420 = vmax.f32 %v11371, 0.0
  %v11421 = vmax.f32 %v11375, 0.0
  %v11422 = vmax.f32 %v11379, 0.0
  %v11423 = vmax.f32 %v11383, 0.0
  %v11424 = vmax.f32 %v11387, 0.0
  %v11425 = vmax.f32 %v11391, 0.0
  %v11426 = vmax.f32 %v11395, 0.0
  %v11427 = vperm.slane %v61, 0
  %v11429 = vsel %vm2206, %v11397, 0
  %v11432 = vsel %vm2206, %v11398, 0
  %v11435 = vsel %vm2206, %v11399, 0
  %v11438 = vsel %vm2206, %v11400, 0
  %v11441 = vsel %vm2206, %v11401, 0
  %v11444 = vsel %vm2206, %v11402, 0
  %v11447 = vsel %vm2206, %v11403, 0
  %v11450 = vsel %vm2206, %v11404, 0
  %v11453 = vsel %vm2206, %v11405, 0
  %v11456 = vsel %vm2206, %v11406, 0
  %v11459 = vsel %vm2206, %v11407, 0
  %v11462 = vsel %vm2206, %v11408, 0
  %v11465 = vsel %vm2206, %v11409, 0
  %v11468 = vsel %vm2206, %v11410, 0
  %v11471 = vsel %vm2206, %v11411, 0
  %v11474 = vsel %vm2206, %v11412, 0
  %v11477 = vsel %vm2206, %v11413, 0
  %v11480 = vsel %vm2206, %v11414, 0
  %v11483 = vsel %vm2206, %v11415, 0
  %v11486 = vsel %vm2206, %v11416, 0
  %v11489 = vsel %vm2206, %v11417, 0
  %v11492 = vsel %vm2206, %v11418, 0
  %v11495 = vsel %vm2206, %v11419, 0
  %v11498 = vsel %vm2206, %v11420, 0
  %v11501 = vsel %vm2206, %v11421, 0
  %v11504 = vsel %vm2206, %v11422, 0
  %v11507 = vsel %vm2206, %v11423, 0
  %v11510 = vsel %vm2206, %v11424, 0
  %v11513 = vsel %vm2206, %v11425, 0
  %v11516 = vsel %vm2206, %v11426, 0
  %11518 = vmatpush.msra.mxu0 0.0
  %11519 = vmatpush.msra.mxu0 0.0
  %11520 = vmatpush.msra.mxu0 0.0
  %11521 = vmatpush.msra.mxu0 0.0
  %11522 = vmatpush.msra.mxu0 0.0
  %11523 = vmatpush.msra.mxu0 0.0
  %11524 = vmatpush.msra.mxu0 0.0
  %11525 = vmatpush.msra.mxu0 0.0
  %11526 = vmatpush.msra.mxu0 0.0
  %11527 = vmatpush.msra.mxu0 0.0
  %11528 = vmatpush.msra.mxu0 0.0
  %11529 = vmatpush.msra.mxu0 0.0
  %11530 = vmatpush.msra.mxu0 0.0
  %11531 = vmatpush.msra.mxu0 0.0
  %v11532 = vand.u32 %v34, 4294901760
  %11533 = vmatpush.msra.mxu0 %v11532
  %v11534 = vand.u32 %v33, 4294901760
  %11535 = vmatpush.msra.mxu0 %v11534
  %v11536 = vand.u32 %v11429, 4294901760
  %v11537 = vsub.f32 %v11429, %v11536
  %v11538 = vand.u32 %v11537, 4294901760
  %v11539 = vsub.f32 %v11537, %v11538
  %v11540 = vand.u32 %v11539, 4294901760
  %11541 = vmatmul.f32.gmra.mxu0 %v11540
  %v11542 = vpop.f32.mrf.mxu0
  %v11543 = vadd.f32 %v11427, %v11542
  %v11544 = vand.u32 %v11432, 4294901760
  %v11545 = vsub.f32 %v11432, %v11544
  %v11546 = vand.u32 %v11545, 4294901760
  %v11547 = vsub.f32 %v11545, %v11546
  %v11548 = vand.u32 %v11547, 4294901760
  %11549 = vmatmul.f32.gmra.mxu0 %v11548
  %v11550 = vpop.f32.mrf.mxu0
  %v11551 = vadd.f32 %v11427, %v11550
  %v11552 = vand.u32 %v11435, 4294901760
  %v11553 = vsub.f32 %v11435, %v11552
  %v11554 = vand.u32 %v11553, 4294901760
  %v11555 = vsub.f32 %v11553, %v11554
  %v11556 = vand.u32 %v11555, 4294901760
  %11557 = vmatmul.f32.gmra.mxu0 %v11556
  %v11558 = vpop.f32.mrf.mxu0
  %v11559 = vadd.f32 %v11427, %v11558
  %v11560 = vand.u32 %v11438, 4294901760
  %v11561 = vsub.f32 %v11438, %v11560
  %v11562 = vand.u32 %v11561, 4294901760
  %v11563 = vsub.f32 %v11561, %v11562
  %v11564 = vand.u32 %v11563, 4294901760
  %11565 = vmatmul.f32.gmra.mxu0 %v11564
  %v11566 = vpop.f32.mrf.mxu0
  %v11567 = vadd.f32 %v11427, %v11566
  %v11568 = vand.u32 %v11441, 4294901760
  %v11569 = vsub.f32 %v11441, %v11568
  %v11570 = vand.u32 %v11569, 4294901760
  %v11571 = vsub.f32 %v11569, %v11570
  %v11572 = vand.u32 %v11571, 4294901760
  %11573 = vmatmul.f32.gmra.mxu0 %v11572
  %v11574 = vpop.f32.mrf.mxu0
  %v11575 = vadd.f32 %v11427, %v11574
  %v11576 = vand.u32 %v11444, 4294901760
  %v11577 = vsub.f32 %v11444, %v11576
  %v11578 = vand.u32 %v11577, 4294901760
  %v11579 = vsub.f32 %v11577, %v11578
  %v11580 = vand.u32 %v11579, 4294901760
  %11581 = vmatmul.f32.gmra.mxu0 %v11580
  %v11582 = vpop.f32.mrf.mxu0
  %v11583 = vadd.f32 %v11427, %v11582
  %v11584 = vand.u32 %v11447, 4294901760
  %v11585 = vsub.f32 %v11447, %v11584
  %v11586 = vand.u32 %v11585, 4294901760
  %v11587 = vsub.f32 %v11585, %v11586
  %v11588 = vand.u32 %v11587, 4294901760
  %11589 = vmatmul.f32.gmra.mxu0 %v11588
  %v11590 = vpop.f32.mrf.mxu0
  %v11591 = vadd.f32 %v11427, %v11590
  %v11592 = vand.u32 %v11450, 4294901760
  %v11593 = vsub.f32 %v11450, %v11592
  %v11594 = vand.u32 %v11593, 4294901760
  %v11595 = vsub.f32 %v11593, %v11594
  %v11596 = vand.u32 %v11595, 4294901760
  %11597 = vmatmul.f32.gmra.mxu0 %v11596
  %v11598 = vpop.f32.mrf.mxu0
  %v11599 = vadd.f32 %v11427, %v11598
  %v11600 = vand.u32 %v11453, 4294901760
  %v11601 = vsub.f32 %v11453, %v11600
  %v11602 = vand.u32 %v11601, 4294901760
  %v11603 = vsub.f32 %v11601, %v11602
  %v11604 = vand.u32 %v11603, 4294901760
  %11605 = vmatmul.f32.gmra.mxu0 %v11604
  %v11606 = vpop.f32.mrf.mxu0
  %v11607 = vadd.f32 %v11427, %v11606
  %v11608 = vand.u32 %v11456, 4294901760
  %v11609 = vsub.f32 %v11456, %v11608
  %v11610 = vand.u32 %v11609, 4294901760
  %v11611 = vsub.f32 %v11609, %v11610
  %v11612 = vand.u32 %v11611, 4294901760
  %11613 = vmatmul.f32.gmra.mxu0 %v11612
  %v11614 = vpop.f32.mrf.mxu0
  %v11615 = vadd.f32 %v11427, %v11614
  %v11616 = vand.u32 %v11459, 4294901760
  %v11617 = vsub.f32 %v11459, %v11616
  %v11618 = vand.u32 %v11617, 4294901760
  %v11619 = vsub.f32 %v11617, %v11618
  %v11620 = vand.u32 %v11619, 4294901760
  %11621 = vmatmul.f32.gmra.mxu0 %v11620
  %v11622 = vpop.f32.mrf.mxu0
  %v11623 = vadd.f32 %v11427, %v11622
  %v11624 = vand.u32 %v11462, 4294901760
  %v11625 = vsub.f32 %v11462, %v11624
  %v11626 = vand.u32 %v11625, 4294901760
  %v11627 = vsub.f32 %v11625, %v11626
  %v11628 = vand.u32 %v11627, 4294901760
  %11629 = vmatmul.f32.gmra.mxu0 %v11628
  %v11630 = vpop.f32.mrf.mxu0
  %v11631 = vadd.f32 %v11427, %v11630
  %v11632 = vand.u32 %v11465, 4294901760
  %v11633 = vsub.f32 %v11465, %v11632
  %v11634 = vand.u32 %v11633, 4294901760
  %v11635 = vsub.f32 %v11633, %v11634
  %v11636 = vand.u32 %v11635, 4294901760
  %11637 = vmatmul.f32.gmra.mxu0 %v11636
  %v11638 = vpop.f32.mrf.mxu0
  %v11639 = vadd.f32 %v11427, %v11638
  %v11640 = vand.u32 %v11468, 4294901760
  %v11641 = vsub.f32 %v11468, %v11640
  %v11642 = vand.u32 %v11641, 4294901760
  %v11643 = vsub.f32 %v11641, %v11642
  %v11644 = vand.u32 %v11643, 4294901760
  %11645 = vmatmul.f32.gmra.mxu0 %v11644
  %v11646 = vpop.f32.mrf.mxu0
  %v11647 = vadd.f32 %v11427, %v11646
  %v11648 = vand.u32 %v11471, 4294901760
  %v11649 = vsub.f32 %v11471, %v11648
  %v11650 = vand.u32 %v11649, 4294901760
  %v11651 = vsub.f32 %v11649, %v11650
  %v11652 = vand.u32 %v11651, 4294901760
  %11653 = vmatmul.f32.gmra.mxu0 %v11652
  %v11654 = vpop.f32.mrf.mxu0
  %v11655 = vadd.f32 %v11427, %v11654
  %v11656 = vand.u32 %v11474, 4294901760
  %v11657 = vsub.f32 %v11474, %v11656
  %v11658 = vand.u32 %v11657, 4294901760
  %v11659 = vsub.f32 %v11657, %v11658
  %v11660 = vand.u32 %v11659, 4294901760
  %11661 = vmatmul.f32.gmra.mxu0 %v11660
  %v11662 = vpop.f32.mrf.mxu0
  %v11663 = vadd.f32 %v11427, %v11662
  %v11664 = vand.u32 %v11477, 4294901760
  %v11665 = vsub.f32 %v11477, %v11664
  %v11666 = vand.u32 %v11665, 4294901760
  %v11667 = vsub.f32 %v11665, %v11666
  %v11668 = vand.u32 %v11667, 4294901760
  %11669 = vmatmul.f32.gmra.mxu0 %v11668
  %v11670 = vpop.f32.mrf.mxu0
  %v11671 = vadd.f32 %v11427, %v11670
  %v11672 = vand.u32 %v11480, 4294901760
  %v11673 = vsub.f32 %v11480, %v11672
  %v11674 = vand.u32 %v11673, 4294901760
  %v11675 = vsub.f32 %v11673, %v11674
  %v11676 = vand.u32 %v11675, 4294901760
  %11677 = vmatmul.f32.gmra.mxu0 %v11676
  %v11678 = vpop.f32.mrf.mxu0
  %v11679 = vadd.f32 %v11427, %v11678
  %v11680 = vand.u32 %v11483, 4294901760
  %v11681 = vsub.f32 %v11483, %v11680
  %v11682 = vand.u32 %v11681, 4294901760
  %v11683 = vsub.f32 %v11681, %v11682
  %v11684 = vand.u32 %v11683, 4294901760
  %11685 = vmatmul.f32.gmra.mxu0 %v11684
  %v11686 = vpop.f32.mrf.mxu0
  %v11687 = vadd.f32 %v11427, %v11686
  %v11688 = vand.u32 %v11486, 4294901760
  %v11689 = vsub.f32 %v11486, %v11688
  %v11690 = vand.u32 %v11689, 4294901760
  %v11691 = vsub.f32 %v11689, %v11690
  %v11692 = vand.u32 %v11691, 4294901760
  %11693 = vmatmul.f32.gmra.mxu0 %v11692
  %v11694 = vpop.f32.mrf.mxu0
  %v11695 = vadd.f32 %v11427, %v11694
  %v11696 = vand.u32 %v11489, 4294901760
  %v11697 = vsub.f32 %v11489, %v11696
  %v11698 = vand.u32 %v11697, 4294901760
  %v11699 = vsub.f32 %v11697, %v11698
  %v11700 = vand.u32 %v11699, 4294901760
  %11701 = vmatmul.f32.gmra.mxu0 %v11700
  %v11702 = vpop.f32.mrf.mxu0
  %v11703 = vadd.f32 %v11427, %v11702
  %v11704 = vand.u32 %v11492, 4294901760
  %v11705 = vsub.f32 %v11492, %v11704
  %v11706 = vand.u32 %v11705, 4294901760
  %v11707 = vsub.f32 %v11705, %v11706
  %v11708 = vand.u32 %v11707, 4294901760
  %11709 = vmatmul.f32.gmra.mxu0 %v11708
  %v11710 = vpop.f32.mrf.mxu0
  %v11711 = vadd.f32 %v11427, %v11710
  %v11712 = vand.u32 %v11495, 4294901760
  %v11713 = vsub.f32 %v11495, %v11712
  %v11714 = vand.u32 %v11713, 4294901760
  %v11715 = vsub.f32 %v11713, %v11714
  %v11716 = vand.u32 %v11715, 4294901760
  %11717 = vmatmul.f32.gmra.mxu0 %v11716
  %v11718 = vpop.f32.mrf.mxu0
  %v11719 = vadd.f32 %v11427, %v11718
  %v11720 = vand.u32 %v11498, 4294901760
  %v11721 = vsub.f32 %v11498, %v11720
  %v11722 = vand.u32 %v11721, 4294901760
  %v11723 = vsub.f32 %v11721, %v11722
  %v11724 = vand.u32 %v11723, 4294901760
  %11725 = vmatmul.f32.gmra.mxu0 %v11724
  %v11726 = vpop.f32.mrf.mxu0
  %v11727 = vadd.f32 %v11427, %v11726
  %v11728 = vand.u32 %v11501, 4294901760
  %v11729 = vsub.f32 %v11501, %v11728
  %v11730 = vand.u32 %v11729, 4294901760
  %v11731 = vsub.f32 %v11729, %v11730
  %v11732 = vand.u32 %v11731, 4294901760
  %11733 = vmatmul.f32.gmra.mxu0 %v11732
  %v11734 = vpop.f32.mrf.mxu0
  %v11735 = vadd.f32 %v11427, %v11734
  %v11736 = vand.u32 %v11504, 4294901760
  %v11737 = vsub.f32 %v11504, %v11736
  %v11738 = vand.u32 %v11737, 4294901760
  %v11739 = vsub.f32 %v11737, %v11738
  %v11740 = vand.u32 %v11739, 4294901760
  %11741 = vmatmul.f32.gmra.mxu0 %v11740
  %v11742 = vpop.f32.mrf.mxu0
  %v11743 = vadd.f32 %v11427, %v11742
  %v11744 = vand.u32 %v11507, 4294901760
  %v11745 = vsub.f32 %v11507, %v11744
  %v11746 = vand.u32 %v11745, 4294901760
  %v11747 = vsub.f32 %v11745, %v11746
  %v11748 = vand.u32 %v11747, 4294901760
  %11749 = vmatmul.f32.gmra.mxu0 %v11748
  %v11750 = vpop.f32.mrf.mxu0
  %v11751 = vadd.f32 %v11427, %v11750
  %v11752 = vand.u32 %v11510, 4294901760
  %v11753 = vsub.f32 %v11510, %v11752
  %v11754 = vand.u32 %v11753, 4294901760
  %v11755 = vsub.f32 %v11753, %v11754
  %v11756 = vand.u32 %v11755, 4294901760
  %11757 = vmatmul.f32.gmra.mxu0 %v11756
  %v11758 = vpop.f32.mrf.mxu0
  %v11759 = vadd.f32 %v11427, %v11758
  %v11760 = vand.u32 %v11513, 4294901760
  %v11761 = vsub.f32 %v11513, %v11760
  %v11762 = vand.u32 %v11761, 4294901760
  %v11763 = vsub.f32 %v11761, %v11762
  %v11764 = vand.u32 %v11763, 4294901760
  %11765 = vmatmul.f32.gmra.mxu0 %v11764
  %v11766 = vpop.f32.mrf.mxu0
  %v11767 = vadd.f32 %v11427, %v11766
  %v11768 = vand.u32 %v11516, 4294901760
  %v11769 = vsub.f32 %v11516, %v11768
  %v11770 = vand.u32 %v11769, 4294901760
  %v11771 = vsub.f32 %v11769, %v11770
  %v11772 = vand.u32 %v11771, 4294901760
  %11773 = vmatmul.f32.gmra.mxu0 %v11772
  %v11774 = vpop.f32.mrf.mxu0
  %v11775 = vadd.f32 %v11427, %v11774
  %11776 = vdwg.mxu0
  %11777 = vmatpush.msra.mxu0 0.0
  %11778 = vmatpush.msra.mxu0 0.0
  %11779 = vmatpush.msra.mxu0 0.0
  %11780 = vmatpush.msra.mxu0 0.0
  %11781 = vmatpush.msra.mxu0 0.0
  %11782 = vmatpush.msra.mxu0 0.0
  %11783 = vmatpush.msra.mxu0 0.0
  %11784 = vmatpush.msra.mxu0 0.0
  %11785 = vmatpush.msra.mxu0 0.0
  %11786 = vmatpush.msra.mxu0 0.0
  %11787 = vmatpush.msra.mxu0 0.0
  %11788 = vmatpush.msra.mxu0 0.0
  %11789 = vmatpush.msra.mxu0 0.0
  %11790 = vmatpush.msra.mxu0 0.0
  %v11791 = vand.u32 %v34, 4294901760
  %v11792 = vsub.f32 %v34, %v11791
  %v11793 = vand.u32 %v11792, 4294901760
  %v11794 = vsub.f32 %v11792, %v11793
  %v11795 = vand.u32 %v11794, 4294901760
  %11796 = vmatpush.msra.mxu0 %v11795
  %v11797 = vand.u32 %v33, 4294901760
  %v11798 = vsub.f32 %v33, %v11797
  %v11799 = vand.u32 %v11798, 4294901760
  %v11800 = vsub.f32 %v11798, %v11799
  %v11801 = vand.u32 %v11800, 4294901760
  %11802 = vmatpush.msra.mxu0 %v11801
  %v11803 = vand.u32 %v11429, 4294901760
  %11804 = vmatmul.f32.gmra.mxu0 %v11803
  %v11805 = vpop.f32.mrf.mxu0
  %v11806 = vadd.f32 %v11543, %v11805
  %v11807 = vand.u32 %v11432, 4294901760
  %11808 = vmatmul.f32.gmra.mxu0 %v11807
  %v11809 = vpop.f32.mrf.mxu0
  %v11810 = vadd.f32 %v11551, %v11809
  %v11811 = vand.u32 %v11435, 4294901760
  %11812 = vmatmul.f32.gmra.mxu0 %v11811
  %v11813 = vpop.f32.mrf.mxu0
  %v11814 = vadd.f32 %v11559, %v11813
  %v11815 = vand.u32 %v11438, 4294901760
  %11816 = vmatmul.f32.gmra.mxu0 %v11815
  %v11817 = vpop.f32.mrf.mxu0
  %v11818 = vadd.f32 %v11567, %v11817
  %v11819 = vand.u32 %v11441, 4294901760
  %11820 = vmatmul.f32.gmra.mxu0 %v11819
  %v11821 = vpop.f32.mrf.mxu0
  %v11822 = vadd.f32 %v11575, %v11821
  %v11823 = vand.u32 %v11444, 4294901760
  %11824 = vmatmul.f32.gmra.mxu0 %v11823
  %v11825 = vpop.f32.mrf.mxu0
  %v11826 = vadd.f32 %v11583, %v11825
  %v11827 = vand.u32 %v11447, 4294901760
  %11828 = vmatmul.f32.gmra.mxu0 %v11827
  %v11829 = vpop.f32.mrf.mxu0
  %v11830 = vadd.f32 %v11591, %v11829
  %v11831 = vand.u32 %v11450, 4294901760
  %11832 = vmatmul.f32.gmra.mxu0 %v11831
  %v11833 = vpop.f32.mrf.mxu0
  %v11834 = vadd.f32 %v11599, %v11833
  %v11835 = vand.u32 %v11453, 4294901760
  %11836 = vmatmul.f32.gmra.mxu0 %v11835
  %v11837 = vpop.f32.mrf.mxu0
  %v11838 = vadd.f32 %v11607, %v11837
  %v11839 = vand.u32 %v11456, 4294901760
  %11840 = vmatmul.f32.gmra.mxu0 %v11839
  %v11841 = vpop.f32.mrf.mxu0
  %v11842 = vadd.f32 %v11615, %v11841
  %v11843 = vand.u32 %v11459, 4294901760
  %11844 = vmatmul.f32.gmra.mxu0 %v11843
  %v11845 = vpop.f32.mrf.mxu0
  %v11846 = vadd.f32 %v11623, %v11845
  %v11847 = vand.u32 %v11462, 4294901760
  %11848 = vmatmul.f32.gmra.mxu0 %v11847
  %v11849 = vpop.f32.mrf.mxu0
  %v11850 = vadd.f32 %v11631, %v11849
  %v11851 = vand.u32 %v11465, 4294901760
  %11852 = vmatmul.f32.gmra.mxu0 %v11851
  %v11853 = vpop.f32.mrf.mxu0
  %v11854 = vadd.f32 %v11639, %v11853
  %v11855 = vand.u32 %v11468, 4294901760
  %11856 = vmatmul.f32.gmra.mxu0 %v11855
  %v11857 = vpop.f32.mrf.mxu0
  %v11858 = vadd.f32 %v11647, %v11857
  %v11859 = vand.u32 %v11471, 4294901760
  %11860 = vmatmul.f32.gmra.mxu0 %v11859
  %v11861 = vpop.f32.mrf.mxu0
  %v11862 = vadd.f32 %v11655, %v11861
  %v11863 = vand.u32 %v11474, 4294901760
  %11864 = vmatmul.f32.gmra.mxu0 %v11863
  %v11865 = vpop.f32.mrf.mxu0
  %v11866 = vadd.f32 %v11663, %v11865
  %v11867 = vand.u32 %v11477, 4294901760
  %11868 = vmatmul.f32.gmra.mxu0 %v11867
  %v11869 = vpop.f32.mrf.mxu0
  %v11870 = vadd.f32 %v11671, %v11869
  %v11871 = vand.u32 %v11480, 4294901760
  %11872 = vmatmul.f32.gmra.mxu0 %v11871
  %v11873 = vpop.f32.mrf.mxu0
  %v11874 = vadd.f32 %v11679, %v11873
  %v11875 = vand.u32 %v11483, 4294901760
  %11876 = vmatmul.f32.gmra.mxu0 %v11875
  %v11877 = vpop.f32.mrf.mxu0
  %v11878 = vadd.f32 %v11687, %v11877
  %v11879 = vand.u32 %v11486, 4294901760
  %11880 = vmatmul.f32.gmra.mxu0 %v11879
  %v11881 = vpop.f32.mrf.mxu0
  %v11882 = vadd.f32 %v11695, %v11881
  %v11883 = vand.u32 %v11489, 4294901760
  %11884 = vmatmul.f32.gmra.mxu0 %v11883
  %v11885 = vpop.f32.mrf.mxu0
  %v11886 = vadd.f32 %v11703, %v11885
  %v11887 = vand.u32 %v11492, 4294901760
  %11888 = vmatmul.f32.gmra.mxu0 %v11887
  %v11889 = vpop.f32.mrf.mxu0
  %v11890 = vadd.f32 %v11711, %v11889
  %v11891 = vand.u32 %v11495, 4294901760
  %11892 = vmatmul.f32.gmra.mxu0 %v11891
  %v11893 = vpop.f32.mrf.mxu0
  %v11894 = vadd.f32 %v11719, %v11893
  %v11895 = vand.u32 %v11498, 4294901760
  %11896 = vmatmul.f32.gmra.mxu0 %v11895
  %v11897 = vpop.f32.mrf.mxu0
  %v11898 = vadd.f32 %v11727, %v11897
  %v11899 = vand.u32 %v11501, 4294901760
  %11900 = vmatmul.f32.gmra.mxu0 %v11899
  %v11901 = vpop.f32.mrf.mxu0
  %v11902 = vadd.f32 %v11735, %v11901
  %v11903 = vand.u32 %v11504, 4294901760
  %11904 = vmatmul.f32.gmra.mxu0 %v11903
  %v11905 = vpop.f32.mrf.mxu0
  %v11906 = vadd.f32 %v11743, %v11905
  %v11907 = vand.u32 %v11507, 4294901760
  %11908 = vmatmul.f32.gmra.mxu0 %v11907
  %v11909 = vpop.f32.mrf.mxu0
  %v11910 = vadd.f32 %v11751, %v11909
  %v11911 = vand.u32 %v11510, 4294901760
  %11912 = vmatmul.f32.gmra.mxu0 %v11911
  %v11913 = vpop.f32.mrf.mxu0
  %v11914 = vadd.f32 %v11759, %v11913
  %v11915 = vand.u32 %v11513, 4294901760
  %11916 = vmatmul.f32.gmra.mxu0 %v11915
  %v11917 = vpop.f32.mrf.mxu0
  %v11918 = vadd.f32 %v11767, %v11917
  %v11919 = vand.u32 %v11516, 4294901760
  %11920 = vmatmul.f32.gmra.mxu0 %v11919
  %v11921 = vpop.f32.mrf.mxu0
  %v11922 = vadd.f32 %v11775, %v11921
  %11923 = vdwg.mxu0
  %11924 = vmatpush.msra.mxu0 0.0
  %11925 = vmatpush.msra.mxu0 0.0
  %11926 = vmatpush.msra.mxu0 0.0
  %11927 = vmatpush.msra.mxu0 0.0
  %11928 = vmatpush.msra.mxu0 0.0
  %11929 = vmatpush.msra.mxu0 0.0
  %11930 = vmatpush.msra.mxu0 0.0
  %11931 = vmatpush.msra.mxu0 0.0
  %11932 = vmatpush.msra.mxu0 0.0
  %11933 = vmatpush.msra.mxu0 0.0
  %11934 = vmatpush.msra.mxu0 0.0
  %11935 = vmatpush.msra.mxu0 0.0
  %11936 = vmatpush.msra.mxu0 0.0
  %11937 = vmatpush.msra.mxu0 0.0
  %v11938 = vand.u32 %v34, 4294901760
  %v11939 = vsub.f32 %v34, %v11938
  %11940 = vmatpush.msra.mxu0 %v11939
  %v11941 = vand.u32 %v33, 4294901760
  %v11942 = vsub.f32 %v33, %v11941
  %11943 = vmatpush.msra.mxu0 %v11942
  %v11944 = vand.u32 %v11429, 4294901760
  %v11945 = vsub.f32 %v11429, %v11944
  %11946 = vmatmul.f32.gmra.mxu0 %v11945
  %v11947 = vpop.f32.mrf.mxu0
  %v11948 = vadd.f32 %v11806, %v11947
  %v11949 = vand.u32 %v11432, 4294901760
  %v11950 = vsub.f32 %v11432, %v11949
  %11951 = vmatmul.f32.gmra.mxu0 %v11950
  %v11952 = vpop.f32.mrf.mxu0
  %v11953 = vadd.f32 %v11810, %v11952
  %v11954 = vand.u32 %v11435, 4294901760
  %v11955 = vsub.f32 %v11435, %v11954
  %11956 = vmatmul.f32.gmra.mxu0 %v11955
  %v11957 = vpop.f32.mrf.mxu0
  %v11958 = vadd.f32 %v11814, %v11957
  %v11959 = vand.u32 %v11438, 4294901760
  %v11960 = vsub.f32 %v11438, %v11959
  %11961 = vmatmul.f32.gmra.mxu0 %v11960
  %v11962 = vpop.f32.mrf.mxu0
  %v11963 = vadd.f32 %v11818, %v11962
  %v11964 = vand.u32 %v11441, 4294901760
  %v11965 = vsub.f32 %v11441, %v11964
  %11966 = vmatmul.f32.gmra.mxu0 %v11965
  %v11967 = vpop.f32.mrf.mxu0
  %v11968 = vadd.f32 %v11822, %v11967
  %v11969 = vand.u32 %v11444, 4294901760
  %v11970 = vsub.f32 %v11444, %v11969
  %11971 = vmatmul.f32.gmra.mxu0 %v11970
  %v11972 = vpop.f32.mrf.mxu0
  %v11973 = vadd.f32 %v11826, %v11972
  %v11974 = vand.u32 %v11447, 4294901760
  %v11975 = vsub.f32 %v11447, %v11974
  %11976 = vmatmul.f32.gmra.mxu0 %v11975
  %v11977 = vpop.f32.mrf.mxu0
  %v11978 = vadd.f32 %v11830, %v11977
  %v11979 = vand.u32 %v11450, 4294901760
  %v11980 = vsub.f32 %v11450, %v11979
  %11981 = vmatmul.f32.gmra.mxu0 %v11980
  %v11982 = vpop.f32.mrf.mxu0
  %v11983 = vadd.f32 %v11834, %v11982
  %v11984 = vand.u32 %v11453, 4294901760
  %v11985 = vsub.f32 %v11453, %v11984
  %11986 = vmatmul.f32.gmra.mxu0 %v11985
  %v11987 = vpop.f32.mrf.mxu0
  %v11988 = vadd.f32 %v11838, %v11987
  %v11989 = vand.u32 %v11456, 4294901760
  %v11990 = vsub.f32 %v11456, %v11989
  %11991 = vmatmul.f32.gmra.mxu0 %v11990
  %v11992 = vpop.f32.mrf.mxu0
  %v11993 = vadd.f32 %v11842, %v11992
  %v11994 = vand.u32 %v11459, 4294901760
  %v11995 = vsub.f32 %v11459, %v11994
  %11996 = vmatmul.f32.gmra.mxu0 %v11995
  %v11997 = vpop.f32.mrf.mxu0
  %v11998 = vadd.f32 %v11846, %v11997
  %v11999 = vand.u32 %v11462, 4294901760
  %v12000 = vsub.f32 %v11462, %v11999
  %12001 = vmatmul.f32.gmra.mxu0 %v12000
  %v12002 = vpop.f32.mrf.mxu0
  %v12003 = vadd.f32 %v11850, %v12002
  %v12004 = vand.u32 %v11465, 4294901760
  %v12005 = vsub.f32 %v11465, %v12004
  %12006 = vmatmul.f32.gmra.mxu0 %v12005
  %v12007 = vpop.f32.mrf.mxu0
  %v12008 = vadd.f32 %v11854, %v12007
  %v12009 = vand.u32 %v11468, 4294901760
  %v12010 = vsub.f32 %v11468, %v12009
  %12011 = vmatmul.f32.gmra.mxu0 %v12010
  %v12012 = vpop.f32.mrf.mxu0
  %v12013 = vadd.f32 %v11858, %v12012
  %v12014 = vand.u32 %v11471, 4294901760
  %v12015 = vsub.f32 %v11471, %v12014
  %12016 = vmatmul.f32.gmra.mxu0 %v12015
  %v12017 = vpop.f32.mrf.mxu0
  %v12018 = vadd.f32 %v11862, %v12017
  %v12019 = vand.u32 %v11474, 4294901760
  %v12020 = vsub.f32 %v11474, %v12019
  %12021 = vmatmul.f32.gmra.mxu0 %v12020
  %v12022 = vpop.f32.mrf.mxu0
  %v12023 = vadd.f32 %v11866, %v12022
  %v12024 = vand.u32 %v11477, 4294901760
  %v12025 = vsub.f32 %v11477, %v12024
  %12026 = vmatmul.f32.gmra.mxu0 %v12025
  %v12027 = vpop.f32.mrf.mxu0
  %v12028 = vadd.f32 %v11870, %v12027
  %v12029 = vand.u32 %v11480, 4294901760
  %v12030 = vsub.f32 %v11480, %v12029
  %12031 = vmatmul.f32.gmra.mxu0 %v12030
  %v12032 = vpop.f32.mrf.mxu0
  %v12033 = vadd.f32 %v11874, %v12032
  %v12034 = vand.u32 %v11483, 4294901760
  %v12035 = vsub.f32 %v11483, %v12034
  %12036 = vmatmul.f32.gmra.mxu0 %v12035
  %v12037 = vpop.f32.mrf.mxu0
  %v12038 = vadd.f32 %v11878, %v12037
  %v12039 = vand.u32 %v11486, 4294901760
  %v12040 = vsub.f32 %v11486, %v12039
  %12041 = vmatmul.f32.gmra.mxu0 %v12040
  %v12042 = vpop.f32.mrf.mxu0
  %v12043 = vadd.f32 %v11882, %v12042
  %v12044 = vand.u32 %v11489, 4294901760
  %v12045 = vsub.f32 %v11489, %v12044
  %12046 = vmatmul.f32.gmra.mxu0 %v12045
  %v12047 = vpop.f32.mrf.mxu0
  %v12048 = vadd.f32 %v11886, %v12047
  %v12049 = vand.u32 %v11492, 4294901760
  %v12050 = vsub.f32 %v11492, %v12049
  %12051 = vmatmul.f32.gmra.mxu0 %v12050
  %v12052 = vpop.f32.mrf.mxu0
  %v12053 = vadd.f32 %v11890, %v12052
  %v12054 = vand.u32 %v11495, 4294901760
  %v12055 = vsub.f32 %v11495, %v12054
  %12056 = vmatmul.f32.gmra.mxu0 %v12055
  %v12057 = vpop.f32.mrf.mxu0
  %v12058 = vadd.f32 %v11894, %v12057
  %v12059 = vand.u32 %v11498, 4294901760
  %v12060 = vsub.f32 %v11498, %v12059
  %12061 = vmatmul.f32.gmra.mxu0 %v12060
  %v12062 = vpop.f32.mrf.mxu0
  %v12063 = vadd.f32 %v11898, %v12062
  %v12064 = vand.u32 %v11501, 4294901760
  %v12065 = vsub.f32 %v11501, %v12064
  %12066 = vmatmul.f32.gmra.mxu0 %v12065
  %v12067 = vpop.f32.mrf.mxu0
  %v12068 = vadd.f32 %v11902, %v12067
  %v12069 = vand.u32 %v11504, 4294901760
  %v12070 = vsub.f32 %v11504, %v12069
  %12071 = vmatmul.f32.gmra.mxu0 %v12070
  %v12072 = vpop.f32.mrf.mxu0
  %v12073 = vadd.f32 %v11906, %v12072
  %v12074 = vand.u32 %v11507, 4294901760
  %v12075 = vsub.f32 %v11507, %v12074
  %12076 = vmatmul.f32.gmra.mxu0 %v12075
  %v12077 = vpop.f32.mrf.mxu0
  %v12078 = vadd.f32 %v11910, %v12077
  %v12079 = vand.u32 %v11510, 4294901760
  %v12080 = vsub.f32 %v11510, %v12079
  %12081 = vmatmul.f32.gmra.mxu0 %v12080
  %v12082 = vpop.f32.mrf.mxu0
  %v12083 = vadd.f32 %v11914, %v12082
  %v12084 = vand.u32 %v11513, 4294901760
  %v12085 = vsub.f32 %v11513, %v12084
  %12086 = vmatmul.f32.gmra.mxu0 %v12085
  %v12087 = vpop.f32.mrf.mxu0
  %v12088 = vadd.f32 %v11918, %v12087
  %v12089 = vand.u32 %v11516, 4294901760
  %v12090 = vsub.f32 %v11516, %v12089
  %12091 = vmatmul.f32.gmra.mxu0 %v12090
  %v12092 = vpop.f32.mrf.mxu0
  %v12093 = vadd.f32 %v11922, %v12092
  %12094 = vdwg.mxu0
  %12095 = vmatpush.msra.mxu0 0.0
  %12096 = vmatpush.msra.mxu0 0.0
  %12097 = vmatpush.msra.mxu0 0.0
  %12098 = vmatpush.msra.mxu0 0.0
  %12099 = vmatpush.msra.mxu0 0.0
  %12100 = vmatpush.msra.mxu0 0.0
  %12101 = vmatpush.msra.mxu0 0.0
  %12102 = vmatpush.msra.mxu0 0.0
  %12103 = vmatpush.msra.mxu0 0.0
  %12104 = vmatpush.msra.mxu0 0.0
  %12105 = vmatpush.msra.mxu0 0.0
  %12106 = vmatpush.msra.mxu0 0.0
  %12107 = vmatpush.msra.mxu0 0.0
  %12108 = vmatpush.msra.mxu0 0.0
  %v12109 = vand.u32 %v34, 4294901760
  %12110 = vmatpush.msra.mxu0 %v12109
  %v12111 = vand.u32 %v33, 4294901760
  %12112 = vmatpush.msra.mxu0 %v12111
  %v12113 = vand.u32 %v11429, 4294901760
  %v12114 = vsub.f32 %v11429, %v12113
  %v12115 = vand.u32 %v12114, 4294901760
  %12116 = vmatmul.f32.gmra.mxu0 %v12115
  %v12117 = vpop.f32.mrf.mxu0
  %v12118 = vadd.f32 %v11948, %v12117
  %v12119 = vand.u32 %v11432, 4294901760
  %v12120 = vsub.f32 %v11432, %v12119
  %v12121 = vand.u32 %v12120, 4294901760
  %12122 = vmatmul.f32.gmra.mxu0 %v12121
  %v12123 = vpop.f32.mrf.mxu0
  %v12124 = vadd.f32 %v11953, %v12123
  %v12125 = vand.u32 %v11435, 4294901760
  %v12126 = vsub.f32 %v11435, %v12125
  %v12127 = vand.u32 %v12126, 4294901760
  %12128 = vmatmul.f32.gmra.mxu0 %v12127
  %v12129 = vpop.f32.mrf.mxu0
  %v12130 = vadd.f32 %v11958, %v12129
  %v12131 = vand.u32 %v11438, 4294901760
  %v12132 = vsub.f32 %v11438, %v12131
  %v12133 = vand.u32 %v12132, 4294901760
  %12134 = vmatmul.f32.gmra.mxu0 %v12133
  %v12135 = vpop.f32.mrf.mxu0
  %v12136 = vadd.f32 %v11963, %v12135
  %v12137 = vand.u32 %v11441, 4294901760
  %v12138 = vsub.f32 %v11441, %v12137
  %v12139 = vand.u32 %v12138, 4294901760
  %12140 = vmatmul.f32.gmra.mxu0 %v12139
  %v12141 = vpop.f32.mrf.mxu0
  %v12142 = vadd.f32 %v11968, %v12141
  %v12143 = vand.u32 %v11444, 4294901760
  %v12144 = vsub.f32 %v11444, %v12143
  %v12145 = vand.u32 %v12144, 4294901760
  %12146 = vmatmul.f32.gmra.mxu0 %v12145
  %v12147 = vpop.f32.mrf.mxu0
  %v12148 = vadd.f32 %v11973, %v12147
  %v12149 = vand.u32 %v11447, 4294901760
  %v12150 = vsub.f32 %v11447, %v12149
  %v12151 = vand.u32 %v12150, 4294901760
  %12152 = vmatmul.f32.gmra.mxu0 %v12151
  %v12153 = vpop.f32.mrf.mxu0
  %v12154 = vadd.f32 %v11978, %v12153
  %v12155 = vand.u32 %v11450, 4294901760
  %v12156 = vsub.f32 %v11450, %v12155
  %v12157 = vand.u32 %v12156, 4294901760
  %12158 = vmatmul.f32.gmra.mxu0 %v12157
  %v12159 = vpop.f32.mrf.mxu0
  %v12160 = vadd.f32 %v11983, %v12159
  %v12161 = vand.u32 %v11453, 4294901760
  %v12162 = vsub.f32 %v11453, %v12161
  %v12163 = vand.u32 %v12162, 4294901760
  %12164 = vmatmul.f32.gmra.mxu0 %v12163
  %v12165 = vpop.f32.mrf.mxu0
  %v12166 = vadd.f32 %v11988, %v12165
  %v12167 = vand.u32 %v11456, 4294901760
  %v12168 = vsub.f32 %v11456, %v12167
  %v12169 = vand.u32 %v12168, 4294901760
  %12170 = vmatmul.f32.gmra.mxu0 %v12169
  %v12171 = vpop.f32.mrf.mxu0
  %v12172 = vadd.f32 %v11993, %v12171
  %v12173 = vand.u32 %v11459, 4294901760
  %v12174 = vsub.f32 %v11459, %v12173
  %v12175 = vand.u32 %v12174, 4294901760
  %12176 = vmatmul.f32.gmra.mxu0 %v12175
  %v12177 = vpop.f32.mrf.mxu0
  %v12178 = vadd.f32 %v11998, %v12177
  %v12179 = vand.u32 %v11462, 4294901760
  %v12180 = vsub.f32 %v11462, %v12179
  %v12181 = vand.u32 %v12180, 4294901760
  %12182 = vmatmul.f32.gmra.mxu0 %v12181
  %v12183 = vpop.f32.mrf.mxu0
  %v12184 = vadd.f32 %v12003, %v12183
  %v12185 = vand.u32 %v11465, 4294901760
  %v12186 = vsub.f32 %v11465, %v12185
  %v12187 = vand.u32 %v12186, 4294901760
  %12188 = vmatmul.f32.gmra.mxu0 %v12187
  %v12189 = vpop.f32.mrf.mxu0
  %v12190 = vadd.f32 %v12008, %v12189
  %v12191 = vand.u32 %v11468, 4294901760
  %v12192 = vsub.f32 %v11468, %v12191
  %v12193 = vand.u32 %v12192, 4294901760
  %12194 = vmatmul.f32.gmra.mxu0 %v12193
  %v12195 = vpop.f32.mrf.mxu0
  %v12196 = vadd.f32 %v12013, %v12195
  %v12197 = vand.u32 %v11471, 4294901760
  %v12198 = vsub.f32 %v11471, %v12197
  %v12199 = vand.u32 %v12198, 4294901760
  %12200 = vmatmul.f32.gmra.mxu0 %v12199
  %v12201 = vpop.f32.mrf.mxu0
  %v12202 = vadd.f32 %v12018, %v12201
  %v12203 = vand.u32 %v11474, 4294901760
  %v12204 = vsub.f32 %v11474, %v12203
  %v12205 = vand.u32 %v12204, 4294901760
  %12206 = vmatmul.f32.gmra.mxu0 %v12205
  %v12207 = vpop.f32.mrf.mxu0
  %v12208 = vadd.f32 %v12023, %v12207
  %v12209 = vand.u32 %v11477, 4294901760
  %v12210 = vsub.f32 %v11477, %v12209
  %v12211 = vand.u32 %v12210, 4294901760
  %12212 = vmatmul.f32.gmra.mxu0 %v12211
  %v12213 = vpop.f32.mrf.mxu0
  %v12214 = vadd.f32 %v12028, %v12213
  %v12215 = vand.u32 %v11480, 4294901760
  %v12216 = vsub.f32 %v11480, %v12215
  %v12217 = vand.u32 %v12216, 4294901760
  %12218 = vmatmul.f32.gmra.mxu0 %v12217
  %v12219 = vpop.f32.mrf.mxu0
  %v12220 = vadd.f32 %v12033, %v12219
  %v12221 = vand.u32 %v11483, 4294901760
  %v12222 = vsub.f32 %v11483, %v12221
  %v12223 = vand.u32 %v12222, 4294901760
  %12224 = vmatmul.f32.gmra.mxu0 %v12223
  %v12225 = vpop.f32.mrf.mxu0
  %v12226 = vadd.f32 %v12038, %v12225
  %v12227 = vand.u32 %v11486, 4294901760
  %v12228 = vsub.f32 %v11486, %v12227
  %v12229 = vand.u32 %v12228, 4294901760
  %12230 = vmatmul.f32.gmra.mxu0 %v12229
  %v12231 = vpop.f32.mrf.mxu0
  %v12232 = vadd.f32 %v12043, %v12231
  %v12233 = vand.u32 %v11489, 4294901760
  %v12234 = vsub.f32 %v11489, %v12233
  %v12235 = vand.u32 %v12234, 4294901760
  %12236 = vmatmul.f32.gmra.mxu0 %v12235
  %v12237 = vpop.f32.mrf.mxu0
  %v12238 = vadd.f32 %v12048, %v12237
  %v12239 = vand.u32 %v11492, 4294901760
  %v12240 = vsub.f32 %v11492, %v12239
  %v12241 = vand.u32 %v12240, 4294901760
  %12242 = vmatmul.f32.gmra.mxu0 %v12241
  %v12243 = vpop.f32.mrf.mxu0
  %v12244 = vadd.f32 %v12053, %v12243
  %v12245 = vand.u32 %v11495, 4294901760
  %v12246 = vsub.f32 %v11495, %v12245
  %v12247 = vand.u32 %v12246, 4294901760
  %12248 = vmatmul.f32.gmra.mxu0 %v12247
  %v12249 = vpop.f32.mrf.mxu0
  %v12250 = vadd.f32 %v12058, %v12249
  %v12251 = vand.u32 %v11498, 4294901760
  %v12252 = vsub.f32 %v11498, %v12251
  %v12253 = vand.u32 %v12252, 4294901760
  %12254 = vmatmul.f32.gmra.mxu0 %v12253
  %v12255 = vpop.f32.mrf.mxu0
  %v12256 = vadd.f32 %v12063, %v12255
  %v12257 = vand.u32 %v11501, 4294901760
  %v12258 = vsub.f32 %v11501, %v12257
  %v12259 = vand.u32 %v12258, 4294901760
  %12260 = vmatmul.f32.gmra.mxu0 %v12259
  %v12261 = vpop.f32.mrf.mxu0
  %v12262 = vadd.f32 %v12068, %v12261
  %v12263 = vand.u32 %v11504, 4294901760
  %v12264 = vsub.f32 %v11504, %v12263
  %v12265 = vand.u32 %v12264, 4294901760
  %12266 = vmatmul.f32.gmra.mxu0 %v12265
  %v12267 = vpop.f32.mrf.mxu0
  %v12268 = vadd.f32 %v12073, %v12267
  %v12269 = vand.u32 %v11507, 4294901760
  %v12270 = vsub.f32 %v11507, %v12269
  %v12271 = vand.u32 %v12270, 4294901760
  %12272 = vmatmul.f32.gmra.mxu0 %v12271
  %v12273 = vpop.f32.mrf.mxu0
  %v12274 = vadd.f32 %v12078, %v12273
  %v12275 = vand.u32 %v11510, 4294901760
  %v12276 = vsub.f32 %v11510, %v12275
  %v12277 = vand.u32 %v12276, 4294901760
  %12278 = vmatmul.f32.gmra.mxu0 %v12277
  %v12279 = vpop.f32.mrf.mxu0
  %v12280 = vadd.f32 %v12083, %v12279
  %v12281 = vand.u32 %v11513, 4294901760
  %v12282 = vsub.f32 %v11513, %v12281
  %v12283 = vand.u32 %v12282, 4294901760
  %12284 = vmatmul.f32.gmra.mxu0 %v12283
  %v12285 = vpop.f32.mrf.mxu0
  %v12286 = vadd.f32 %v12088, %v12285
  %v12287 = vand.u32 %v11516, 4294901760
  %v12288 = vsub.f32 %v11516, %v12287
  %v12289 = vand.u32 %v12288, 4294901760
  %12290 = vmatmul.f32.gmra.mxu0 %v12289
  %v12291 = vpop.f32.mrf.mxu0
  %v12292 = vadd.f32 %v12093, %v12291
  %12293 = vdwg.mxu0
  %12294 = vmatpush.msra.mxu0 0.0
  %12295 = vmatpush.msra.mxu0 0.0
  %12296 = vmatpush.msra.mxu0 0.0
  %12297 = vmatpush.msra.mxu0 0.0
  %12298 = vmatpush.msra.mxu0 0.0
  %12299 = vmatpush.msra.mxu0 0.0
  %12300 = vmatpush.msra.mxu0 0.0
  %12301 = vmatpush.msra.mxu0 0.0
  %12302 = vmatpush.msra.mxu0 0.0
  %12303 = vmatpush.msra.mxu0 0.0
  %12304 = vmatpush.msra.mxu0 0.0
  %12305 = vmatpush.msra.mxu0 0.0
  %12306 = vmatpush.msra.mxu0 0.0
  %12307 = vmatpush.msra.mxu0 0.0
  %v12308 = vand.u32 %v34, 4294901760
  %v12309 = vsub.f32 %v34, %v12308
  %v12310 = vand.u32 %v12309, 4294901760
  %12311 = vmatpush.msra.mxu0 %v12310
  %v12312 = vand.u32 %v33, 4294901760
  %v12313 = vsub.f32 %v33, %v12312
  %v12314 = vand.u32 %v12313, 4294901760
  %12315 = vmatpush.msra.mxu0 %v12314
  %v12316 = vand.u32 %v11429, 4294901760
  %12317 = vmatmul.f32.gmra.mxu0 %v12316
  %v12318 = vpop.f32.mrf.mxu0
  %v12319 = vadd.f32 %v12118, %v12318
  %v12320 = vand.u32 %v11432, 4294901760
  %12321 = vmatmul.f32.gmra.mxu0 %v12320
  %v12322 = vpop.f32.mrf.mxu0
  %v12323 = vadd.f32 %v12124, %v12322
  %v12324 = vand.u32 %v11435, 4294901760
  %12325 = vmatmul.f32.gmra.mxu0 %v12324
  %v12326 = vpop.f32.mrf.mxu0
  %v12327 = vadd.f32 %v12130, %v12326
  %v12328 = vand.u32 %v11438, 4294901760
  %12329 = vmatmul.f32.gmra.mxu0 %v12328
  %v12330 = vpop.f32.mrf.mxu0
  %v12331 = vadd.f32 %v12136, %v12330
  %v12332 = vand.u32 %v11441, 4294901760
  %12333 = vmatmul.f32.gmra.mxu0 %v12332
  %v12334 = vpop.f32.mrf.mxu0
  %v12335 = vadd.f32 %v12142, %v12334
  %v12336 = vand.u32 %v11444, 4294901760
  %12337 = vmatmul.f32.gmra.mxu0 %v12336
  %v12338 = vpop.f32.mrf.mxu0
  %v12339 = vadd.f32 %v12148, %v12338
  %v12340 = vand.u32 %v11447, 4294901760
  %12341 = vmatmul.f32.gmra.mxu0 %v12340
  %v12342 = vpop.f32.mrf.mxu0
  %v12343 = vadd.f32 %v12154, %v12342
  %v12344 = vand.u32 %v11450, 4294901760
  %12345 = vmatmul.f32.gmra.mxu0 %v12344
  %v12346 = vpop.f32.mrf.mxu0
  %v12347 = vadd.f32 %v12160, %v12346
  %v12348 = vand.u32 %v11453, 4294901760
  %12349 = vmatmul.f32.gmra.mxu0 %v12348
  %v12350 = vpop.f32.mrf.mxu0
  %v12351 = vadd.f32 %v12166, %v12350
  %v12352 = vand.u32 %v11456, 4294901760
  %12353 = vmatmul.f32.gmra.mxu0 %v12352
  %v12354 = vpop.f32.mrf.mxu0
  %v12355 = vadd.f32 %v12172, %v12354
  %v12356 = vand.u32 %v11459, 4294901760
  %12357 = vmatmul.f32.gmra.mxu0 %v12356
  %v12358 = vpop.f32.mrf.mxu0
  %v12359 = vadd.f32 %v12178, %v12358
  %v12360 = vand.u32 %v11462, 4294901760
  %12361 = vmatmul.f32.gmra.mxu0 %v12360
  %v12362 = vpop.f32.mrf.mxu0
  %v12363 = vadd.f32 %v12184, %v12362
  %v12364 = vand.u32 %v11465, 4294901760
  %12365 = vmatmul.f32.gmra.mxu0 %v12364
  %v12366 = vpop.f32.mrf.mxu0
  %v12367 = vadd.f32 %v12190, %v12366
  %v12368 = vand.u32 %v11468, 4294901760
  %12369 = vmatmul.f32.gmra.mxu0 %v12368
  %v12370 = vpop.f32.mrf.mxu0
  %v12371 = vadd.f32 %v12196, %v12370
  %v12372 = vand.u32 %v11471, 4294901760
  %12373 = vmatmul.f32.gmra.mxu0 %v12372
  %v12374 = vpop.f32.mrf.mxu0
  %v12375 = vadd.f32 %v12202, %v12374
  %v12376 = vand.u32 %v11474, 4294901760
  %12377 = vmatmul.f32.gmra.mxu0 %v12376
  %v12378 = vpop.f32.mrf.mxu0
  %v12379 = vadd.f32 %v12208, %v12378
  %v12380 = vand.u32 %v11477, 4294901760
  %12381 = vmatmul.f32.gmra.mxu0 %v12380
  %v12382 = vpop.f32.mrf.mxu0
  %v12383 = vadd.f32 %v12214, %v12382
  %v12384 = vand.u32 %v11480, 4294901760
  %12385 = vmatmul.f32.gmra.mxu0 %v12384
  %v12386 = vpop.f32.mrf.mxu0
  %v12387 = vadd.f32 %v12220, %v12386
  %v12388 = vand.u32 %v11483, 4294901760
  %12389 = vmatmul.f32.gmra.mxu0 %v12388
  %v12390 = vpop.f32.mrf.mxu0
  %v12391 = vadd.f32 %v12226, %v12390
  %v12392 = vand.u32 %v11486, 4294901760
  %12393 = vmatmul.f32.gmra.mxu0 %v12392
  %v12394 = vpop.f32.mrf.mxu0
  %v12395 = vadd.f32 %v12232, %v12394
  %v12396 = vand.u32 %v11489, 4294901760
  %12397 = vmatmul.f32.gmra.mxu0 %v12396
  %v12398 = vpop.f32.mrf.mxu0
  %v12399 = vadd.f32 %v12238, %v12398
  %v12400 = vand.u32 %v11492, 4294901760
  %12401 = vmatmul.f32.gmra.mxu0 %v12400
  %v12402 = vpop.f32.mrf.mxu0
  %v12403 = vadd.f32 %v12244, %v12402
  %v12404 = vand.u32 %v11495, 4294901760
  %12405 = vmatmul.f32.gmra.mxu0 %v12404
  %v12406 = vpop.f32.mrf.mxu0
  %v12407 = vadd.f32 %v12250, %v12406
  %v12408 = vand.u32 %v11498, 4294901760
  %12409 = vmatmul.f32.gmra.mxu0 %v12408
  %v12410 = vpop.f32.mrf.mxu0
  %v12411 = vadd.f32 %v12256, %v12410
  %v12412 = vand.u32 %v11501, 4294901760
  %12413 = vmatmul.f32.gmra.mxu0 %v12412
  %v12414 = vpop.f32.mrf.mxu0
  %v12415 = vadd.f32 %v12262, %v12414
  %v12416 = vand.u32 %v11504, 4294901760
  %12417 = vmatmul.f32.gmra.mxu0 %v12416
  %v12418 = vpop.f32.mrf.mxu0
  %v12419 = vadd.f32 %v12268, %v12418
  %v12420 = vand.u32 %v11507, 4294901760
  %12421 = vmatmul.f32.gmra.mxu0 %v12420
  %v12422 = vpop.f32.mrf.mxu0
  %v12423 = vadd.f32 %v12274, %v12422
  %v12424 = vand.u32 %v11510, 4294901760
  %12425 = vmatmul.f32.gmra.mxu0 %v12424
  %v12426 = vpop.f32.mrf.mxu0
  %v12427 = vadd.f32 %v12280, %v12426
  %v12428 = vand.u32 %v11513, 4294901760
  %12429 = vmatmul.f32.gmra.mxu0 %v12428
  %v12430 = vpop.f32.mrf.mxu0
  %v12431 = vadd.f32 %v12286, %v12430
  %v12432 = vand.u32 %v11516, 4294901760
  %12433 = vmatmul.f32.gmra.mxu0 %v12432
  %v12434 = vpop.f32.mrf.mxu0
  %v12435 = vadd.f32 %v12292, %v12434
  %12436 = vdwg.mxu0
  %12437 = vmatpush.msra.mxu0 0.0
  %12438 = vmatpush.msra.mxu0 0.0
  %12439 = vmatpush.msra.mxu0 0.0
  %12440 = vmatpush.msra.mxu0 0.0
  %12441 = vmatpush.msra.mxu0 0.0
  %12442 = vmatpush.msra.mxu0 0.0
  %12443 = vmatpush.msra.mxu0 0.0
  %12444 = vmatpush.msra.mxu0 0.0
  %12445 = vmatpush.msra.mxu0 0.0
  %12446 = vmatpush.msra.mxu0 0.0
  %12447 = vmatpush.msra.mxu0 0.0
  %12448 = vmatpush.msra.mxu0 0.0
  %12449 = vmatpush.msra.mxu0 0.0
  %12450 = vmatpush.msra.mxu0 0.0
  %v12451 = vand.u32 %v34, 4294901760
  %12452 = vmatpush.msra.mxu0 %v12451
  %v12453 = vand.u32 %v33, 4294901760
  %12454 = vmatpush.msra.mxu0 %v12453
  %v12455 = vand.u32 %v11429, 4294901760
  %12456 = vmatmul.f32.gmra.mxu0 %v12455
  %v12457 = vpop.f32.mrf.mxu0
  %v12458 = vadd.f32 %v12319, %v12457
  %v12459 = vand.u32 %v11432, 4294901760
  %12460 = vmatmul.f32.gmra.mxu0 %v12459
  %v12461 = vpop.f32.mrf.mxu0
  %v12462 = vadd.f32 %v12323, %v12461
  %v12463 = vand.u32 %v11435, 4294901760
  %12464 = vmatmul.f32.gmra.mxu0 %v12463
  %v12465 = vpop.f32.mrf.mxu0
  %v12466 = vadd.f32 %v12327, %v12465
  %v12467 = vand.u32 %v11438, 4294901760
  %12468 = vmatmul.f32.gmra.mxu0 %v12467
  %v12469 = vpop.f32.mrf.mxu0
  %v12470 = vadd.f32 %v12331, %v12469
  %v12471 = vand.u32 %v11441, 4294901760
  %12472 = vmatmul.f32.gmra.mxu0 %v12471
  %v12473 = vpop.f32.mrf.mxu0
  %v12474 = vadd.f32 %v12335, %v12473
  %v12475 = vand.u32 %v11444, 4294901760
  %12476 = vmatmul.f32.gmra.mxu0 %v12475
  %v12477 = vpop.f32.mrf.mxu0
  %v12478 = vadd.f32 %v12339, %v12477
  %v12479 = vand.u32 %v11447, 4294901760
  %12480 = vmatmul.f32.gmra.mxu0 %v12479
  %v12481 = vpop.f32.mrf.mxu0
  %v12482 = vadd.f32 %v12343, %v12481
  %v12483 = vand.u32 %v11450, 4294901760
  %12484 = vmatmul.f32.gmra.mxu0 %v12483
  %v12485 = vpop.f32.mrf.mxu0
  %v12486 = vadd.f32 %v12347, %v12485
  %v12487 = vand.u32 %v11453, 4294901760
  %12488 = vmatmul.f32.gmra.mxu0 %v12487
  %v12489 = vpop.f32.mrf.mxu0
  %v12490 = vadd.f32 %v12351, %v12489
  %v12491 = vand.u32 %v11456, 4294901760
  %12492 = vmatmul.f32.gmra.mxu0 %v12491
  %v12493 = vpop.f32.mrf.mxu0
  %v12494 = vadd.f32 %v12355, %v12493
  %v12495 = vand.u32 %v11459, 4294901760
  %12496 = vmatmul.f32.gmra.mxu0 %v12495
  %v12497 = vpop.f32.mrf.mxu0
  %v12498 = vadd.f32 %v12359, %v12497
  %v12499 = vand.u32 %v11462, 4294901760
  %12500 = vmatmul.f32.gmra.mxu0 %v12499
  %v12501 = vpop.f32.mrf.mxu0
  %v12502 = vadd.f32 %v12363, %v12501
  %v12503 = vand.u32 %v11465, 4294901760
  %12504 = vmatmul.f32.gmra.mxu0 %v12503
  %v12505 = vpop.f32.mrf.mxu0
  %v12506 = vadd.f32 %v12367, %v12505
  %v12507 = vand.u32 %v11468, 4294901760
  %12508 = vmatmul.f32.gmra.mxu0 %v12507
  %v12509 = vpop.f32.mrf.mxu0
  %v12510 = vadd.f32 %v12371, %v12509
  %v12511 = vand.u32 %v11471, 4294901760
  %12512 = vmatmul.f32.gmra.mxu0 %v12511
  %v12513 = vpop.f32.mrf.mxu0
  %v12514 = vadd.f32 %v12375, %v12513
  %v12515 = vand.u32 %v11474, 4294901760
  %12516 = vmatmul.f32.gmra.mxu0 %v12515
  %v12517 = vpop.f32.mrf.mxu0
  %v12518 = vadd.f32 %v12379, %v12517
  %v12519 = vand.u32 %v11477, 4294901760
  %12520 = vmatmul.f32.gmra.mxu0 %v12519
  %v12521 = vpop.f32.mrf.mxu0
  %v12522 = vadd.f32 %v12383, %v12521
  %v12523 = vand.u32 %v11480, 4294901760
  %12524 = vmatmul.f32.gmra.mxu0 %v12523
  %v12525 = vpop.f32.mrf.mxu0
  %v12526 = vadd.f32 %v12387, %v12525
  %v12527 = vand.u32 %v11483, 4294901760
  %12528 = vmatmul.f32.gmra.mxu0 %v12527
  %v12529 = vpop.f32.mrf.mxu0
  %v12530 = vadd.f32 %v12391, %v12529
  %v12531 = vand.u32 %v11486, 4294901760
  %12532 = vmatmul.f32.gmra.mxu0 %v12531
  %v12533 = vpop.f32.mrf.mxu0
  %v12534 = vadd.f32 %v12395, %v12533
  %v12535 = vand.u32 %v11489, 4294901760
  %12536 = vmatmul.f32.gmra.mxu0 %v12535
  %v12537 = vpop.f32.mrf.mxu0
  %v12538 = vadd.f32 %v12399, %v12537
  %v12539 = vand.u32 %v11492, 4294901760
  %12540 = vmatmul.f32.gmra.mxu0 %v12539
  %v12541 = vpop.f32.mrf.mxu0
  %v12542 = vadd.f32 %v12403, %v12541
  %v12543 = vand.u32 %v11495, 4294901760
  %12544 = vmatmul.f32.gmra.mxu0 %v12543
  %v12545 = vpop.f32.mrf.mxu0
  %v12546 = vadd.f32 %v12407, %v12545
  %v12547 = vand.u32 %v11498, 4294901760
  %12548 = vmatmul.f32.gmra.mxu0 %v12547
  %v12549 = vpop.f32.mrf.mxu0
  %v12550 = vadd.f32 %v12411, %v12549
  %v12551 = vand.u32 %v11501, 4294901760
  %12552 = vmatmul.f32.gmra.mxu0 %v12551
  %v12553 = vpop.f32.mrf.mxu0
  %v12554 = vadd.f32 %v12415, %v12553
  %v12555 = vand.u32 %v11504, 4294901760
  %12556 = vmatmul.f32.gmra.mxu0 %v12555
  %v12557 = vpop.f32.mrf.mxu0
  %v12558 = vadd.f32 %v12419, %v12557
  %v12559 = vand.u32 %v11507, 4294901760
  %12560 = vmatmul.f32.gmra.mxu0 %v12559
  %v12561 = vpop.f32.mrf.mxu0
  %v12562 = vadd.f32 %v12423, %v12561
  %v12563 = vand.u32 %v11510, 4294901760
  %12564 = vmatmul.f32.gmra.mxu0 %v12563
  %v12565 = vpop.f32.mrf.mxu0
  %v12566 = vadd.f32 %v12427, %v12565
  %v12567 = vand.u32 %v11513, 4294901760
  %12568 = vmatmul.f32.gmra.mxu0 %v12567
  %v12569 = vpop.f32.mrf.mxu0
  %v12570 = vadd.f32 %v12431, %v12569
  %v12571 = vand.u32 %v11516, 4294901760
  %12572 = vmatmul.f32.gmra.mxu0 %v12571
  %v12573 = vpop.f32.mrf.mxu0
  %v12574 = vadd.f32 %v12435, %v12573
  %12575 = vdwg.mxu0
  %vm12576 = vcmask 7168
  %12577 = vst.msk [vmem:[%s3] sm:$0xff] %vm12576, %v12458
  %12578 = vst.msk [vmem:[%s3 + $0x8] sm:$0xff] %vm12576, %v12462
  %12579 = vst.msk [vmem:[%s3 + $0x10] sm:$0xff] %vm12576, %v12466
  %12580 = vst.msk [vmem:[%s3 + $0x18] sm:$0xff] %vm12576, %v12470
  %12581 = vst.msk [vmem:[%s3 + $0x20] sm:$0xff] %vm12576, %v12474
  %12582 = vst.msk [vmem:[%s3 + $0x28] sm:$0xff] %vm12576, %v12478
  %12583 = vst.msk [vmem:[%s3 + $0x30] sm:$0xff] %vm12576, %v12482
  %12584 = vst.msk [vmem:[%s3 + $0x38] sm:$0xff] %vm12576, %v12486
  %12585 = vst.msk [vmem:[%s3 + $0x40] sm:$0xff] %vm12576, %v12490
  %12586 = vst.msk [vmem:[%s3 + $0x48] sm:$0xff] %vm12576, %v12494
  %12587 = vst.msk [vmem:[%s3 + $0x50] sm:$0xff] %vm12576, %v12498
  %12588 = vst.msk [vmem:[%s3 + $0x58] sm:$0xff] %vm12576, %v12502
  %12589 = vst.msk [vmem:[%s3 + $0x60] sm:$0xff] %vm12576, %v12506
  %12590 = vst.msk [vmem:[%s3 + $0x68] sm:$0xff] %vm12576, %v12510
  %12591 = vst.msk [vmem:[%s3 + $0x70] sm:$0xff] %vm12576, %v12514
  %12592 = vst.msk [vmem:[%s3 + $0x78] sm:$0xff] %vm12576, %v12518
  %12593 = vst.msk [vmem:[%s3 + $0x80] sm:$0xff] %vm12576, %v12522
  %12594 = vst.msk [vmem:[%s3 + $0x88] sm:$0xff] %vm12576, %v12526
  %12595 = vst.msk [vmem:[%s3 + $0x90] sm:$0xff] %vm12576, %v12530
  %12596 = vst.msk [vmem:[%s3 + $0x98] sm:$0xff] %vm12576, %v12534
  %12597 = vst.msk [vmem:[%s3 + $0xa0] sm:$0xff] %vm12576, %v12538
  %12598 = vst.msk [vmem:[%s3 + $0xa8] sm:$0xff] %vm12576, %v12542
  %12599 = vst.msk [vmem:[%s3 + $0xb0] sm:$0xff] %vm12576, %v12546
  %12600 = vst.msk [vmem:[%s3 + $0xb8] sm:$0xff] %vm12576, %v12550
  %12601 = vst.msk [vmem:[%s3 + $0xc0] sm:$0xff] %vm12576, %v12554
  %12602 = vst.msk [vmem:[%s3 + $0xc8] sm:$0xff] %vm12576, %v12558
  %12603 = vst.msk [vmem:[%s3 + $0xd0] sm:$0xff] %vm12576, %v12562
  %12604 = vst.msk [vmem:[%s3 + $0xd8] sm:$0xff] %vm12576, %v12566
  %12605 = vst.msk [vmem:[%s3 + $0xe0] sm:$0xff] %vm12576, %v12570
  %12606 = vst.msk [vmem:[%s3 + $0xe8] sm:$0xff] %vm12576, %v12574
  // Predicated region
  $region14: #{similarity_net_forward.1} parent=0 // pred_check
    _
  $region15: #{similarity_net_forward.1} parent=0 // pred_check_branch
    %12608 = sbr.rel (0) target = $region17
  $region16: #{similarity_net_forward.1} parent=0 // pred_region
    _
  $region17: #{similarity_net_forward.1} parent=0 // pred_fallthru
    _
  // Predicated region
  $region18: #{similarity_net_forward.1} parent=0 // pred_check
    _
  $region19: #{similarity_net_forward.1} parent=0 // pred_check_branch
    %12610 = sbr.rel (0) target = $region21
  $region20: #{similarity_net_forward.1} parent=0 // pred_region
    _
  $region21: #{similarity_net_forward.1} parent=0 // pred_fallthru
    _

</llo_original>
